<compile_context>
chip_gen: v5e
topology: v5e:2x2
jax: 0.10.0
libtpu: 0.0.40
codegen_flags: <defaults>
</compile_context>

<pallas_src>
import jax
import jax.numpy as jnp
from jax import lax
from jax.experimental import pallas as pl
from jax.experimental.pallas import tpu as pltpu

KSIZE = 4                      # every conv in this module is 4x4
ACT_DTYPE = jnp.float32        # dtype of the in-VMEM padded activations


def _round_up(x, m):
    return (x + m - 1) // m * m


def _store_width(c):
    # Per-tap channel storage width of the in-VMEM padded activations: keep it
    # close to the real channel count so the packed-K matmuls are mostly real.
    if c <= 32:
        return 32
    if c <= 64:
        return 64
    return _round_up(c, 128)


def _ds(start, size, stride):
    return pl.ds(start, size) if stride == 1 else pl.ds(start, size, stride)


# ----------------------------- static shape plan --------------------------- #
def make_plan(height, width, input_nc, ndf=28, n_layers=3):
    chans = [input_nc, ndf]
    strides = [2]
    has_bn = [False]
    acts = ["lrelu"]
    for n in range(n_layers):
        chans.append(ndf * min(2 ** (n + 1), 8))
        strides.append(1 if n == n_layers - 1 else 2)
        has_bn.append(True)
        acts.append("lrelu")
    chans.append(1)
    strides.append(1)
    has_bn.append(False)
    acts.append("sigmoid")

    plan = []
    h, w = height, width
    for i, s in enumerate(strides):
        hp, wp = h + 2, w + 2                               # after ReflectionPad2d(1)
        ho = (hp - KSIZE) // s + 1
        wo = (wp - KSIZE) // s + 1
        wo_pad = _round_up(wo, 8)                           # junk cols -> free reshapes
        w_alloc = max(wp, (KSIZE - 1) + s * (wo_pad - 1) + 1)
        cin, cout = chans[i], chans[i + 1]
        plan.append(dict(
            cin=cin, cout=cout, cout_p=_round_up(cout, 128),
            cin_store=None if i == 0 else _store_width(cin),
            stride=s, hp=hp, wp=wp, w_alloc=w_alloc,
            ho=ho, wo=wo, wo_pad=wo_pad, m=ho * wo_pad,
            bn=has_bn[i], act=acts[i]))
        h, w = ho, wo
    # layer 0 is im2col'd host-side: K = 16 taps * cin, padded lane-dense to 128
    plan[0]["k0"] = _round_up(KSIZE * KSIZE * plan[0]["cin"], 128)
    return plan


# ----------------------------- fused Pallas kernel -------------------------- #
def _make_kernel(plan):
    nl = len(plan)

    def kernel(*refs):
        lhs0_ref = refs[0]                       # (m0, k0) bf16, host-side im2col
        w_refs = refs[1:1 + nl]                  # packed bf16 weights
        sh_refs = refs[1 + nl:1 + 2 * nl]        # (1, cout_p) f32 folded shifts
        o_ref = refs[1 + 2 * nl]                 # (ho_last, wo_last, cout_p_last)
        bufs = refs[2 + 2 * nl:]                 # padded-activation scratch, layers 1..nl-1

        # Zero the extra ("junk") columns of the scratch buffers.  They are only
        # read by junk output columns, which get sliced off before being used.
        for l in range(1, nl):
            L = plan[l]
            if L["w_alloc"] > L["wp"]:
                b = bufs[l - 1]
                b[:, L["wp"]:, :] = jnp.zeros(
                    (L["hp"], L["w_alloc"] - L["wp"], b.shape[-1]), b.dtype)

        for l in range(nl):
            L = plan[l]
            ho, wo, wo_pad, s = L["ho"], L["wo"], L["wo_pad"], L["stride"]
            cout_p, m = L["cout_p"], L["m"]

            if l == 0:
                # whole first conv = one MXU matmul over the host-packed im2col LHS
                acc = jnp.dot(lhs0_ref[...], w_refs[0][...],
                              preferred_element_type=jnp.float32)
            else:
                src = bufs[l - 1]
                cs = L["cin_store"]
                acc = None
                for kh in range(KSIZE):          # 4 grouped matmuls, K = 4*cs
                    taps = [src[_ds(kh, ho, s), _ds(kw, wo_pad, s), :]
                            for kw in range(KSIZE)]
                    lhs = jnp.concatenate(taps, axis=-1)
                    lhs = lhs.reshape(m, KSIZE * cs).astype(jnp.bfloat16)
                    part = jnp.dot(lhs, w_refs[l][kh],
                                   preferred_element_type=jnp.float32)
                    acc = part if acc is None else acc + part

            y = acc + sh_refs[l][...]            # folded conv-bias + BatchNorm
            if L["act"] == "sigmoid":
                y = 1.0 / (1.0 + jnp.exp(-y))    # exact; final tile is tiny
            else:                                # LeakyReLU(0.2)
                y = jnp.where(y >= 0.0, y, 0.2 * y)

            yv = y.reshape(ho, wo_pad, cout_p)[:, :wo, :]   # drop junk columns
            if l == nl - 1:
                o_ref[...] = yv.astype(o_ref.dtype)
            else:
                nxt = bufs[l]                    # next layer's padded-input buffer
                cn = plan[l + 1]["cin_store"]
                yb = yv[:, :, :cn].astype(nxt.dtype)
                # in-VMEM ReflectionPad2d(1)
                nxt[1:ho + 1, 1:wo + 1, :] = yb
                nxt[1:ho + 1, 0:1, :] = yb[:, 1:2, :]
                nxt[1:ho + 1, wo + 1:wo + 2, :] = yb[:, wo - 2:wo - 1, :]
                nxt[0:1, 0:wo + 2, :] = nxt[2:3, 0:wo + 2, :]
                nxt[ho + 1:ho + 2, 0:wo + 2, :] = nxt[ho - 1:ho, 0:wo + 2, :]

    return kernel


def build_forward(plan, batch, out_dtype=jnp.float32):
    nl = len(plan)
    L0, Ll = plan[0], plan[-1]
    m0, k0 = L0["m"], L0["k0"]
    kernel = _make_kernel(plan)

    in_specs = [pl.BlockSpec((None, m0, k0), lambda b: (b, 0, 0))]
    in_specs.append(pl.BlockSpec((k0, L0["cout_p"]), lambda b: (0, 0)))
    for L in plan[1:]:
        in_specs.append(pl.BlockSpec(
            (KSIZE, KSIZE * L["cin_store"], L["cout_p"]), lambda b: (0, 0, 0)))
    for L in plan:
        in_specs.append(pl.BlockSpec((1, L["cout_p"]), lambda b: (0, 0)))

    out_spec = pl.BlockSpec((None, Ll["ho"], Ll["wo"], Ll["cout_p"]),
                            lambda b: (b, 0, 0, 0))
    scratch = [pltpu.VMEM((L["hp"], L["w_alloc"], L["cin_store"]), ACT_DTYPE)
               for L in plan[1:]]

    call = pl.pallas_call(
        kernel,
        out_shape=jax.ShapeDtypeStruct(
            (batch, Ll["ho"], Ll["wo"], Ll["cout_p"]), out_dtype),
        grid=(batch,),
        in_specs=in_specs,
        out_specs=out_spec,
        scratch_shapes=scratch,
        compiler_params=pltpu.CompilerParams(
            dimension_semantics=("parallel",),          # batch across cores (v7x)
            vmem_limit_bytes=32 * 1024 * 1024),
    )
    # TODO(synk): weights/shifts are grid-invariant; single-buffer them
    #             (pl.Buffered(1)) and fold batch into M for 1-TC chips.

    s0, ho0, wo0, wo0_pad, cin0 = (L0["stride"], L0["ho"], L0["wo"],
                                   L0["wo_pad"], L0["cin"])

    def forward(x_nchw, packed_ws, packed_shifts):
        # NCHW -> NHWC, ReflectionPad2d(1) and the layer-0 im2col on the XLA
        # side: (B,H,W,C) -> (B, ho0*wo0_pad, 16*cin -> k0) bf16, lane-dense.
        x = jnp.transpose(x_nchw, (0, 2, 3, 1)).astype(jnp.float32)
        xp = jnp.pad(x, ((0, 0), (1, 1), (1, 1), (0, 0)), mode="reflect")
        taps = [xp[:, kh:kh + s0 * ho0:s0, kw:kw + s0 * wo0:s0, :]
                for kh in range(KSIZE) for kw in range(KSIZE)]
        p = jnp.concatenate(taps, axis=-1)               # (B, ho0, wo0, 16*cin)
        p = jnp.pad(p, ((0, 0), (0, 0), (0, wo0_pad - wo0),
                        (0, k0 - KSIZE * KSIZE * cin0)))
        lhs0 = p.reshape(batch, m0, k0).astype(jnp.bfloat16)
        out = call(lhs0, *packed_ws, *packed_shifts)
        out = out[..., :1]                               # drop padded channels
        return jnp.transpose(out, (0, 3, 1, 2))          # NHWC -> NCHW

    return jax.jit(forward)


# ------------------------------- parameters -------------------------------- #
def init_params(key, plan, eps=1e-5):
    """Random Conv/BN params (PyTorch layout) + packed/folded kernel operands."""
    torch_params, packed_ws, packed_shifts = [], [], []
    for li, L in enumerate(plan):
        cin, cout, cout_p = L["cin"], L["cout"], L["cout_p"]
        key, k1, k2, k3, k4, k5, k6 = jax.random.split(key, 7)
        w = jax.random.normal(k1, (cout, cin, KSIZE, KSIZE), jnp.float32) * 0.05
        b = jax.random.normal(k2, (cout,), jnp.float32) * 0.01
        if L["bn"]:
            gamma = 1.0 + 0.1 * jax.random.normal(k3, (cout,), jnp.float32)
            beta = 0.1 * jax.random.normal(k4, (cout,), jnp.float32)
            mean = 0.1 * jax.random.normal(k5, (cout,), jnp.float32)
            var = 1.0 + 0.1 * jax.random.uniform(k6, (cout,), jnp.float32)
        else:
            gamma = jnp.ones((cout,), jnp.float32)
            beta = jnp.zeros((cout,), jnp.float32)
            mean = jnp.zeros((cout,), jnp.float32)
            var = jnp.ones((cout,), jnp.float32)
        torch_params.append(dict(w=w, b=b, gamma=gamma, beta=beta, mean=mean,
                                 var=var, stride=L["stride"], bn=L["bn"],
                                 act=L["act"]))

        # Fold eval-mode BN + conv bias into the weights.
        scale = gamma / jnp.sqrt(var + eps)
        shift = beta - mean * scale
        w_f = w * scale[:, None, None, None]
        sh_f = b * scale + shift

        wt = jnp.transpose(w_f, (2, 3, 1, 0))            # (kh, kw, cin, cout) = HWIO
        if li == 0:
            # all 16 taps along K, matching the host-side im2col tap order.
            wt = wt.reshape(KSIZE * KSIZE * cin, cout)
            wt = jnp.pad(wt, ((0, L["k0"] - KSIZE * KSIZE * cin),
                              (0, cout_p - cout)))
        else:
            # grouped by kh; within a group K runs over (kw, channel).
            cs = L["cin_store"]
            wt = jnp.pad(wt, ((0, 0), (0, 0), (0, cs - cin), (0, cout_p - cout)))
            wt = wt.reshape(KSIZE, KSIZE * cs, cout_p)
        packed_ws.append(wt.astype(jnp.bfloat16))
        packed_shifts.append(
            jnp.pad(sh_f, (0, cout_p - cout)).reshape(1, cout_p).astype(jnp.float32))
    return torch_params, packed_ws, packed_shifts


# ----------------------------- pure-JAX reference --------------------------- #
def reference_forward(x_nchw, torch_params, eps=1e-5):
    x = jnp.transpose(x_nchw, (0, 2, 3, 1)).astype(jnp.float32)
    for p in torch_params:
        xp = jnp.pad(x, ((0, 0), (1, 1), (1, 1), (0, 0)), mode="reflect")
        w = jnp.transpose(p["w"], (2, 3, 1, 0))          # HWIO
        y = lax.conv_general_dilated(
            xp, w, (p["stride"], p["stride"]), "VALID",
            dimension_numbers=("NHWC", "HWIO", "NHWC")) + p["b"]
        if p["bn"]:
            y = (y - p["mean"]) * (p["gamma"] / jnp.sqrt(p["var"] + eps)) + p["beta"]
        # Dropout2d is identity in eval mode.
        y = jax.nn.sigmoid(y) if p["act"] == "sigmoid" else jnp.where(y >= 0.0, y, 0.2 * y)
        x = y
    return jnp.transpose(x, (0, 3, 1, 2))


# ----------------------------------- main ----------------------------------- #
if __name__ == "__main__":
    key = jax.random.PRNGKey(0)
    k_x, k_p = jax.random.split(key)

    # Input must be >= 32x32 so the final ReflectionPad2d(1) sees spatial dim >= 2.
    N, C, H, W = 2, 3, 32, 32
    x = jax.random.normal(k_x, (N, C, H, W), jnp.float32)

    plan = make_plan(H, W, input_nc=C, ndf=28, n_layers=3)
    torch_params, packed_ws, packed_shifts = init_params(k_p, plan)

    forward = build_forward(plan, N)
    out = jax.block_until_ready(forward(x, packed_ws, packed_shifts))

    # Expected spatial trace: 32 -> 16 -> 8 -> 4 -> 3 -> 2, channels -> 1.
    assert out.shape == (N, 1, 2, 2), out.shape
    assert out.dtype == jnp.float32
    assert bool(jnp.all(jnp.isfinite(out)))
    assert bool(jnp.all((out >= 0.0) & (out <= 1.0)))       # Sigmoid range

    ref = reference_forward(x, torch_params)
    err = float(jnp.max(jnp.abs(out - ref)))
    assert err < 5e-2, f"max abs err vs reference: {err}"

    print("KERNEL_OK")
</pallas_src>

<mosaic_0001>
module attributes {stable_mosaic.version = 11 : i64} {
  func.func @kernel(%arg0: i32, %arg1: memref<1x256x128xbf16, #tpu.memory_space<vmem>>, %arg2: memref<128x128xbf16, #tpu.memory_space<vmem>>, %arg3: memref<4x128x128xbf16, #tpu.memory_space<vmem>>, %arg4: memref<4x256x128xbf16, #tpu.memory_space<vmem>>, %arg5: memref<4x512x256xbf16, #tpu.memory_space<vmem>>, %arg6: memref<4x1024x128xbf16, #tpu.memory_space<vmem>>, %arg7: memref<1x128xf32, #tpu.memory_space<vmem>>, %arg8: memref<1x128xf32, #tpu.memory_space<vmem>>, %arg9: memref<1x128xf32, #tpu.memory_space<vmem>>, %arg10: memref<1x256xf32, #tpu.memory_space<vmem>>, %arg11: memref<1x128xf32, #tpu.memory_space<vmem>>, %arg12: memref<1x2x2x128xf32, #tpu.memory_space<vmem>>, %arg13: memref<18x18x32xf32, #tpu.memory_space<vmem>>, %arg14: memref<10x18x64xf32, #tpu.memory_space<vmem>>, %arg15: memref<6x11x128xf32, #tpu.memory_space<vmem>>, %arg16: memref<5x11x256xf32, #tpu.memory_space<vmem>>) attributes {dimension_semantics = [#tpu.dimension_semantics<parallel>], iteration_bounds = array<i64: 2>, scalar_prefetch = 0 : i64, scratch_operands = 4 : i64, tpu.core_type = #tpu.core_type<tc>, window_params = [{transform_indices = @transform_0, window_bounds = array<i64: 1, 256, 128>}, {pipeline_mode = #tpu.pipeline_mode<synchronous>, transform_indices = @transform_1, window_bounds = array<i64: 128, 128>}, {pipeline_mode = #tpu.pipeline_mode<synchronous>, transform_indices = @transform_2, window_bounds = array<i64: 4, 128, 128>}, {pipeline_mode = #tpu.pipeline_mode<synchronous>, transform_indices = @transform_3, window_bounds = array<i64: 4, 256, 128>}, {pipeline_mode = #tpu.pipeline_mode<synchronous>, transform_indices = @transform_4, window_bounds = array<i64: 4, 512, 256>}, {pipeline_mode = #tpu.pipeline_mode<synchronous>, transform_indices = @transform_5, window_bounds = array<i64: 4, 1024, 128>}, {pipeline_mode = #tpu.pipeline_mode<synchronous>, transform_indices = @transform_6, window_bounds = array<i64: 1, 128>}, {pipeline_mode = #tpu.pipeline_mode<synchronous>, transform_indices = @transform_7, window_bounds = array<i64: 1, 128>}, {pipeline_mode = #tpu.pipeline_mode<synchronous>, transform_indices = @transform_8, window_bounds = array<i64: 1, 128>}, {pipeline_mode = #tpu.pipeline_mode<synchronous>, transform_indices = @transform_9, window_bounds = array<i64: 1, 256>}, {pipeline_mode = #tpu.pipeline_mode<synchronous>, transform_indices = @transform_10, window_bounds = array<i64: 1, 128>}, {transform_indices = @transform_11, window_bounds = array<i64: 1, 2, 2, 128>}]} {
    %cst = arith.constant 0.000000e+00 : f32
    %0 = vector.broadcast %cst : f32 to vector<10x8x64xf32>
    %c0 = arith.constant 0 : index
    %c10 = arith.constant 10 : index
    %c0_0 = arith.constant 0 : index
    %1 = vector.load %arg14[%c0, %c10, %c0_0] : memref<10x18x64xf32, #tpu.memory_space<vmem>>, vector<10x8x64xf32>
    tpu.vector_store %arg14[%c0, %c10, %c0_0], %0 {strides = array<i32>} : memref<10x18x64xf32, #tpu.memory_space<vmem>>, vector<10x8x64xf32>,
    %cst_1 = arith.constant 0.000000e+00 : f32
    %2 = vector.broadcast %cst_1 : f32 to vector<6x5x128xf32>
    %c0_2 = arith.constant 0 : index
    %c6 = arith.constant 6 : index
    %c0_3 = arith.constant 0 : index
    %3 = vector.load %arg15[%c0_2, %c6, %c0_3] : memref<6x11x128xf32, #tpu.memory_space<vmem>>, vector<6x5x128xf32>
    tpu.vector_store %arg15[%c0_2, %c6, %c0_3], %2 {strides = array<i32>} : memref<6x11x128xf32, #tpu.memory_space<vmem>>, vector<6x5x128xf32>,
    %cst_4 = arith.constant 0.000000e+00 : f32
    %4 = vector.broadcast %cst_4 : f32 to vector<5x6x256xf32>
    %c0_5 = arith.constant 0 : index
    %c5 = arith.constant 5 : index
    %c0_6 = arith.constant 0 : index
    %5 = vector.load %arg16[%c0_5, %c5, %c0_6] : memref<5x11x256xf32, #tpu.memory_space<vmem>>, vector<5x6x256xf32>
    tpu.vector_store %arg16[%c0_5, %c5, %c0_6], %4 {strides = array<i32>} : memref<5x11x256xf32, #tpu.memory_space<vmem>>, vector<5x6x256xf32>,
    %c0_7 = arith.constant 0 : index
    %c0_8 = arith.constant 0 : index
    %c0_9 = arith.constant 0 : index
    %6 = vector.load %arg1[%c0_7, %c0_8, %c0_9] : memref<1x256x128xbf16, #tpu.memory_space<vmem>>, vector<1x256x128xbf16>
    %7 = vector.shape_cast %6 : vector<1x256x128xbf16> to vector<256x128xbf16>
    %c0_10 = arith.constant 0 : index
    %c0_11 = arith.constant 0 : index
    %8 = vector.load %arg2[%c0_10, %c0_11] : memref<128x128xbf16, #tpu.memory_space<vmem>>, vector<128x128xbf16>
    %cst_12 = arith.constant dense<0.000000e+00> : vector<256x128xf32>
    %9 = tpu.matmul %7, %8, %cst_12 {dimension_numbers = #tpu.dot_dimension_numbers<[1], [0], [0], [1], [0, 0, 1, 1], [], []>} : vector<256x128xbf16>, vector<128x128xbf16>, vector<256x128xf32> -> vector<256x128xf32>
    %c0_13 = arith.constant 0 : index
    %c0_14 = arith.constant 0 : index
    %10 = vector.load %arg7[%c0_13, %c0_14] : memref<1x128xf32, #tpu.memory_space<vmem>>, vector<1x128xf32>
    %11 = vector.broadcast %10 : vector<1x128xf32> to vector<256x128xf32>
    %12 = arith.addf %9, %11 : vector<256x128xf32>
    %cst_15 = arith.constant 0.000000e+00 : f32
    %13 = vector.broadcast %cst_15 : f32 to vector<256x128xf32>
    %14 = arith.cmpf oge, %12, %13 : vector<256x128xf32>
    %cst_16 = arith.constant 2.000000e-01 : f32
    %15 = vector.broadcast %cst_16 : f32 to vector<256x128xf32>
    %16 = arith.mulf %15, %12 : vector<256x128xf32>
    %17 = arith.select %14, %12, %16 : vector<256x128xi1>, vector<256x128xf32>
    %18 = vector.shape_cast %17 : vector<256x128xf32> to vector<16x16x128xf32>
    %19 = vector.extract_strided_slice %18 {offsets = [0, 0, 0], sizes = [16, 16, 32], strides = [1, 1, 1]} : vector<16x16x128xf32> to vector<16x16x32xf32>
    %c1 = arith.constant 1 : index
    %c1_17 = arith.constant 1 : index
    %c0_18 = arith.constant 0 : index
    %20 = vector.load %arg13[%c1, %c1_17, %c0_18] : memref<18x18x32xf32, #tpu.memory_space<vmem>>, vector<16x16x32xf32>
    tpu.vector_store %arg13[%c1, %c1_17, %c0_18], %19 {strides = array<i32>} : memref<18x18x32xf32, #tpu.memory_space<vmem>>, vector<16x16x32xf32>,
    %21 = vector.extract_strided_slice %19 {offsets = [0, 1, 0], sizes = [16, 1, 32], strides = [1, 1, 1]} : vector<16x16x32xf32> to vector<16x1x32xf32>
    %c1_19 = arith.constant 1 : index
    %c0_20 = arith.constant 0 : index
    %c0_21 = arith.constant 0 : index
    %22 = vector.load %arg13[%c1_19, %c0_20, %c0_21] : memref<18x18x32xf32, #tpu.memory_space<vmem>>, vector<16x1x32xf32>
    tpu.vector_store %arg13[%c1_19, %c0_20, %c0_21], %21 {strides = array<i32>} : memref<18x18x32xf32, #tpu.memory_space<vmem>>, vector<16x1x32xf32>,
    %23 = vector.extract_strided_slice %19 {offsets = [0, 14, 0], sizes = [16, 1, 32], strides = [1, 1, 1]} : vector<16x16x32xf32> to vector<16x1x32xf32>
    %c1_22 = arith.constant 1 : index
    %c17 = arith.constant 17 : index
    %c0_23 = arith.constant 0 : index
    %24 = vector.load %arg13[%c1_22, %c17, %c0_23] : memref<18x18x32xf32, #tpu.memory_space<vmem>>, vector<16x1x32xf32>
    tpu.vector_store %arg13[%c1_22, %c17, %c0_23], %23 {strides = array<i32>} : memref<18x18x32xf32, #tpu.memory_space<vmem>>, vector<16x1x32xf32>,
    %c2 = arith.constant 2 : index
    %c0_24 = arith.constant 0 : index
    %c0_25 = arith.constant 0 : index
    %25 = vector.load %arg13[%c2, %c0_24, %c0_25] : memref<18x18x32xf32, #tpu.memory_space<vmem>>, vector<1x18x32xf32>
    %c0_26 = arith.constant 0 : index
    %c0_27 = arith.constant 0 : index
    %c0_28 = arith.constant 0 : index
    %26 = vector.load %arg13[%c0_26, %c0_27, %c0_28] : memref<18x18x32xf32, #tpu.memory_space<vmem>>, vector<1x18x32xf32>
    tpu.vector_store %arg13[%c0_26, %c0_27, %c0_28], %25 {strides = array<i32>} : memref<18x18x32xf32, #tpu.memory_space<vmem>>, vector<1x18x32xf32>,
    %c15 = arith.constant 15 : index
    %c0_29 = arith.constant 0 : index
    %c0_30 = arith.constant 0 : index
    %27 = vector.load %arg13[%c15, %c0_29, %c0_30] : memref<18x18x32xf32, #tpu.memory_space<vmem>>, vector<1x18x32xf32>
    %c17_31 = arith.constant 17 : index
    %c0_32 = arith.constant 0 : index
    %c0_33 = arith.constant 0 : index
    %28 = vector.load %arg13[%c17_31, %c0_32, %c0_33] : memref<18x18x32xf32, #tpu.memory_space<vmem>>, vector<1x18x32xf32>
    tpu.vector_store %arg13[%c17_31, %c0_32, %c0_33], %27 {strides = array<i32>} : memref<18x18x32xf32, #tpu.memory_space<vmem>>, vector<1x18x32xf32>,
    %c0_34 = arith.constant 0 : index
    %c0_35 = arith.constant 0 : index
    %c0_36 = arith.constant 0 : index
    %29 = tpu.strided_load %arg13[%c0_34, %c0_35, %c0_36] {strides = array<i32: 2, 2, 1>} : memref<18x18x32xf32, #tpu.memory_space<vmem>>, vector<8x8x32xf32>
    %c0_37 = arith.constant 0 : index
    %c1_38 = arith.constant 1 : index
    %c0_39 = arith.constant 0 : index
    %30 = tpu.strided_load %arg13[%c0_37, %c1_38, %c0_39] {strides = array<i32: 2, 2, 1>} : memref<18x18x32xf32, #tpu.memory_space<vmem>>, vector<8x8x32xf32>
    %c0_40 = arith.constant 0 : index
    %c2_41 = arith.constant 2 : index
    %c0_42 = arith.constant 0 : index
    %31 = tpu.strided_load %arg13[%c0_40, %c2_41, %c0_42] {strides = array<i32: 2, 2, 1>} : memref<18x18x32xf32, #tpu.memory_space<vmem>>, vector<8x8x32xf32>
    %c0_43 = arith.constant 0 : index
    %c3 = arith.constant 3 : index
    %c0_44 = arith.constant 0 : index
    %32 = tpu.strided_load %arg13[%c0_43, %c3, %c0_44] {strides = array<i32: 2, 2, 1>} : memref<18x18x32xf32, #tpu.memory_space<vmem>>, vector<8x8x32xf32>
    %33 = tpu.concatenate %29, %30, %31, %32 in 2 : vector<8x8x32xf32>, vector<8x8x32xf32>, vector<8x8x32xf32>, vector<8x8x32xf32> -> vector<8x8x128xf32>
    %34 = vector.shape_cast %33 : vector<8x8x128xf32> to vector<64x128xf32>
    %35 = arith.truncf %34 : vector<64x128xf32> to vector<64x128xbf16>
    %c0_45 = arith.constant 0 : index
    %c0_46 = arith.constant 0 : index
    %c0_47 = arith.constant 0 : index
    %36 = vector.load %arg3[%c0_45, %c0_46, %c0_47] : memref<4x128x128xbf16, #tpu.memory_space<vmem>>, vector<1x128x128xbf16>
    %37 = vector.shape_cast %36 : vector<1x128x128xbf16> to vector<128x128xbf16>
    %cst_48 = arith.constant dense<0.000000e+00> : vector<64x128xf32>
    %38 = tpu.matmul %35, %37, %cst_48 {dimension_numbers = #tpu.dot_dimension_numbers<[1], [0], [0], [1], [0, 0, 1, 1], [], []>} : vector<64x128xbf16>, vector<128x128xbf16>, vector<64x128xf32> -> vector<64x128xf32>
    %c1_49 = arith.constant 1 : index
    %c0_50 = arith.constant 0 : index
    %c0_51 = arith.constant 0 : index
    %39 = tpu.strided_load %arg13[%c1_49, %c0_50, %c0_51] {strides = array<i32: 2, 2, 1>} : memref<18x18x32xf32, #tpu.memory_space<vmem>>, vector<8x8x32xf32>
    %c1_52 = arith.constant 1 : index
    %c1_53 = arith.constant 1 : index
    %c0_54 = arith.constant 0 : index
    %40 = tpu.strided_load %arg13[%c1_52, %c1_53, %c0_54] {strides = array<i32: 2, 2, 1>} : memref<18x18x32xf32, #tpu.memory_space<vmem>>, vector<8x8x32xf32>
    %c1_55 = arith.constant 1 : index
    %c2_56 = arith.constant 2 : index
    %c0_57 = arith.constant 0 : index
    %41 = tpu.strided_load %arg13[%c1_55, %c2_56, %c0_57] {strides = array<i32: 2, 2, 1>} : memref<18x18x32xf32, #tpu.memory_space<vmem>>, vector<8x8x32xf32>
    %c1_58 = arith.constant 1 : index
    %c3_59 = arith.constant 3 : index
    %c0_60 = arith.constant 0 : index
    %42 = tpu.strided_load %arg13[%c1_58, %c3_59, %c0_60] {strides = array<i32: 2, 2, 1>} : memref<18x18x32xf32, #tpu.memory_space<vmem>>, vector<8x8x32xf32>
    %43 = tpu.concatenate %39, %40, %41, %42 in 2 : vector<8x8x32xf32>, vector<8x8x32xf32>, vector<8x8x32xf32>, vector<8x8x32xf32> -> vector<8x8x128xf32>
    %44 = vector.shape_cast %43 : vector<8x8x128xf32> to vector<64x128xf32>
    %45 = arith.truncf %44 : vector<64x128xf32> to vector<64x128xbf16>
    %c1_61 = arith.constant 1 : index
    %c0_62 = arith.constant 0 : index
    %c0_63 = arith.constant 0 : index
    %46 = vector.load %arg3[%c1_61, %c0_62, %c0_63] : memref<4x128x128xbf16, #tpu.memory_space<vmem>>, vector<1x128x128xbf16>
    %47 = vector.shape_cast %46 : vector<1x128x128xbf16> to vector<128x128xbf16>
    %cst_64 = arith.constant dense<0.000000e+00> : vector<64x128xf32>
    %48 = tpu.matmul %45, %47, %cst_64 {dimension_numbers = #tpu.dot_dimension_numbers<[1], [0], [0], [1], [0, 0, 1, 1], [], []>} : vector<64x128xbf16>, vector<128x128xbf16>, vector<64x128xf32> -> vector<64x128xf32>
    %49 = arith.addf %38, %48 : vector<64x128xf32>
    %c2_65 = arith.constant 2 : index
    %c0_66 = arith.constant 0 : index
    %c0_67 = arith.constant 0 : index
    %50 = tpu.strided_load %arg13[%c2_65, %c0_66, %c0_67] {strides = array<i32: 2, 2, 1>} : memref<18x18x32xf32, #tpu.memory_space<vmem>>, vector<8x8x32xf32>
    %c2_68 = arith.constant 2 : index
    %c1_69 = arith.constant 1 : index
    %c0_70 = arith.constant 0 : index
    %51 = tpu.strided_load %arg13[%c2_68, %c1_69, %c0_70] {strides = array<i32: 2, 2, 1>} : memref<18x18x32xf32, #tpu.memory_space<vmem>>, vector<8x8x32xf32>
    %c2_71 = arith.constant 2 : index
    %c2_72 = arith.constant 2 : index
    %c0_73 = arith.constant 0 : index
    %52 = tpu.strided_load %arg13[%c2_71, %c2_72, %c0_73] {strides = array<i32: 2, 2, 1>} : memref<18x18x32xf32, #tpu.memory_space<vmem>>, vector<8x8x32xf32>
    %c2_74 = arith.constant 2 : index
    %c3_75 = arith.constant 3 : index
    %c0_76 = arith.constant 0 : index
    %53 = tpu.strided_load %arg13[%c2_74, %c3_75, %c0_76] {strides = array<i32: 2, 2, 1>} : memref<18x18x32xf32, #tpu.memory_space<vmem>>, vector<8x8x32xf32>
    %54 = tpu.concatenate %50, %51, %52, %53 in 2 : vector<8x8x32xf32>, vector<8x8x32xf32>, vector<8x8x32xf32>, vector<8x8x32xf32> -> vector<8x8x128xf32>
    %55 = vector.shape_cast %54 : vector<8x8x128xf32> to vector<64x128xf32>
    %56 = arith.truncf %55 : vector<64x128xf32> to vector<64x128xbf16>
    %c2_77 = arith.constant 2 : index
    %c0_78 = arith.constant 0 : index
    %c0_79 = arith.constant 0 : index
    %57 = vector.load %arg3[%c2_77, %c0_78, %c0_79] : memref<4x128x128xbf16, #tpu.memory_space<vmem>>, vector<1x128x128xbf16>
    %58 = vector.shape_cast %57 : vector<1x128x128xbf16> to vector<128x128xbf16>
    %cst_80 = arith.constant dense<0.000000e+00> : vector<64x128xf32>
    %59 = tpu.matmul %56, %58, %cst_80 {dimension_numbers = #tpu.dot_dimension_numbers<[1], [0], [0], [1], [0, 0, 1, 1], [], []>} : vector<64x128xbf16>, vector<128x128xbf16>, vector<64x128xf32> -> vector<64x128xf32>
    %60 = arith.addf %49, %59 : vector<64x128xf32>
    %c3_81 = arith.constant 3 : index
    %c0_82 = arith.constant 0 : index
    %c0_83 = arith.constant 0 : index
    %61 = tpu.strided_load %arg13[%c3_81, %c0_82, %c0_83] {strides = array<i32: 2, 2, 1>} : memref<18x18x32xf32, #tpu.memory_space<vmem>>, vector<8x8x32xf32>
    %c3_84 = arith.constant 3 : index
    %c1_85 = arith.constant 1 : index
    %c0_86 = arith.constant 0 : index
    %62 = tpu.strided_load %arg13[%c3_84, %c1_85, %c0_86] {strides = array<i32: 2, 2, 1>} : memref<18x18x32xf32, #tpu.memory_space<vmem>>, vector<8x8x32xf32>
    %c3_87 = arith.constant 3 : index
    %c2_88 = arith.constant 2 : index
    %c0_89 = arith.constant 0 : index
    %63 = tpu.strided_load %arg13[%c3_87, %c2_88, %c0_89] {strides = array<i32: 2, 2, 1>} : memref<18x18x32xf32, #tpu.memory_space<vmem>>, vector<8x8x32xf32>
    %c3_90 = arith.constant 3 : index
    %c3_91 = arith.constant 3 : index
    %c0_92 = arith.constant 0 : index
    %64 = tpu.strided_load %arg13[%c3_90, %c3_91, %c0_92] {strides = array<i32: 2, 2, 1>} : memref<18x18x32xf32, #tpu.memory_space<vmem>>, vector<8x8x32xf32>
    %65 = tpu.concatenate %61, %62, %63, %64 in 2 : vector<8x8x32xf32>, vector<8x8x32xf32>, vector<8x8x32xf32>, vector<8x8x32xf32> -> vector<8x8x128xf32>
    %66 = vector.shape_cast %65 : vector<8x8x128xf32> to vector<64x128xf32>
    %67 = arith.truncf %66 : vector<64x128xf32> to vector<64x128xbf16>
    %c3_93 = arith.constant 3 : index
    %c0_94 = arith.constant 0 : index
    %c0_95 = arith.constant 0 : index
    %68 = vector.load %arg3[%c3_93, %c0_94, %c0_95] : memref<4x128x128xbf16, #tpu.memory_space<vmem>>, vector<1x128x128xbf16>
    %69 = vector.shape_cast %68 : vector<1x128x128xbf16> to vector<128x128xbf16>
    %cst_96 = arith.constant dense<0.000000e+00> : vector<64x128xf32>
    %70 = tpu.matmul %67, %69, %cst_96 {dimension_numbers = #tpu.dot_dimension_numbers<[1], [0], [0], [1], [0, 0, 1, 1], [], []>} : vector<64x128xbf16>, vector<128x128xbf16>, vector<64x128xf32> -> vector<64x128xf32>
    %71 = arith.addf %60, %70 : vector<64x128xf32>
    %c0_97 = arith.constant 0 : index
    %c0_98 = arith.constant 0 : index
    %72 = vector.load %arg8[%c0_97, %c0_98] : memref<1x128xf32, #tpu.memory_space<vmem>>, vector<1x128xf32>
    %73 = vector.broadcast %72 : vector<1x128xf32> to vector<64x128xf32>
    %74 = arith.addf %71, %73 : vector<64x128xf32>
    %cst_99 = arith.constant 0.000000e+00 : f32
    %75 = vector.broadcast %cst_99 : f32 to vector<64x128xf32>
    %76 = arith.cmpf oge, %74, %75 : vector<64x128xf32>
    %cst_100 = arith.constant 2.000000e-01 : f32
    %77 = vector.broadcast %cst_100 : f32 to vector<64x128xf32>
    %78 = arith.mulf %77, %74 : vector<64x128xf32>
    %79 = arith.select %76, %74, %78 : vector<64x128xi1>, vector<64x128xf32>
    %80 = vector.shape_cast %79 : vector<64x128xf32> to vector<8x8x128xf32>
    %81 = vector.extract_strided_slice %80 {offsets = [0, 0, 0], sizes = [8, 8, 64], strides = [1, 1, 1]} : vector<8x8x128xf32> to vector<8x8x64xf32>
    %c1_101 = arith.constant 1 : index
    %c1_102 = arith.constant 1 : index
    %c0_103 = arith.constant 0 : index
    %82 = vector.load %arg14[%c1_101, %c1_102, %c0_103] : memref<10x18x64xf32, #tpu.memory_space<vmem>>, vector<8x8x64xf32>
    tpu.vector_store %arg14[%c1_101, %c1_102, %c0_103], %81 {strides = array<i32>} : memref<10x18x64xf32, #tpu.memory_space<vmem>>, vector<8x8x64xf32>,
    %83 = vector.extract_strided_slice %81 {offsets = [0, 1, 0], sizes = [8, 1, 64], strides = [1, 1, 1]} : vector<8x8x64xf32> to vector<8x1x64xf32>
    %c1_104 = arith.constant 1 : index
    %c0_105 = arith.constant 0 : index
    %c0_106 = arith.constant 0 : index
    %84 = vector.load %arg14[%c1_104, %c0_105, %c0_106] : memref<10x18x64xf32, #tpu.memory_space<vmem>>, vector<8x1x64xf32>
    tpu.vector_store %arg14[%c1_104, %c0_105, %c0_106], %83 {strides = array<i32>} : memref<10x18x64xf32, #tpu.memory_space<vmem>>, vector<8x1x64xf32>,
    %85 = vector.extract_strided_slice %81 {offsets = [0, 6, 0], sizes = [8, 1, 64], strides = [1, 1, 1]} : vector<8x8x64xf32> to vector<8x1x64xf32>
    %c1_107 = arith.constant 1 : index
    %c9 = arith.constant 9 : index
    %c0_108 = arith.constant 0 : index
    %86 = vector.load %arg14[%c1_107, %c9, %c0_108] : memref<10x18x64xf32, #tpu.memory_space<vmem>>, vector<8x1x64xf32>
    tpu.vector_store %arg14[%c1_107, %c9, %c0_108], %85 {strides = array<i32>} : memref<10x18x64xf32, #tpu.memory_space<vmem>>, vector<8x1x64xf32>,
    %c2_109 = arith.constant 2 : index
    %c0_110 = arith.constant 0 : index
    %c0_111 = arith.constant 0 : index
    %87 = vector.load %arg14[%c2_109, %c0_110, %c0_111] : memref<10x18x64xf32, #tpu.memory_space<vmem>>, vector<1x10x64xf32>
    %c0_112 = arith.constant 0 : index
    %c0_113 = arith.constant 0 : index
    %c0_114 = arith.constant 0 : index
    %88 = vector.load %arg14[%c0_112, %c0_113, %c0_114] : memref<10x18x64xf32, #tpu.memory_space<vmem>>, vector<1x10x64xf32>
    tpu.vector_store %arg14[%c0_112, %c0_113, %c0_114], %87 {strides = array<i32>} : memref<10x18x64xf32, #tpu.memory_space<vmem>>, vector<1x10x64xf32>,
    %c7 = arith.constant 7 : index
    %c0_115 = arith.constant 0 : index
    %c0_116 = arith.constant 0 : index
    %89 = vector.load %arg14[%c7, %c0_115, %c0_116] : memref<10x18x64xf32, #tpu.memory_space<vmem>>, vector<1x10x64xf32>
    %c9_117 = arith.constant 9 : index
    %c0_118 = arith.constant 0 : index
    %c0_119 = arith.constant 0 : index
    %90 = vector.load %arg14[%c9_117, %c0_118, %c0_119] : memref<10x18x64xf32, #tpu.memory_space<vmem>>, vector<1x10x64xf32>
    tpu.vector_store %arg14[%c9_117, %c0_118, %c0_119], %89 {strides = array<i32>} : memref<10x18x64xf32, #tpu.memory_space<vmem>>, vector<1x10x64xf32>,
    %c0_120 = arith.constant 0 : index
    %c0_121 = arith.constant 0 : index
    %c0_122 = arith.constant 0 : index
    %91 = tpu.strided_load %arg14[%c0_120, %c0_121, %c0_122] {strides = array<i32: 2, 2, 1>} : memref<10x18x64xf32, #tpu.memory_space<vmem>>, vector<4x8x64xf32>
    %c0_123 = arith.constant 0 : index
    %c1_124 = arith.constant 1 : index
    %c0_125 = arith.constant 0 : index
    %92 = tpu.strided_load %arg14[%c0_123, %c1_124, %c0_125] {strides = array<i32: 2, 2, 1>} : memref<10x18x64xf32, #tpu.memory_space<vmem>>, vector<4x8x64xf32>
    %c0_126 = arith.constant 0 : index
    %c2_127 = arith.constant 2 : index
    %c0_128 = arith.constant 0 : index
    %93 = tpu.strided_load %arg14[%c0_126, %c2_127, %c0_128] {strides = array<i32: 2, 2, 1>} : memref<10x18x64xf32, #tpu.memory_space<vmem>>, vector<4x8x64xf32>
    %c0_129 = arith.constant 0 : index
    %c3_130 = arith.constant 3 : index
    %c0_131 = arith.constant 0 : index
    %94 = tpu.strided_load %arg14[%c0_129, %c3_130, %c0_131] {strides = array<i32: 2, 2, 1>} : memref<10x18x64xf32, #tpu.memory_space<vmem>>, vector<4x8x64xf32>
    %95 = tpu.concatenate %91, %92, %93, %94 in 2 : vector<4x8x64xf32>, vector<4x8x64xf32>, vector<4x8x64xf32>, vector<4x8x64xf32> -> vector<4x8x256xf32>
    %96 = vector.shape_cast %95 : vector<4x8x256xf32> to vector<32x256xf32>
    %97 = arith.truncf %96 : vector<32x256xf32> to vector<32x256xbf16>
    %c0_132 = arith.constant 0 : index
    %c0_133 = arith.constant 0 : index
    %c0_134 = arith.constant 0 : index
    %98 = vector.load %arg4[%c0_132, %c0_133, %c0_134] : memref<4x256x128xbf16, #tpu.memory_space<vmem>>, vector<1x256x128xbf16>
    %99 = vector.shape_cast %98 : vector<1x256x128xbf16> to vector<256x128xbf16>
    %cst_135 = arith.constant dense<0.000000e+00> : vector<32x128xf32>
    %100 = tpu.matmul %97, %99, %cst_135 {dimension_numbers = #tpu.dot_dimension_numbers<[1], [0], [0], [1], [0, 0, 1, 1], [], []>} : vector<32x256xbf16>, vector<256x128xbf16>, vector<32x128xf32> -> vector<32x128xf32>
    %c1_136 = arith.constant 1 : index
    %c0_137 = arith.constant 0 : index
    %c0_138 = arith.constant 0 : index
    %101 = tpu.strided_load %arg14[%c1_136, %c0_137, %c0_138] {strides = array<i32: 2, 2, 1>} : memref<10x18x64xf32, #tpu.memory_space<vmem>>, vector<4x8x64xf32>
    %c1_139 = arith.constant 1 : index
    %c1_140 = arith.constant 1 : index
    %c0_141 = arith.constant 0 : index
    %102 = tpu.strided_load %arg14[%c1_139, %c1_140, %c0_141] {strides = array<i32: 2, 2, 1>} : memref<10x18x64xf32, #tpu.memory_space<vmem>>, vector<4x8x64xf32>
    %c1_142 = arith.constant 1 : index
    %c2_143 = arith.constant 2 : index
    %c0_144 = arith.constant 0 : index
    %103 = tpu.strided_load %arg14[%c1_142, %c2_143, %c0_144] {strides = array<i32: 2, 2, 1>} : memref<10x18x64xf32, #tpu.memory_space<vmem>>, vector<4x8x64xf32>
    %c1_145 = arith.constant 1 : index
    %c3_146 = arith.constant 3 : index
    %c0_147 = arith.constant 0 : index
    %104 = tpu.strided_load %arg14[%c1_145, %c3_146, %c0_147] {strides = array<i32: 2, 2, 1>} : memref<10x18x64xf32, #tpu.memory_space<vmem>>, vector<4x8x64xf32>
    %105 = tpu.concatenate %101, %102, %103, %104 in 2 : vector<4x8x64xf32>, vector<4x8x64xf32>, vector<4x8x64xf32>, vector<4x8x64xf32> -> vector<4x8x256xf32>
    %106 = vector.shape_cast %105 : vector<4x8x256xf32> to vector<32x256xf32>
    %107 = arith.truncf %106 : vector<32x256xf32> to vector<32x256xbf16>
    %c1_148 = arith.constant 1 : index
    %c0_149 = arith.constant 0 : index
    %c0_150 = arith.constant 0 : index
    %108 = vector.load %arg4[%c1_148, %c0_149, %c0_150] : memref<4x256x128xbf16, #tpu.memory_space<vmem>>, vector<1x256x128xbf16>
    %109 = vector.shape_cast %108 : vector<1x256x128xbf16> to vector<256x128xbf16>
    %cst_151 = arith.constant dense<0.000000e+00> : vector<32x128xf32>
    %110 = tpu.matmul %107, %109, %cst_151 {dimension_numbers = #tpu.dot_dimension_numbers<[1], [0], [0], [1], [0, 0, 1, 1], [], []>} : vector<32x256xbf16>, vector<256x128xbf16>, vector<32x128xf32> -> vector<32x128xf32>
    %111 = arith.addf %100, %110 : vector<32x128xf32>
    %c2_152 = arith.constant 2 : index
    %c0_153 = arith.constant 0 : index
    %c0_154 = arith.constant 0 : index
    %112 = tpu.strided_load %arg14[%c2_152, %c0_153, %c0_154] {strides = array<i32: 2, 2, 1>} : memref<10x18x64xf32, #tpu.memory_space<vmem>>, vector<4x8x64xf32>
    %c2_155 = arith.constant 2 : index
    %c1_156 = arith.constant 1 : index
    %c0_157 = arith.constant 0 : index
    %113 = tpu.strided_load %arg14[%c2_155, %c1_156, %c0_157] {strides = array<i32: 2, 2, 1>} : memref<10x18x64xf32, #tpu.memory_space<vmem>>, vector<4x8x64xf32>
    %c2_158 = arith.constant 2 : index
    %c2_159 = arith.constant 2 : index
    %c0_160 = arith.constant 0 : index
    %114 = tpu.strided_load %arg14[%c2_158, %c2_159, %c0_160] {strides = array<i32: 2, 2, 1>} : memref<10x18x64xf32, #tpu.memory_space<vmem>>, vector<4x8x64xf32>
    %c2_161 = arith.constant 2 : index
    %c3_162 = arith.constant 3 : index
    %c0_163 = arith.constant 0 : index
    %115 = tpu.strided_load %arg14[%c2_161, %c3_162, %c0_163] {strides = array<i32: 2, 2, 1>} : memref<10x18x64xf32, #tpu.memory_space<vmem>>, vector<4x8x64xf32>
    %116 = tpu.concatenate %112, %113, %114, %115 in 2 : vector<4x8x64xf32>, vector<4x8x64xf32>, vector<4x8x64xf32>, vector<4x8x64xf32> -> vector<4x8x256xf32>
    %117 = vector.shape_cast %116 : vector<4x8x256xf32> to vector<32x256xf32>
    %118 = arith.truncf %117 : vector<32x256xf32> to vector<32x256xbf16>
    %c2_164 = arith.constant 2 : index
    %c0_165 = arith.constant 0 : index
    %c0_166 = arith.constant 0 : index
    %119 = vector.load %arg4[%c2_164, %c0_165, %c0_166] : memref<4x256x128xbf16, #tpu.memory_space<vmem>>, vector<1x256x128xbf16>
    %120 = vector.shape_cast %119 : vector<1x256x128xbf16> to vector<256x128xbf16>
    %cst_167 = arith.constant dense<0.000000e+00> : vector<32x128xf32>
    %121 = tpu.matmul %118, %120, %cst_167 {dimension_numbers = #tpu.dot_dimension_numbers<[1], [0], [0], [1], [0, 0, 1, 1], [], []>} : vector<32x256xbf16>, vector<256x128xbf16>, vector<32x128xf32> -> vector<32x128xf32>
    %122 = arith.addf %111, %121 : vector<32x128xf32>
    %c3_168 = arith.constant 3 : index
    %c0_169 = arith.constant 0 : index
    %c0_170 = arith.constant 0 : index
    %123 = tpu.strided_load %arg14[%c3_168, %c0_169, %c0_170] {strides = array<i32: 2, 2, 1>} : memref<10x18x64xf32, #tpu.memory_space<vmem>>, vector<4x8x64xf32>
    %c3_171 = arith.constant 3 : index
    %c1_172 = arith.constant 1 : index
    %c0_173 = arith.constant 0 : index
    %124 = tpu.strided_load %arg14[%c3_171, %c1_172, %c0_173] {strides = array<i32: 2, 2, 1>} : memref<10x18x64xf32, #tpu.memory_space<vmem>>, vector<4x8x64xf32>
    %c3_174 = arith.constant 3 : index
    %c2_175 = arith.constant 2 : index
    %c0_176 = arith.constant 0 : index
    %125 = tpu.strided_load %arg14[%c3_174, %c2_175, %c0_176] {strides = array<i32: 2, 2, 1>} : memref<10x18x64xf32, #tpu.memory_space<vmem>>, vector<4x8x64xf32>
    %c3_177 = arith.constant 3 : index
    %c3_178 = arith.constant 3 : index
    %c0_179 = arith.constant 0 : index
    %126 = tpu.strided_load %arg14[%c3_177, %c3_178, %c0_179] {strides = array<i32: 2, 2, 1>} : memref<10x18x64xf32, #tpu.memory_space<vmem>>, vector<4x8x64xf32>
    %127 = tpu.concatenate %123, %124, %125, %126 in 2 : vector<4x8x64xf32>, vector<4x8x64xf32>, vector<4x8x64xf32>, vector<4x8x64xf32> -> vector<4x8x256xf32>
    %128 = vector.shape_cast %127 : vector<4x8x256xf32> to vector<32x256xf32>
    %129 = arith.truncf %128 : vector<32x256xf32> to vector<32x256xbf16>
    %c3_180 = arith.constant 3 : index
    %c0_181 = arith.constant 0 : index
    %c0_182 = arith.constant 0 : index
    %130 = vector.load %arg4[%c3_180, %c0_181, %c0_182] : memref<4x256x128xbf16, #tpu.memory_space<vmem>>, vector<1x256x128xbf16>
    %131 = vector.shape_cast %130 : vector<1x256x128xbf16> to vector<256x128xbf16>
    %cst_183 = arith.constant dense<0.000000e+00> : vector<32x128xf32>
    %132 = tpu.matmul %129, %131, %cst_183 {dimension_numbers = #tpu.dot_dimension_numbers<[1], [0], [0], [1], [0, 0, 1, 1], [], []>} : vector<32x256xbf16>, vector<256x128xbf16>, vector<32x128xf32> -> vector<32x128xf32>
    %133 = arith.addf %122, %132 : vector<32x128xf32>
    %c0_184 = arith.constant 0 : index
    %c0_185 = arith.constant 0 : index
    %134 = vector.load %arg9[%c0_184, %c0_185] : memref<1x128xf32, #tpu.memory_space<vmem>>, vector<1x128xf32>
    %135 = vector.broadcast %134 : vector<1x128xf32> to vector<32x128xf32>
    %136 = arith.addf %133, %135 : vector<32x128xf32>
    %cst_186 = arith.constant 0.000000e+00 : f32
    %137 = vector.broadcast %cst_186 : f32 to vector<32x128xf32>
    %138 = arith.cmpf oge, %136, %137 : vector<32x128xf32>
    %cst_187 = arith.constant 2.000000e-01 : f32
    %139 = vector.broadcast %cst_187 : f32 to vector<32x128xf32>
    %140 = arith.mulf %139, %136 : vector<32x128xf32>
    %141 = arith.select %138, %136, %140 : vector<32x128xi1>, vector<32x128xf32>
    %142 = vector.shape_cast %141 : vector<32x128xf32> to vector<4x8x128xf32>
    %143 = vector.extract_strided_slice %142 {offsets = [0, 0, 0], sizes = [4, 4, 128], strides = [1, 1, 1]} : vector<4x8x128xf32> to vector<4x4x128xf32>
    %c1_188 = arith.constant 1 : index
    %c1_189 = arith.constant 1 : index
    %c0_190 = arith.constant 0 : index
    %144 = vector.load %arg15[%c1_188, %c1_189, %c0_190] : memref<6x11x128xf32, #tpu.memory_space<vmem>>, vector<4x4x128xf32>
    tpu.vector_store %arg15[%c1_188, %c1_189, %c0_190], %143 {strides = array<i32>} : memref<6x11x128xf32, #tpu.memory_space<vmem>>, vector<4x4x128xf32>,
    %145 = vector.extract_strided_slice %143 {offsets = [0, 1, 0], sizes = [4, 1, 128], strides = [1, 1, 1]} : vector<4x4x128xf32> to vector<4x1x128xf32>
    %c1_191 = arith.constant 1 : index
    %c0_192 = arith.constant 0 : index
    %c0_193 = arith.constant 0 : index
    %146 = vector.load %arg15[%c1_191, %c0_192, %c0_193] : memref<6x11x128xf32, #tpu.memory_space<vmem>>, vector<4x1x128xf32>
    tpu.vector_store %arg15[%c1_191, %c0_192, %c0_193], %145 {strides = array<i32>} : memref<6x11x128xf32, #tpu.memory_space<vmem>>, vector<4x1x128xf32>,
    %147 = vector.extract_strided_slice %143 {offsets = [0, 2, 0], sizes = [4, 1, 128], strides = [1, 1, 1]} : vector<4x4x128xf32> to vector<4x1x128xf32>
    %c1_194 = arith.constant 1 : index
    %c5_195 = arith.constant 5 : index
    %c0_196 = arith.constant 0 : index
    %148 = vector.load %arg15[%c1_194, %c5_195, %c0_196] : memref<6x11x128xf32, #tpu.memory_space<vmem>>, vector<4x1x128xf32>
    tpu.vector_store %arg15[%c1_194, %c5_195, %c0_196], %147 {strides = array<i32>} : memref<6x11x128xf32, #tpu.memory_space<vmem>>, vector<4x1x128xf32>,
    %c2_197 = arith.constant 2 : index
    %c0_198 = arith.constant 0 : index
    %c0_199 = arith.constant 0 : index
    %149 = vector.load %arg15[%c2_197, %c0_198, %c0_199] : memref<6x11x128xf32, #tpu.memory_space<vmem>>, vector<1x6x128xf32>
    %c0_200 = arith.constant 0 : index
    %c0_201 = arith.constant 0 : index
    %c0_202 = arith.constant 0 : index
    %150 = vector.load %arg15[%c0_200, %c0_201, %c0_202] : memref<6x11x128xf32, #tpu.memory_space<vmem>>, vector<1x6x128xf32>
    tpu.vector_store %arg15[%c0_200, %c0_201, %c0_202], %149 {strides = array<i32>} : memref<6x11x128xf32, #tpu.memory_space<vmem>>, vector<1x6x128xf32>,
    %c3_203 = arith.constant 3 : index
    %c0_204 = arith.constant 0 : index
    %c0_205 = arith.constant 0 : index
    %151 = vector.load %arg15[%c3_203, %c0_204, %c0_205] : memref<6x11x128xf32, #tpu.memory_space<vmem>>, vector<1x6x128xf32>
    %c5_206 = arith.constant 5 : index
    %c0_207 = arith.constant 0 : index
    %c0_208 = arith.constant 0 : index
    %152 = vector.load %arg15[%c5_206, %c0_207, %c0_208] : memref<6x11x128xf32, #tpu.memory_space<vmem>>, vector<1x6x128xf32>
    tpu.vector_store %arg15[%c5_206, %c0_207, %c0_208], %151 {strides = array<i32>} : memref<6x11x128xf32, #tpu.memory_space<vmem>>, vector<1x6x128xf32>,
    %c0_209 = arith.constant 0 : index
    %c0_210 = arith.constant 0 : index
    %c0_211 = arith.constant 0 : index
    %153 = vector.load %arg15[%c0_209, %c0_210, %c0_211] : memref<6x11x128xf32, #tpu.memory_space<vmem>>, vector<3x8x128xf32>
    %c0_212 = arith.constant 0 : index
    %c1_213 = arith.constant 1 : index
    %c0_214 = arith.constant 0 : index
    %154 = vector.load %arg15[%c0_212, %c1_213, %c0_214] : memref<6x11x128xf32, #tpu.memory_space<vmem>>, vector<3x8x128xf32>
    %c0_215 = arith.constant 0 : index
    %c2_216 = arith.constant 2 : index
    %c0_217 = arith.constant 0 : index
    %155 = vector.load %arg15[%c0_215, %c2_216, %c0_217] : memref<6x11x128xf32, #tpu.memory_space<vmem>>, vector<3x8x128xf32>
    %c0_218 = arith.constant 0 : index
    %c3_219 = arith.constant 3 : index
    %c0_220 = arith.constant 0 : index
    %156 = vector.load %arg15[%c0_218, %c3_219, %c0_220] : memref<6x11x128xf32, #tpu.memory_space<vmem>>, vector<3x8x128xf32>
    %157 = tpu.concatenate %153, %154, %155, %156 in 2 : vector<3x8x128xf32>, vector<3x8x128xf32>, vector<3x8x128xf32>, vector<3x8x128xf32> -> vector<3x8x512xf32>
    %158 = vector.shape_cast %157 : vector<3x8x512xf32> to vector<24x512xf32>
    %159 = arith.truncf %158 : vector<24x512xf32> to vector<24x512xbf16>
    %c0_221 = arith.constant 0 : index
    %c0_222 = arith.constant 0 : index
    %c0_223 = arith.constant 0 : index
    %160 = vector.load %arg5[%c0_221, %c0_222, %c0_223] : memref<4x512x256xbf16, #tpu.memory_space<vmem>>, vector<1x512x256xbf16>
    %161 = vector.shape_cast %160 : vector<1x512x256xbf16> to vector<512x256xbf16>
    %cst_224 = arith.constant dense<0.000000e+00> : vector<24x256xf32>
    %162 = tpu.matmul %159, %161, %cst_224 {dimension_numbers = #tpu.dot_dimension_numbers<[1], [0], [0], [1], [0, 0, 1, 1], [], []>} : vector<24x512xbf16>, vector<512x256xbf16>, vector<24x256xf32> -> vector<24x256xf32>
    %c1_225 = arith.constant 1 : index
    %c0_226 = arith.constant 0 : index
    %c0_227 = arith.constant 0 : index
    %163 = vector.load %arg15[%c1_225, %c0_226, %c0_227] : memref<6x11x128xf32, #tpu.memory_space<vmem>>, vector<3x8x128xf32>
    %c1_228 = arith.constant 1 : index
    %c1_229 = arith.constant 1 : index
    %c0_230 = arith.constant 0 : index
    %164 = vector.load %arg15[%c1_228, %c1_229, %c0_230] : memref<6x11x128xf32, #tpu.memory_space<vmem>>, vector<3x8x128xf32>
    %c1_231 = arith.constant 1 : index
    %c2_232 = arith.constant 2 : index
    %c0_233 = arith.constant 0 : index
    %165 = vector.load %arg15[%c1_231, %c2_232, %c0_233] : memref<6x11x128xf32, #tpu.memory_space<vmem>>, vector<3x8x128xf32>
    %c1_234 = arith.constant 1 : index
    %c3_235 = arith.constant 3 : index
    %c0_236 = arith.constant 0 : index
    %166 = vector.load %arg15[%c1_234, %c3_235, %c0_236] : memref<6x11x128xf32, #tpu.memory_space<vmem>>, vector<3x8x128xf32>
    %167 = tpu.concatenate %163, %164, %165, %166 in 2 : vector<3x8x128xf32>, vector<3x8x128xf32>, vector<3x8x128xf32>, vector<3x8x128xf32> -> vector<3x8x512xf32>
    %168 = vector.shape_cast %167 : vector<3x8x512xf32> to vector<24x512xf32>
    %169 = arith.truncf %168 : vector<24x512xf32> to vector<24x512xbf16>
    %c1_237 = arith.constant 1 : index
    %c0_238 = arith.constant 0 : index
    %c0_239 = arith.constant 0 : index
    %170 = vector.load %arg5[%c1_237, %c0_238, %c0_239] : memref<4x512x256xbf16, #tpu.memory_space<vmem>>, vector<1x512x256xbf16>
    %171 = vector.shape_cast %170 : vector<1x512x256xbf16> to vector<512x256xbf16>
    %cst_240 = arith.constant dense<0.000000e+00> : vector<24x256xf32>
    %172 = tpu.matmul %169, %171, %cst_240 {dimension_numbers = #tpu.dot_dimension_numbers<[1], [0], [0], [1], [0, 0, 1, 1], [], []>} : vector<24x512xbf16>, vector<512x256xbf16>, vector<24x256xf32> -> vector<24x256xf32>
    %173 = arith.addf %162, %172 : vector<24x256xf32>
    %c2_241 = arith.constant 2 : index
    %c0_242 = arith.constant 0 : index
    %c0_243 = arith.constant 0 : index
    %174 = vector.load %arg15[%c2_241, %c0_242, %c0_243] : memref<6x11x128xf32, #tpu.memory_space<vmem>>, vector<3x8x128xf32>
    %c2_244 = arith.constant 2 : index
    %c1_245 = arith.constant 1 : index
    %c0_246 = arith.constant 0 : index
    %175 = vector.load %arg15[%c2_244, %c1_245, %c0_246] : memref<6x11x128xf32, #tpu.memory_space<vmem>>, vector<3x8x128xf32>
    %c2_247 = arith.constant 2 : index
    %c2_248 = arith.constant 2 : index
    %c0_249 = arith.constant 0 : index
    %176 = vector.load %arg15[%c2_247, %c2_248, %c0_249] : memref<6x11x128xf32, #tpu.memory_space<vmem>>, vector<3x8x128xf32>
    %c2_250 = arith.constant 2 : index
    %c3_251 = arith.constant 3 : index
    %c0_252 = arith.constant 0 : index
    %177 = vector.load %arg15[%c2_250, %c3_251, %c0_252] : memref<6x11x128xf32, #tpu.memory_space<vmem>>, vector<3x8x128xf32>
    %178 = tpu.concatenate %174, %175, %176, %177 in 2 : vector<3x8x128xf32>, vector<3x8x128xf32>, vector<3x8x128xf32>, vector<3x8x128xf32> -> vector<3x8x512xf32>
    %179 = vector.shape_cast %178 : vector<3x8x512xf32> to vector<24x512xf32>
    %180 = arith.truncf %179 : vector<24x512xf32> to vector<24x512xbf16>
    %c2_253 = arith.constant 2 : index
    %c0_254 = arith.constant 0 : index
    %c0_255 = arith.constant 0 : index
    %181 = vector.load %arg5[%c2_253, %c0_254, %c0_255] : memref<4x512x256xbf16, #tpu.memory_space<vmem>>, vector<1x512x256xbf16>
    %182 = vector.shape_cast %181 : vector<1x512x256xbf16> to vector<512x256xbf16>
    %cst_256 = arith.constant dense<0.000000e+00> : vector<24x256xf32>
    %183 = tpu.matmul %180, %182, %cst_256 {dimension_numbers = #tpu.dot_dimension_numbers<[1], [0], [0], [1], [0, 0, 1, 1], [], []>} : vector<24x512xbf16>, vector<512x256xbf16>, vector<24x256xf32> -> vector<24x256xf32>
    %184 = arith.addf %173, %183 : vector<24x256xf32>
    %c3_257 = arith.constant 3 : index
    %c0_258 = arith.constant 0 : index
    %c0_259 = arith.constant 0 : index
    %185 = vector.load %arg15[%c3_257, %c0_258, %c0_259] : memref<6x11x128xf32, #tpu.memory_space<vmem>>, vector<3x8x128xf32>
    %c3_260 = arith.constant 3 : index
    %c1_261 = arith.constant 1 : index
    %c0_262 = arith.constant 0 : index
    %186 = vector.load %arg15[%c3_260, %c1_261, %c0_262] : memref<6x11x128xf32, #tpu.memory_space<vmem>>, vector<3x8x128xf32>
    %c3_263 = arith.constant 3 : index
    %c2_264 = arith.constant 2 : index
    %c0_265 = arith.constant 0 : index
    %187 = vector.load %arg15[%c3_263, %c2_264, %c0_265] : memref<6x11x128xf32, #tpu.memory_space<vmem>>, vector<3x8x128xf32>
    %c3_266 = arith.constant 3 : index
    %c3_267 = arith.constant 3 : index
    %c0_268 = arith.constant 0 : index
    %188 = vector.load %arg15[%c3_266, %c3_267, %c0_268] : memref<6x11x128xf32, #tpu.memory_space<vmem>>, vector<3x8x128xf32>
    %189 = tpu.concatenate %185, %186, %187, %188 in 2 : vector<3x8x128xf32>, vector<3x8x128xf32>, vector<3x8x128xf32>, vector<3x8x128xf32> -> vector<3x8x512xf32>
    %190 = vector.shape_cast %189 : vector<3x8x512xf32> to vector<24x512xf32>
    %191 = arith.truncf %190 : vector<24x512xf32> to vector<24x512xbf16>
    %c3_269 = arith.constant 3 : index
    %c0_270 = arith.constant 0 : index
    %c0_271 = arith.constant 0 : index
    %192 = vector.load %arg5[%c3_269, %c0_270, %c0_271] : memref<4x512x256xbf16, #tpu.memory_space<vmem>>, vector<1x512x256xbf16>
    %193 = vector.shape_cast %192 : vector<1x512x256xbf16> to vector<512x256xbf16>
    %cst_272 = arith.constant dense<0.000000e+00> : vector<24x256xf32>
    %194 = tpu.matmul %191, %193, %cst_272 {dimension_numbers = #tpu.dot_dimension_numbers<[1], [0], [0], [1], [0, 0, 1, 1], [], []>} : vector<24x512xbf16>, vector<512x256xbf16>, vector<24x256xf32> -> vector<24x256xf32>
    %195 = arith.addf %184, %194 : vector<24x256xf32>
    %c0_273 = arith.constant 0 : index
    %c0_274 = arith.constant 0 : index
    %196 = vector.load %arg10[%c0_273, %c0_274] : memref<1x256xf32, #tpu.memory_space<vmem>>, vector<1x256xf32>
    %197 = vector.broadcast %196 : vector<1x256xf32> to vector<24x256xf32>
    %198 = arith.addf %195, %197 : vector<24x256xf32>
    %cst_275 = arith.constant 0.000000e+00 : f32
    %199 = vector.broadcast %cst_275 : f32 to vector<24x256xf32>
    %200 = arith.cmpf oge, %198, %199 : vector<24x256xf32>
    %cst_276 = arith.constant 2.000000e-01 : f32
    %201 = vector.broadcast %cst_276 : f32 to vector<24x256xf32>
    %202 = arith.mulf %201, %198 : vector<24x256xf32>
    %203 = arith.select %200, %198, %202 : vector<24x256xi1>, vector<24x256xf32>
    %204 = vector.shape_cast %203 : vector<24x256xf32> to vector<3x8x256xf32>
    %205 = vector.extract_strided_slice %204 {offsets = [0, 0, 0], sizes = [3, 3, 256], strides = [1, 1, 1]} : vector<3x8x256xf32> to vector<3x3x256xf32>
    %c1_277 = arith.constant 1 : index
    %c1_278 = arith.constant 1 : index
    %c0_279 = arith.constant 0 : index
    %206 = vector.load %arg16[%c1_277, %c1_278, %c0_279] : memref<5x11x256xf32, #tpu.memory_space<vmem>>, vector<3x3x256xf32>
    tpu.vector_store %arg16[%c1_277, %c1_278, %c0_279], %205 {strides = array<i32>} : memref<5x11x256xf32, #tpu.memory_space<vmem>>, vector<3x3x256xf32>,
    %207 = vector.extract_strided_slice %205 {offsets = [0, 1, 0], sizes = [3, 1, 256], strides = [1, 1, 1]} : vector<3x3x256xf32> to vector<3x1x256xf32>
    %c1_280 = arith.constant 1 : index
    %c0_281 = arith.constant 0 : index
    %c0_282 = arith.constant 0 : index
    %208 = vector.load %arg16[%c1_280, %c0_281, %c0_282] : memref<5x11x256xf32, #tpu.memory_space<vmem>>, vector<3x1x256xf32>
    tpu.vector_store %arg16[%c1_280, %c0_281, %c0_282], %207 {strides = array<i32>} : memref<5x11x256xf32, #tpu.memory_space<vmem>>, vector<3x1x256xf32>,
    %209 = vector.extract_strided_slice %205 {offsets = [0, 1, 0], sizes = [3, 1, 256], strides = [1, 1, 1]} : vector<3x3x256xf32> to vector<3x1x256xf32>
    %c1_283 = arith.constant 1 : index
    %c4 = arith.constant 4 : index
    %c0_284 = arith.constant 0 : index
    %210 = vector.load %arg16[%c1_283, %c4, %c0_284] : memref<5x11x256xf32, #tpu.memory_space<vmem>>, vector<3x1x256xf32>
    tpu.vector_store %arg16[%c1_283, %c4, %c0_284], %209 {strides = array<i32>} : memref<5x11x256xf32, #tpu.memory_space<vmem>>, vector<3x1x256xf32>,
    %c2_285 = arith.constant 2 : index
    %c0_286 = arith.constant 0 : index
    %c0_287 = arith.constant 0 : index
    %211 = vector.load %arg16[%c2_285, %c0_286, %c0_287] : memref<5x11x256xf32, #tpu.memory_space<vmem>>, vector<1x5x256xf32>
    %c0_288 = arith.constant 0 : index
    %c0_289 = arith.constant 0 : index
    %c0_290 = arith.constant 0 : index
    %212 = vector.load %arg16[%c0_288, %c0_289, %c0_290] : memref<5x11x256xf32, #tpu.memory_space<vmem>>, vector<1x5x256xf32>
    tpu.vector_store %arg16[%c0_288, %c0_289, %c0_290], %211 {strides = array<i32>} : memref<5x11x256xf32, #tpu.memory_space<vmem>>, vector<1x5x256xf32>,
    %c2_291 = arith.constant 2 : index
    %c0_292 = arith.constant 0 : index
    %c0_293 = arith.constant 0 : index
    %213 = vector.load %arg16[%c2_291, %c0_292, %c0_293] : memref<5x11x256xf32, #tpu.memory_space<vmem>>, vector<1x5x256xf32>
    %c4_294 = arith.constant 4 : index
    %c0_295 = arith.constant 0 : index
    %c0_296 = arith.constant 0 : index
    %214 = vector.load %arg16[%c4_294, %c0_295, %c0_296] : memref<5x11x256xf32, #tpu.memory_space<vmem>>, vector<1x5x256xf32>
    tpu.vector_store %arg16[%c4_294, %c0_295, %c0_296], %213 {strides = array<i32>} : memref<5x11x256xf32, #tpu.memory_space<vmem>>, vector<1x5x256xf32>,
    %c0_297 = arith.constant 0 : index
    %c0_298 = arith.constant 0 : index
    %c0_299 = arith.constant 0 : index
    %215 = vector.load %arg16[%c0_297, %c0_298, %c0_299] : memref<5x11x256xf32, #tpu.memory_space<vmem>>, vector<2x8x256xf32>
    %c0_300 = arith.constant 0 : index
    %c1_301 = arith.constant 1 : index
    %c0_302 = arith.constant 0 : index
    %216 = vector.load %arg16[%c0_300, %c1_301, %c0_302] : memref<5x11x256xf32, #tpu.memory_space<vmem>>, vector<2x8x256xf32>
    %c0_303 = arith.constant 0 : index
    %c2_304 = arith.constant 2 : index
    %c0_305 = arith.constant 0 : index
    %217 = vector.load %arg16[%c0_303, %c2_304, %c0_305] : memref<5x11x256xf32, #tpu.memory_space<vmem>>, vector<2x8x256xf32>
    %c0_306 = arith.constant 0 : index
    %c3_307 = arith.constant 3 : index
    %c0_308 = arith.constant 0 : index
    %218 = vector.load %arg16[%c0_306, %c3_307, %c0_308] : memref<5x11x256xf32, #tpu.memory_space<vmem>>, vector<2x8x256xf32>
    %219 = tpu.concatenate %215, %216, %217, %218 in 2 : vector<2x8x256xf32>, vector<2x8x256xf32>, vector<2x8x256xf32>, vector<2x8x256xf32> -> vector<2x8x1024xf32>
    %220 = vector.shape_cast %219 : vector<2x8x1024xf32> to vector<16x1024xf32>
    %221 = arith.truncf %220 : vector<16x1024xf32> to vector<16x1024xbf16>
    %c0_309 = arith.constant 0 : index
    %c0_310 = arith.constant 0 : index
    %c0_311 = arith.constant 0 : index
    %222 = vector.load %arg6[%c0_309, %c0_310, %c0_311] : memref<4x1024x128xbf16, #tpu.memory_space<vmem>>, vector<1x1024x128xbf16>
    %223 = vector.shape_cast %222 : vector<1x1024x128xbf16> to vector<1024x128xbf16>
    %cst_312 = arith.constant dense<0.000000e+00> : vector<16x128xf32>
    %224 = tpu.matmul %221, %223, %cst_312 {dimension_numbers = #tpu.dot_dimension_numbers<[1], [0], [0], [1], [0, 0, 1, 1], [], []>} : vector<16x1024xbf16>, vector<1024x128xbf16>, vector<16x128xf32> -> vector<16x128xf32>
    %c1_313 = arith.constant 1 : index
    %c0_314 = arith.constant 0 : index
    %c0_315 = arith.constant 0 : index
    %225 = vector.load %arg16[%c1_313, %c0_314, %c0_315] : memref<5x11x256xf32, #tpu.memory_space<vmem>>, vector<2x8x256xf32>
    %c1_316 = arith.constant 1 : index
    %c1_317 = arith.constant 1 : index
    %c0_318 = arith.constant 0 : index
    %226 = vector.load %arg16[%c1_316, %c1_317, %c0_318] : memref<5x11x256xf32, #tpu.memory_space<vmem>>, vector<2x8x256xf32>
    %c1_319 = arith.constant 1 : index
    %c2_320 = arith.constant 2 : index
    %c0_321 = arith.constant 0 : index
    %227 = vector.load %arg16[%c1_319, %c2_320, %c0_321] : memref<5x11x256xf32, #tpu.memory_space<vmem>>, vector<2x8x256xf32>
    %c1_322 = arith.constant 1 : index
    %c3_323 = arith.constant 3 : index
    %c0_324 = arith.constant 0 : index
    %228 = vector.load %arg16[%c1_322, %c3_323, %c0_324] : memref<5x11x256xf32, #tpu.memory_space<vmem>>, vector<2x8x256xf32>
    %229 = tpu.concatenate %225, %226, %227, %228 in 2 : vector<2x8x256xf32>, vector<2x8x256xf32>, vector<2x8x256xf32>, vector<2x8x256xf32> -> vector<2x8x1024xf32>
    %230 = vector.shape_cast %229 : vector<2x8x1024xf32> to vector<16x1024xf32>
    %231 = arith.truncf %230 : vector<16x1024xf32> to vector<16x1024xbf16>
    %c1_325 = arith.constant 1 : index
    %c0_326 = arith.constant 0 : index
    %c0_327 = arith.constant 0 : index
    %232 = vector.load %arg6[%c1_325, %c0_326, %c0_327] : memref<4x1024x128xbf16, #tpu.memory_space<vmem>>, vector<1x1024x128xbf16>
    %233 = vector.shape_cast %232 : vector<1x1024x128xbf16> to vector<1024x128xbf16>
    %cst_328 = arith.constant dense<0.000000e+00> : vector<16x128xf32>
    %234 = tpu.matmul %231, %233, %cst_328 {dimension_numbers = #tpu.dot_dimension_numbers<[1], [0], [0], [1], [0, 0, 1, 1], [], []>} : vector<16x1024xbf16>, vector<1024x128xbf16>, vector<16x128xf32> -> vector<16x128xf32>
    %235 = arith.addf %224, %234 : vector<16x128xf32>
    %c2_329 = arith.constant 2 : index
    %c0_330 = arith.constant 0 : index
    %c0_331 = arith.constant 0 : index
    %236 = vector.load %arg16[%c2_329, %c0_330, %c0_331] : memref<5x11x256xf32, #tpu.memory_space<vmem>>, vector<2x8x256xf32>
    %c2_332 = arith.constant 2 : index
    %c1_333 = arith.constant 1 : index
    %c0_334 = arith.constant 0 : index
    %237 = vector.load %arg16[%c2_332, %c1_333, %c0_334] : memref<5x11x256xf32, #tpu.memory_space<vmem>>, vector<2x8x256xf32>
    %c2_335 = arith.constant 2 : index
    %c2_336 = arith.constant 2 : index
    %c0_337 = arith.constant 0 : index
    %238 = vector.load %arg16[%c2_335, %c2_336, %c0_337] : memref<5x11x256xf32, #tpu.memory_space<vmem>>, vector<2x8x256xf32>
    %c2_338 = arith.constant 2 : index
    %c3_339 = arith.constant 3 : index
    %c0_340 = arith.constant 0 : index
    %239 = vector.load %arg16[%c2_338, %c3_339, %c0_340] : memref<5x11x256xf32, #tpu.memory_space<vmem>>, vector<2x8x256xf32>
    %240 = tpu.concatenate %236, %237, %238, %239 in 2 : vector<2x8x256xf32>, vector<2x8x256xf32>, vector<2x8x256xf32>, vector<2x8x256xf32> -> vector<2x8x1024xf32>
    %241 = vector.shape_cast %240 : vector<2x8x1024xf32> to vector<16x1024xf32>
    %242 = arith.truncf %241 : vector<16x1024xf32> to vector<16x1024xbf16>
    %c2_341 = arith.constant 2 : index
    %c0_342 = arith.constant 0 : index
    %c0_343 = arith.constant 0 : index
    %243 = vector.load %arg6[%c2_341, %c0_342, %c0_343] : memref<4x1024x128xbf16, #tpu.memory_space<vmem>>, vector<1x1024x128xbf16>
    %244 = vector.shape_cast %243 : vector<1x1024x128xbf16> to vector<1024x128xbf16>
    %cst_344 = arith.constant dense<0.000000e+00> : vector<16x128xf32>
    %245 = tpu.matmul %242, %244, %cst_344 {dimension_numbers = #tpu.dot_dimension_numbers<[1], [0], [0], [1], [0, 0, 1, 1], [], []>} : vector<16x1024xbf16>, vector<1024x128xbf16>, vector<16x128xf32> -> vector<16x128xf32>
    %246 = arith.addf %235, %245 : vector<16x128xf32>
    %c3_345 = arith.constant 3 : index
    %c0_346 = arith.constant 0 : index
    %c0_347 = arith.constant 0 : index
    %247 = vector.load %arg16[%c3_345, %c0_346, %c0_347] : memref<5x11x256xf32, #tpu.memory_space<vmem>>, vector<2x8x256xf32>
    %c3_348 = arith.constant 3 : index
    %c1_349 = arith.constant 1 : index
    %c0_350 = arith.constant 0 : index
    %248 = vector.load %arg16[%c3_348, %c1_349, %c0_350] : memref<5x11x256xf32, #tpu.memory_space<vmem>>, vector<2x8x256xf32>
    %c3_351 = arith.constant 3 : index
    %c2_352 = arith.constant 2 : index
    %c0_353 = arith.constant 0 : index
    %249 = vector.load %arg16[%c3_351, %c2_352, %c0_353] : memref<5x11x256xf32, #tpu.memory_space<vmem>>, vector<2x8x256xf32>
    %c3_354 = arith.constant 3 : index
    %c3_355 = arith.constant 3 : index
    %c0_356 = arith.constant 0 : index
    %250 = vector.load %arg16[%c3_354, %c3_355, %c0_356] : memref<5x11x256xf32, #tpu.memory_space<vmem>>, vector<2x8x256xf32>
    %251 = tpu.concatenate %247, %248, %249, %250 in 2 : vector<2x8x256xf32>, vector<2x8x256xf32>, vector<2x8x256xf32>, vector<2x8x256xf32> -> vector<2x8x1024xf32>
    %252 = vector.shape_cast %251 : vector<2x8x1024xf32> to vector<16x1024xf32>
    %253 = arith.truncf %252 : vector<16x1024xf32> to vector<16x1024xbf16>
    %c3_357 = arith.constant 3 : index
    %c0_358 = arith.constant 0 : index
    %c0_359 = arith.constant 0 : index
    %254 = vector.load %arg6[%c3_357, %c0_358, %c0_359] : memref<4x1024x128xbf16, #tpu.memory_space<vmem>>, vector<1x1024x128xbf16>
    %255 = vector.shape_cast %254 : vector<1x1024x128xbf16> to vector<1024x128xbf16>
    %cst_360 = arith.constant dense<0.000000e+00> : vector<16x128xf32>
    %256 = tpu.matmul %253, %255, %cst_360 {dimension_numbers = #tpu.dot_dimension_numbers<[1], [0], [0], [1], [0, 0, 1, 1], [], []>} : vector<16x1024xbf16>, vector<1024x128xbf16>, vector<16x128xf32> -> vector<16x128xf32>
    %257 = arith.addf %246, %256 : vector<16x128xf32>
    %c0_361 = arith.constant 0 : index
    %c0_362 = arith.constant 0 : index
    %258 = vector.load %arg11[%c0_361, %c0_362] : memref<1x128xf32, #tpu.memory_space<vmem>>, vector<1x128xf32>
    %259 = vector.broadcast %258 : vector<1x128xf32> to vector<16x128xf32>
    %260 = arith.addf %257, %259 : vector<16x128xf32>
    %cst_363 = arith.constant 0.000000e+00 : f32
    %261 = vector.broadcast %cst_363 : f32 to vector<16x128xf32>
    %262 = arith.subf %261, %260 : vector<16x128xf32>
    %263 = math.exp %262 : vector<16x128xf32>
    %cst_364 = arith.constant 1.000000e+00 : f32
    %264 = vector.broadcast %cst_364 : f32 to vector<16x128xf32>
    %265 = arith.addf %264, %263 : vector<16x128xf32>
    %cst_365 = arith.constant 1.000000e+00 : f32
    %266 = vector.broadcast %cst_365 : f32 to vector<16x128xf32>
    %267 = arith.divf %266, %265 : vector<16x128xf32>
    %268 = vector.shape_cast %267 : vector<16x128xf32> to vector<2x8x128xf32>
    %269 = vector.extract_strided_slice %268 {offsets = [0, 0, 0], sizes = [2, 2, 128], strides = [1, 1, 1]} : vector<2x8x128xf32> to vector<2x2x128xf32>
    %c0_366 = arith.constant 0 : index
    %c0_367 = arith.constant 0 : index
    %c0_368 = arith.constant 0 : index
    %c0_369 = arith.constant 0 : index
    %270 = vector.load %arg12[%c0_366, %c0_367, %c0_368, %c0_369] : memref<1x2x2x128xf32, #tpu.memory_space<vmem>>, vector<1x2x2x128xf32>
    %271 = vector.shape_cast %270 : vector<1x2x2x128xf32> to vector<2x2x128xf32>
    %272 = vector.shape_cast %269 : vector<2x2x128xf32> to vector<1x2x2x128xf32>
    tpu.vector_store %arg12[%c0_366, %c0_367, %c0_368, %c0_369], %272 {strides = array<i32>} : memref<1x2x2x128xf32, #tpu.memory_space<vmem>>, vector<1x2x2x128xf32>,
    return
  }
  func.func @transform_0(%arg0: i32) -> (i32, i32, i32) {
    %c0_i32 = arith.constant 0 : i32
    %c0_i32_0 = arith.constant 0 : i32
    %c0_i32_1 = arith.constant 0 : i32
    return %arg0, %c0_i32, %c0_i32_0 : i32, i32, i32
  }
  func.func @transform_1(%arg0: i32) -> (i32, i32) {
    %c0_i32 = arith.constant 0 : i32
    %c0_i32_0 = arith.constant 0 : i32
    %c0_i32_1 = arith.constant 0 : i32
    return %c0_i32, %c0_i32_0 : i32, i32
  }
  func.func @transform_2(%arg0: i32) -> (i32, i32, i32) {
    %c0_i32 = arith.constant 0 : i32
    %c0_i32_0 = arith.constant 0 : i32
    %c0_i32_1 = arith.constant 0 : i32
    %c0_i32_2 = arith.constant 0 : i32
    return %c0_i32, %c0_i32_0, %c0_i32_1 : i32, i32, i32
  }
  func.func @transform_3(%arg0: i32) -> (i32, i32, i32) {
    %c0_i32 = arith.constant 0 : i32
    %c0_i32_0 = arith.constant 0 : i32
    %c0_i32_1 = arith.constant 0 : i32
    %c0_i32_2 = arith.constant 0 : i32
    return %c0_i32, %c0_i32_0, %c0_i32_1 : i32, i32, i32
  }
  func.func @transform_4(%arg0: i32) -> (i32, i32, i32) {
    %c0_i32 = arith.constant 0 : i32
    %c0_i32_0 = arith.constant 0 : i32
    %c0_i32_1 = arith.constant 0 : i32
    %c0_i32_2 = arith.constant 0 : i32
    return %c0_i32, %c0_i32_0, %c0_i32_1 : i32, i32, i32
  }
  func.func @transform_5(%arg0: i32) -> (i32, i32, i32) {
    %c0_i32 = arith.constant 0 : i32
    %c0_i32_0 = arith.constant 0 : i32
    %c0_i32_1 = arith.constant 0 : i32
    %c0_i32_2 = arith.constant 0 : i32
    return %c0_i32, %c0_i32_0, %c0_i32_1 : i32, i32, i32
  }
  func.func @transform_6(%arg0: i32) -> (i32, i32) {
    %c0_i32 = arith.constant 0 : i32
    %c0_i32_0 = arith.constant 0 : i32
    %c0_i32_1 = arith.constant 0 : i32
    return %c0_i32, %c0_i32_0 : i32, i32
  }
  func.func @transform_7(%arg0: i32) -> (i32, i32) {
    %c0_i32 = arith.constant 0 : i32
    %c0_i32_0 = arith.constant 0 : i32
    %c0_i32_1 = arith.constant 0 : i32
    return %c0_i32, %c0_i32_0 : i32, i32
  }
  func.func @transform_8(%arg0: i32) -> (i32, i32) {
    %c0_i32 = arith.constant 0 : i32
    %c0_i32_0 = arith.constant 0 : i32
    %c0_i32_1 = arith.constant 0 : i32
    return %c0_i32, %c0_i32_0 : i32, i32
  }
  func.func @transform_9(%arg0: i32) -> (i32, i32) {
    %c0_i32 = arith.constant 0 : i32
    %c0_i32_0 = arith.constant 0 : i32
    %c0_i32_1 = arith.constant 0 : i32
    return %c0_i32, %c0_i32_0 : i32, i32
  }
  func.func @transform_10(%arg0: i32) -> (i32, i32) {
    %c0_i32 = arith.constant 0 : i32
    %c0_i32_0 = arith.constant 0 : i32
    %c0_i32_1 = arith.constant 0 : i32
    return %c0_i32, %c0_i32_0 : i32, i32
  }
  func.func @transform_11(%arg0: i32) -> (i32, i32, i32, i32) {
    %c0_i32 = arith.constant 0 : i32
    %c0_i32_0 = arith.constant 0 : i32
    %c0_i32_1 = arith.constant 0 : i32
    %c0_i32_2 = arith.constant 0 : i32
    return %arg0, %c0_i32, %c0_i32_0, %c0_i32_1 : i32, i32, i32, i32
  }
}

</mosaic_0001>

<llo_original>
// kernel: forward.1
$region0: #{forward.1}
  #allocation0 [shape = 'u32[]', space=smem, size = 0x4, offset = 0x4, fixed_abs, tag = 'smem constant byte address 0x4 - core index']
  #allocation1 [shape = 'u32[72,128]{1,0:T(1,128)}', space=vmem, size = 0x9000, scoped, tag = 'internal scratch']
  #allocation2 [shape = 'f32[18,18,32]{2,1,0:T(8,128)}', space=vmem, size = 0x36000, scoped, tag = 'scratch operand']
  #allocation3 [shape = 'f32[10,18,64]{2,1,0:T(8,128)}', space=vmem, size = 0x1e000, scoped, tag = 'scratch operand']
  #allocation4 [shape = 'f32[6,11,128]{2,1,0:T(8,128)}', space=vmem, size = 0xc000, scoped, tag = 'scratch operand']
  #allocation5 [shape = 'f32[5,11,256]{2,1,0:T(8,128)}', space=vmem, size = 0x14000, scoped, tag = 'scratch operand']
  %s0 = inlined_call_operand.vmem [shape: bf16[2,256,128], index: 0, kind: input, shape index: {}]
  %s1 = inlined_call_operand.vmem [shape: bf16[128,128], index: 1, kind: input, shape index: {}]
  %s2 = inlined_call_operand.vmem [shape: bf16[4,128,128], index: 2, kind: input, shape index: {}]
  %s3 = inlined_call_operand.vmem [shape: bf16[4,256,128], index: 3, kind: input, shape index: {}]
  %s4 = inlined_call_operand.vmem [shape: bf16[4,512,256], index: 4, kind: input, shape index: {}]
  %s5 = inlined_call_operand.vmem [shape: bf16[4,1024,128], index: 5, kind: input, shape index: {}]
  %s6 = inlined_call_operand.vmem [shape: f32[1,128], index: 6, kind: input, shape index: {}]
  %s7 = inlined_call_operand.vmem [shape: f32[1,128], index: 7, kind: input, shape index: {}]
  %s8 = inlined_call_operand.vmem [shape: f32[1,128], index: 8, kind: input, shape index: {}]
  %s9 = inlined_call_operand.vmem [shape: f32[1,256], index: 9, kind: input, shape index: {}]
  %s10 = inlined_call_operand.vmem [shape: f32[1,128], index: 10, kind: input, shape index: {}]
  %s11 = inlined_call_operand.vmem [shape: f32[2,2,2,128], index: 11, kind: output, shape index: {}]
  %s12 = sld [smem:[#allocation0]]
  $region77: #{forward.1} parent=0
    _
  %s14 = ssub.s32 1, %s12
  %s15 = scalar_select 0, %s14, %s12
  loop: start=0, step=1, limit=4
  $region2: #{forward.1} parent=0 // loop_pre_header
    _
  $region3: #{forward.1} parent=0 // loop_header
    %s17 = sphi 0, %s21
    %p18 = scmp.ge.s32.totalorder %s17, 4
    %s27 = sphi 0, %s29
    %s30 = sphi 0, %s27
    %s31 = sphi 0, %s30
    %s47 = sphi 0, %s31
    %s51 = sphi 0, %s51
    %s53 = sphi 0, %s51
    %s54 = sphi 0, %s53
    %s68 = sphi 0, %s54
    %s72 = sphi 0, %s72
    %s74 = sphi 0, %s72
    %s75 = sphi 0, %s74
    %s89 = sphi 0, %s75
    %s93 = sphi 0, %s93
    %s95 = sphi 0, %s93
    %s96 = sphi 0, %s95
    %s110 = sphi 0, %s96
    %s114 = sphi 0, %s114
    %s116 = sphi 0, %s114
    %s117 = sphi 0, %s116
    %s131 = sphi 0, %s117
    %s135 = sphi 0, %s135
    %s137 = sphi 0, %s135
    %s138 = sphi 0, %s137
    %s152 = sphi 0, %s138
    %s156 = sphi 0, %s156
    %s158 = sphi 0, %s156
    %s159 = sphi 0, %s158
    %s173 = sphi 0, %s159
    %s177 = sphi 0, %s177
    %s179 = sphi 0, %s177
    %s180 = sphi 0, %s179
    %s194 = sphi 0, %s180
    %s198 = sphi 0, %s198
    %s200 = sphi 0, %s198
    %s201 = sphi 0, %s200
    %s215 = sphi 0, %s201
    %s219 = sphi 0, %s219
    %s221 = sphi 0, %s219
    %s222 = sphi 0, %s221
    %s236 = sphi 0, %s222
    %s240 = sphi 0, %s240
    %s242 = sphi 0, %s240
    %s243 = sphi 0, %s242
    %s257 = sphi 0, %s243
    %s263 = sphi 0, %s265
    %s266 = sphi 0, %s263
    %s267 = sphi 0, %s266
    %s283 = sphi 0, %s267
  $region4: #{forward.1} parent=0 // loop_header_branch
    %20 = sbr.rel (%p18) target = $region8
  $region5: #{forward.1} parent=0 // loop_body
    %s22 = ssub.s32 %s17, 1
    %s23 = ssub.s32 %s17, 2
    %s24 = sadd.s32 %s17, 1
    %s25 = ssub.s32 %s17, %s24
    %p26 = scmp.eq.s32.totalorder %s25, 0
    %s28 = sadd.s32 %s27, 1
    %s29 = scalar_select %p26, %s27, %s28
    %p32 = pneg %p26
    %p33 = scmp.eq.s32.totalorder %s17, 1
    %p34 = por %p32, %p33
    %p35 = scmp.ne.s32.totalorder %s27, %s30
    %p36 = scmp.eq.s32.totalorder %s17, 0
    %p37 = por %p35, %p36
    %p38 = scmp.ne.s32.totalorder %s27, %s30
    %p39 = scmp.eq.s32.totalorder %s22, 1
    %p40 = por %p38, %p39
    %p41 = scmp.ne.s32.totalorder %s30, %s31
    %p42 = scmp.eq.s32.totalorder %s22, 0
    %p43 = por %p41, %p42
    %p44 = scmp.ne.s32.totalorder %s30, %s31
    %p45 = scmp.eq.s32.totalorder %s23, 1
    %p46 = por %p44, %p45
    %p48 = scmp.ne.s32.totalorder %s31, %s47
    %p49 = scmp.eq.s32.totalorder %s23, 0
    %p50 = por %p48, %p49
    %s52 = sadd.s32 %s51, 1
    %p55 = scmp.eq.s32.totalorder %s17, 1
    %p56 = scmp.ne.s32.totalorder %s51, %s53
    %p57 = scmp.eq.s32.totalorder %s17, 0
    %p58 = por %p56, %p57
    %p59 = scmp.ne.s32.totalorder %s51, %s53
    %p60 = scmp.eq.s32.totalorder %s22, 1
    %p61 = por %p59, %p60
    %p62 = scmp.ne.s32.totalorder %s53, %s54
    %p63 = scmp.eq.s32.totalorder %s22, 0
    %p64 = por %p62, %p63
    %p65 = scmp.ne.s32.totalorder %s53, %s54
    %p66 = scmp.eq.s32.totalorder %s23, 1
    %p67 = por %p65, %p66
    %p69 = scmp.ne.s32.totalorder %s54, %s68
    %p70 = scmp.eq.s32.totalorder %s23, 0
    %p71 = por %p69, %p70
    %s73 = sadd.s32 %s72, 1
    %p76 = scmp.eq.s32.totalorder %s17, 1
    %p77 = scmp.ne.s32.totalorder %s72, %s74
    %p78 = scmp.eq.s32.totalorder %s17, 0
    %p79 = por %p77, %p78
    %p80 = scmp.ne.s32.totalorder %s72, %s74
    %p81 = scmp.eq.s32.totalorder %s22, 1
    %p82 = por %p80, %p81
    %p83 = scmp.ne.s32.totalorder %s74, %s75
    %p84 = scmp.eq.s32.totalorder %s22, 0
    %p85 = por %p83, %p84
    %p86 = scmp.ne.s32.totalorder %s74, %s75
    %p87 = scmp.eq.s32.totalorder %s23, 1
    %p88 = por %p86, %p87
    %p90 = scmp.ne.s32.totalorder %s75, %s89
    %p91 = scmp.eq.s32.totalorder %s23, 0
    %p92 = por %p90, %p91
    %s94 = sadd.s32 %s93, 1
    %p97 = scmp.eq.s32.totalorder %s17, 1
    %p98 = scmp.ne.s32.totalorder %s93, %s95
    %p99 = scmp.eq.s32.totalorder %s17, 0
    %p100 = por %p98, %p99
    %p101 = scmp.ne.s32.totalorder %s93, %s95
    %p102 = scmp.eq.s32.totalorder %s22, 1
    %p103 = por %p101, %p102
    %p104 = scmp.ne.s32.totalorder %s95, %s96
    %p105 = scmp.eq.s32.totalorder %s22, 0
    %p106 = por %p104, %p105
    %p107 = scmp.ne.s32.totalorder %s95, %s96
    %p108 = scmp.eq.s32.totalorder %s23, 1
    %p109 = por %p107, %p108
    %p111 = scmp.ne.s32.totalorder %s96, %s110
    %p112 = scmp.eq.s32.totalorder %s23, 0
    %p113 = por %p111, %p112
    %s115 = sadd.s32 %s114, 1
    %p118 = scmp.eq.s32.totalorder %s17, 1
    %p119 = scmp.ne.s32.totalorder %s114, %s116
    %p120 = scmp.eq.s32.totalorder %s17, 0
    %p121 = por %p119, %p120
    %p122 = scmp.ne.s32.totalorder %s114, %s116
    %p123 = scmp.eq.s32.totalorder %s22, 1
    %p124 = por %p122, %p123
    %p125 = scmp.ne.s32.totalorder %s116, %s117
    %p126 = scmp.eq.s32.totalorder %s22, 0
    %p127 = por %p125, %p126
    %p128 = scmp.ne.s32.totalorder %s116, %s117
    %p129 = scmp.eq.s32.totalorder %s23, 1
    %p130 = por %p128, %p129
    %p132 = scmp.ne.s32.totalorder %s117, %s131
    %p133 = scmp.eq.s32.totalorder %s23, 0
    %p134 = por %p132, %p133
    %s136 = sadd.s32 %s135, 1
    %p139 = scmp.eq.s32.totalorder %s17, 1
    %p140 = scmp.ne.s32.totalorder %s135, %s137
    %p141 = scmp.eq.s32.totalorder %s17, 0
    %p142 = por %p140, %p141
    %p143 = scmp.ne.s32.totalorder %s135, %s137
    %p144 = scmp.eq.s32.totalorder %s22, 1
    %p145 = por %p143, %p144
    %p146 = scmp.ne.s32.totalorder %s137, %s138
    %p147 = scmp.eq.s32.totalorder %s22, 0
    %p148 = por %p146, %p147
    %p149 = scmp.ne.s32.totalorder %s137, %s138
    %p150 = scmp.eq.s32.totalorder %s23, 1
    %p151 = por %p149, %p150
    %p153 = scmp.ne.s32.totalorder %s138, %s152
    %p154 = scmp.eq.s32.totalorder %s23, 0
    %p155 = por %p153, %p154
    %s157 = sadd.s32 %s156, 1
    %p160 = scmp.eq.s32.totalorder %s17, 1
    %p161 = scmp.ne.s32.totalorder %s156, %s158
    %p162 = scmp.eq.s32.totalorder %s17, 0
    %p163 = por %p161, %p162
    %p164 = scmp.ne.s32.totalorder %s156, %s158
    %p165 = scmp.eq.s32.totalorder %s22, 1
    %p166 = por %p164, %p165
    %p167 = scmp.ne.s32.totalorder %s158, %s159
    %p168 = scmp.eq.s32.totalorder %s22, 0
    %p169 = por %p167, %p168
    %p170 = scmp.ne.s32.totalorder %s158, %s159
    %p171 = scmp.eq.s32.totalorder %s23, 1
    %p172 = por %p170, %p171
    %p174 = scmp.ne.s32.totalorder %s159, %s173
    %p175 = scmp.eq.s32.totalorder %s23, 0
    %p176 = por %p174, %p175
    %s178 = sadd.s32 %s177, 1
    %p181 = scmp.eq.s32.totalorder %s17, 1
    %p182 = scmp.ne.s32.totalorder %s177, %s179
    %p183 = scmp.eq.s32.totalorder %s17, 0
    %p184 = por %p182, %p183
    %p185 = scmp.ne.s32.totalorder %s177, %s179
    %p186 = scmp.eq.s32.totalorder %s22, 1
    %p187 = por %p185, %p186
    %p188 = scmp.ne.s32.totalorder %s179, %s180
    %p189 = scmp.eq.s32.totalorder %s22, 0
    %p190 = por %p188, %p189
    %p191 = scmp.ne.s32.totalorder %s179, %s180
    %p192 = scmp.eq.s32.totalorder %s23, 1
    %p193 = por %p191, %p192
    %p195 = scmp.ne.s32.totalorder %s180, %s194
    %p196 = scmp.eq.s32.totalorder %s23, 0
    %p197 = por %p195, %p196
    %s199 = sadd.s32 %s198, 1
    %p202 = scmp.eq.s32.totalorder %s17, 1
    %p203 = scmp.ne.s32.totalorder %s198, %s200
    %p204 = scmp.eq.s32.totalorder %s17, 0
    %p205 = por %p203, %p204
    %p206 = scmp.ne.s32.totalorder %s198, %s200
    %p207 = scmp.eq.s32.totalorder %s22, 1
    %p208 = por %p206, %p207
    %p209 = scmp.ne.s32.totalorder %s200, %s201
    %p210 = scmp.eq.s32.totalorder %s22, 0
    %p211 = por %p209, %p210
    %p212 = scmp.ne.s32.totalorder %s200, %s201
    %p213 = scmp.eq.s32.totalorder %s23, 1
    %p214 = por %p212, %p213
    %p216 = scmp.ne.s32.totalorder %s201, %s215
    %p217 = scmp.eq.s32.totalorder %s23, 0
    %p218 = por %p216, %p217
    %s220 = sadd.s32 %s219, 1
    %p223 = scmp.eq.s32.totalorder %s17, 1
    %p224 = scmp.ne.s32.totalorder %s219, %s221
    %p225 = scmp.eq.s32.totalorder %s17, 0
    %p226 = por %p224, %p225
    %p227 = scmp.ne.s32.totalorder %s219, %s221
    %p228 = scmp.eq.s32.totalorder %s22, 1
    %p229 = por %p227, %p228
    %p230 = scmp.ne.s32.totalorder %s221, %s222
    %p231 = scmp.eq.s32.totalorder %s22, 0
    %p232 = por %p230, %p231
    %p233 = scmp.ne.s32.totalorder %s221, %s222
    %p234 = scmp.eq.s32.totalorder %s23, 1
    %p235 = por %p233, %p234
    %p237 = scmp.ne.s32.totalorder %s222, %s236
    %p238 = scmp.eq.s32.totalorder %s23, 0
    %p239 = por %p237, %p238
    %s241 = sadd.s32 %s240, 1
    %p244 = scmp.eq.s32.totalorder %s17, 1
    %p245 = scmp.ne.s32.totalorder %s240, %s242
    %p246 = scmp.eq.s32.totalorder %s17, 0
    %p247 = por %p245, %p246
    %p248 = scmp.ne.s32.totalorder %s240, %s242
    %p249 = scmp.eq.s32.totalorder %s22, 1
    %p250 = por %p248, %p249
    %p251 = scmp.ne.s32.totalorder %s242, %s243
    %p252 = scmp.eq.s32.totalorder %s22, 0
    %p253 = por %p251, %p252
    %p254 = scmp.ne.s32.totalorder %s242, %s243
    %p255 = scmp.eq.s32.totalorder %s23, 1
    %p256 = por %p254, %p255
    %p258 = scmp.ne.s32.totalorder %s243, %s257
    %p259 = scmp.eq.s32.totalorder %s23, 0
    %p260 = por %p258, %p259
    %s261 = ssub.s32 %s17, %s24
    %p262 = scmp.eq.s32.totalorder %s261, 0
    %s264 = sadd.s32 %s263, 1
    %s265 = scalar_select %p262, %s263, %s264
    %p268 = pneg %p262
    %p269 = scmp.eq.s32.totalorder %s17, 1
    %p270 = por %p268, %p269
    %p271 = scmp.ne.s32.totalorder %s263, %s266
    %p272 = scmp.eq.s32.totalorder %s17, 0
    %p273 = por %p271, %p272
    %p274 = scmp.ne.s32.totalorder %s263, %s266
    %p275 = scmp.eq.s32.totalorder %s22, 1
    %p276 = por %p274, %p275
    %p277 = scmp.ne.s32.totalorder %s266, %s267
    %p278 = scmp.eq.s32.totalorder %s22, 0
    %p279 = por %p277, %p278
    %p280 = scmp.ne.s32.totalorder %s266, %s267
    %p281 = scmp.eq.s32.totalorder %s23, 1
    %p282 = por %p280, %p281
    %p284 = scmp.ne.s32.totalorder %s267, %s283
    %p285 = scmp.eq.s32.totalorder %s23, 0
    %p286 = por %p284, %p285
    %p287 = scmp.le.s32.totalorder 1, %s17
    %p288 = scmp.lt.s32.totalorder %s17, 3
    %p289 = pnand %p287, %p288
    %p290 = pneg %p289
    // Predicated region
    $region9: #{forward.1} parent=5 // pred_check
      _
    $region10: #{forward.1} parent=5 // pred_check_branch
      %292 = sbr.rel (%p289) target = $region12
    $region11: #{forward.1} parent=5 // pred_region
      %s293 = ssub.s32 %s17, 1
      // Predicated region
      $region13: #{forward.1} parent=11 // pred_check
        %p294 = pneg %p64
      $region14: #{forward.1} parent=11 // pred_check_branch
        %296 = sbr.rel (%p294) target = $region16
      $region15: #{forward.1} parent=11 // pred_region
        _
      $region16: #{forward.1} parent=11 // pred_fallthru
        _
      // Predicated region
      $region17: #{forward.1} parent=11 // pred_check
        %p297 = pneg %p85
      $region18: #{forward.1} parent=11 // pred_check_branch
        %299 = sbr.rel (%p297) target = $region20
      $region19: #{forward.1} parent=11 // pred_region
        _
      $region20: #{forward.1} parent=11 // pred_fallthru
        _
      // Predicated region
      $region21: #{forward.1} parent=11 // pred_check
        %p300 = pneg %p106
      $region22: #{forward.1} parent=11 // pred_check_branch
        %302 = sbr.rel (%p300) target = $region24
      $region23: #{forward.1} parent=11 // pred_region
        _
      $region24: #{forward.1} parent=11 // pred_fallthru
        _
      // Predicated region
      $region25: #{forward.1} parent=11 // pred_check
        %p303 = pneg %p127
      $region26: #{forward.1} parent=11 // pred_check_branch
        %305 = sbr.rel (%p303) target = $region28
      $region27: #{forward.1} parent=11 // pred_region
        _
      $region28: #{forward.1} parent=11 // pred_fallthru
        _
      // Predicated region
      $region29: #{forward.1} parent=11 // pred_check
        %p306 = pneg %p148
      $region30: #{forward.1} parent=11 // pred_check_branch
        %308 = sbr.rel (%p306) target = $region32
      $region31: #{forward.1} parent=11 // pred_region
        _
      $region32: #{forward.1} parent=11 // pred_fallthru
        _
      // Predicated region
      $region33: #{forward.1} parent=11 // pred_check
        %p309 = pneg %p169
      $region34: #{forward.1} parent=11 // pred_check_branch
        %311 = sbr.rel (%p309) target = $region36
      $region35: #{forward.1} parent=11 // pred_region
        _
      $region36: #{forward.1} parent=11 // pred_fallthru
        _
      // Predicated region
      $region37: #{forward.1} parent=11 // pred_check
        %p312 = pneg %p190
      $region38: #{forward.1} parent=11 // pred_check_branch
        %314 = sbr.rel (%p312) target = $region40
      $region39: #{forward.1} parent=11 // pred_region
        _
      $region40: #{forward.1} parent=11 // pred_fallthru
        _
      // Predicated region
      $region41: #{forward.1} parent=11 // pred_check
        %p315 = pneg %p211
      $region42: #{forward.1} parent=11 // pred_check_branch
        %317 = sbr.rel (%p315) target = $region44
      $region43: #{forward.1} parent=11 // pred_region
        _
      $region44: #{forward.1} parent=11 // pred_fallthru
        _
      // Predicated region
      $region45: #{forward.1} parent=11 // pred_check
        %p318 = pneg %p232
      $region46: #{forward.1} parent=11 // pred_check_branch
        %320 = sbr.rel (%p318) target = $region48
      $region47: #{forward.1} parent=11 // pred_region
        _
      $region48: #{forward.1} parent=11 // pred_fallthru
        _
      // Predicated region
      $region49: #{forward.1} parent=11 // pred_check
        %p321 = pneg %p253
      $region50: #{forward.1} parent=11 // pred_check_branch
        %323 = sbr.rel (%p321) target = $region52
      $region51: #{forward.1} parent=11 // pred_region
        _
      $region52: #{forward.1} parent=11 // pred_fallthru
        _
    $region12: #{forward.1} parent=5 // pred_fallthru
      _
    %p324 = scmp.lt.s32.totalorder %s17, 2
    // Predicated region
    $region53: #{forward.1} parent=5 // pred_check
      %p325 = pneg %p324
    $region54: #{forward.1} parent=5 // pred_check_branch
      %327 = sbr.rel (%p325) target = $region56
    $region55: #{forward.1} parent=5 // pred_region
      // Predicated region
      $region57: #{forward.1} parent=55 // pred_check
        %p328 = pneg %p37
      $region58: #{forward.1} parent=55 // pred_check_branch
        %330 = sbr.rel (%p328) target = $region60
      $region59: #{forward.1} parent=55 // pred_region
        %p331 = scmp.lt.s32.totalorder %s17, 1
        %s332 = scalar_select %p331, %s17, 1
        %s333 = smul.addr %s332, 32
        %s334 = smul.addr %s333, 4
        %s335 = scalar_lea.vmem %s0, %s334
      $region60: #{forward.1} parent=55 // pred_fallthru
        _
    $region56: #{forward.1} parent=5 // pred_fallthru
      _
    %p336 = scmp.le.s32.totalorder 1, %s17
    %p337 = scmp.lt.s32.totalorder %s17, 3
    %p338 = pnand %p336, %p337
    %p339 = pneg %p338
    // Predicated region
    $region61: #{forward.1} parent=5 // pred_check
      _
    $region62: #{forward.1} parent=5 // pred_check_branch
      %341 = sbr.rel (%p338) target = $region64
    $region63: #{forward.1} parent=5 // pred_region
      %s342 = ssub.s32 %s17, 1
      %p343 = scmp.lt.s32.totalorder %s22, 1
      %s344 = scalar_select %p343, %s22, 1
      %s345 = smul.addr %s344, 32
      %s346 = smul.addr %s345, 4
      %s347 = scalar_lea.vmem %s0, %s346
      %p348 = pneg %p43
      %p349 = pneg %p40
      %p350 = pneg %p64
      %p351 = pneg %p61
      %p352 = pneg %p85
      %p353 = pneg %p82
      %p354 = pneg %p106
      %p355 = pneg %p103
      %p356 = pneg %p127
      %p357 = pneg %p124
      %p358 = pneg %p148
      %p359 = pneg %p145
      %p360 = pneg %p169
      %p361 = pneg %p166
      %p362 = pneg %p190
      %p363 = pneg %p187
      %p364 = pneg %p211
      %p365 = pneg %p208
      %p366 = pneg %p232
      %p367 = pneg %p229
      %p368 = pneg %p253
      %p369 = pneg %p250
      %p370 = pneg %p279
      %p371 = pneg %p276
      %p372 = scmp.lt.s32.totalorder %s22, 1
      %s373 = scalar_select %p372, %s22, 1
      %s374 = smul.addr %s373, 2
      %s375 = smul.addr %s374, 2
      %s376 = scalar_lea.vmem %s11, %s375
      %p377 = scmp.lt.s32.totalorder %s22, 1
      %s378 = scalar_select %p377, %s22, 1
      %s379 = smul.addr %s378, 32
      %s380 = smul.addr %s379, 4
      %s381 = scalar_lea.vmem %s0, %s380
      %p382 = scmp.lt.s32.totalorder %s22, 1
      %s383 = scalar_select %p382, %s22, 1
      %s384 = smul.addr %s383, 2
      %s385 = smul.addr %s384, 2
      %s386 = scalar_lea.vmem %s11, %s385
      %vm387 = vcmask 523264
      %388 = vst.msk [vmem:[#allocation3 + $0xa] sm:$0xff] %vm387, 0.0
      %389 = vst.msk [vmem:[#allocation3 + $0x22] sm:$0xff] %vm387, 0.0
      %390 = vst.msk [vmem:[#allocation3 + $0x3a] sm:$0xff] %vm387, 0.0
      %391 = vst.msk [vmem:[#allocation3 + $0x52] sm:$0xff] %vm387, 0.0
      %392 = vst.msk [vmem:[#allocation3 + $0x6a] sm:$0xff] %vm387, 0.0
      %393 = vst.msk [vmem:[#allocation3 + $0x82] sm:$0xff] %vm387, 0.0
      %394 = vst.msk [vmem:[#allocation3 + $0x9a] sm:$0xff] %vm387, 0.0
      %395 = vst.msk [vmem:[#allocation3 + $0xb2] sm:$0xff] %vm387, 0.0
      %396 = vst.msk [vmem:[#allocation3 + $0xca] sm:$0xff] %vm387, 0.0
      %397 = vst.msk [vmem:[#allocation3 + $0xe2] sm:$0xff] %vm387, 0.0
      %398 = vst [vmem:[#allocation4 + $0x6] sm:$0x1f] 0.0
      %399 = vst [vmem:[#allocation4 + $0x16] sm:$0x1f] 0.0
      %400 = vst [vmem:[#allocation4 + $0x26] sm:$0x1f] 0.0
      %401 = vst [vmem:[#allocation4 + $0x36] sm:$0x1f] 0.0
      %402 = vst [vmem:[#allocation4 + $0x46] sm:$0x1f] 0.0
      %403 = vst [vmem:[#allocation4 + $0x56] sm:$0x1f] 0.0
      %404 = vst [vmem:[#allocation5] sm:$0xe0] 0.0
      %405 = vst [vmem:[#allocation5 + $0x8] sm:$0xe0] 0.0
      %406 = vst [vmem:[#allocation5 + $0x10] sm:$0x7] 0.0
      %407 = vst [vmem:[#allocation5 + $0x18] sm:$0x7] 0.0
      %408 = vst [vmem:[#allocation5 + $0x20] sm:$0xe0] 0.0
      %409 = vst [vmem:[#allocation5 + $0x28] sm:$0xe0] 0.0
      %410 = vst [vmem:[#allocation5 + $0x30] sm:$0x7] 0.0
      %411 = vst [vmem:[#allocation5 + $0x38] sm:$0x7] 0.0
      %412 = vst [vmem:[#allocation5 + $0x40] sm:$0xe0] 0.0
      %413 = vst [vmem:[#allocation5 + $0x48] sm:$0xe0] 0.0
      %414 = vst [vmem:[#allocation5 + $0x50] sm:$0x7] 0.0
      %415 = vst [vmem:[#allocation5 + $0x58] sm:$0x7] 0.0
      %416 = vst [vmem:[#allocation5 + $0x60] sm:$0xe0] 0.0
      %417 = vst [vmem:[#allocation5 + $0x68] sm:$0xe0] 0.0
      %418 = vst [vmem:[#allocation5 + $0x70] sm:$0x7] 0.0
      %419 = vst [vmem:[#allocation5 + $0x78] sm:$0x7] 0.0
      %420 = vst [vmem:[#allocation5 + $0x80] sm:$0xe0] 0.0
      %421 = vst [vmem:[#allocation5 + $0x88] sm:$0xe0] 0.0
      %422 = vst [vmem:[#allocation5 + $0x90] sm:$0x7] 0.0
      %423 = vst [vmem:[#allocation5 + $0x98] sm:$0x7] 0.0
      %v424 = vld [vmem:[%s381] sm:$0xf]
      %v425 = vld [vmem:[%s381 + $0x4] sm:$0xf]
      %v426 = vld [vmem:[%s381 + $0x8] sm:$0xf]
      %v427 = vld [vmem:[%s381 + $0xc] sm:$0xf]
      %v428 = vld [vmem:[%s381 + $0x10] sm:$0xf]
      %v429 = vld [vmem:[%s381 + $0x14] sm:$0xf]
      %v430 = vld [vmem:[%s381 + $0x18] sm:$0xf]
      %v431 = vld [vmem:[%s381 + $0x1c] sm:$0xf]
      %v432 = vld [vmem:[%s381 + $0x20] sm:$0xf]
      %v433 = vld [vmem:[%s381 + $0x24] sm:$0xf]
      %v434 = vld [vmem:[%s381 + $0x28] sm:$0xf]
      %v435 = vld [vmem:[%s381 + $0x2c] sm:$0xf]
      %v436 = vld [vmem:[%s381 + $0x30] sm:$0xf]
      %v437 = vld [vmem:[%s381 + $0x34] sm:$0xf]
      %v438 = vld [vmem:[%s381 + $0x38] sm:$0xf]
      %v439 = vld [vmem:[%s381 + $0x3c] sm:$0xf]
      %v440 = vld [vmem:[%s381 + $0x40] sm:$0xf]
      %v441 = vld [vmem:[%s381 + $0x44] sm:$0xf]
      %v442 = vld [vmem:[%s381 + $0x48] sm:$0xf]
      %v443 = vld [vmem:[%s381 + $0x4c] sm:$0xf]
      %v444 = vld [vmem:[%s381 + $0x50] sm:$0xf]
      %v445 = vld [vmem:[%s381 + $0x54] sm:$0xf]
      %v446 = vld [vmem:[%s381 + $0x58] sm:$0xf]
      %v447 = vld [vmem:[%s381 + $0x5c] sm:$0xf]
      %v448 = vld [vmem:[%s381 + $0x60] sm:$0xf]
      %v449 = vld [vmem:[%s381 + $0x64] sm:$0xf]
      %v450 = vld [vmem:[%s381 + $0x68] sm:$0xf]
      %v451 = vld [vmem:[%s381 + $0x6c] sm:$0xf]
      %v452 = vld [vmem:[%s381 + $0x70] sm:$0xf]
      %v453 = vld [vmem:[%s381 + $0x74] sm:$0xf]
      %v454 = vld [vmem:[%s381 + $0x78] sm:$0xf]
      %v455 = vld [vmem:[%s381 + $0x7c] sm:$0xf]
      %v456 = vld [vmem:[%s1] sm:$0xf]
      %v457 = vld [vmem:[%s1 + $0x4] sm:$0xf]
      %v458 = vld [vmem:[%s1 + $0x8] sm:$0xf]
      %v459 = vld [vmem:[%s1 + $0xc] sm:$0xf]
      %v460 = vld [vmem:[%s1 + $0x10] sm:$0xf]
      %v461 = vld [vmem:[%s1 + $0x14] sm:$0xf]
      %v462 = vld [vmem:[%s1 + $0x18] sm:$0xf]
      %v463 = vld [vmem:[%s1 + $0x1c] sm:$0xf]
      %v464 = vld [vmem:[%s1 + $0x20] sm:$0xf]
      %v465 = vld [vmem:[%s1 + $0x24] sm:$0xf]
      %v466 = vld [vmem:[%s1 + $0x28] sm:$0xf]
      %v467 = vld [vmem:[%s1 + $0x2c] sm:$0xf]
      %v468 = vld [vmem:[%s1 + $0x30] sm:$0xf]
      %v469 = vld [vmem:[%s1 + $0x34] sm:$0xf]
      %v470 = vld [vmem:[%s1 + $0x38] sm:$0xf]
      %v471 = vld [vmem:[%s1 + $0x3c] sm:$0xf]
      %v472 = vld [vmem:[%s6] sm:$0x1]
      %v474 = vperm.slane %v472, 0
      %v508 = vunpack.c.l.b16 %v424
      %v509 = vunpack.c.l.b16 %v425
      %v510 = vunpack.c.l.b16 %v426
      %v511 = vunpack.c.l.b16 %v427
      %v512 = vunpack.c.l.b16 %v428
      %v513 = vunpack.c.l.b16 %v429
      %v514 = vunpack.c.l.b16 %v430
      %v515 = vunpack.c.l.b16 %v431
      %v516 = vunpack.c.l.b16 %v432
      %v517 = vunpack.c.l.b16 %v433
      %v518 = vunpack.c.l.b16 %v434
      %v519 = vunpack.c.l.b16 %v435
      %v520 = vunpack.c.l.b16 %v436
      %v521 = vunpack.c.l.b16 %v437
      %v522 = vunpack.c.l.b16 %v438
      %v523 = vunpack.c.l.b16 %v439
      %v524 = vunpack.c.l.b16 %v440
      %v525 = vunpack.c.l.b16 %v441
      %v526 = vunpack.c.l.b16 %v442
      %v527 = vunpack.c.l.b16 %v443
      %v528 = vunpack.c.l.b16 %v444
      %v529 = vunpack.c.l.b16 %v445
      %v530 = vunpack.c.l.b16 %v446
      %v531 = vunpack.c.l.b16 %v447
      %v532 = vunpack.c.l.b16 %v448
      %v533 = vunpack.c.l.b16 %v449
      %v534 = vunpack.c.l.b16 %v450
      %v535 = vunpack.c.l.b16 %v451
      %v536 = vunpack.c.l.b16 %v452
      %v537 = vunpack.c.l.b16 %v453
      %v538 = vunpack.c.l.b16 %v454
      %v539 = vunpack.c.l.b16 %v455
      %v540 = vpack.c.b16 %v509, %v508
      %v541 = vpack.c.b16 %v511, %v510
      %v542 = vpack.c.b16 %v513, %v512
      %v543 = vpack.c.b16 %v515, %v514
      %v544 = vpack.c.b16 %v517, %v516
      %v545 = vpack.c.b16 %v519, %v518
      %v546 = vpack.c.b16 %v521, %v520
      %v547 = vpack.c.b16 %v523, %v522
      %v548 = vpack.c.b16 %v525, %v524
      %v549 = vpack.c.b16 %v527, %v526
      %v550 = vpack.c.b16 %v529, %v528
      %v551 = vpack.c.b16 %v531, %v530
      %v552 = vpack.c.b16 %v533, %v532
      %v553 = vpack.c.b16 %v535, %v534
      %v554 = vpack.c.b16 %v537, %v536
      %v555 = vpack.c.b16 %v539, %v538
      %v588 = vunpack.c.l.b16 %v456
      %v589 = vunpack.c.l.b16 %v457
      %v590 = vunpack.c.l.b16 %v458
      %v591 = vunpack.c.l.b16 %v459
      %v592 = vunpack.c.l.b16 %v460
      %v593 = vunpack.c.l.b16 %v461
      %v594 = vunpack.c.l.b16 %v462
      %v595 = vunpack.c.l.b16 %v463
      %v596 = vunpack.c.l.b16 %v464
      %v597 = vunpack.c.l.b16 %v465
      %v598 = vunpack.c.l.b16 %v466
      %v599 = vunpack.c.l.b16 %v467
      %v600 = vunpack.c.l.b16 %v468
      %v601 = vunpack.c.l.b16 %v469
      %v602 = vunpack.c.l.b16 %v470
      %v603 = vunpack.c.l.b16 %v471
      %v604 = vpack.c.b16 %v589, %v588
      %v605 = vpack.c.b16 %v591, %v590
      %v606 = vpack.c.b16 %v593, %v592
      %v607 = vpack.c.b16 %v595, %v594
      %v608 = vpack.c.b16 %v597, %v596
      %v609 = vpack.c.b16 %v599, %v598
      %v610 = vpack.c.b16 %v601, %v600
      %v611 = vpack.c.b16 %v603, %v602
      %620 = vmatpush.bf16.msra.mxu0 %v611
      %621 = vmatpush.bf16.msra.mxu0 %v610
      %622 = vmatpush.bf16.msra.mxu0 %v609
      %623 = vmatpush.bf16.msra.mxu0 %v608
      %624 = vmatpush.bf16.msra.mxu0 %v607
      %625 = vmatpush.bf16.msra.mxu0 %v606
      %626 = vmatpush.bf16.msra.mxu0 %v605
      %627 = vmatpush.bf16.msra.mxu0 %v604
      %628 = vmatmul.bf16.gmra.mxu0 %v540
      %v629 = vpop.f32.mrf.mxu0
      %v630 = vadd.f32 %v474, %v629
      %v631 = vpop.f32.mrf.mxu0
      %v632 = vadd.f32 %v474, %v631
      %633 = vmatmul.bf16.gmra.mxu0 %v541
      %v634 = vpop.f32.mrf.mxu0
      %v635 = vadd.f32 %v474, %v634
      %v636 = vpop.f32.mrf.mxu0
      %v637 = vadd.f32 %v474, %v636
      %638 = vmatmul.bf16.gmra.mxu0 %v542
      %v639 = vpop.f32.mrf.mxu0
      %v640 = vadd.f32 %v474, %v639
      %v641 = vpop.f32.mrf.mxu0
      %v642 = vadd.f32 %v474, %v641
      %643 = vmatmul.bf16.gmra.mxu0 %v543
      %v644 = vpop.f32.mrf.mxu0
      %v645 = vadd.f32 %v474, %v644
      %v646 = vpop.f32.mrf.mxu0
      %v647 = vadd.f32 %v474, %v646
      %648 = vmatmul.bf16.gmra.mxu0 %v544
      %v649 = vpop.f32.mrf.mxu0
      %v650 = vadd.f32 %v474, %v649
      %v651 = vpop.f32.mrf.mxu0
      %v652 = vadd.f32 %v474, %v651
      %653 = vmatmul.bf16.gmra.mxu0 %v545
      %v654 = vpop.f32.mrf.mxu0
      %v655 = vadd.f32 %v474, %v654
      %v656 = vpop.f32.mrf.mxu0
      %v657 = vadd.f32 %v474, %v656
      %658 = vmatmul.bf16.gmra.mxu0 %v546
      %v659 = vpop.f32.mrf.mxu0
      %v660 = vadd.f32 %v474, %v659
      %v661 = vpop.f32.mrf.mxu0
      %v662 = vadd.f32 %v474, %v661
      %663 = vmatmul.bf16.gmra.mxu0 %v547
      %v664 = vpop.f32.mrf.mxu0
      %v665 = vadd.f32 %v474, %v664
      %v666 = vpop.f32.mrf.mxu0
      %v667 = vadd.f32 %v474, %v666
      %668 = vmatmul.bf16.gmra.mxu0 %v548
      %v669 = vpop.f32.mrf.mxu0
      %v670 = vadd.f32 %v474, %v669
      %v671 = vpop.f32.mrf.mxu0
      %v672 = vadd.f32 %v474, %v671
      %673 = vmatmul.bf16.gmra.mxu0 %v549
      %v674 = vpop.f32.mrf.mxu0
      %v675 = vadd.f32 %v474, %v674
      %v676 = vpop.f32.mrf.mxu0
      %v677 = vadd.f32 %v474, %v676
      %678 = vmatmul.bf16.gmra.mxu0 %v550
      %v679 = vpop.f32.mrf.mxu0
      %v680 = vadd.f32 %v474, %v679
      %v681 = vpop.f32.mrf.mxu0
      %v682 = vadd.f32 %v474, %v681
      %683 = vmatmul.bf16.gmra.mxu0 %v551
      %v684 = vpop.f32.mrf.mxu0
      %v685 = vadd.f32 %v474, %v684
      %v686 = vpop.f32.mrf.mxu0
      %v687 = vadd.f32 %v474, %v686
      %688 = vmatmul.bf16.gmra.mxu0 %v552
      %v689 = vpop.f32.mrf.mxu0
      %v690 = vadd.f32 %v474, %v689
      %v691 = vpop.f32.mrf.mxu0
      %v692 = vadd.f32 %v474, %v691
      %693 = vmatmul.bf16.gmra.mxu0 %v553
      %v694 = vpop.f32.mrf.mxu0
      %v695 = vadd.f32 %v474, %v694
      %v696 = vpop.f32.mrf.mxu0
      %v697 = vadd.f32 %v474, %v696
      %698 = vmatmul.bf16.gmra.mxu0 %v554
      %v699 = vpop.f32.mrf.mxu0
      %v700 = vadd.f32 %v474, %v699
      %v701 = vpop.f32.mrf.mxu0
      %v702 = vadd.f32 %v474, %v701
      %703 = vmatmul.bf16.gmra.mxu0 %v555
      %v704 = vpop.f32.mrf.mxu0
      %v705 = vadd.f32 %v474, %v704
      %v706 = vpop.f32.mrf.mxu0
      %v707 = vadd.f32 %v474, %v706
      %708 = vdwg.mxu0
      %vm709 = vcmp.ge.f32.partialorder %v630, 0.0
      %vm710 = vcmp.ge.f32.partialorder %v632, 0.0
      %vm711 = vcmp.ge.f32.partialorder %v635, 0.0
      %vm712 = vcmp.ge.f32.partialorder %v637, 0.0
      %vm713 = vcmp.ge.f32.partialorder %v640, 0.0
      %vm714 = vcmp.ge.f32.partialorder %v642, 0.0
      %vm715 = vcmp.ge.f32.partialorder %v645, 0.0
      %vm716 = vcmp.ge.f32.partialorder %v647, 0.0
      %vm717 = vcmp.ge.f32.partialorder %v650, 0.0
      %vm718 = vcmp.ge.f32.partialorder %v652, 0.0
      %vm719 = vcmp.ge.f32.partialorder %v655, 0.0
      %vm720 = vcmp.ge.f32.partialorder %v657, 0.0
      %vm721 = vcmp.ge.f32.partialorder %v660, 0.0
      %vm722 = vcmp.ge.f32.partialorder %v662, 0.0
      %vm723 = vcmp.ge.f32.partialorder %v665, 0.0
      %vm724 = vcmp.ge.f32.partialorder %v667, 0.0
      %vm725 = vcmp.ge.f32.partialorder %v670, 0.0
      %vm726 = vcmp.ge.f32.partialorder %v672, 0.0
      %vm727 = vcmp.ge.f32.partialorder %v675, 0.0
      %vm728 = vcmp.ge.f32.partialorder %v677, 0.0
      %vm729 = vcmp.ge.f32.partialorder %v680, 0.0
      %vm730 = vcmp.ge.f32.partialorder %v682, 0.0
      %vm731 = vcmp.ge.f32.partialorder %v685, 0.0
      %vm732 = vcmp.ge.f32.partialorder %v687, 0.0
      %vm733 = vcmp.ge.f32.partialorder %v690, 0.0
      %vm734 = vcmp.ge.f32.partialorder %v692, 0.0
      %vm735 = vcmp.ge.f32.partialorder %v695, 0.0
      %vm736 = vcmp.ge.f32.partialorder %v697, 0.0
      %vm737 = vcmp.ge.f32.partialorder %v700, 0.0
      %vm738 = vcmp.ge.f32.partialorder %v702, 0.0
      %vm739 = vcmp.ge.f32.partialorder %v705, 0.0
      %vm740 = vcmp.ge.f32.partialorder %v707, 0.0
      %v741 = vmul.f32 %v630, 0.2
      %v742 = vmul.f32 %v632, 0.2
      %v743 = vmul.f32 %v635, 0.2
      %v744 = vmul.f32 %v637, 0.2
      %v745 = vmul.f32 %v640, 0.2
      %v746 = vmul.f32 %v642, 0.2
      %v747 = vmul.f32 %v645, 0.2
      %v748 = vmul.f32 %v647, 0.2
      %v749 = vmul.f32 %v650, 0.2
      %v750 = vmul.f32 %v652, 0.2
      %v751 = vmul.f32 %v655, 0.2
      %v752 = vmul.f32 %v657, 0.2
      %v753 = vmul.f32 %v660, 0.2
      %v754 = vmul.f32 %v662, 0.2
      %v755 = vmul.f32 %v665, 0.2
      %v756 = vmul.f32 %v667, 0.2
      %v757 = vmul.f32 %v670, 0.2
      %v758 = vmul.f32 %v672, 0.2
      %v759 = vmul.f32 %v675, 0.2
      %v760 = vmul.f32 %v677, 0.2
      %v761 = vmul.f32 %v680, 0.2
      %v762 = vmul.f32 %v682, 0.2
      %v763 = vmul.f32 %v685, 0.2
      %v764 = vmul.f32 %v687, 0.2
      %v765 = vmul.f32 %v690, 0.2
      %v766 = vmul.f32 %v692, 0.2
      %v767 = vmul.f32 %v695, 0.2
      %v768 = vmul.f32 %v697, 0.2
      %v769 = vmul.f32 %v700, 0.2
      %v770 = vmul.f32 %v702, 0.2
      %v771 = vmul.f32 %v705, 0.2
      %v772 = vmul.f32 %v707, 0.2
      %v773 = vsel %vm709, %v630, %v741
      %v774 = vsel %vm710, %v632, %v742
      %v775 = vsel %vm711, %v635, %v743
      %v776 = vsel %vm712, %v637, %v744
      %v777 = vsel %vm713, %v640, %v745
      %v778 = vsel %vm714, %v642, %v746
      %v779 = vsel %vm715, %v645, %v747
      %v780 = vsel %vm716, %v647, %v748
      %v781 = vsel %vm717, %v650, %v749
      %v782 = vsel %vm718, %v652, %v750
      %v783 = vsel %vm719, %v655, %v751
      %v784 = vsel %vm720, %v657, %v752
      %v785 = vsel %vm721, %v660, %v753
      %v786 = vsel %vm722, %v662, %v754
      %v787 = vsel %vm723, %v665, %v755
      %v788 = vsel %vm724, %v667, %v756
      %v789 = vsel %vm725, %v670, %v757
      %v790 = vsel %vm726, %v672, %v758
      %v791 = vsel %vm727, %v675, %v759
      %v792 = vsel %vm728, %v677, %v760
      %v793 = vsel %vm729, %v680, %v761
      %v794 = vsel %vm730, %v682, %v762
      %v795 = vsel %vm731, %v685, %v763
      %v796 = vsel %vm732, %v687, %v764
      %v797 = vsel %vm733, %v690, %v765
      %v798 = vsel %vm734, %v692, %v766
      %v799 = vsel %vm735, %v695, %v767
      %v800 = vsel %vm736, %v697, %v768
      %v801 = vsel %vm737, %v700, %v769
      %v802 = vsel %vm738, %v702, %v770
      %v803 = vsel %vm739, %v705, %v771
      %v804 = vsel %vm740, %v707, %v772
      %s805 = scalar_lea.vmem [#allocation2], 24
      %vm806 = vcmask 261120
      %807 = vst.msk [vmem:[%s805 + $0x1] sm:$0xff] %vm806, %v773
      %808 = vst.msk [vmem:[%s805 + $0x9] sm:$0xff] %vm806, %v774
      %809 = vst.msk [vmem:[%s805 + $0x19] sm:$0xff] %vm806, %v775
      %810 = vst.msk [vmem:[%s805 + $0x21] sm:$0xff] %vm806, %v776
      %811 = vst.msk [vmem:[%s805 + $0x31] sm:$0xff] %vm806, %v777
      %812 = vst.msk [vmem:[%s805 + $0x39] sm:$0xff] %vm806, %v778
      %813 = vst.msk [vmem:[%s805 + $0x49] sm:$0xff] %vm806, %v779
      %814 = vst.msk [vmem:[%s805 + $0x51] sm:$0xff] %vm806, %v780
      %815 = vst.msk [vmem:[%s805 + $0x61] sm:$0xff] %vm806, %v781
      %816 = vst.msk [vmem:[%s805 + $0x69] sm:$0xff] %vm806, %v782
      %817 = vst.msk [vmem:[%s805 + $0x79] sm:$0xff] %vm806, %v783
      %818 = vst.msk [vmem:[%s805 + $0x81] sm:$0xff] %vm806, %v784
      %819 = vst.msk [vmem:[%s805 + $0x91] sm:$0xff] %vm806, %v785
      %820 = vst.msk [vmem:[%s805 + $0x99] sm:$0xff] %vm806, %v786
      %821 = vst.msk [vmem:[%s805 + $0xa9] sm:$0xff] %vm806, %v787
      %822 = vst.msk [vmem:[%s805 + $0xb1] sm:$0xff] %vm806, %v788
      %823 = vst.msk [vmem:[%s805 + $0xc1] sm:$0xff] %vm806, %v789
      %824 = vst.msk [vmem:[%s805 + $0xc9] sm:$0xff] %vm806, %v790
      %825 = vst.msk [vmem:[%s805 + $0xd9] sm:$0xff] %vm806, %v791
      %826 = vst.msk [vmem:[%s805 + $0xe1] sm:$0xff] %vm806, %v792
      %827 = vst.msk [vmem:[%s805 + $0xf1] sm:$0xff] %vm806, %v793
      %828 = vst.msk [vmem:[%s805 + $0xf9] sm:$0xff] %vm806, %v794
      %829 = vst.msk [vmem:[%s805 + $0x109] sm:$0xff] %vm806, %v795
      %830 = vst.msk [vmem:[%s805 + $0x111] sm:$0xff] %vm806, %v796
      %831 = vst.msk [vmem:[%s805 + $0x121] sm:$0xff] %vm806, %v797
      %832 = vst.msk [vmem:[%s805 + $0x129] sm:$0xff] %vm806, %v798
      %833 = vst.msk [vmem:[%s805 + $0x139] sm:$0xff] %vm806, %v799
      %834 = vst.msk [vmem:[%s805 + $0x141] sm:$0xff] %vm806, %v800
      %835 = vst.msk [vmem:[%s805 + $0x151] sm:$0xff] %vm806, %v801
      %836 = vst.msk [vmem:[%s805 + $0x159] sm:$0xff] %vm806, %v802
      %837 = vst.msk [vmem:[%s805 + $0x169] sm:$0xff] %vm806, %v803
      %838 = vst.msk [vmem:[%s805 + $0x171] sm:$0xff] %vm806, %v804
      %vm839 = vcmask 254977
      %840 = vst.msk [vmem:[%s805 - $0x1] sm:$0x2] %vm839, %v773
      %841 = vst.msk [vmem:[%s805 + $0x17] sm:$0x2] %vm839, %v775
      %842 = vst.msk [vmem:[%s805 + $0x2f] sm:$0x2] %vm839, %v777
      %843 = vst.msk [vmem:[%s805 + $0x47] sm:$0x2] %vm839, %v779
      %844 = vst.msk [vmem:[%s805 + $0x5f] sm:$0x2] %vm839, %v781
      %845 = vst.msk [vmem:[%s805 + $0x77] sm:$0x2] %vm839, %v783
      %846 = vst.msk [vmem:[%s805 + $0x8f] sm:$0x2] %vm839, %v785
      %847 = vst.msk [vmem:[%s805 + $0xa7] sm:$0x2] %vm839, %v787
      %848 = vst.msk [vmem:[%s805 + $0xbf] sm:$0x2] %vm839, %v789
      %849 = vst.msk [vmem:[%s805 + $0xd7] sm:$0x2] %vm839, %v791
      %850 = vst.msk [vmem:[%s805 + $0xef] sm:$0x2] %vm839, %v793
      %851 = vst.msk [vmem:[%s805 + $0x107] sm:$0x2] %vm839, %v795
      %852 = vst.msk [vmem:[%s805 + $0x11f] sm:$0x2] %vm839, %v797
      %853 = vst.msk [vmem:[%s805 + $0x137] sm:$0x2] %vm839, %v799
      %854 = vst.msk [vmem:[%s805 + $0x14f] sm:$0x2] %vm839, %v801
      %855 = vst.msk [vmem:[%s805 + $0x167] sm:$0x2] %vm839, %v803
      %vm856 = vcmask 260102
      %857 = vst.msk [vmem:[%s805 + $0xb] sm:$0x40] %vm856, %v774
      %858 = vst.msk [vmem:[%s805 + $0x23] sm:$0x40] %vm856, %v776
      %859 = vst.msk [vmem:[%s805 + $0x3b] sm:$0x40] %vm856, %v778
      %860 = vst.msk [vmem:[%s805 + $0x53] sm:$0x40] %vm856, %v780
      %861 = vst.msk [vmem:[%s805 + $0x6b] sm:$0x40] %vm856, %v782
      %862 = vst.msk [vmem:[%s805 + $0x83] sm:$0x40] %vm856, %v784
      %863 = vst.msk [vmem:[%s805 + $0x9b] sm:$0x40] %vm856, %v786
      %864 = vst.msk [vmem:[%s805 + $0xb3] sm:$0x40] %vm856, %v788
      %865 = vst.msk [vmem:[%s805 + $0xcb] sm:$0x40] %vm856, %v790
      %866 = vst.msk [vmem:[%s805 + $0xe3] sm:$0x40] %vm856, %v792
      %867 = vst.msk [vmem:[%s805 + $0xfb] sm:$0x40] %vm856, %v794
      %868 = vst.msk [vmem:[%s805 + $0x113] sm:$0x40] %vm856, %v796
      %869 = vst.msk [vmem:[%s805 + $0x12b] sm:$0x40] %vm856, %v798
      %870 = vst.msk [vmem:[%s805 + $0x143] sm:$0x40] %vm856, %v800
      %871 = vst.msk [vmem:[%s805 + $0x15b] sm:$0x40] %vm856, %v802
      %872 = vst.msk [vmem:[%s805 + $0x173] sm:$0x40] %vm856, %v804
      %s873 = scalar_lea.vmem [#allocation2], 48
      %v874 = vld [vmem:[%s873] sm:$0xff]
      %v875 = vld [vmem:[%s873 + $0x8] sm:$0xff]
      %v876 = vld [vmem:[%s873 + $0x10] sm:$0x3]
      %877 = vst.msk [vmem:[#allocation2] sm:$0xff] %vm806, %v874
      %878 = vst.msk [vmem:[#allocation2 + $0x8] sm:$0xff] %vm806, %v875
      %vm879 = vcmask 254976
      %880 = vst.msk [vmem:[#allocation2 + $0x10] sm:$0x3] %vm879, %v876
      %s881 = scalar_lea.vmem [#allocation2], 360
      %v882 = vld [vmem:[%s881] sm:$0xff]
      %v883 = vld [vmem:[%s881 + $0x8] sm:$0xff]
      %v884 = vld [vmem:[%s881 + $0x10] sm:$0x3]
      %s885 = scalar_lea.vmem [#allocation2], 408
      %886 = vst.msk [vmem:[%s885] sm:$0xff] %vm806, %v882
      %887 = vst.msk [vmem:[%s885 + $0x8] sm:$0xff] %vm806, %v883
      %888 = vst.msk [vmem:[%s885 + $0x10] sm:$0x3] %vm879, %v884
      %v889 = vld [vmem:[#allocation2] ss:$2 sm:$0xff]
      %s890 = scalar_lea.vmem [#allocation2], 48
      %v891 = vld [vmem:[%s890] ss:$2 sm:$0xff]
      %s892 = scalar_lea.vmem [#allocation2], 96
      %v893 = vld [vmem:[%s892] ss:$2 sm:$0xff]
      %s894 = scalar_lea.vmem [#allocation2], 144
      %v895 = vld [vmem:[%s894] ss:$2 sm:$0xff]
      %s896 = scalar_lea.vmem [#allocation2], 192
      %v897 = vld [vmem:[%s896] ss:$2 sm:$0xff]
      %s898 = scalar_lea.vmem [#allocation2], 240
      %v899 = vld [vmem:[%s898] ss:$2 sm:$0xff]
      %s900 = scalar_lea.vmem [#allocation2], 288
      %v901 = vld [vmem:[%s900] ss:$2 sm:$0xff]
      %s902 = scalar_lea.vmem [#allocation2], 336
      %v903 = vld [vmem:[%s902] ss:$2 sm:$0xff]
      %s904 = scalar_lea.vmem [#allocation2], 1
      %v905 = vld [vmem:[%s904] ss:$2 sm:$0xff]
      %s906 = scalar_lea.vmem [#allocation2], 49
      %v907 = vld [vmem:[%s906] ss:$2 sm:$0xff]
      %s908 = scalar_lea.vmem [#allocation2], 97
      %v909 = vld [vmem:[%s908] ss:$2 sm:$0xff]
      %s910 = scalar_lea.vmem [#allocation2], 145
      %v911 = vld [vmem:[%s910] ss:$2 sm:$0xff]
      %s912 = scalar_lea.vmem [#allocation2], 193
      %v913 = vld [vmem:[%s912] ss:$2 sm:$0xff]
      %s914 = scalar_lea.vmem [#allocation2], 241
      %v915 = vld [vmem:[%s914] ss:$2 sm:$0xff]
      %s916 = scalar_lea.vmem [#allocation2], 289
      %v917 = vld [vmem:[%s916] ss:$2 sm:$0xff]
      %s918 = scalar_lea.vmem [#allocation2], 337
      %v919 = vld [vmem:[%s918] ss:$2 sm:$0xff]
      %s920 = scalar_lea.vmem [#allocation2], 2
      %v921 = vld [vmem:[%s920] ss:$2 sm:$0xff]
      %s922 = scalar_lea.vmem [#allocation2], 50
      %v923 = vld [vmem:[%s922] ss:$2 sm:$0xff]
      %s924 = scalar_lea.vmem [#allocation2], 98
      %v925 = vld [vmem:[%s924] ss:$2 sm:$0xff]
      %s926 = scalar_lea.vmem [#allocation2], 146
      %v927 = vld [vmem:[%s926] ss:$2 sm:$0xff]
      %s928 = scalar_lea.vmem [#allocation2], 194
      %v929 = vld [vmem:[%s928] ss:$2 sm:$0xff]
      %s930 = scalar_lea.vmem [#allocation2], 242
      %v931 = vld [vmem:[%s930] ss:$2 sm:$0xff]
      %s932 = scalar_lea.vmem [#allocation2], 290
      %v933 = vld [vmem:[%s932] ss:$2 sm:$0xff]
      %s934 = scalar_lea.vmem [#allocation2], 338
      %v935 = vld [vmem:[%s934] ss:$2 sm:$0xff]
      %s936 = scalar_lea.vmem [#allocation2], 3
      %v937 = vld [vmem:[%s936] ss:$2 sm:$0xff]
      %s938 = scalar_lea.vmem [#allocation2], 51
      %v939 = vld [vmem:[%s938] ss:$2 sm:$0xff]
      %s940 = scalar_lea.vmem [#allocation2], 99
      %v941 = vld [vmem:[%s940] ss:$2 sm:$0xff]
      %s942 = scalar_lea.vmem [#allocation2], 147
      %v943 = vld [vmem:[%s942] ss:$2 sm:$0xff]
      %s944 = scalar_lea.vmem [#allocation2], 195
      %v945 = vld [vmem:[%s944] ss:$2 sm:$0xff]
      %s946 = scalar_lea.vmem [#allocation2], 243
      %v947 = vld [vmem:[%s946] ss:$2 sm:$0xff]
      %s948 = scalar_lea.vmem [#allocation2], 291
      %v949 = vld [vmem:[%s948] ss:$2 sm:$0xff]
      %s950 = scalar_lea.vmem [#allocation2], 339
      %v951 = vld [vmem:[%s950] ss:$2 sm:$0xff]
      %960 = vrot.lane.b32.xlu0 %v905, 32
      %v961 = vpop.permute.xlu0 %960
      %962 = vrot.lane.b32.xlu0 %v907, 32
      %v963 = vpop.permute.xlu0 %962
      %964 = vrot.lane.b32.xlu0 %v909, 32
      %v965 = vpop.permute.xlu0 %964
      %966 = vrot.lane.b32.xlu0 %v911, 32
      %v967 = vpop.permute.xlu0 %966
      %968 = vrot.lane.b32.xlu0 %v913, 32
      %v969 = vpop.permute.xlu0 %968
      %970 = vrot.lane.b32.xlu0 %v915, 32
      %v971 = vpop.permute.xlu0 %970
      %972 = vrot.lane.b32.xlu0 %v917, 32
      %v973 = vpop.permute.xlu0 %972
      %974 = vrot.lane.b32.xlu0 %v919, 32
      %v975 = vpop.permute.xlu0 %974
      %992 = vrot.lane.b32.xlu0 %v921, 64
      %v993 = vpop.permute.xlu0 %992
      %994 = vrot.lane.b32.xlu0 %v923, 64
      %v995 = vpop.permute.xlu0 %994
      %996 = vrot.lane.b32.xlu0 %v925, 64
      %v997 = vpop.permute.xlu0 %996
      %998 = vrot.lane.b32.xlu0 %v927, 64
      %v999 = vpop.permute.xlu0 %998
      %1000 = vrot.lane.b32.xlu0 %v929, 64
      %v1001 = vpop.permute.xlu0 %1000
      %1002 = vrot.lane.b32.xlu0 %v931, 64
      %v1003 = vpop.permute.xlu0 %1002
      %1004 = vrot.lane.b32.xlu0 %v933, 64
      %v1005 = vpop.permute.xlu0 %1004
      %1006 = vrot.lane.b32.xlu0 %v935, 64
      %v1007 = vpop.permute.xlu0 %1006
      %1024 = vrot.lane.b32.xlu0 %v937, 96
      %v1025 = vpop.permute.xlu0 %1024
      %1026 = vrot.lane.b32.xlu0 %v939, 96
      %v1027 = vpop.permute.xlu0 %1026
      %1028 = vrot.lane.b32.xlu0 %v941, 96
      %v1029 = vpop.permute.xlu0 %1028
      %1030 = vrot.lane.b32.xlu0 %v943, 96
      %v1031 = vpop.permute.xlu0 %1030
      %1032 = vrot.lane.b32.xlu0 %v945, 96
      %v1033 = vpop.permute.xlu0 %1032
      %1034 = vrot.lane.b32.xlu0 %v947, 96
      %v1035 = vpop.permute.xlu0 %1034
      %1036 = vrot.lane.b32.xlu0 %v949, 96
      %v1037 = vpop.permute.xlu0 %1036
      %1038 = vrot.lane.b32.xlu0 %v951, 96
      %v1039 = vpop.permute.xlu0 %1038
      %v1048 = vsel %vm806, %v889, %v961
      %v1049 = vsel %vm806, %v891, %v963
      %v1050 = vsel %vm806, %v893, %v965
      %v1051 = vsel %vm806, %v895, %v967
      %v1052 = vsel %vm806, %v897, %v969
      %v1053 = vsel %vm806, %v899, %v971
      %v1054 = vsel %vm806, %v901, %v973
      %v1055 = vsel %vm806, %v903, %v975
      %v1056 = vsel %vm387, %v1048, %v993
      %v1057 = vsel %vm387, %v1049, %v995
      %v1058 = vsel %vm387, %v1050, %v997
      %v1059 = vsel %vm387, %v1051, %v999
      %v1060 = vsel %vm387, %v1052, %v1001
      %v1061 = vsel %vm387, %v1053, %v1003
      %v1062 = vsel %vm387, %v1054, %v1005
      %v1063 = vsel %vm387, %v1055, %v1007
      %vm1064 = vcmask 785408
      %v1065 = vsel %vm1064, %v1056, %v1025
      %v1066 = vsel %vm1064, %v1057, %v1027
      %v1067 = vsel %vm1064, %v1058, %v1029
      %v1068 = vsel %vm1064, %v1059, %v1031
      %v1069 = vsel %vm1064, %v1060, %v1033
      %v1070 = vsel %vm1064, %v1061, %v1035
      %v1071 = vsel %vm1064, %v1062, %v1037
      %v1072 = vsel %vm1064, %v1063, %v1039
      %v1073 = vpack.c.bf16 %v1066, %v1065
      %v1074 = vpack.c.bf16 %v1068, %v1067
      %v1075 = vpack.c.bf16 %v1070, %v1069
      %v1076 = vpack.c.bf16 %v1072, %v1071
      %v1077 = vld [vmem:[%s2] sm:$0xf]
      %v1078 = vld [vmem:[%s2 + $0x4] sm:$0xf]
      %v1079 = vld [vmem:[%s2 + $0x8] sm:$0xf]
      %v1080 = vld [vmem:[%s2 + $0xc] sm:$0xf]
      %v1081 = vld [vmem:[%s2 + $0x10] sm:$0xf]
      %v1082 = vld [vmem:[%s2 + $0x14] sm:$0xf]
      %v1083 = vld [vmem:[%s2 + $0x18] sm:$0xf]
      %v1084 = vld [vmem:[%s2 + $0x1c] sm:$0xf]
      %v1085 = vld [vmem:[%s2 + $0x20] sm:$0xf]
      %v1086 = vld [vmem:[%s2 + $0x24] sm:$0xf]
      %v1087 = vld [vmem:[%s2 + $0x28] sm:$0xf]
      %v1088 = vld [vmem:[%s2 + $0x2c] sm:$0xf]
      %v1089 = vld [vmem:[%s2 + $0x30] sm:$0xf]
      %v1090 = vld [vmem:[%s2 + $0x34] sm:$0xf]
      %v1091 = vld [vmem:[%s2 + $0x38] sm:$0xf]
      %v1092 = vld [vmem:[%s2 + $0x3c] sm:$0xf]
      %v1093 = vld [vmem:[%s805] ss:$2 sm:$0xff]
      %s1094 = scalar_lea.vmem %s805, 48 [#allocation2]
      %v1095 = vld [vmem:[%s1094] ss:$2 sm:$0xff]
      %s1096 = scalar_lea.vmem %s805, 96 [#allocation2]
      %v1097 = vld [vmem:[%s1096] ss:$2 sm:$0xff]
      %s1098 = scalar_lea.vmem %s805, 144 [#allocation2]
      %v1099 = vld [vmem:[%s1098] ss:$2 sm:$0xff]
      %s1100 = scalar_lea.vmem %s805, 192 [#allocation2]
      %v1101 = vld [vmem:[%s1100] ss:$2 sm:$0xff]
      %s1102 = scalar_lea.vmem %s805, 240 [#allocation2]
      %v1103 = vld [vmem:[%s1102] ss:$2 sm:$0xff]
      %s1104 = scalar_lea.vmem %s805, 288 [#allocation2]
      %v1105 = vld [vmem:[%s1104] ss:$2 sm:$0xff]
      %s1106 = scalar_lea.vmem %s805, 336 [#allocation2]
      %v1107 = vld [vmem:[%s1106] ss:$2 sm:$0xff]
      %s1108 = scalar_lea.vmem %s805, 1 [#allocation2]
      %v1109 = vld [vmem:[%s1108] ss:$2 sm:$0xff]
      %s1110 = scalar_lea.vmem %s805, 49 [#allocation2]
      %v1111 = vld [vmem:[%s1110] ss:$2 sm:$0xff]
      %s1112 = scalar_lea.vmem %s805, 97 [#allocation2]
      %v1113 = vld [vmem:[%s1112] ss:$2 sm:$0xff]
      %s1114 = scalar_lea.vmem %s805, 145 [#allocation2]
      %v1115 = vld [vmem:[%s1114] ss:$2 sm:$0xff]
      %s1116 = scalar_lea.vmem %s805, 193 [#allocation2]
      %v1117 = vld [vmem:[%s1116] ss:$2 sm:$0xff]
      %s1118 = scalar_lea.vmem %s805, 241 [#allocation2]
      %v1119 = vld [vmem:[%s1118] ss:$2 sm:$0xff]
      %s1120 = scalar_lea.vmem %s805, 289 [#allocation2]
      %v1121 = vld [vmem:[%s1120] ss:$2 sm:$0xff]
      %s1122 = scalar_lea.vmem %s805, 337 [#allocation2]
      %v1123 = vld [vmem:[%s1122] ss:$2 sm:$0xff]
      %s1124 = scalar_lea.vmem %s805, 2 [#allocation2]
      %v1125 = vld [vmem:[%s1124] ss:$2 sm:$0xff]
      %s1126 = scalar_lea.vmem %s805, 50 [#allocation2]
      %v1127 = vld [vmem:[%s1126] ss:$2 sm:$0xff]
      %s1128 = scalar_lea.vmem %s805, 98 [#allocation2]
      %v1129 = vld [vmem:[%s1128] ss:$2 sm:$0xff]
      %s1130 = scalar_lea.vmem %s805, 146 [#allocation2]
      %v1131 = vld [vmem:[%s1130] ss:$2 sm:$0xff]
      %s1132 = scalar_lea.vmem %s805, 194 [#allocation2]
      %v1133 = vld [vmem:[%s1132] ss:$2 sm:$0xff]
      %s1134 = scalar_lea.vmem %s805, 242 [#allocation2]
      %v1135 = vld [vmem:[%s1134] ss:$2 sm:$0xff]
      %s1136 = scalar_lea.vmem %s805, 290 [#allocation2]
      %v1137 = vld [vmem:[%s1136] ss:$2 sm:$0xff]
      %s1138 = scalar_lea.vmem %s805, 338 [#allocation2]
      %v1139 = vld [vmem:[%s1138] ss:$2 sm:$0xff]
      %s1140 = scalar_lea.vmem %s805, 3 [#allocation2]
      %v1141 = vld [vmem:[%s1140] ss:$2 sm:$0xff]
      %s1142 = scalar_lea.vmem %s805, 51 [#allocation2]
      %v1143 = vld [vmem:[%s1142] ss:$2 sm:$0xff]
      %s1144 = scalar_lea.vmem %s805, 99 [#allocation2]
      %v1145 = vld [vmem:[%s1144] ss:$2 sm:$0xff]
      %s1146 = scalar_lea.vmem %s805, 147 [#allocation2]
      %v1147 = vld [vmem:[%s1146] ss:$2 sm:$0xff]
      %s1148 = scalar_lea.vmem %s805, 195 [#allocation2]
      %v1149 = vld [vmem:[%s1148] ss:$2 sm:$0xff]
      %s1150 = scalar_lea.vmem %s805, 243 [#allocation2]
      %v1151 = vld [vmem:[%s1150] ss:$2 sm:$0xff]
      %s1152 = scalar_lea.vmem %s805, 291 [#allocation2]
      %v1153 = vld [vmem:[%s1152] ss:$2 sm:$0xff]
      %s1154 = scalar_lea.vmem %s805, 339 [#allocation2]
      %v1155 = vld [vmem:[%s1154] ss:$2 sm:$0xff]
      %1164 = vrot.lane.b32.xlu0 %v1109, 32
      %v1165 = vpop.permute.xlu0 %1164
      %1166 = vrot.lane.b32.xlu0 %v1111, 32
      %v1167 = vpop.permute.xlu0 %1166
      %1168 = vrot.lane.b32.xlu0 %v1113, 32
      %v1169 = vpop.permute.xlu0 %1168
      %1170 = vrot.lane.b32.xlu0 %v1115, 32
      %v1171 = vpop.permute.xlu0 %1170
      %1172 = vrot.lane.b32.xlu0 %v1117, 32
      %v1173 = vpop.permute.xlu0 %1172
      %1174 = vrot.lane.b32.xlu0 %v1119, 32
      %v1175 = vpop.permute.xlu0 %1174
      %1176 = vrot.lane.b32.xlu0 %v1121, 32
      %v1177 = vpop.permute.xlu0 %1176
      %1178 = vrot.lane.b32.xlu0 %v1123, 32
      %v1179 = vpop.permute.xlu0 %1178
      %1196 = vrot.lane.b32.xlu0 %v1125, 64
      %v1197 = vpop.permute.xlu0 %1196
      %1198 = vrot.lane.b32.xlu0 %v1127, 64
      %v1199 = vpop.permute.xlu0 %1198
      %1200 = vrot.lane.b32.xlu0 %v1129, 64
      %v1201 = vpop.permute.xlu0 %1200
      %1202 = vrot.lane.b32.xlu0 %v1131, 64
      %v1203 = vpop.permute.xlu0 %1202
      %1204 = vrot.lane.b32.xlu0 %v1133, 64
      %v1205 = vpop.permute.xlu0 %1204
      %1206 = vrot.lane.b32.xlu0 %v1135, 64
      %v1207 = vpop.permute.xlu0 %1206
      %1208 = vrot.lane.b32.xlu0 %v1137, 64
      %v1209 = vpop.permute.xlu0 %1208
      %1210 = vrot.lane.b32.xlu0 %v1139, 64
      %v1211 = vpop.permute.xlu0 %1210
      %1228 = vrot.lane.b32.xlu0 %v1141, 96
      %v1229 = vpop.permute.xlu0 %1228
      %1230 = vrot.lane.b32.xlu0 %v1143, 96
      %v1231 = vpop.permute.xlu0 %1230
      %1232 = vrot.lane.b32.xlu0 %v1145, 96
      %v1233 = vpop.permute.xlu0 %1232
      %1234 = vrot.lane.b32.xlu0 %v1147, 96
      %v1235 = vpop.permute.xlu0 %1234
      %1236 = vrot.lane.b32.xlu0 %v1149, 96
      %v1237 = vpop.permute.xlu0 %1236
      %1238 = vrot.lane.b32.xlu0 %v1151, 96
      %v1239 = vpop.permute.xlu0 %1238
      %1240 = vrot.lane.b32.xlu0 %v1153, 96
      %v1241 = vpop.permute.xlu0 %1240
      %1242 = vrot.lane.b32.xlu0 %v1155, 96
      %v1243 = vpop.permute.xlu0 %1242
      %v1252 = vsel %vm806, %v1093, %v1165
      %v1253 = vsel %vm806, %v1095, %v1167
      %v1254 = vsel %vm806, %v1097, %v1169
      %v1255 = vsel %vm806, %v1099, %v1171
      %v1256 = vsel %vm806, %v1101, %v1173
      %v1257 = vsel %vm806, %v1103, %v1175
      %v1258 = vsel %vm806, %v1105, %v1177
      %v1259 = vsel %vm806, %v1107, %v1179
      %v1260 = vsel %vm387, %v1252, %v1197
      %v1261 = vsel %vm387, %v1253, %v1199
      %v1262 = vsel %vm387, %v1254, %v1201
      %v1263 = vsel %vm387, %v1255, %v1203
      %v1264 = vsel %vm387, %v1256, %v1205
      %v1265 = vsel %vm387, %v1257, %v1207
      %v1266 = vsel %vm387, %v1258, %v1209
      %v1267 = vsel %vm387, %v1259, %v1211
      %v1268 = vsel %vm1064, %v1260, %v1229
      %v1269 = vsel %vm1064, %v1261, %v1231
      %v1270 = vsel %vm1064, %v1262, %v1233
      %v1271 = vsel %vm1064, %v1263, %v1235
      %v1272 = vsel %vm1064, %v1264, %v1237
      %v1273 = vsel %vm1064, %v1265, %v1239
      %v1274 = vsel %vm1064, %v1266, %v1241
      %v1275 = vsel %vm1064, %v1267, %v1243
      %v1276 = vpack.c.bf16 %v1269, %v1268
      %v1277 = vpack.c.bf16 %v1271, %v1270
      %v1278 = vpack.c.bf16 %v1273, %v1272
      %v1279 = vpack.c.bf16 %v1275, %v1274
      %s1280 = scalar_lea.vmem %s2, 64
      %v1281 = vld [vmem:[%s1280] sm:$0xf]
      %v1282 = vld [vmem:[%s1280 + $0x4] sm:$0xf]
      %v1283 = vld [vmem:[%s1280 + $0x8] sm:$0xf]
      %v1284 = vld [vmem:[%s1280 + $0xc] sm:$0xf]
      %v1285 = vld [vmem:[%s1280 + $0x10] sm:$0xf]
      %v1286 = vld [vmem:[%s1280 + $0x14] sm:$0xf]
      %v1287 = vld [vmem:[%s1280 + $0x18] sm:$0xf]
      %v1288 = vld [vmem:[%s1280 + $0x1c] sm:$0xf]
      %v1289 = vld [vmem:[%s1280 + $0x20] sm:$0xf]
      %v1290 = vld [vmem:[%s1280 + $0x24] sm:$0xf]
      %v1291 = vld [vmem:[%s1280 + $0x28] sm:$0xf]
      %v1292 = vld [vmem:[%s1280 + $0x2c] sm:$0xf]
      %v1293 = vld [vmem:[%s1280 + $0x30] sm:$0xf]
      %v1294 = vld [vmem:[%s1280 + $0x34] sm:$0xf]
      %v1295 = vld [vmem:[%s1280 + $0x38] sm:$0xf]
      %v1296 = vld [vmem:[%s1280 + $0x3c] sm:$0xf]
      %v1313 = vunpack.c.l.b16 %v1281
      %v1314 = vunpack.c.l.b16 %v1282
      %v1315 = vunpack.c.l.b16 %v1283
      %v1316 = vunpack.c.l.b16 %v1284
      %v1317 = vunpack.c.l.b16 %v1285
      %v1318 = vunpack.c.l.b16 %v1286
      %v1319 = vunpack.c.l.b16 %v1287
      %v1320 = vunpack.c.l.b16 %v1288
      %v1321 = vunpack.c.l.b16 %v1289
      %v1322 = vunpack.c.l.b16 %v1290
      %v1323 = vunpack.c.l.b16 %v1291
      %v1324 = vunpack.c.l.b16 %v1292
      %v1325 = vunpack.c.l.b16 %v1293
      %v1326 = vunpack.c.l.b16 %v1294
      %v1327 = vunpack.c.l.b16 %v1295
      %v1328 = vunpack.c.l.b16 %v1296
      %v1329 = vpack.c.b16 %v1314, %v1313
      %v1330 = vpack.c.b16 %v1316, %v1315
      %v1331 = vpack.c.b16 %v1318, %v1317
      %v1332 = vpack.c.b16 %v1320, %v1319
      %v1333 = vpack.c.b16 %v1322, %v1321
      %v1334 = vpack.c.b16 %v1324, %v1323
      %v1335 = vpack.c.b16 %v1326, %v1325
      %v1336 = vpack.c.b16 %v1328, %v1327
      %1345 = vmatpush.bf16.msra.mxu0 %v1336
      %1346 = vmatpush.bf16.msra.mxu0 %v1335
      %1347 = vmatpush.bf16.msra.mxu0 %v1334
      %1348 = vmatpush.bf16.msra.mxu0 %v1333
      %1349 = vmatpush.bf16.msra.mxu0 %v1332
      %1350 = vmatpush.bf16.msra.mxu0 %v1331
      %1351 = vmatpush.bf16.msra.mxu0 %v1330
      %1352 = vmatpush.bf16.msra.mxu0 %v1329
      %1353 = vmatmul.bf16.gmra.mxu0 %v1276
      %v1354 = vpop.f32.mrf.mxu0
      %v1355 = vadd.f32 0.0, %v1354
      %v1356 = vpop.f32.mrf.mxu0
      %v1357 = vadd.f32 0.0, %v1356
      %1358 = vmatmul.bf16.gmra.mxu0 %v1277
      %v1359 = vpop.f32.mrf.mxu0
      %v1360 = vadd.f32 0.0, %v1359
      %v1361 = vpop.f32.mrf.mxu0
      %v1362 = vadd.f32 0.0, %v1361
      %1363 = vmatmul.bf16.gmra.mxu0 %v1278
      %v1364 = vpop.f32.mrf.mxu0
      %v1365 = vadd.f32 0.0, %v1364
      %v1366 = vpop.f32.mrf.mxu0
      %v1367 = vadd.f32 0.0, %v1366
      %1368 = vmatmul.bf16.gmra.mxu0 %v1279
      %v1369 = vpop.f32.mrf.mxu0
      %v1370 = vadd.f32 0.0, %v1369
      %v1371 = vpop.f32.mrf.mxu0
      %v1372 = vadd.f32 0.0, %v1371
      %1373 = vdwg.mxu0
      %v1390 = vunpack.c.l.b16 %v1077
      %v1391 = vunpack.c.l.b16 %v1078
      %v1392 = vunpack.c.l.b16 %v1079
      %v1393 = vunpack.c.l.b16 %v1080
      %v1394 = vunpack.c.l.b16 %v1081
      %v1395 = vunpack.c.l.b16 %v1082
      %v1396 = vunpack.c.l.b16 %v1083
      %v1397 = vunpack.c.l.b16 %v1084
      %v1398 = vunpack.c.l.b16 %v1085
      %v1399 = vunpack.c.l.b16 %v1086
      %v1400 = vunpack.c.l.b16 %v1087
      %v1401 = vunpack.c.l.b16 %v1088
      %v1402 = vunpack.c.l.b16 %v1089
      %v1403 = vunpack.c.l.b16 %v1090
      %v1404 = vunpack.c.l.b16 %v1091
      %v1405 = vunpack.c.l.b16 %v1092
      %v1406 = vpack.c.b16 %v1391, %v1390
      %v1407 = vpack.c.b16 %v1393, %v1392
      %v1408 = vpack.c.b16 %v1395, %v1394
      %v1409 = vpack.c.b16 %v1397, %v1396
      %v1410 = vpack.c.b16 %v1399, %v1398
      %v1411 = vpack.c.b16 %v1401, %v1400
      %v1412 = vpack.c.b16 %v1403, %v1402
      %v1413 = vpack.c.b16 %v1405, %v1404
      %1422 = vmatpush.bf16.msra.mxu0 %v1413
      %1423 = vmatpush.bf16.msra.mxu0 %v1412
      %1424 = vmatpush.bf16.msra.mxu0 %v1411
      %1425 = vmatpush.bf16.msra.mxu0 %v1410
      %1426 = vmatpush.bf16.msra.mxu0 %v1409
      %1427 = vmatpush.bf16.msra.mxu0 %v1408
      %1428 = vmatpush.bf16.msra.mxu0 %v1407
      %1429 = vmatpush.bf16.msra.mxu0 %v1406
      %1430 = vmatmul.bf16.gmra.mxu0 %v1073
      %v1431 = vpop.f32.mrf.mxu0
      %v1432 = vadd.f32 %v1355, %v1431
      %v1433 = vpop.f32.mrf.mxu0
      %v1434 = vadd.f32 %v1357, %v1433
      %1435 = vmatmul.bf16.gmra.mxu0 %v1074
      %v1436 = vpop.f32.mrf.mxu0
      %v1437 = vadd.f32 %v1360, %v1436
      %v1438 = vpop.f32.mrf.mxu0
      %v1439 = vadd.f32 %v1362, %v1438
      %1440 = vmatmul.bf16.gmra.mxu0 %v1075
      %v1441 = vpop.f32.mrf.mxu0
      %v1442 = vadd.f32 %v1365, %v1441
      %v1443 = vpop.f32.mrf.mxu0
      %v1444 = vadd.f32 %v1367, %v1443
      %1445 = vmatmul.bf16.gmra.mxu0 %v1076
      %v1446 = vpop.f32.mrf.mxu0
      %v1447 = vadd.f32 %v1370, %v1446
      %v1448 = vpop.f32.mrf.mxu0
      %v1449 = vadd.f32 %v1372, %v1448
      %1450 = vdwg.mxu0
      %v1451 = vld [vmem:[%s873] ss:$2 sm:$0xff]
      %s1452 = scalar_lea.vmem %s873, 48 [#allocation2]
      %v1453 = vld [vmem:[%s1452] ss:$2 sm:$0xff]
      %s1454 = scalar_lea.vmem %s873, 96 [#allocation2]
      %v1455 = vld [vmem:[%s1454] ss:$2 sm:$0xff]
      %s1456 = scalar_lea.vmem %s873, 144 [#allocation2]
      %v1457 = vld [vmem:[%s1456] ss:$2 sm:$0xff]
      %s1458 = scalar_lea.vmem %s873, 192 [#allocation2]
      %v1459 = vld [vmem:[%s1458] ss:$2 sm:$0xff]
      %s1460 = scalar_lea.vmem %s873, 240 [#allocation2]
      %v1461 = vld [vmem:[%s1460] ss:$2 sm:$0xff]
      %s1462 = scalar_lea.vmem %s873, 288 [#allocation2]
      %v1463 = vld [vmem:[%s1462] ss:$2 sm:$0xff]
      %s1464 = scalar_lea.vmem %s873, 336 [#allocation2]
      %v1465 = vld [vmem:[%s1464] ss:$2 sm:$0xff]
      %s1466 = scalar_lea.vmem %s873, 1 [#allocation2]
      %v1467 = vld [vmem:[%s1466] ss:$2 sm:$0xff]
      %s1468 = scalar_lea.vmem %s873, 49 [#allocation2]
      %v1469 = vld [vmem:[%s1468] ss:$2 sm:$0xff]
      %s1470 = scalar_lea.vmem %s873, 97 [#allocation2]
      %v1471 = vld [vmem:[%s1470] ss:$2 sm:$0xff]
      %s1472 = scalar_lea.vmem %s873, 145 [#allocation2]
      %v1473 = vld [vmem:[%s1472] ss:$2 sm:$0xff]
      %s1474 = scalar_lea.vmem %s873, 193 [#allocation2]
      %v1475 = vld [vmem:[%s1474] ss:$2 sm:$0xff]
      %s1476 = scalar_lea.vmem %s873, 241 [#allocation2]
      %v1477 = vld [vmem:[%s1476] ss:$2 sm:$0xff]
      %s1478 = scalar_lea.vmem %s873, 289 [#allocation2]
      %v1479 = vld [vmem:[%s1478] ss:$2 sm:$0xff]
      %s1480 = scalar_lea.vmem %s873, 337 [#allocation2]
      %v1481 = vld [vmem:[%s1480] ss:$2 sm:$0xff]
      %s1482 = scalar_lea.vmem %s873, 2 [#allocation2]
      %v1483 = vld [vmem:[%s1482] ss:$2 sm:$0xff]
      %s1484 = scalar_lea.vmem %s873, 50 [#allocation2]
      %v1485 = vld [vmem:[%s1484] ss:$2 sm:$0xff]
      %s1486 = scalar_lea.vmem %s873, 98 [#allocation2]
      %v1487 = vld [vmem:[%s1486] ss:$2 sm:$0xff]
      %s1488 = scalar_lea.vmem %s873, 146 [#allocation2]
      %v1489 = vld [vmem:[%s1488] ss:$2 sm:$0xff]
      %s1490 = scalar_lea.vmem %s873, 194 [#allocation2]
      %v1491 = vld [vmem:[%s1490] ss:$2 sm:$0xff]
      %s1492 = scalar_lea.vmem %s873, 242 [#allocation2]
      %v1493 = vld [vmem:[%s1492] ss:$2 sm:$0xff]
      %s1494 = scalar_lea.vmem %s873, 290 [#allocation2]
      %v1495 = vld [vmem:[%s1494] ss:$2 sm:$0xff]
      %s1496 = scalar_lea.vmem %s873, 338 [#allocation2]
      %v1497 = vld [vmem:[%s1496] ss:$2 sm:$0xff]
      %s1498 = scalar_lea.vmem %s873, 3 [#allocation2]
      %v1499 = vld [vmem:[%s1498] ss:$2 sm:$0xff]
      %s1500 = scalar_lea.vmem %s873, 51 [#allocation2]
      %v1501 = vld [vmem:[%s1500] ss:$2 sm:$0xff]
      %s1502 = scalar_lea.vmem %s873, 99 [#allocation2]
      %v1503 = vld [vmem:[%s1502] ss:$2 sm:$0xff]
      %s1504 = scalar_lea.vmem %s873, 147 [#allocation2]
      %v1505 = vld [vmem:[%s1504] ss:$2 sm:$0xff]
      %s1506 = scalar_lea.vmem %s873, 195 [#allocation2]
      %v1507 = vld [vmem:[%s1506] ss:$2 sm:$0xff]
      %s1508 = scalar_lea.vmem %s873, 243 [#allocation2]
      %v1509 = vld [vmem:[%s1508] ss:$2 sm:$0xff]
      %s1510 = scalar_lea.vmem %s873, 291 [#allocation2]
      %v1511 = vld [vmem:[%s1510] ss:$2 sm:$0xff]
      %s1512 = scalar_lea.vmem %s873, 339 [#allocation2]
      %v1513 = vld [vmem:[%s1512] ss:$2 sm:$0xff]
      %1522 = vrot.lane.b32.xlu0 %v1467, 32
      %v1523 = vpop.permute.xlu0 %1522
      %1524 = vrot.lane.b32.xlu0 %v1469, 32
      %v1525 = vpop.permute.xlu0 %1524
      %1526 = vrot.lane.b32.xlu0 %v1471, 32
      %v1527 = vpop.permute.xlu0 %1526
      %1528 = vrot.lane.b32.xlu0 %v1473, 32
      %v1529 = vpop.permute.xlu0 %1528
      %1530 = vrot.lane.b32.xlu0 %v1475, 32
      %v1531 = vpop.permute.xlu0 %1530
      %1532 = vrot.lane.b32.xlu0 %v1477, 32
      %v1533 = vpop.permute.xlu0 %1532
      %1534 = vrot.lane.b32.xlu0 %v1479, 32
      %v1535 = vpop.permute.xlu0 %1534
      %1536 = vrot.lane.b32.xlu0 %v1481, 32
      %v1537 = vpop.permute.xlu0 %1536
      %1554 = vrot.lane.b32.xlu0 %v1483, 64
      %v1555 = vpop.permute.xlu0 %1554
      %1556 = vrot.lane.b32.xlu0 %v1485, 64
      %v1557 = vpop.permute.xlu0 %1556
      %1558 = vrot.lane.b32.xlu0 %v1487, 64
      %v1559 = vpop.permute.xlu0 %1558
      %1560 = vrot.lane.b32.xlu0 %v1489, 64
      %v1561 = vpop.permute.xlu0 %1560
      %1562 = vrot.lane.b32.xlu0 %v1491, 64
      %v1563 = vpop.permute.xlu0 %1562
      %1564 = vrot.lane.b32.xlu0 %v1493, 64
      %v1565 = vpop.permute.xlu0 %1564
      %1566 = vrot.lane.b32.xlu0 %v1495, 64
      %v1567 = vpop.permute.xlu0 %1566
      %1568 = vrot.lane.b32.xlu0 %v1497, 64
      %v1569 = vpop.permute.xlu0 %1568
      %1586 = vrot.lane.b32.xlu0 %v1499, 96
      %v1587 = vpop.permute.xlu0 %1586
      %1588 = vrot.lane.b32.xlu0 %v1501, 96
      %v1589 = vpop.permute.xlu0 %1588
      %1590 = vrot.lane.b32.xlu0 %v1503, 96
      %v1591 = vpop.permute.xlu0 %1590
      %1592 = vrot.lane.b32.xlu0 %v1505, 96
      %v1593 = vpop.permute.xlu0 %1592
      %1594 = vrot.lane.b32.xlu0 %v1507, 96
      %v1595 = vpop.permute.xlu0 %1594
      %1596 = vrot.lane.b32.xlu0 %v1509, 96
      %v1597 = vpop.permute.xlu0 %1596
      %1598 = vrot.lane.b32.xlu0 %v1511, 96
      %v1599 = vpop.permute.xlu0 %1598
      %1600 = vrot.lane.b32.xlu0 %v1513, 96
      %v1601 = vpop.permute.xlu0 %1600
      %v1610 = vsel %vm806, %v1451, %v1523
      %v1611 = vsel %vm806, %v1453, %v1525
      %v1612 = vsel %vm806, %v1455, %v1527
      %v1613 = vsel %vm806, %v1457, %v1529
      %v1614 = vsel %vm806, %v1459, %v1531
      %v1615 = vsel %vm806, %v1461, %v1533
      %v1616 = vsel %vm806, %v1463, %v1535
      %v1617 = vsel %vm806, %v1465, %v1537
      %v1618 = vsel %vm387, %v1610, %v1555
      %v1619 = vsel %vm387, %v1611, %v1557
      %v1620 = vsel %vm387, %v1612, %v1559
      %v1621 = vsel %vm387, %v1613, %v1561
      %v1622 = vsel %vm387, %v1614, %v1563
      %v1623 = vsel %vm387, %v1615, %v1565
      %v1624 = vsel %vm387, %v1616, %v1567
      %v1625 = vsel %vm387, %v1617, %v1569
      %v1626 = vsel %vm1064, %v1618, %v1587
      %v1627 = vsel %vm1064, %v1619, %v1589
      %v1628 = vsel %vm1064, %v1620, %v1591
      %v1629 = vsel %vm1064, %v1621, %v1593
      %v1630 = vsel %vm1064, %v1622, %v1595
      %v1631 = vsel %vm1064, %v1623, %v1597
      %v1632 = vsel %vm1064, %v1624, %v1599
      %v1633 = vsel %vm1064, %v1625, %v1601
      %v1634 = vpack.c.bf16 %v1627, %v1626
      %v1635 = vpack.c.bf16 %v1629, %v1628
      %v1636 = vpack.c.bf16 %v1631, %v1630
      %v1637 = vpack.c.bf16 %v1633, %v1632
      %s1638 = scalar_lea.vmem %s2, 128
      %v1639 = vld [vmem:[%s1638] sm:$0xf]
      %v1640 = vld [vmem:[%s1638 + $0x4] sm:$0xf]
      %v1641 = vld [vmem:[%s1638 + $0x8] sm:$0xf]
      %v1642 = vld [vmem:[%s1638 + $0xc] sm:$0xf]
      %v1643 = vld [vmem:[%s1638 + $0x10] sm:$0xf]
      %v1644 = vld [vmem:[%s1638 + $0x14] sm:$0xf]
      %v1645 = vld [vmem:[%s1638 + $0x18] sm:$0xf]
      %v1646 = vld [vmem:[%s1638 + $0x1c] sm:$0xf]
      %v1647 = vld [vmem:[%s1638 + $0x20] sm:$0xf]
      %v1648 = vld [vmem:[%s1638 + $0x24] sm:$0xf]
      %v1649 = vld [vmem:[%s1638 + $0x28] sm:$0xf]
      %v1650 = vld [vmem:[%s1638 + $0x2c] sm:$0xf]
      %v1651 = vld [vmem:[%s1638 + $0x30] sm:$0xf]
      %v1652 = vld [vmem:[%s1638 + $0x34] sm:$0xf]
      %v1653 = vld [vmem:[%s1638 + $0x38] sm:$0xf]
      %v1654 = vld [vmem:[%s1638 + $0x3c] sm:$0xf]
      %v1671 = vunpack.c.l.b16 %v1639
      %v1672 = vunpack.c.l.b16 %v1640
      %v1673 = vunpack.c.l.b16 %v1641
      %v1674 = vunpack.c.l.b16 %v1642
      %v1675 = vunpack.c.l.b16 %v1643
      %v1676 = vunpack.c.l.b16 %v1644
      %v1677 = vunpack.c.l.b16 %v1645
      %v1678 = vunpack.c.l.b16 %v1646
      %v1679 = vunpack.c.l.b16 %v1647
      %v1680 = vunpack.c.l.b16 %v1648
      %v1681 = vunpack.c.l.b16 %v1649
      %v1682 = vunpack.c.l.b16 %v1650
      %v1683 = vunpack.c.l.b16 %v1651
      %v1684 = vunpack.c.l.b16 %v1652
      %v1685 = vunpack.c.l.b16 %v1653
      %v1686 = vunpack.c.l.b16 %v1654
      %v1687 = vpack.c.b16 %v1672, %v1671
      %v1688 = vpack.c.b16 %v1674, %v1673
      %v1689 = vpack.c.b16 %v1676, %v1675
      %v1690 = vpack.c.b16 %v1678, %v1677
      %v1691 = vpack.c.b16 %v1680, %v1679
      %v1692 = vpack.c.b16 %v1682, %v1681
      %v1693 = vpack.c.b16 %v1684, %v1683
      %v1694 = vpack.c.b16 %v1686, %v1685
      %1703 = vmatpush.bf16.msra.mxu0 %v1694
      %1704 = vmatpush.bf16.msra.mxu0 %v1693
      %1705 = vmatpush.bf16.msra.mxu0 %v1692
      %1706 = vmatpush.bf16.msra.mxu0 %v1691
      %1707 = vmatpush.bf16.msra.mxu0 %v1690
      %1708 = vmatpush.bf16.msra.mxu0 %v1689
      %1709 = vmatpush.bf16.msra.mxu0 %v1688
      %1710 = vmatpush.bf16.msra.mxu0 %v1687
      %1711 = vmatmul.bf16.gmra.mxu0 %v1634
      %v1712 = vpop.f32.mrf.mxu0
      %v1713 = vadd.f32 0.0, %v1712
      %v1714 = vpop.f32.mrf.mxu0
      %v1715 = vadd.f32 0.0, %v1714
      %1716 = vmatmul.bf16.gmra.mxu0 %v1635
      %v1717 = vpop.f32.mrf.mxu0
      %v1718 = vadd.f32 0.0, %v1717
      %v1719 = vpop.f32.mrf.mxu0
      %v1720 = vadd.f32 0.0, %v1719
      %1721 = vmatmul.bf16.gmra.mxu0 %v1636
      %v1722 = vpop.f32.mrf.mxu0
      %v1723 = vadd.f32 0.0, %v1722
      %v1724 = vpop.f32.mrf.mxu0
      %v1725 = vadd.f32 0.0, %v1724
      %1726 = vmatmul.bf16.gmra.mxu0 %v1637
      %v1727 = vpop.f32.mrf.mxu0
      %v1728 = vadd.f32 0.0, %v1727
      %v1729 = vpop.f32.mrf.mxu0
      %v1730 = vadd.f32 0.0, %v1729
      %1731 = vdwg.mxu0
      %v1732 = vadd.f32 %v1432, %v1713
      %v1733 = vadd.f32 %v1434, %v1715
      %v1734 = vadd.f32 %v1437, %v1718
      %v1735 = vadd.f32 %v1439, %v1720
      %v1736 = vadd.f32 %v1442, %v1723
      %v1737 = vadd.f32 %v1444, %v1725
      %v1738 = vadd.f32 %v1447, %v1728
      %v1739 = vadd.f32 %v1449, %v1730
      %s1740 = scalar_lea.vmem [#allocation2], 72
      %v1741 = vld [vmem:[%s1740] ss:$2 sm:$0xff]
      %s1742 = scalar_lea.vmem %s1740, 48 [#allocation2]
      %v1743 = vld [vmem:[%s1742] ss:$2 sm:$0xff]
      %s1744 = scalar_lea.vmem %s1740, 96 [#allocation2]
      %v1745 = vld [vmem:[%s1744] ss:$2 sm:$0xff]
      %s1746 = scalar_lea.vmem %s1740, 144 [#allocation2]
      %v1747 = vld [vmem:[%s1746] ss:$2 sm:$0xff]
      %s1748 = scalar_lea.vmem %s1740, 192 [#allocation2]
      %v1749 = vld [vmem:[%s1748] ss:$2 sm:$0xff]
      %s1750 = scalar_lea.vmem %s1740, 240 [#allocation2]
      %v1751 = vld [vmem:[%s1750] ss:$2 sm:$0xff]
      %s1752 = scalar_lea.vmem %s1740, 288 [#allocation2]
      %v1753 = vld [vmem:[%s1752] ss:$2 sm:$0xff]
      %s1754 = scalar_lea.vmem %s1740, 336 [#allocation2]
      %v1755 = vld [vmem:[%s1754] ss:$2 sm:$0xff]
      %s1756 = scalar_lea.vmem %s1740, 1 [#allocation2]
      %v1757 = vld [vmem:[%s1756] ss:$2 sm:$0xff]
      %s1758 = scalar_lea.vmem %s1740, 49 [#allocation2]
      %v1759 = vld [vmem:[%s1758] ss:$2 sm:$0xff]
      %s1760 = scalar_lea.vmem %s1740, 97 [#allocation2]
      %v1761 = vld [vmem:[%s1760] ss:$2 sm:$0xff]
      %s1762 = scalar_lea.vmem %s1740, 145 [#allocation2]
      %v1763 = vld [vmem:[%s1762] ss:$2 sm:$0xff]
      %s1764 = scalar_lea.vmem %s1740, 193 [#allocation2]
      %v1765 = vld [vmem:[%s1764] ss:$2 sm:$0xff]
      %s1766 = scalar_lea.vmem %s1740, 241 [#allocation2]
      %v1767 = vld [vmem:[%s1766] ss:$2 sm:$0xff]
      %s1768 = scalar_lea.vmem %s1740, 289 [#allocation2]
      %v1769 = vld [vmem:[%s1768] ss:$2 sm:$0xff]
      %s1770 = scalar_lea.vmem %s1740, 337 [#allocation2]
      %v1771 = vld [vmem:[%s1770] ss:$2 sm:$0xff]
      %s1772 = scalar_lea.vmem %s1740, 2 [#allocation2]
      %v1773 = vld [vmem:[%s1772] ss:$2 sm:$0xff]
      %s1774 = scalar_lea.vmem %s1740, 50 [#allocation2]
      %v1775 = vld [vmem:[%s1774] ss:$2 sm:$0xff]
      %s1776 = scalar_lea.vmem %s1740, 98 [#allocation2]
      %v1777 = vld [vmem:[%s1776] ss:$2 sm:$0xff]
      %s1778 = scalar_lea.vmem %s1740, 146 [#allocation2]
      %v1779 = vld [vmem:[%s1778] ss:$2 sm:$0xff]
      %s1780 = scalar_lea.vmem %s1740, 194 [#allocation2]
      %v1781 = vld [vmem:[%s1780] ss:$2 sm:$0xff]
      %s1782 = scalar_lea.vmem %s1740, 242 [#allocation2]
      %v1783 = vld [vmem:[%s1782] ss:$2 sm:$0xff]
      %s1784 = scalar_lea.vmem %s1740, 290 [#allocation2]
      %v1785 = vld [vmem:[%s1784] ss:$2 sm:$0xff]
      %s1786 = scalar_lea.vmem %s1740, 338 [#allocation2]
      %v1787 = vld [vmem:[%s1786] ss:$2 sm:$0xff]
      %s1788 = scalar_lea.vmem %s1740, 3 [#allocation2]
      %v1789 = vld [vmem:[%s1788] ss:$2 sm:$0xff]
      %s1790 = scalar_lea.vmem %s1740, 51 [#allocation2]
      %v1791 = vld [vmem:[%s1790] ss:$2 sm:$0xff]
      %s1792 = scalar_lea.vmem %s1740, 99 [#allocation2]
      %v1793 = vld [vmem:[%s1792] ss:$2 sm:$0xff]
      %s1794 = scalar_lea.vmem %s1740, 147 [#allocation2]
      %v1795 = vld [vmem:[%s1794] ss:$2 sm:$0xff]
      %s1796 = scalar_lea.vmem %s1740, 195 [#allocation2]
      %v1797 = vld [vmem:[%s1796] ss:$2 sm:$0xff]
      %s1798 = scalar_lea.vmem %s1740, 243 [#allocation2]
      %v1799 = vld [vmem:[%s1798] ss:$2 sm:$0xff]
      %s1800 = scalar_lea.vmem %s1740, 291 [#allocation2]
      %v1801 = vld [vmem:[%s1800] ss:$2 sm:$0xff]
      %s1802 = scalar_lea.vmem %s1740, 339 [#allocation2]
      %v1803 = vld [vmem:[%s1802] ss:$2 sm:$0xff]
      %1812 = vrot.lane.b32.xlu0 %v1757, 32
      %v1813 = vpop.permute.xlu0 %1812
      %1814 = vrot.lane.b32.xlu0 %v1759, 32
      %v1815 = vpop.permute.xlu0 %1814
      %1816 = vrot.lane.b32.xlu0 %v1761, 32
      %v1817 = vpop.permute.xlu0 %1816
      %1818 = vrot.lane.b32.xlu0 %v1763, 32
      %v1819 = vpop.permute.xlu0 %1818
      %1820 = vrot.lane.b32.xlu0 %v1765, 32
      %v1821 = vpop.permute.xlu0 %1820
      %1822 = vrot.lane.b32.xlu0 %v1767, 32
      %v1823 = vpop.permute.xlu0 %1822
      %1824 = vrot.lane.b32.xlu0 %v1769, 32
      %v1825 = vpop.permute.xlu0 %1824
      %1826 = vrot.lane.b32.xlu0 %v1771, 32
      %v1827 = vpop.permute.xlu0 %1826
      %1844 = vrot.lane.b32.xlu0 %v1773, 64
      %v1845 = vpop.permute.xlu0 %1844
      %1846 = vrot.lane.b32.xlu0 %v1775, 64
      %v1847 = vpop.permute.xlu0 %1846
      %1848 = vrot.lane.b32.xlu0 %v1777, 64
      %v1849 = vpop.permute.xlu0 %1848
      %1850 = vrot.lane.b32.xlu0 %v1779, 64
      %v1851 = vpop.permute.xlu0 %1850
      %1852 = vrot.lane.b32.xlu0 %v1781, 64
      %v1853 = vpop.permute.xlu0 %1852
      %1854 = vrot.lane.b32.xlu0 %v1783, 64
      %v1855 = vpop.permute.xlu0 %1854
      %1856 = vrot.lane.b32.xlu0 %v1785, 64
      %v1857 = vpop.permute.xlu0 %1856
      %1858 = vrot.lane.b32.xlu0 %v1787, 64
      %v1859 = vpop.permute.xlu0 %1858
      %1876 = vrot.lane.b32.xlu0 %v1789, 96
      %v1877 = vpop.permute.xlu0 %1876
      %1878 = vrot.lane.b32.xlu0 %v1791, 96
      %v1879 = vpop.permute.xlu0 %1878
      %1880 = vrot.lane.b32.xlu0 %v1793, 96
      %v1881 = vpop.permute.xlu0 %1880
      %1882 = vrot.lane.b32.xlu0 %v1795, 96
      %v1883 = vpop.permute.xlu0 %1882
      %1884 = vrot.lane.b32.xlu0 %v1797, 96
      %v1885 = vpop.permute.xlu0 %1884
      %1886 = vrot.lane.b32.xlu0 %v1799, 96
      %v1887 = vpop.permute.xlu0 %1886
      %1888 = vrot.lane.b32.xlu0 %v1801, 96
      %v1889 = vpop.permute.xlu0 %1888
      %1890 = vrot.lane.b32.xlu0 %v1803, 96
      %v1891 = vpop.permute.xlu0 %1890
      %v1900 = vsel %vm806, %v1741, %v1813
      %v1901 = vsel %vm806, %v1743, %v1815
      %v1902 = vsel %vm806, %v1745, %v1817
      %v1903 = vsel %vm806, %v1747, %v1819
      %v1904 = vsel %vm806, %v1749, %v1821
      %v1905 = vsel %vm806, %v1751, %v1823
      %v1906 = vsel %vm806, %v1753, %v1825
      %v1907 = vsel %vm806, %v1755, %v1827
      %v1908 = vsel %vm387, %v1900, %v1845
      %v1909 = vsel %vm387, %v1901, %v1847
      %v1910 = vsel %vm387, %v1902, %v1849
      %v1911 = vsel %vm387, %v1903, %v1851
      %v1912 = vsel %vm387, %v1904, %v1853
      %v1913 = vsel %vm387, %v1905, %v1855
      %v1914 = vsel %vm387, %v1906, %v1857
      %v1915 = vsel %vm387, %v1907, %v1859
      %v1916 = vsel %vm1064, %v1908, %v1877
      %v1917 = vsel %vm1064, %v1909, %v1879
      %v1918 = vsel %vm1064, %v1910, %v1881
      %v1919 = vsel %vm1064, %v1911, %v1883
      %v1920 = vsel %vm1064, %v1912, %v1885
      %v1921 = vsel %vm1064, %v1913, %v1887
      %v1922 = vsel %vm1064, %v1914, %v1889
      %v1923 = vsel %vm1064, %v1915, %v1891
      %v1924 = vpack.c.bf16 %v1917, %v1916
      %v1925 = vpack.c.bf16 %v1919, %v1918
      %v1926 = vpack.c.bf16 %v1921, %v1920
      %v1927 = vpack.c.bf16 %v1923, %v1922
      %s1928 = scalar_lea.vmem %s2, 192
      %v1929 = vld [vmem:[%s1928] sm:$0xf]
      %v1930 = vld [vmem:[%s1928 + $0x4] sm:$0xf]
      %v1931 = vld [vmem:[%s1928 + $0x8] sm:$0xf]
      %v1932 = vld [vmem:[%s1928 + $0xc] sm:$0xf]
      %v1933 = vld [vmem:[%s1928 + $0x10] sm:$0xf]
      %v1934 = vld [vmem:[%s1928 + $0x14] sm:$0xf]
      %v1935 = vld [vmem:[%s1928 + $0x18] sm:$0xf]
      %v1936 = vld [vmem:[%s1928 + $0x1c] sm:$0xf]
      %v1937 = vld [vmem:[%s1928 + $0x20] sm:$0xf]
      %v1938 = vld [vmem:[%s1928 + $0x24] sm:$0xf]
      %v1939 = vld [vmem:[%s1928 + $0x28] sm:$0xf]
      %v1940 = vld [vmem:[%s1928 + $0x2c] sm:$0xf]
      %v1941 = vld [vmem:[%s1928 + $0x30] sm:$0xf]
      %v1942 = vld [vmem:[%s1928 + $0x34] sm:$0xf]
      %v1943 = vld [vmem:[%s1928 + $0x38] sm:$0xf]
      %v1944 = vld [vmem:[%s1928 + $0x3c] sm:$0xf]
      %v1961 = vunpack.c.l.b16 %v1929
      %v1962 = vunpack.c.l.b16 %v1930
      %v1963 = vunpack.c.l.b16 %v1931
      %v1964 = vunpack.c.l.b16 %v1932
      %v1965 = vunpack.c.l.b16 %v1933
      %v1966 = vunpack.c.l.b16 %v1934
      %v1967 = vunpack.c.l.b16 %v1935
      %v1968 = vunpack.c.l.b16 %v1936
      %v1969 = vunpack.c.l.b16 %v1937
      %v1970 = vunpack.c.l.b16 %v1938
      %v1971 = vunpack.c.l.b16 %v1939
      %v1972 = vunpack.c.l.b16 %v1940
      %v1973 = vunpack.c.l.b16 %v1941
      %v1974 = vunpack.c.l.b16 %v1942
      %v1975 = vunpack.c.l.b16 %v1943
      %v1976 = vunpack.c.l.b16 %v1944
      %v1977 = vpack.c.b16 %v1962, %v1961
      %v1978 = vpack.c.b16 %v1964, %v1963
      %v1979 = vpack.c.b16 %v1966, %v1965
      %v1980 = vpack.c.b16 %v1968, %v1967
      %v1981 = vpack.c.b16 %v1970, %v1969
      %v1982 = vpack.c.b16 %v1972, %v1971
      %v1983 = vpack.c.b16 %v1974, %v1973
      %v1984 = vpack.c.b16 %v1976, %v1975
      %1993 = vmatpush.bf16.msra.mxu0 %v1984
      %1994 = vmatpush.bf16.msra.mxu0 %v1983
      %1995 = vmatpush.bf16.msra.mxu0 %v1982
      %1996 = vmatpush.bf16.msra.mxu0 %v1981
      %1997 = vmatpush.bf16.msra.mxu0 %v1980
      %1998 = vmatpush.bf16.msra.mxu0 %v1979
      %1999 = vmatpush.bf16.msra.mxu0 %v1978
      %2000 = vmatpush.bf16.msra.mxu0 %v1977
      %2001 = vmatmul.bf16.gmra.mxu0 %v1924
      %v2002 = vpop.f32.mrf.mxu0
      %v2003 = vadd.f32 0.0, %v2002
      %v2004 = vpop.f32.mrf.mxu0
      %v2005 = vadd.f32 0.0, %v2004
      %2006 = vmatmul.bf16.gmra.mxu0 %v1925
      %v2007 = vpop.f32.mrf.mxu0
      %v2008 = vadd.f32 0.0, %v2007
      %v2009 = vpop.f32.mrf.mxu0
      %v2010 = vadd.f32 0.0, %v2009
      %2011 = vmatmul.bf16.gmra.mxu0 %v1926
      %v2012 = vpop.f32.mrf.mxu0
      %v2013 = vadd.f32 0.0, %v2012
      %v2014 = vpop.f32.mrf.mxu0
      %v2015 = vadd.f32 0.0, %v2014
      %2016 = vmatmul.bf16.gmra.mxu0 %v1927
      %v2017 = vpop.f32.mrf.mxu0
      %v2018 = vadd.f32 0.0, %v2017
      %v2019 = vpop.f32.mrf.mxu0
      %v2020 = vadd.f32 0.0, %v2019
      %2021 = vdwg.mxu0
      %v2022 = vadd.f32 %v1732, %v2003
      %v2023 = vadd.f32 %v1733, %v2005
      %v2024 = vadd.f32 %v1734, %v2008
      %v2025 = vadd.f32 %v1735, %v2010
      %v2026 = vadd.f32 %v1736, %v2013
      %v2027 = vadd.f32 %v1737, %v2015
      %v2028 = vadd.f32 %v1738, %v2018
      %v2029 = vadd.f32 %v1739, %v2020
      %v2030 = vld [vmem:[%s7] sm:$0x1]
      %v2032 = vperm.slane %v2030, 0
      %v2034 = vadd.f32 %v2022, %v2032
      %v2035 = vadd.f32 %v2023, %v2032
      %v2036 = vadd.f32 %v2024, %v2032
      %v2037 = vadd.f32 %v2025, %v2032
      %v2038 = vadd.f32 %v2026, %v2032
      %v2039 = vadd.f32 %v2027, %v2032
      %v2040 = vadd.f32 %v2028, %v2032
      %v2041 = vadd.f32 %v2029, %v2032
      %vm2042 = vcmp.ge.f32.partialorder %v2034, 0.0
      %vm2043 = vcmp.ge.f32.partialorder %v2035, 0.0
      %vm2044 = vcmp.ge.f32.partialorder %v2036, 0.0
      %vm2045 = vcmp.ge.f32.partialorder %v2037, 0.0
      %vm2046 = vcmp.ge.f32.partialorder %v2038, 0.0
      %vm2047 = vcmp.ge.f32.partialorder %v2039, 0.0
      %vm2048 = vcmp.ge.f32.partialorder %v2040, 0.0
      %vm2049 = vcmp.ge.f32.partialorder %v2041, 0.0
      %v2050 = vmul.f32 %v2034, 0.2
      %v2051 = vmul.f32 %v2035, 0.2
      %v2052 = vmul.f32 %v2036, 0.2
      %v2053 = vmul.f32 %v2037, 0.2
      %v2054 = vmul.f32 %v2038, 0.2
      %v2055 = vmul.f32 %v2039, 0.2
      %v2056 = vmul.f32 %v2040, 0.2
      %v2057 = vmul.f32 %v2041, 0.2
      %v2058 = vsel %vm2042, %v2034, %v2050
      %v2059 = vsel %vm2043, %v2035, %v2051
      %v2060 = vsel %vm2044, %v2036, %v2052
      %v2061 = vsel %vm2045, %v2037, %v2053
      %v2062 = vsel %vm2046, %v2038, %v2054
      %v2063 = vsel %vm2047, %v2039, %v2055
      %v2064 = vsel %vm2048, %v2040, %v2056
      %v2065 = vsel %vm2049, %v2041, %v2057
      %s2066 = scalar_lea.vmem [#allocation3], 24
      %2067 = vst.msk [vmem:[%s2066 + $0x1] sm:$0xff] %vm387, %v2058
      %2068 = vst.msk [vmem:[%s2066 + $0x19] sm:$0xff] %vm387, %v2059
      %2069 = vst.msk [vmem:[%s2066 + $0x31] sm:$0xff] %vm387, %v2060
      %2070 = vst.msk [vmem:[%s2066 + $0x49] sm:$0xff] %vm387, %v2061
      %2071 = vst.msk [vmem:[%s2066 + $0x61] sm:$0xff] %vm387, %v2062
      %2072 = vst.msk [vmem:[%s2066 + $0x79] sm:$0xff] %vm387, %v2063
      %2073 = vst.msk [vmem:[%s2066 + $0x91] sm:$0xff] %vm387, %v2064
      %2074 = vst.msk [vmem:[%s2066 + $0xa9] sm:$0xff] %vm387, %v2065
      %vm2075 = vcmask 517121
      %2076 = vst.msk [vmem:[%s2066 - $0x1] sm:$0x2] %vm2075, %v2058
      %2077 = vst.msk [vmem:[%s2066 + $0x17] sm:$0x2] %vm2075, %v2059
      %2078 = vst.msk [vmem:[%s2066 + $0x2f] sm:$0x2] %vm2075, %v2060
      %2079 = vst.msk [vmem:[%s2066 + $0x47] sm:$0x2] %vm2075, %v2061
      %2080 = vst.msk [vmem:[%s2066 + $0x5f] sm:$0x2] %vm2075, %v2062
      %2081 = vst.msk [vmem:[%s2066 + $0x77] sm:$0x2] %vm2075, %v2063
      %2082 = vst.msk [vmem:[%s2066 + $0x8f] sm:$0x2] %vm2075, %v2064
      %2083 = vst.msk [vmem:[%s2066 + $0xa7] sm:$0x2] %vm2075, %v2065
      %vm2084 = vcmask 522246
      %2085 = vst.msk [vmem:[%s2066 + $0x3] sm:$0x40] %vm2084, %v2058
      %2086 = vst.msk [vmem:[%s2066 + $0x1b] sm:$0x40] %vm2084, %v2059
      %2087 = vst.msk [vmem:[%s2066 + $0x33] sm:$0x40] %vm2084, %v2060
      %2088 = vst.msk [vmem:[%s2066 + $0x4b] sm:$0x40] %vm2084, %v2061
      %2089 = vst.msk [vmem:[%s2066 + $0x63] sm:$0x40] %vm2084, %v2062
      %2090 = vst.msk [vmem:[%s2066 + $0x7b] sm:$0x40] %vm2084, %v2063
      %2091 = vst.msk [vmem:[%s2066 + $0x93] sm:$0x40] %vm2084, %v2064
      %2092 = vst.msk [vmem:[%s2066 + $0xab] sm:$0x40] %vm2084, %v2065
      %s2093 = scalar_lea.vmem [#allocation3], 48
      %v2094 = vld [vmem:[%s2093] sm:$0xff]
      %v2095 = vld [vmem:[%s2093 + $0x8] sm:$0x3]
      %2096 = vst.msk [vmem:[#allocation3] sm:$0xff] %vm387, %v2094
      %vm2097 = vcmask 517120
      %2098 = vst.msk [vmem:[#allocation3 + $0x8] sm:$0x3] %vm2097, %v2095
      %s2099 = scalar_lea.vmem [#allocation3], 168
      %v2100 = vld [vmem:[%s2099] sm:$0xff]
      %v2101 = vld [vmem:[%s2099 + $0x8] sm:$0x3]
      %s2102 = scalar_lea.vmem [#allocation3], 216
      %2103 = vst.msk [vmem:[%s2102] sm:$0xff] %vm387, %v2100
      %2104 = vst.msk [vmem:[%s2102 + $0x8] sm:$0x3] %vm2097, %v2101
      %v2105 = vld [vmem:[#allocation3] ss:$2 sm:$0xff]
      %s2106 = scalar_lea.vmem [#allocation3], 48
      %v2107 = vld [vmem:[%s2106] ss:$2 sm:$0xff]
      %s2108 = scalar_lea.vmem [#allocation3], 96
      %v2109 = vld [vmem:[%s2108] ss:$2 sm:$0xff]
      %s2110 = scalar_lea.vmem [#allocation3], 144
      %v2111 = vld [vmem:[%s2110] ss:$2 sm:$0xff]
      %s2112 = scalar_lea.vmem [#allocation3], 1
      %v2113 = vld [vmem:[%s2112] ss:$2 sm:$0xff]
      %s2114 = scalar_lea.vmem [#allocation3], 49
      %v2115 = vld [vmem:[%s2114] ss:$2 sm:$0xff]
      %s2116 = scalar_lea.vmem [#allocation3], 97
      %v2117 = vld [vmem:[%s2116] ss:$2 sm:$0xff]
      %s2118 = scalar_lea.vmem [#allocation3], 145
      %v2119 = vld [vmem:[%s2118] ss:$2 sm:$0xff]
      %s2120 = scalar_lea.vmem [#allocation3], 2
      %v2121 = vld [vmem:[%s2120] ss:$2 sm:$0xff]
      %s2122 = scalar_lea.vmem [#allocation3], 50
      %v2123 = vld [vmem:[%s2122] ss:$2 sm:$0xff]
      %s2124 = scalar_lea.vmem [#allocation3], 98
      %v2125 = vld [vmem:[%s2124] ss:$2 sm:$0xff]
      %s2126 = scalar_lea.vmem [#allocation3], 146
      %v2127 = vld [vmem:[%s2126] ss:$2 sm:$0xff]
      %s2128 = scalar_lea.vmem [#allocation3], 3
      %v2129 = vld [vmem:[%s2128] ss:$2 sm:$0xff]
      %s2130 = scalar_lea.vmem [#allocation3], 51
      %v2131 = vld [vmem:[%s2130] ss:$2 sm:$0xff]
      %s2132 = scalar_lea.vmem [#allocation3], 99
      %v2133 = vld [vmem:[%s2132] ss:$2 sm:$0xff]
      %s2134 = scalar_lea.vmem [#allocation3], 147
      %v2135 = vld [vmem:[%s2134] ss:$2 sm:$0xff]
      %2140 = vrot.lane.b32.xlu0 %v2113, 64
      %v2141 = vpop.permute.xlu0 %2140
      %2142 = vrot.lane.b32.xlu0 %v2115, 64
      %v2143 = vpop.permute.xlu0 %2142
      %2144 = vrot.lane.b32.xlu0 %v2117, 64
      %v2145 = vpop.permute.xlu0 %2144
      %2146 = vrot.lane.b32.xlu0 %v2119, 64
      %v2147 = vpop.permute.xlu0 %2146
      %2156 = vrot.lane.b32.xlu0 %v2129, 64
      %v2157 = vpop.permute.xlu0 %2156
      %2158 = vrot.lane.b32.xlu0 %v2131, 64
      %v2159 = vpop.permute.xlu0 %2158
      %2160 = vrot.lane.b32.xlu0 %v2133, 64
      %v2161 = vpop.permute.xlu0 %2160
      %2162 = vrot.lane.b32.xlu0 %v2135, 64
      %v2163 = vpop.permute.xlu0 %2162
      %v2168 = vsel %vm387, %v2105, %v2141
      %v2169 = vsel %vm387, %v2107, %v2143
      %v2170 = vsel %vm387, %v2109, %v2145
      %v2171 = vsel %vm387, %v2111, %v2147
      %v2172 = vsel %vm387, %v2121, %v2157
      %v2173 = vsel %vm387, %v2123, %v2159
      %v2174 = vsel %vm387, %v2125, %v2161
      %v2175 = vsel %vm387, %v2127, %v2163
      %v2176 = vpack.c.bf16 %v2169, %v2168
      %v2177 = vpack.c.bf16 %v2173, %v2172
      %v2178 = vpack.c.bf16 %v2171, %v2170
      %v2179 = vpack.c.bf16 %v2175, %v2174
      %v2180 = vld [vmem:[%s3] sm:$0xf]
      %v2181 = vld [vmem:[%s3 + $0x4] sm:$0xf]
      %v2182 = vld [vmem:[%s3 + $0x8] sm:$0xf]
      %v2183 = vld [vmem:[%s3 + $0xc] sm:$0xf]
      %v2184 = vld [vmem:[%s3 + $0x10] sm:$0xf]
      %v2185 = vld [vmem:[%s3 + $0x14] sm:$0xf]
      %v2186 = vld [vmem:[%s3 + $0x18] sm:$0xf]
      %v2187 = vld [vmem:[%s3 + $0x1c] sm:$0xf]
      %v2188 = vld [vmem:[%s3 + $0x20] sm:$0xf]
      %v2189 = vld [vmem:[%s3 + $0x24] sm:$0xf]
      %v2190 = vld [vmem:[%s3 + $0x28] sm:$0xf]
      %v2191 = vld [vmem:[%s3 + $0x2c] sm:$0xf]
      %v2192 = vld [vmem:[%s3 + $0x30] sm:$0xf]
      %v2193 = vld [vmem:[%s3 + $0x34] sm:$0xf]
      %v2194 = vld [vmem:[%s3 + $0x38] sm:$0xf]
      %v2195 = vld [vmem:[%s3 + $0x3c] sm:$0xf]
      %v2196 = vld [vmem:[%s3 + $0x40] sm:$0xf]
      %v2197 = vld [vmem:[%s3 + $0x44] sm:$0xf]
      %v2198 = vld [vmem:[%s3 + $0x48] sm:$0xf]
      %v2199 = vld [vmem:[%s3 + $0x4c] sm:$0xf]
      %v2200 = vld [vmem:[%s3 + $0x50] sm:$0xf]
      %v2201 = vld [vmem:[%s3 + $0x54] sm:$0xf]
      %v2202 = vld [vmem:[%s3 + $0x58] sm:$0xf]
      %v2203 = vld [vmem:[%s3 + $0x5c] sm:$0xf]
      %v2204 = vld [vmem:[%s3 + $0x60] sm:$0xf]
      %v2205 = vld [vmem:[%s3 + $0x64] sm:$0xf]
      %v2206 = vld [vmem:[%s3 + $0x68] sm:$0xf]
      %v2207 = vld [vmem:[%s3 + $0x6c] sm:$0xf]
      %v2208 = vld [vmem:[%s3 + $0x70] sm:$0xf]
      %v2209 = vld [vmem:[%s3 + $0x74] sm:$0xf]
      %v2210 = vld [vmem:[%s3 + $0x78] sm:$0xf]
      %v2211 = vld [vmem:[%s3 + $0x7c] sm:$0xf]
      %v2212 = vld [vmem:[%s2066] ss:$2 sm:$0xff]
      %s2213 = scalar_lea.vmem %s2066, 48 [#allocation3]
      %v2214 = vld [vmem:[%s2213] ss:$2 sm:$0xff]
      %s2215 = scalar_lea.vmem %s2066, 96 [#allocation3]
      %v2216 = vld [vmem:[%s2215] ss:$2 sm:$0xff]
      %s2217 = scalar_lea.vmem %s2066, 144 [#allocation3]
      %v2218 = vld [vmem:[%s2217] ss:$2 sm:$0xff]
      %s2219 = scalar_lea.vmem %s2066, 1 [#allocation3]
      %v2220 = vld [vmem:[%s2219] ss:$2 sm:$0xff]
      %s2221 = scalar_lea.vmem %s2066, 49 [#allocation3]
      %v2222 = vld [vmem:[%s2221] ss:$2 sm:$0xff]
      %s2223 = scalar_lea.vmem %s2066, 97 [#allocation3]
      %v2224 = vld [vmem:[%s2223] ss:$2 sm:$0xff]
      %s2225 = scalar_lea.vmem %s2066, 145 [#allocation3]
      %v2226 = vld [vmem:[%s2225] ss:$2 sm:$0xff]
      %s2227 = scalar_lea.vmem %s2066, 2 [#allocation3]
      %v2228 = vld [vmem:[%s2227] ss:$2 sm:$0xff]
      %s2229 = scalar_lea.vmem %s2066, 50 [#allocation3]
      %v2230 = vld [vmem:[%s2229] ss:$2 sm:$0xff]
      %s2231 = scalar_lea.vmem %s2066, 98 [#allocation3]
      %v2232 = vld [vmem:[%s2231] ss:$2 sm:$0xff]
      %s2233 = scalar_lea.vmem %s2066, 146 [#allocation3]
      %v2234 = vld [vmem:[%s2233] ss:$2 sm:$0xff]
      %s2235 = scalar_lea.vmem %s2066, 3 [#allocation3]
      %v2236 = vld [vmem:[%s2235] ss:$2 sm:$0xff]
      %s2237 = scalar_lea.vmem %s2066, 51 [#allocation3]
      %v2238 = vld [vmem:[%s2237] ss:$2 sm:$0xff]
      %s2239 = scalar_lea.vmem %s2066, 99 [#allocation3]
      %v2240 = vld [vmem:[%s2239] ss:$2 sm:$0xff]
      %s2241 = scalar_lea.vmem %s2066, 147 [#allocation3]
      %v2242 = vld [vmem:[%s2241] ss:$2 sm:$0xff]
      %2247 = vrot.lane.b32.xlu0 %v2220, 64
      %v2248 = vpop.permute.xlu0 %2247
      %2249 = vrot.lane.b32.xlu0 %v2222, 64
      %v2250 = vpop.permute.xlu0 %2249
      %2251 = vrot.lane.b32.xlu0 %v2224, 64
      %v2252 = vpop.permute.xlu0 %2251
      %2253 = vrot.lane.b32.xlu0 %v2226, 64
      %v2254 = vpop.permute.xlu0 %2253
      %2263 = vrot.lane.b32.xlu0 %v2236, 64
      %v2264 = vpop.permute.xlu0 %2263
      %2265 = vrot.lane.b32.xlu0 %v2238, 64
      %v2266 = vpop.permute.xlu0 %2265
      %2267 = vrot.lane.b32.xlu0 %v2240, 64
      %v2268 = vpop.permute.xlu0 %2267
      %2269 = vrot.lane.b32.xlu0 %v2242, 64
      %v2270 = vpop.permute.xlu0 %2269
      %v2275 = vsel %vm387, %v2212, %v2248
      %v2276 = vsel %vm387, %v2214, %v2250
      %v2277 = vsel %vm387, %v2216, %v2252
      %v2278 = vsel %vm387, %v2218, %v2254
      %v2279 = vsel %vm387, %v2228, %v2264
      %v2280 = vsel %vm387, %v2230, %v2266
      %v2281 = vsel %vm387, %v2232, %v2268
      %v2282 = vsel %vm387, %v2234, %v2270
      %v2283 = vpack.c.bf16 %v2276, %v2275
      %v2284 = vpack.c.bf16 %v2280, %v2279
      %v2285 = vpack.c.bf16 %v2278, %v2277
      %v2286 = vpack.c.bf16 %v2282, %v2281
      %s2287 = scalar_lea.vmem %s3, 128
      %v2288 = vld [vmem:[%s2287] sm:$0xf]
      %v2289 = vld [vmem:[%s2287 + $0x4] sm:$0xf]
      %v2290 = vld [vmem:[%s2287 + $0x8] sm:$0xf]
      %v2291 = vld [vmem:[%s2287 + $0xc] sm:$0xf]
      %v2292 = vld [vmem:[%s2287 + $0x10] sm:$0xf]
      %v2293 = vld [vmem:[%s2287 + $0x14] sm:$0xf]
      %v2294 = vld [vmem:[%s2287 + $0x18] sm:$0xf]
      %v2295 = vld [vmem:[%s2287 + $0x1c] sm:$0xf]
      %v2296 = vld [vmem:[%s2287 + $0x20] sm:$0xf]
      %v2297 = vld [vmem:[%s2287 + $0x24] sm:$0xf]
      %v2298 = vld [vmem:[%s2287 + $0x28] sm:$0xf]
      %v2299 = vld [vmem:[%s2287 + $0x2c] sm:$0xf]
      %v2300 = vld [vmem:[%s2287 + $0x30] sm:$0xf]
      %v2301 = vld [vmem:[%s2287 + $0x34] sm:$0xf]
      %v2302 = vld [vmem:[%s2287 + $0x38] sm:$0xf]
      %v2303 = vld [vmem:[%s2287 + $0x3c] sm:$0xf]
      %v2304 = vld [vmem:[%s2287 + $0x40] sm:$0xf]
      %v2305 = vld [vmem:[%s2287 + $0x44] sm:$0xf]
      %v2306 = vld [vmem:[%s2287 + $0x48] sm:$0xf]
      %v2307 = vld [vmem:[%s2287 + $0x4c] sm:$0xf]
      %v2308 = vld [vmem:[%s2287 + $0x50] sm:$0xf]
      %v2309 = vld [vmem:[%s2287 + $0x54] sm:$0xf]
      %v2310 = vld [vmem:[%s2287 + $0x58] sm:$0xf]
      %v2311 = vld [vmem:[%s2287 + $0x5c] sm:$0xf]
      %v2312 = vld [vmem:[%s2287 + $0x60] sm:$0xf]
      %v2313 = vld [vmem:[%s2287 + $0x64] sm:$0xf]
      %v2314 = vld [vmem:[%s2287 + $0x68] sm:$0xf]
      %v2315 = vld [vmem:[%s2287 + $0x6c] sm:$0xf]
      %v2316 = vld [vmem:[%s2287 + $0x70] sm:$0xf]
      %v2317 = vld [vmem:[%s2287 + $0x74] sm:$0xf]
      %v2318 = vld [vmem:[%s2287 + $0x78] sm:$0xf]
      %v2319 = vld [vmem:[%s2287 + $0x7c] sm:$0xf]
      %v2352 = vunpack.c.l.b16 %v2288
      %v2353 = vunpack.c.l.b16 %v2289
      %v2354 = vunpack.c.l.b16 %v2290
      %v2355 = vunpack.c.l.b16 %v2291
      %v2356 = vunpack.c.l.b16 %v2292
      %v2357 = vunpack.c.l.b16 %v2293
      %v2358 = vunpack.c.l.b16 %v2294
      %v2359 = vunpack.c.l.b16 %v2295
      %v2360 = vunpack.c.l.b16 %v2296
      %v2361 = vunpack.c.l.b16 %v2297
      %v2362 = vunpack.c.l.b16 %v2298
      %v2363 = vunpack.c.l.b16 %v2299
      %v2364 = vunpack.c.l.b16 %v2300
      %v2365 = vunpack.c.l.b16 %v2301
      %v2366 = vunpack.c.l.b16 %v2302
      %v2367 = vunpack.c.l.b16 %v2303
      %v2368 = vunpack.c.l.b16 %v2304
      %v2369 = vunpack.c.l.b16 %v2305
      %v2370 = vunpack.c.l.b16 %v2306
      %v2371 = vunpack.c.l.b16 %v2307
      %v2372 = vunpack.c.l.b16 %v2308
      %v2373 = vunpack.c.l.b16 %v2309
      %v2374 = vunpack.c.l.b16 %v2310
      %v2375 = vunpack.c.l.b16 %v2311
      %v2376 = vunpack.c.l.b16 %v2312
      %v2377 = vunpack.c.l.b16 %v2313
      %v2378 = vunpack.c.l.b16 %v2314
      %v2379 = vunpack.c.l.b16 %v2315
      %v2380 = vunpack.c.l.b16 %v2316
      %v2381 = vunpack.c.l.b16 %v2317
      %v2382 = vunpack.c.l.b16 %v2318
      %v2383 = vunpack.c.l.b16 %v2319
      %v2384 = vpack.c.b16 %v2353, %v2352
      %v2385 = vpack.c.b16 %v2355, %v2354
      %v2386 = vpack.c.b16 %v2357, %v2356
      %v2387 = vpack.c.b16 %v2359, %v2358
      %v2388 = vpack.c.b16 %v2361, %v2360
      %v2389 = vpack.c.b16 %v2363, %v2362
      %v2390 = vpack.c.b16 %v2365, %v2364
      %v2391 = vpack.c.b16 %v2367, %v2366
      %v2392 = vpack.c.b16 %v2369, %v2368
      %v2393 = vpack.c.b16 %v2371, %v2370
      %v2394 = vpack.c.b16 %v2373, %v2372
      %v2395 = vpack.c.b16 %v2375, %v2374
      %v2396 = vpack.c.b16 %v2377, %v2376
      %v2397 = vpack.c.b16 %v2379, %v2378
      %v2398 = vpack.c.b16 %v2381, %v2380
      %v2399 = vpack.c.b16 %v2383, %v2382
      %2416 = vmatpush.bf16.msra.mxu0 %v2391
      %2417 = vmatpush.bf16.msra.mxu0 %v2390
      %2418 = vmatpush.bf16.msra.mxu0 %v2389
      %2419 = vmatpush.bf16.msra.mxu0 %v2388
      %2420 = vmatpush.bf16.msra.mxu0 %v2387
      %2421 = vmatpush.bf16.msra.mxu0 %v2386
      %2422 = vmatpush.bf16.msra.mxu0 %v2385
      %2423 = vmatpush.bf16.msra.mxu0 %v2384
      %2424 = vmatmul.bf16.gmra.mxu0 %v2283
      %v2425 = vpop.f32.mrf.mxu0
      %v2426 = vadd.f32 0.0, %v2425
      %v2427 = vpop.f32.mrf.mxu0
      %v2428 = vadd.f32 0.0, %v2427
      %2429 = vmatmul.bf16.gmra.mxu0 %v2285
      %v2430 = vpop.f32.mrf.mxu0
      %v2431 = vadd.f32 0.0, %v2430
      %v2432 = vpop.f32.mrf.mxu0
      %v2433 = vadd.f32 0.0, %v2432
      %2434 = vdwg.mxu0
      %2435 = vmatpush.bf16.msra.mxu0 %v2399
      %2436 = vmatpush.bf16.msra.mxu0 %v2398
      %2437 = vmatpush.bf16.msra.mxu0 %v2397
      %2438 = vmatpush.bf16.msra.mxu0 %v2396
      %2439 = vmatpush.bf16.msra.mxu0 %v2395
      %2440 = vmatpush.bf16.msra.mxu0 %v2394
      %2441 = vmatpush.bf16.msra.mxu0 %v2393
      %2442 = vmatpush.bf16.msra.mxu0 %v2392
      %2443 = vmatmul.bf16.gmra.mxu0 %v2284
      %v2444 = vpop.f32.mrf.mxu0
      %v2445 = vadd.f32 %v2426, %v2444
      %v2446 = vpop.f32.mrf.mxu0
      %v2447 = vadd.f32 %v2428, %v2446
      %2448 = vmatmul.bf16.gmra.mxu0 %v2286
      %v2449 = vpop.f32.mrf.mxu0
      %v2450 = vadd.f32 %v2431, %v2449
      %v2451 = vpop.f32.mrf.mxu0
      %v2452 = vadd.f32 %v2433, %v2451
      %2453 = vdwg.mxu0
      %v2486 = vunpack.c.l.b16 %v2180
      %v2487 = vunpack.c.l.b16 %v2181
      %v2488 = vunpack.c.l.b16 %v2182
      %v2489 = vunpack.c.l.b16 %v2183
      %v2490 = vunpack.c.l.b16 %v2184
      %v2491 = vunpack.c.l.b16 %v2185
      %v2492 = vunpack.c.l.b16 %v2186
      %v2493 = vunpack.c.l.b16 %v2187
      %v2494 = vunpack.c.l.b16 %v2188
      %v2495 = vunpack.c.l.b16 %v2189
      %v2496 = vunpack.c.l.b16 %v2190
      %v2497 = vunpack.c.l.b16 %v2191
      %v2498 = vunpack.c.l.b16 %v2192
      %v2499 = vunpack.c.l.b16 %v2193
      %v2500 = vunpack.c.l.b16 %v2194
      %v2501 = vunpack.c.l.b16 %v2195
      %v2502 = vunpack.c.l.b16 %v2196
      %v2503 = vunpack.c.l.b16 %v2197
      %v2504 = vunpack.c.l.b16 %v2198
      %v2505 = vunpack.c.l.b16 %v2199
      %v2506 = vunpack.c.l.b16 %v2200
      %v2507 = vunpack.c.l.b16 %v2201
      %v2508 = vunpack.c.l.b16 %v2202
      %v2509 = vunpack.c.l.b16 %v2203
      %v2510 = vunpack.c.l.b16 %v2204
      %v2511 = vunpack.c.l.b16 %v2205
      %v2512 = vunpack.c.l.b16 %v2206
      %v2513 = vunpack.c.l.b16 %v2207
      %v2514 = vunpack.c.l.b16 %v2208
      %v2515 = vunpack.c.l.b16 %v2209
      %v2516 = vunpack.c.l.b16 %v2210
      %v2517 = vunpack.c.l.b16 %v2211
      %v2518 = vpack.c.b16 %v2487, %v2486
      %v2519 = vpack.c.b16 %v2489, %v2488
      %v2520 = vpack.c.b16 %v2491, %v2490
      %v2521 = vpack.c.b16 %v2493, %v2492
      %v2522 = vpack.c.b16 %v2495, %v2494
      %v2523 = vpack.c.b16 %v2497, %v2496
      %v2524 = vpack.c.b16 %v2499, %v2498
      %v2525 = vpack.c.b16 %v2501, %v2500
      %v2526 = vpack.c.b16 %v2503, %v2502
      %v2527 = vpack.c.b16 %v2505, %v2504
      %v2528 = vpack.c.b16 %v2507, %v2506
      %v2529 = vpack.c.b16 %v2509, %v2508
      %v2530 = vpack.c.b16 %v2511, %v2510
      %v2531 = vpack.c.b16 %v2513, %v2512
      %v2532 = vpack.c.b16 %v2515, %v2514
      %v2533 = vpack.c.b16 %v2517, %v2516
      %2550 = vmatpush.bf16.msra.mxu0 %v2525
      %2551 = vmatpush.bf16.msra.mxu0 %v2524
      %2552 = vmatpush.bf16.msra.mxu0 %v2523
      %2553 = vmatpush.bf16.msra.mxu0 %v2522
      %2554 = vmatpush.bf16.msra.mxu0 %v2521
      %2555 = vmatpush.bf16.msra.mxu0 %v2520
      %2556 = vmatpush.bf16.msra.mxu0 %v2519
      %2557 = vmatpush.bf16.msra.mxu0 %v2518
      %2558 = vmatmul.bf16.gmra.mxu0 %v2176
      %v2559 = vpop.f32.mrf.mxu0
      %v2560 = vadd.f32 %v2445, %v2559
      %v2561 = vpop.f32.mrf.mxu0
      %v2562 = vadd.f32 %v2447, %v2561
      %2563 = vmatmul.bf16.gmra.mxu0 %v2178
      %v2564 = vpop.f32.mrf.mxu0
      %v2565 = vadd.f32 %v2450, %v2564
      %v2566 = vpop.f32.mrf.mxu0
      %v2567 = vadd.f32 %v2452, %v2566
      %2568 = vdwg.mxu0
      %2569 = vmatpush.bf16.msra.mxu0 %v2533
      %2570 = vmatpush.bf16.msra.mxu0 %v2532
      %2571 = vmatpush.bf16.msra.mxu0 %v2531
      %2572 = vmatpush.bf16.msra.mxu0 %v2530
      %2573 = vmatpush.bf16.msra.mxu0 %v2529
      %2574 = vmatpush.bf16.msra.mxu0 %v2528
      %2575 = vmatpush.bf16.msra.mxu0 %v2527
      %2576 = vmatpush.bf16.msra.mxu0 %v2526
      %2577 = vmatmul.bf16.gmra.mxu0 %v2177
      %v2578 = vpop.f32.mrf.mxu0
      %v2579 = vadd.f32 %v2560, %v2578
      %v2580 = vpop.f32.mrf.mxu0
      %v2581 = vadd.f32 %v2562, %v2580
      %2582 = vmatmul.bf16.gmra.mxu0 %v2179
      %v2583 = vpop.f32.mrf.mxu0
      %v2584 = vadd.f32 %v2565, %v2583
      %v2585 = vpop.f32.mrf.mxu0
      %v2586 = vadd.f32 %v2567, %v2585
      %2587 = vdwg.mxu0
      %v2588 = vld [vmem:[%s2093] ss:$2 sm:$0xff]
      %s2589 = scalar_lea.vmem %s2093, 48 [#allocation3]
      %v2590 = vld [vmem:[%s2589] ss:$2 sm:$0xff]
      %s2591 = scalar_lea.vmem %s2093, 96 [#allocation3]
      %v2592 = vld [vmem:[%s2591] ss:$2 sm:$0xff]
      %s2593 = scalar_lea.vmem %s2093, 144 [#allocation3]
      %v2594 = vld [vmem:[%s2593] ss:$2 sm:$0xff]
      %s2595 = scalar_lea.vmem %s2093, 1 [#allocation3]
      %v2596 = vld [vmem:[%s2595] ss:$2 sm:$0xff]
      %s2597 = scalar_lea.vmem %s2093, 49 [#allocation3]
      %v2598 = vld [vmem:[%s2597] ss:$2 sm:$0xff]
      %s2599 = scalar_lea.vmem %s2093, 97 [#allocation3]
      %v2600 = vld [vmem:[%s2599] ss:$2 sm:$0xff]
      %s2601 = scalar_lea.vmem %s2093, 145 [#allocation3]
      %v2602 = vld [vmem:[%s2601] ss:$2 sm:$0xff]
      %s2603 = scalar_lea.vmem %s2093, 2 [#allocation3]
      %v2604 = vld [vmem:[%s2603] ss:$2 sm:$0xff]
      %s2605 = scalar_lea.vmem %s2093, 50 [#allocation3]
      %v2606 = vld [vmem:[%s2605] ss:$2 sm:$0xff]
      %s2607 = scalar_lea.vmem %s2093, 98 [#allocation3]
      %v2608 = vld [vmem:[%s2607] ss:$2 sm:$0xff]
      %s2609 = scalar_lea.vmem %s2093, 146 [#allocation3]
      %v2610 = vld [vmem:[%s2609] ss:$2 sm:$0xff]
      %s2611 = scalar_lea.vmem %s2093, 3 [#allocation3]
      %v2612 = vld [vmem:[%s2611] ss:$2 sm:$0xff]
      %s2613 = scalar_lea.vmem %s2093, 51 [#allocation3]
      %v2614 = vld [vmem:[%s2613] ss:$2 sm:$0xff]
      %s2615 = scalar_lea.vmem %s2093, 99 [#allocation3]
      %v2616 = vld [vmem:[%s2615] ss:$2 sm:$0xff]
      %s2617 = scalar_lea.vmem %s2093, 147 [#allocation3]
      %v2618 = vld [vmem:[%s2617] ss:$2 sm:$0xff]
      %2623 = vrot.lane.b32.xlu0 %v2596, 64
      %v2624 = vpop.permute.xlu0 %2623
      %2625 = vrot.lane.b32.xlu0 %v2598, 64
      %v2626 = vpop.permute.xlu0 %2625
      %2627 = vrot.lane.b32.xlu0 %v2600, 64
      %v2628 = vpop.permute.xlu0 %2627
      %2629 = vrot.lane.b32.xlu0 %v2602, 64
      %v2630 = vpop.permute.xlu0 %2629
      %2639 = vrot.lane.b32.xlu0 %v2612, 64
      %v2640 = vpop.permute.xlu0 %2639
      %2641 = vrot.lane.b32.xlu0 %v2614, 64
      %v2642 = vpop.permute.xlu0 %2641
      %2643 = vrot.lane.b32.xlu0 %v2616, 64
      %v2644 = vpop.permute.xlu0 %2643
      %2645 = vrot.lane.b32.xlu0 %v2618, 64
      %v2646 = vpop.permute.xlu0 %2645
      %v2651 = vsel %vm387, %v2588, %v2624
      %v2652 = vsel %vm387, %v2590, %v2626
      %v2653 = vsel %vm387, %v2592, %v2628
      %v2654 = vsel %vm387, %v2594, %v2630
      %v2655 = vsel %vm387, %v2604, %v2640
      %v2656 = vsel %vm387, %v2606, %v2642
      %v2657 = vsel %vm387, %v2608, %v2644
      %v2658 = vsel %vm387, %v2610, %v2646
      %v2659 = vpack.c.bf16 %v2652, %v2651
      %v2660 = vpack.c.bf16 %v2656, %v2655
      %v2661 = vpack.c.bf16 %v2654, %v2653
      %v2662 = vpack.c.bf16 %v2658, %v2657
      %s2663 = scalar_lea.vmem %s3, 256
      %v2664 = vld [vmem:[%s2663] sm:$0xf]
      %v2665 = vld [vmem:[%s2663 + $0x4] sm:$0xf]
      %v2666 = vld [vmem:[%s2663 + $0x8] sm:$0xf]
      %v2667 = vld [vmem:[%s2663 + $0xc] sm:$0xf]
      %v2668 = vld [vmem:[%s2663 + $0x10] sm:$0xf]
      %v2669 = vld [vmem:[%s2663 + $0x14] sm:$0xf]
      %v2670 = vld [vmem:[%s2663 + $0x18] sm:$0xf]
      %v2671 = vld [vmem:[%s2663 + $0x1c] sm:$0xf]
      %v2672 = vld [vmem:[%s2663 + $0x20] sm:$0xf]
      %v2673 = vld [vmem:[%s2663 + $0x24] sm:$0xf]
      %v2674 = vld [vmem:[%s2663 + $0x28] sm:$0xf]
      %v2675 = vld [vmem:[%s2663 + $0x2c] sm:$0xf]
      %v2676 = vld [vmem:[%s2663 + $0x30] sm:$0xf]
      %v2677 = vld [vmem:[%s2663 + $0x34] sm:$0xf]
      %v2678 = vld [vmem:[%s2663 + $0x38] sm:$0xf]
      %v2679 = vld [vmem:[%s2663 + $0x3c] sm:$0xf]
      %v2680 = vld [vmem:[%s2663 + $0x40] sm:$0xf]
      %v2681 = vld [vmem:[%s2663 + $0x44] sm:$0xf]
      %v2682 = vld [vmem:[%s2663 + $0x48] sm:$0xf]
      %v2683 = vld [vmem:[%s2663 + $0x4c] sm:$0xf]
      %v2684 = vld [vmem:[%s2663 + $0x50] sm:$0xf]
      %v2685 = vld [vmem:[%s2663 + $0x54] sm:$0xf]
      %v2686 = vld [vmem:[%s2663 + $0x58] sm:$0xf]
      %v2687 = vld [vmem:[%s2663 + $0x5c] sm:$0xf]
      %v2688 = vld [vmem:[%s2663 + $0x60] sm:$0xf]
      %v2689 = vld [vmem:[%s2663 + $0x64] sm:$0xf]
      %v2690 = vld [vmem:[%s2663 + $0x68] sm:$0xf]
      %v2691 = vld [vmem:[%s2663 + $0x6c] sm:$0xf]
      %v2692 = vld [vmem:[%s2663 + $0x70] sm:$0xf]
      %v2693 = vld [vmem:[%s2663 + $0x74] sm:$0xf]
      %v2694 = vld [vmem:[%s2663 + $0x78] sm:$0xf]
      %v2695 = vld [vmem:[%s2663 + $0x7c] sm:$0xf]
      %v2728 = vunpack.c.l.b16 %v2664
      %v2729 = vunpack.c.l.b16 %v2665
      %v2730 = vunpack.c.l.b16 %v2666
      %v2731 = vunpack.c.l.b16 %v2667
      %v2732 = vunpack.c.l.b16 %v2668
      %v2733 = vunpack.c.l.b16 %v2669
      %v2734 = vunpack.c.l.b16 %v2670
      %v2735 = vunpack.c.l.b16 %v2671
      %v2736 = vunpack.c.l.b16 %v2672
      %v2737 = vunpack.c.l.b16 %v2673
      %v2738 = vunpack.c.l.b16 %v2674
      %v2739 = vunpack.c.l.b16 %v2675
      %v2740 = vunpack.c.l.b16 %v2676
      %v2741 = vunpack.c.l.b16 %v2677
      %v2742 = vunpack.c.l.b16 %v2678
      %v2743 = vunpack.c.l.b16 %v2679
      %v2744 = vunpack.c.l.b16 %v2680
      %v2745 = vunpack.c.l.b16 %v2681
      %v2746 = vunpack.c.l.b16 %v2682
      %v2747 = vunpack.c.l.b16 %v2683
      %v2748 = vunpack.c.l.b16 %v2684
      %v2749 = vunpack.c.l.b16 %v2685
      %v2750 = vunpack.c.l.b16 %v2686
      %v2751 = vunpack.c.l.b16 %v2687
      %v2752 = vunpack.c.l.b16 %v2688
      %v2753 = vunpack.c.l.b16 %v2689
      %v2754 = vunpack.c.l.b16 %v2690
      %v2755 = vunpack.c.l.b16 %v2691
      %v2756 = vunpack.c.l.b16 %v2692
      %v2757 = vunpack.c.l.b16 %v2693
      %v2758 = vunpack.c.l.b16 %v2694
      %v2759 = vunpack.c.l.b16 %v2695
      %v2760 = vpack.c.b16 %v2729, %v2728
      %v2761 = vpack.c.b16 %v2731, %v2730
      %v2762 = vpack.c.b16 %v2733, %v2732
      %v2763 = vpack.c.b16 %v2735, %v2734
      %v2764 = vpack.c.b16 %v2737, %v2736
      %v2765 = vpack.c.b16 %v2739, %v2738
      %v2766 = vpack.c.b16 %v2741, %v2740
      %v2767 = vpack.c.b16 %v2743, %v2742
      %v2768 = vpack.c.b16 %v2745, %v2744
      %v2769 = vpack.c.b16 %v2747, %v2746
      %v2770 = vpack.c.b16 %v2749, %v2748
      %v2771 = vpack.c.b16 %v2751, %v2750
      %v2772 = vpack.c.b16 %v2753, %v2752
      %v2773 = vpack.c.b16 %v2755, %v2754
      %v2774 = vpack.c.b16 %v2757, %v2756
      %v2775 = vpack.c.b16 %v2759, %v2758
      %2792 = vmatpush.bf16.msra.mxu0 %v2767
      %2793 = vmatpush.bf16.msra.mxu0 %v2766
      %2794 = vmatpush.bf16.msra.mxu0 %v2765
      %2795 = vmatpush.bf16.msra.mxu0 %v2764
      %2796 = vmatpush.bf16.msra.mxu0 %v2763
      %2797 = vmatpush.bf16.msra.mxu0 %v2762
      %2798 = vmatpush.bf16.msra.mxu0 %v2761
      %2799 = vmatpush.bf16.msra.mxu0 %v2760
      %2800 = vmatmul.bf16.gmra.mxu0 %v2659
      %v2801 = vpop.f32.mrf.mxu0
      %v2802 = vadd.f32 0.0, %v2801
      %v2803 = vpop.f32.mrf.mxu0
      %v2804 = vadd.f32 0.0, %v2803
      %2805 = vmatmul.bf16.gmra.mxu0 %v2661
      %v2806 = vpop.f32.mrf.mxu0
      %v2807 = vadd.f32 0.0, %v2806
      %v2808 = vpop.f32.mrf.mxu0
      %v2809 = vadd.f32 0.0, %v2808
      %2810 = vdwg.mxu0
      %2811 = vmatpush.bf16.msra.mxu0 %v2775
      %2812 = vmatpush.bf16.msra.mxu0 %v2774
      %2813 = vmatpush.bf16.msra.mxu0 %v2773
      %2814 = vmatpush.bf16.msra.mxu0 %v2772
      %2815 = vmatpush.bf16.msra.mxu0 %v2771
      %2816 = vmatpush.bf16.msra.mxu0 %v2770
      %2817 = vmatpush.bf16.msra.mxu0 %v2769
      %2818 = vmatpush.bf16.msra.mxu0 %v2768
      %2819 = vmatmul.bf16.gmra.mxu0 %v2660
      %v2820 = vpop.f32.mrf.mxu0
      %v2821 = vadd.f32 %v2802, %v2820
      %v2822 = vpop.f32.mrf.mxu0
      %v2823 = vadd.f32 %v2804, %v2822
      %2824 = vmatmul.bf16.gmra.mxu0 %v2662
      %v2825 = vpop.f32.mrf.mxu0
      %v2826 = vadd.f32 %v2807, %v2825
      %v2827 = vpop.f32.mrf.mxu0
      %v2828 = vadd.f32 %v2809, %v2827
      %2829 = vdwg.mxu0
      %v2830 = vadd.f32 %v2579, %v2821
      %v2831 = vadd.f32 %v2581, %v2823
      %v2832 = vadd.f32 %v2584, %v2826
      %v2833 = vadd.f32 %v2586, %v2828
      %s2834 = scalar_lea.vmem [#allocation3], 72
      %v2835 = vld [vmem:[%s2834] ss:$2 sm:$0xff]
      %s2836 = scalar_lea.vmem %s2834, 48 [#allocation3]
      %v2837 = vld [vmem:[%s2836] ss:$2 sm:$0xff]
      %s2838 = scalar_lea.vmem %s2834, 96 [#allocation3]
      %v2839 = vld [vmem:[%s2838] ss:$2 sm:$0xff]
      %s2840 = scalar_lea.vmem %s2834, 144 [#allocation3]
      %v2841 = vld [vmem:[%s2840] ss:$2 sm:$0xff]
      %s2842 = scalar_lea.vmem %s2834, 1 [#allocation3]
      %v2843 = vld [vmem:[%s2842] ss:$2 sm:$0xff]
      %s2844 = scalar_lea.vmem %s2834, 49 [#allocation3]
      %v2845 = vld [vmem:[%s2844] ss:$2 sm:$0xff]
      %s2846 = scalar_lea.vmem %s2834, 97 [#allocation3]
      %v2847 = vld [vmem:[%s2846] ss:$2 sm:$0xff]
      %s2848 = scalar_lea.vmem %s2834, 145 [#allocation3]
      %v2849 = vld [vmem:[%s2848] ss:$2 sm:$0xff]
      %s2850 = scalar_lea.vmem %s2834, 2 [#allocation3]
      %v2851 = vld [vmem:[%s2850] ss:$2 sm:$0xff]
      %s2852 = scalar_lea.vmem %s2834, 50 [#allocation3]
      %v2853 = vld [vmem:[%s2852] ss:$2 sm:$0xff]
      %s2854 = scalar_lea.vmem %s2834, 98 [#allocation3]
      %v2855 = vld [vmem:[%s2854] ss:$2 sm:$0xff]
      %s2856 = scalar_lea.vmem %s2834, 146 [#allocation3]
      %v2857 = vld [vmem:[%s2856] ss:$2 sm:$0xff]
      %s2858 = scalar_lea.vmem %s2834, 3 [#allocation3]
      %v2859 = vld [vmem:[%s2858] ss:$2 sm:$0xff]
      %s2860 = scalar_lea.vmem %s2834, 51 [#allocation3]
      %v2861 = vld [vmem:[%s2860] ss:$2 sm:$0xff]
      %s2862 = scalar_lea.vmem %s2834, 99 [#allocation3]
      %v2863 = vld [vmem:[%s2862] ss:$2 sm:$0xff]
      %s2864 = scalar_lea.vmem %s2834, 147 [#allocation3]
      %v2865 = vld [vmem:[%s2864] ss:$2 sm:$0xff]
      %2870 = vrot.lane.b32.xlu0 %v2843, 64
      %v2871 = vpop.permute.xlu0 %2870
      %2872 = vrot.lane.b32.xlu0 %v2845, 64
      %v2873 = vpop.permute.xlu0 %2872
      %2874 = vrot.lane.b32.xlu0 %v2847, 64
      %v2875 = vpop.permute.xlu0 %2874
      %2876 = vrot.lane.b32.xlu0 %v2849, 64
      %v2877 = vpop.permute.xlu0 %2876
      %2886 = vrot.lane.b32.xlu0 %v2859, 64
      %v2887 = vpop.permute.xlu0 %2886
      %2888 = vrot.lane.b32.xlu0 %v2861, 64
      %v2889 = vpop.permute.xlu0 %2888
      %2890 = vrot.lane.b32.xlu0 %v2863, 64
      %v2891 = vpop.permute.xlu0 %2890
      %2892 = vrot.lane.b32.xlu0 %v2865, 64
      %v2893 = vpop.permute.xlu0 %2892
      %v2898 = vsel %vm387, %v2835, %v2871
      %v2899 = vsel %vm387, %v2837, %v2873
      %v2900 = vsel %vm387, %v2839, %v2875
      %v2901 = vsel %vm387, %v2841, %v2877
      %v2902 = vsel %vm387, %v2851, %v2887
      %v2903 = vsel %vm387, %v2853, %v2889
      %v2904 = vsel %vm387, %v2855, %v2891
      %v2905 = vsel %vm387, %v2857, %v2893
      %v2906 = vpack.c.bf16 %v2899, %v2898
      %v2907 = vpack.c.bf16 %v2903, %v2902
      %v2908 = vpack.c.bf16 %v2901, %v2900
      %v2909 = vpack.c.bf16 %v2905, %v2904
      %s2910 = scalar_lea.vmem %s3, 384
      %v2911 = vld [vmem:[%s2910] sm:$0xf]
      %v2912 = vld [vmem:[%s2910 + $0x4] sm:$0xf]
      %v2913 = vld [vmem:[%s2910 + $0x8] sm:$0xf]
      %v2914 = vld [vmem:[%s2910 + $0xc] sm:$0xf]
      %v2915 = vld [vmem:[%s2910 + $0x10] sm:$0xf]
      %v2916 = vld [vmem:[%s2910 + $0x14] sm:$0xf]
      %v2917 = vld [vmem:[%s2910 + $0x18] sm:$0xf]
      %v2918 = vld [vmem:[%s2910 + $0x1c] sm:$0xf]
      %v2919 = vld [vmem:[%s2910 + $0x20] sm:$0xf]
      %v2920 = vld [vmem:[%s2910 + $0x24] sm:$0xf]
      %v2921 = vld [vmem:[%s2910 + $0x28] sm:$0xf]
      %v2922 = vld [vmem:[%s2910 + $0x2c] sm:$0xf]
      %v2923 = vld [vmem:[%s2910 + $0x30] sm:$0xf]
      %v2924 = vld [vmem:[%s2910 + $0x34] sm:$0xf]
      %v2925 = vld [vmem:[%s2910 + $0x38] sm:$0xf]
      %v2926 = vld [vmem:[%s2910 + $0x3c] sm:$0xf]
      %v2927 = vld [vmem:[%s2910 + $0x40] sm:$0xf]
      %v2928 = vld [vmem:[%s2910 + $0x44] sm:$0xf]
      %v2929 = vld [vmem:[%s2910 + $0x48] sm:$0xf]
      %v2930 = vld [vmem:[%s2910 + $0x4c] sm:$0xf]
      %v2931 = vld [vmem:[%s2910 + $0x50] sm:$0xf]
      %v2932 = vld [vmem:[%s2910 + $0x54] sm:$0xf]
      %v2933 = vld [vmem:[%s2910 + $0x58] sm:$0xf]
      %v2934 = vld [vmem:[%s2910 + $0x5c] sm:$0xf]
      %v2935 = vld [vmem:[%s2910 + $0x60] sm:$0xf]
      %v2936 = vld [vmem:[%s2910 + $0x64] sm:$0xf]
      %v2937 = vld [vmem:[%s2910 + $0x68] sm:$0xf]
      %v2938 = vld [vmem:[%s2910 + $0x6c] sm:$0xf]
      %v2939 = vld [vmem:[%s2910 + $0x70] sm:$0xf]
      %v2940 = vld [vmem:[%s2910 + $0x74] sm:$0xf]
      %v2941 = vld [vmem:[%s2910 + $0x78] sm:$0xf]
      %v2942 = vld [vmem:[%s2910 + $0x7c] sm:$0xf]
      %v2975 = vunpack.c.l.b16 %v2911
      %v2976 = vunpack.c.l.b16 %v2912
      %v2977 = vunpack.c.l.b16 %v2913
      %v2978 = vunpack.c.l.b16 %v2914
      %v2979 = vunpack.c.l.b16 %v2915
      %v2980 = vunpack.c.l.b16 %v2916
      %v2981 = vunpack.c.l.b16 %v2917
      %v2982 = vunpack.c.l.b16 %v2918
      %v2983 = vunpack.c.l.b16 %v2919
      %v2984 = vunpack.c.l.b16 %v2920
      %v2985 = vunpack.c.l.b16 %v2921
      %v2986 = vunpack.c.l.b16 %v2922
      %v2987 = vunpack.c.l.b16 %v2923
      %v2988 = vunpack.c.l.b16 %v2924
      %v2989 = vunpack.c.l.b16 %v2925
      %v2990 = vunpack.c.l.b16 %v2926
      %v2991 = vunpack.c.l.b16 %v2927
      %v2992 = vunpack.c.l.b16 %v2928
      %v2993 = vunpack.c.l.b16 %v2929
      %v2994 = vunpack.c.l.b16 %v2930
      %v2995 = vunpack.c.l.b16 %v2931
      %v2996 = vunpack.c.l.b16 %v2932
      %v2997 = vunpack.c.l.b16 %v2933
      %v2998 = vunpack.c.l.b16 %v2934
      %v2999 = vunpack.c.l.b16 %v2935
      %v3000 = vunpack.c.l.b16 %v2936
      %v3001 = vunpack.c.l.b16 %v2937
      %v3002 = vunpack.c.l.b16 %v2938
      %v3003 = vunpack.c.l.b16 %v2939
      %v3004 = vunpack.c.l.b16 %v2940
      %v3005 = vunpack.c.l.b16 %v2941
      %v3006 = vunpack.c.l.b16 %v2942
      %v3007 = vpack.c.b16 %v2976, %v2975
      %v3008 = vpack.c.b16 %v2978, %v2977
      %v3009 = vpack.c.b16 %v2980, %v2979
      %v3010 = vpack.c.b16 %v2982, %v2981
      %v3011 = vpack.c.b16 %v2984, %v2983
      %v3012 = vpack.c.b16 %v2986, %v2985
      %v3013 = vpack.c.b16 %v2988, %v2987
      %v3014 = vpack.c.b16 %v2990, %v2989
      %v3015 = vpack.c.b16 %v2992, %v2991
      %v3016 = vpack.c.b16 %v2994, %v2993
      %v3017 = vpack.c.b16 %v2996, %v2995
      %v3018 = vpack.c.b16 %v2998, %v2997
      %v3019 = vpack.c.b16 %v3000, %v2999
      %v3020 = vpack.c.b16 %v3002, %v3001
      %v3021 = vpack.c.b16 %v3004, %v3003
      %v3022 = vpack.c.b16 %v3006, %v3005
      %3039 = vmatpush.bf16.msra.mxu0 %v3014
      %3040 = vmatpush.bf16.msra.mxu0 %v3013
      %3041 = vmatpush.bf16.msra.mxu0 %v3012
      %3042 = vmatpush.bf16.msra.mxu0 %v3011
      %3043 = vmatpush.bf16.msra.mxu0 %v3010
      %3044 = vmatpush.bf16.msra.mxu0 %v3009
      %3045 = vmatpush.bf16.msra.mxu0 %v3008
      %3046 = vmatpush.bf16.msra.mxu0 %v3007
      %3047 = vmatmul.bf16.gmra.mxu0 %v2906
      %v3048 = vpop.f32.mrf.mxu0
      %v3049 = vadd.f32 0.0, %v3048
      %v3050 = vpop.f32.mrf.mxu0
      %v3051 = vadd.f32 0.0, %v3050
      %3052 = vmatmul.bf16.gmra.mxu0 %v2908
      %v3053 = vpop.f32.mrf.mxu0
      %v3054 = vadd.f32 0.0, %v3053
      %v3055 = vpop.f32.mrf.mxu0
      %v3056 = vadd.f32 0.0, %v3055
      %3057 = vdwg.mxu0
      %3058 = vmatpush.bf16.msra.mxu0 %v3022
      %3059 = vmatpush.bf16.msra.mxu0 %v3021
      %3060 = vmatpush.bf16.msra.mxu0 %v3020
      %3061 = vmatpush.bf16.msra.mxu0 %v3019
      %3062 = vmatpush.bf16.msra.mxu0 %v3018
      %3063 = vmatpush.bf16.msra.mxu0 %v3017
      %3064 = vmatpush.bf16.msra.mxu0 %v3016
      %3065 = vmatpush.bf16.msra.mxu0 %v3015
      %3066 = vmatmul.bf16.gmra.mxu0 %v2907
      %v3067 = vpop.f32.mrf.mxu0
      %v3068 = vadd.f32 %v3049, %v3067
      %v3069 = vpop.f32.mrf.mxu0
      %v3070 = vadd.f32 %v3051, %v3069
      %3071 = vmatmul.bf16.gmra.mxu0 %v2909
      %v3072 = vpop.f32.mrf.mxu0
      %v3073 = vadd.f32 %v3054, %v3072
      %v3074 = vpop.f32.mrf.mxu0
      %v3075 = vadd.f32 %v3056, %v3074
      %3076 = vdwg.mxu0
      %v3077 = vadd.f32 %v2830, %v3068
      %v3078 = vadd.f32 %v2831, %v3070
      %v3079 = vadd.f32 %v2832, %v3073
      %v3080 = vadd.f32 %v2833, %v3075
      %v3081 = vld [vmem:[%s8] sm:$0x1]
      %v3083 = vperm.slane %v3081, 0
      %v3085 = vadd.f32 %v3077, %v3083
      %v3086 = vadd.f32 %v3078, %v3083
      %v3087 = vadd.f32 %v3079, %v3083
      %v3088 = vadd.f32 %v3080, %v3083
      %vm3089 = vcmp.ge.f32.partialorder %v3085, 0.0
      %vm3090 = vcmp.ge.f32.partialorder %v3086, 0.0
      %vm3091 = vcmp.ge.f32.partialorder %v3087, 0.0
      %vm3092 = vcmp.ge.f32.partialorder %v3088, 0.0
      %v3093 = vmul.f32 %v3085, 0.2
      %v3094 = vmul.f32 %v3086, 0.2
      %v3095 = vmul.f32 %v3087, 0.2
      %v3096 = vmul.f32 %v3088, 0.2
      %v3097 = vsel %vm3089, %v3085, %v3093
      %v3098 = vsel %vm3090, %v3086, %v3094
      %v3099 = vsel %vm3091, %v3087, %v3095
      %v3100 = vsel %vm3092, %v3088, %v3096
      %s3101 = scalar_lea.vmem [#allocation4], 16
      %3102 = vst [vmem:[%s3101 + $0x1] sm:$0xf] %v3097
      %3103 = vst [vmem:[%s3101 + $0x11] sm:$0xf] %v3098
      %3104 = vst [vmem:[%s3101 + $0x21] sm:$0xf] %v3099
      %3105 = vst [vmem:[%s3101 + $0x31] sm:$0xf] %v3100
      %3106 = vst [vmem:[%s3101 - $0x1] sm:$0x2] %v3097
      %3107 = vst [vmem:[%s3101 + $0xf] sm:$0x2] %v3098
      %3108 = vst [vmem:[%s3101 + $0x1f] sm:$0x2] %v3099
      %3109 = vst [vmem:[%s3101 + $0x2f] sm:$0x2] %v3100
      %3110 = vst [vmem:[%s3101 + $0x3] sm:$0x4] %v3097
      %3111 = vst [vmem:[%s3101 + $0x13] sm:$0x4] %v3098
      %3112 = vst [vmem:[%s3101 + $0x23] sm:$0x4] %v3099
      %3113 = vst [vmem:[%s3101 + $0x33] sm:$0x4] %v3100
      %s3114 = scalar_lea.vmem [#allocation4], 32
      %v3115 = vld [vmem:[%s3114] sm:$0x3f]
      %3116 = vst [vmem:[#allocation4] sm:$0x3f] %v3115
      %s3117 = scalar_lea.vmem [#allocation4], 48
      %v3118 = vld [vmem:[%s3117] sm:$0x3f]
      %s3119 = scalar_lea.vmem [#allocation4], 80
      %3120 = vst [vmem:[%s3119] sm:$0x3f] %v3118
      %v3121 = vld [vmem:[#allocation4] sm:$0xff]
      %v3122 = vld [vmem:[#allocation4 + $0x10] sm:$0xff]
      %v3123 = vld [vmem:[#allocation4 + $0x20] sm:$0xff]
      %v3124 = vld [vmem:[#allocation4 + $0x1] sm:$0xff]
      %v3125 = vld [vmem:[#allocation4 + $0x11] sm:$0xff]
      %v3126 = vld [vmem:[#allocation4 + $0x21] sm:$0xff]
      %v3127 = vld [vmem:[#allocation4 + $0x2] sm:$0xff]
      %v3128 = vld [vmem:[#allocation4 + $0x12] sm:$0xff]
      %v3129 = vld [vmem:[#allocation4 + $0x22] sm:$0xff]
      %v3130 = vld [vmem:[#allocation4 + $0x3] sm:$0xff]
      %v3131 = vld [vmem:[#allocation4 + $0x13] sm:$0xff]
      %v3132 = vld [vmem:[#allocation4 + $0x23] sm:$0xff]
      %v3133 = vpack.c.bf16 %v3122, %v3121
      %v3134 = vpack.c.bf16 %v3125, %v3124
      %v3135 = vpack.c.bf16 %v3128, %v3127
      %v3136 = vpack.c.bf16 %v3131, %v3130
      %v3137 = vpack.c.bf16 %v3123, %v3123
      %v3138 = vpack.c.bf16 %v3126, %v3126
      %v3139 = vpack.c.bf16 %v3129, %v3129
      %v3140 = vpack.c.bf16 %v3132, %v3132
      %v3141 = vld [vmem:[%s4] sm:$0xff]
      %v3142 = vld [vmem:[%s4 + $0x8] sm:$0xff]
      %v3143 = vld [vmem:[%s4 + $0x10] sm:$0xff]
      %v3144 = vld [vmem:[%s4 + $0x18] sm:$0xff]
      %v3145 = vld [vmem:[%s4 + $0x20] sm:$0xff]
      %v3146 = vld [vmem:[%s4 + $0x28] sm:$0xff]
      %v3147 = vld [vmem:[%s4 + $0x30] sm:$0xff]
      %v3148 = vld [vmem:[%s4 + $0x38] sm:$0xff]
      %v3149 = vld [vmem:[%s4 + $0x40] sm:$0xff]
      %v3150 = vld [vmem:[%s4 + $0x48] sm:$0xff]
      %v3151 = vld [vmem:[%s4 + $0x50] sm:$0xff]
      %v3152 = vld [vmem:[%s4 + $0x58] sm:$0xff]
      %v3153 = vld [vmem:[%s4 + $0x60] sm:$0xff]
      %v3154 = vld [vmem:[%s4 + $0x68] sm:$0xff]
      %v3155 = vld [vmem:[%s4 + $0x70] sm:$0xff]
      %v3156 = vld [vmem:[%s4 + $0x78] sm:$0xff]
      %v3157 = vld [vmem:[%s4 + $0x80] sm:$0xff]
      %v3158 = vld [vmem:[%s4 + $0x88] sm:$0xff]
      %v3159 = vld [vmem:[%s4 + $0x90] sm:$0xff]
      %v3160 = vld [vmem:[%s4 + $0x98] sm:$0xff]
      %v3161 = vld [vmem:[%s4 + $0xa0] sm:$0xff]
      %v3162 = vld [vmem:[%s4 + $0xa8] sm:$0xff]
      %v3163 = vld [vmem:[%s4 + $0xb0] sm:$0xff]
      %v3164 = vld [vmem:[%s4 + $0xb8] sm:$0xff]
      %v3165 = vld [vmem:[%s4 + $0xc0] sm:$0xff]
      %v3166 = vld [vmem:[%s4 + $0xc8] sm:$0xff]
      %v3167 = vld [vmem:[%s4 + $0xd0] sm:$0xff]
      %v3168 = vld [vmem:[%s4 + $0xd8] sm:$0xff]
      %v3169 = vld [vmem:[%s4 + $0xe0] sm:$0xff]
      %v3170 = vld [vmem:[%s4 + $0xe8] sm:$0xff]
      %v3171 = vld [vmem:[%s4 + $0xf0] sm:$0xff]
      %v3172 = vld [vmem:[%s4 + $0xf8] sm:$0xff]
      %v3173 = vld [vmem:[%s4 + $0x100] sm:$0xff]
      %v3174 = vld [vmem:[%s4 + $0x108] sm:$0xff]
      %v3175 = vld [vmem:[%s4 + $0x110] sm:$0xff]
      %v3176 = vld [vmem:[%s4 + $0x118] sm:$0xff]
      %v3177 = vld [vmem:[%s4 + $0x120] sm:$0xff]
      %v3178 = vld [vmem:[%s4 + $0x128] sm:$0xff]
      %v3179 = vld [vmem:[%s4 + $0x130] sm:$0xff]
      %v3180 = vld [vmem:[%s4 + $0x138] sm:$0xff]
      %v3181 = vld [vmem:[%s4 + $0x140] sm:$0xff]
      %v3182 = vld [vmem:[%s4 + $0x148] sm:$0xff]
      %v3183 = vld [vmem:[%s4 + $0x150] sm:$0xff]
      %v3184 = vld [vmem:[%s4 + $0x158] sm:$0xff]
      %v3185 = vld [vmem:[%s4 + $0x160] sm:$0xff]
      %v3186 = vld [vmem:[%s4 + $0x168] sm:$0xff]
      %v3187 = vld [vmem:[%s4 + $0x170] sm:$0xff]
      %v3188 = vld [vmem:[%s4 + $0x178] sm:$0xff]
      %v3189 = vld [vmem:[%s4 + $0x180] sm:$0xff]
      %v3190 = vld [vmem:[%s4 + $0x188] sm:$0xff]
      %v3191 = vld [vmem:[%s4 + $0x190] sm:$0xff]
      %v3192 = vld [vmem:[%s4 + $0x198] sm:$0xff]
      %v3193 = vld [vmem:[%s4 + $0x1a0] sm:$0xff]
      %v3194 = vld [vmem:[%s4 + $0x1a8] sm:$0xff]
      %v3195 = vld [vmem:[%s4 + $0x1b0] sm:$0xff]
      %v3196 = vld [vmem:[%s4 + $0x1b8] sm:$0xff]
      %v3197 = vld [vmem:[%s4 + $0x1c0] sm:$0xff]
      %v3198 = vld [vmem:[%s4 + $0x1c8] sm:$0xff]
      %v3199 = vld [vmem:[%s4 + $0x1d0] sm:$0xff]
      %v3200 = vld [vmem:[%s4 + $0x1d8] sm:$0xff]
      %v3201 = vld [vmem:[%s4 + $0x1e0] sm:$0xff]
      %v3202 = vld [vmem:[%s4 + $0x1e8] sm:$0xff]
      %v3203 = vld [vmem:[%s4 + $0x1f0] sm:$0xff]
      %v3204 = vld [vmem:[%s4 + $0x1f8] sm:$0xff]
      %v3205 = vld [vmem:[%s3101] sm:$0xff]
      %v3206 = vld [vmem:[%s3101 + $0x10] sm:$0xff]
      %v3207 = vld [vmem:[%s3101 + $0x20] sm:$0xff]
      %v3208 = vld [vmem:[%s3101 + $0x1] sm:$0xff]
      %v3209 = vld [vmem:[%s3101 + $0x11] sm:$0xff]
      %v3210 = vld [vmem:[%s3101 + $0x21] sm:$0xff]
      %v3211 = vld [vmem:[%s3101 + $0x2] sm:$0xff]
      %v3212 = vld [vmem:[%s3101 + $0x12] sm:$0xff]
      %v3213 = vld [vmem:[%s3101 + $0x22] sm:$0xff]
      %v3214 = vld [vmem:[%s3101 + $0x3] sm:$0xff]
      %v3215 = vld [vmem:[%s3101 + $0x13] sm:$0xff]
      %v3216 = vld [vmem:[%s3101 + $0x23] sm:$0xff]
      %v3217 = vpack.c.bf16 %v3206, %v3205
      %v3218 = vpack.c.bf16 %v3209, %v3208
      %v3219 = vpack.c.bf16 %v3212, %v3211
      %v3220 = vpack.c.bf16 %v3215, %v3214
      %v3221 = vpack.c.bf16 %v3207, %v3207
      %v3222 = vpack.c.bf16 %v3210, %v3210
      %v3223 = vpack.c.bf16 %v3213, %v3213
      %v3224 = vpack.c.bf16 %v3216, %v3216
      %s3225 = scalar_lea.vmem %s4, 512
      %v3226 = vld [vmem:[%s3225] sm:$0xff]
      %v3227 = vld [vmem:[%s3225 + $0x8] sm:$0xff]
      %v3228 = vld [vmem:[%s3225 + $0x10] sm:$0xff]
      %v3229 = vld [vmem:[%s3225 + $0x18] sm:$0xff]
      %v3230 = vld [vmem:[%s3225 + $0x20] sm:$0xff]
      %v3231 = vld [vmem:[%s3225 + $0x28] sm:$0xff]
      %v3232 = vld [vmem:[%s3225 + $0x30] sm:$0xff]
      %v3233 = vld [vmem:[%s3225 + $0x38] sm:$0xff]
      %v3234 = vld [vmem:[%s3225 + $0x40] sm:$0xff]
      %v3235 = vld [vmem:[%s3225 + $0x48] sm:$0xff]
      %v3236 = vld [vmem:[%s3225 + $0x50] sm:$0xff]
      %v3237 = vld [vmem:[%s3225 + $0x58] sm:$0xff]
      %v3238 = vld [vmem:[%s3225 + $0x60] sm:$0xff]
      %v3239 = vld [vmem:[%s3225 + $0x68] sm:$0xff]
      %v3240 = vld [vmem:[%s3225 + $0x70] sm:$0xff]
      %v3241 = vld [vmem:[%s3225 + $0x78] sm:$0xff]
      %v3242 = vld [vmem:[%s3225 + $0x80] sm:$0xff]
      %v3243 = vld [vmem:[%s3225 + $0x88] sm:$0xff]
      %v3244 = vld [vmem:[%s3225 + $0x90] sm:$0xff]
      %v3245 = vld [vmem:[%s3225 + $0x98] sm:$0xff]
      %v3246 = vld [vmem:[%s3225 + $0xa0] sm:$0xff]
      %v3247 = vld [vmem:[%s3225 + $0xa8] sm:$0xff]
      %v3248 = vld [vmem:[%s3225 + $0xb0] sm:$0xff]
      %v3249 = vld [vmem:[%s3225 + $0xb8] sm:$0xff]
      %v3250 = vld [vmem:[%s3225 + $0xc0] sm:$0xff]
      %v3251 = vld [vmem:[%s3225 + $0xc8] sm:$0xff]
      %v3252 = vld [vmem:[%s3225 + $0xd0] sm:$0xff]
      %v3253 = vld [vmem:[%s3225 + $0xd8] sm:$0xff]
      %v3254 = vld [vmem:[%s3225 + $0xe0] sm:$0xff]
      %v3255 = vld [vmem:[%s3225 + $0xe8] sm:$0xff]
      %v3256 = vld [vmem:[%s3225 + $0xf0] sm:$0xff]
      %v3257 = vld [vmem:[%s3225 + $0xf8] sm:$0xff]
      %v3258 = vld [vmem:[%s3225 + $0x100] sm:$0xff]
      %v3259 = vld [vmem:[%s3225 + $0x108] sm:$0xff]
      %v3260 = vld [vmem:[%s3225 + $0x110] sm:$0xff]
      %v3261 = vld [vmem:[%s3225 + $0x118] sm:$0xff]
      %v3262 = vld [vmem:[%s3225 + $0x120] sm:$0xff]
      %v3263 = vld [vmem:[%s3225 + $0x128] sm:$0xff]
      %v3264 = vld [vmem:[%s3225 + $0x130] sm:$0xff]
      %v3265 = vld [vmem:[%s3225 + $0x138] sm:$0xff]
      %v3266 = vld [vmem:[%s3225 + $0x140] sm:$0xff]
      %v3267 = vld [vmem:[%s3225 + $0x148] sm:$0xff]
      %v3268 = vld [vmem:[%s3225 + $0x150] sm:$0xff]
      %v3269 = vld [vmem:[%s3225 + $0x158] sm:$0xff]
      %v3270 = vld [vmem:[%s3225 + $0x160] sm:$0xff]
      %v3271 = vld [vmem:[%s3225 + $0x168] sm:$0xff]
      %v3272 = vld [vmem:[%s3225 + $0x170] sm:$0xff]
      %v3273 = vld [vmem:[%s3225 + $0x178] sm:$0xff]
      %v3274 = vld [vmem:[%s3225 + $0x180] sm:$0xff]
      %v3275 = vld [vmem:[%s3225 + $0x188] sm:$0xff]
      %v3276 = vld [vmem:[%s3225 + $0x190] sm:$0xff]
      %v3277 = vld [vmem:[%s3225 + $0x198] sm:$0xff]
      %v3278 = vld [vmem:[%s3225 + $0x1a0] sm:$0xff]
      %v3279 = vld [vmem:[%s3225 + $0x1a8] sm:$0xff]
      %v3280 = vld [vmem:[%s3225 + $0x1b0] sm:$0xff]
      %v3281 = vld [vmem:[%s3225 + $0x1b8] sm:$0xff]
      %v3282 = vld [vmem:[%s3225 + $0x1c0] sm:$0xff]
      %v3283 = vld [vmem:[%s3225 + $0x1c8] sm:$0xff]
      %v3284 = vld [vmem:[%s3225 + $0x1d0] sm:$0xff]
      %v3285 = vld [vmem:[%s3225 + $0x1d8] sm:$0xff]
      %v3286 = vld [vmem:[%s3225 + $0x1e0] sm:$0xff]
      %v3287 = vld [vmem:[%s3225 + $0x1e8] sm:$0xff]
      %v3288 = vld [vmem:[%s3225 + $0x1f0] sm:$0xff]
      %v3289 = vld [vmem:[%s3225 + $0x1f8] sm:$0xff]
      %v3354 = vunpack.c.l.b16 %v3226
      %v3355 = vunpack.c.h.b16 %v3226
      %v3356 = vunpack.c.l.b16 %v3227
      %v3357 = vunpack.c.h.b16 %v3227
      %v3358 = vunpack.c.l.b16 %v3228
      %v3359 = vunpack.c.h.b16 %v3228
      %v3360 = vunpack.c.l.b16 %v3229
      %v3361 = vunpack.c.h.b16 %v3229
      %v3362 = vunpack.c.l.b16 %v3230
      %v3363 = vunpack.c.h.b16 %v3230
      %v3364 = vunpack.c.l.b16 %v3231
      %v3365 = vunpack.c.h.b16 %v3231
      %v3366 = vunpack.c.l.b16 %v3232
      %v3367 = vunpack.c.h.b16 %v3232
      %v3368 = vunpack.c.l.b16 %v3233
      %v3369 = vunpack.c.h.b16 %v3233
      %v3370 = vunpack.c.l.b16 %v3234
      %v3371 = vunpack.c.h.b16 %v3234
      %v3372 = vunpack.c.l.b16 %v3235
      %v3373 = vunpack.c.h.b16 %v3235
      %v3374 = vunpack.c.l.b16 %v3236
      %v3375 = vunpack.c.h.b16 %v3236
      %v3376 = vunpack.c.l.b16 %v3237
      %v3377 = vunpack.c.h.b16 %v3237
      %v3378 = vunpack.c.l.b16 %v3238
      %v3379 = vunpack.c.h.b16 %v3238
      %v3380 = vunpack.c.l.b16 %v3239
      %v3381 = vunpack.c.h.b16 %v3239
      %v3382 = vunpack.c.l.b16 %v3240
      %v3383 = vunpack.c.h.b16 %v3240
      %v3384 = vunpack.c.l.b16 %v3241
      %v3385 = vunpack.c.h.b16 %v3241
      %v3386 = vunpack.c.l.b16 %v3242
      %v3387 = vunpack.c.h.b16 %v3242
      %v3388 = vunpack.c.l.b16 %v3243
      %v3389 = vunpack.c.h.b16 %v3243
      %v3390 = vunpack.c.l.b16 %v3244
      %v3391 = vunpack.c.h.b16 %v3244
      %v3392 = vunpack.c.l.b16 %v3245
      %v3393 = vunpack.c.h.b16 %v3245
      %v3394 = vunpack.c.l.b16 %v3246
      %v3395 = vunpack.c.h.b16 %v3246
      %v3396 = vunpack.c.l.b16 %v3247
      %v3397 = vunpack.c.h.b16 %v3247
      %v3398 = vunpack.c.l.b16 %v3248
      %v3399 = vunpack.c.h.b16 %v3248
      %v3400 = vunpack.c.l.b16 %v3249
      %v3401 = vunpack.c.h.b16 %v3249
      %v3402 = vunpack.c.l.b16 %v3250
      %v3403 = vunpack.c.h.b16 %v3250
      %v3404 = vunpack.c.l.b16 %v3251
      %v3405 = vunpack.c.h.b16 %v3251
      %v3406 = vunpack.c.l.b16 %v3252
      %v3407 = vunpack.c.h.b16 %v3252
      %v3408 = vunpack.c.l.b16 %v3253
      %v3409 = vunpack.c.h.b16 %v3253
      %v3410 = vunpack.c.l.b16 %v3254
      %v3411 = vunpack.c.h.b16 %v3254
      %v3412 = vunpack.c.l.b16 %v3255
      %v3413 = vunpack.c.h.b16 %v3255
      %v3414 = vunpack.c.l.b16 %v3256
      %v3415 = vunpack.c.h.b16 %v3256
      %v3416 = vunpack.c.l.b16 %v3257
      %v3417 = vunpack.c.h.b16 %v3257
      %v3418 = vunpack.c.l.b16 %v3258
      %v3419 = vunpack.c.h.b16 %v3258
      %v3420 = vunpack.c.l.b16 %v3259
      %v3421 = vunpack.c.h.b16 %v3259
      %v3422 = vunpack.c.l.b16 %v3260
      %v3423 = vunpack.c.h.b16 %v3260
      %v3424 = vunpack.c.l.b16 %v3261
      %v3425 = vunpack.c.h.b16 %v3261
      %v3426 = vunpack.c.l.b16 %v3262
      %v3427 = vunpack.c.h.b16 %v3262
      %v3428 = vunpack.c.l.b16 %v3263
      %v3429 = vunpack.c.h.b16 %v3263
      %v3430 = vunpack.c.l.b16 %v3264
      %v3431 = vunpack.c.h.b16 %v3264
      %v3432 = vunpack.c.l.b16 %v3265
      %v3433 = vunpack.c.h.b16 %v3265
      %v3434 = vunpack.c.l.b16 %v3266
      %v3435 = vunpack.c.h.b16 %v3266
      %v3436 = vunpack.c.l.b16 %v3267
      %v3437 = vunpack.c.h.b16 %v3267
      %v3438 = vunpack.c.l.b16 %v3268
      %v3439 = vunpack.c.h.b16 %v3268
      %v3440 = vunpack.c.l.b16 %v3269
      %v3441 = vunpack.c.h.b16 %v3269
      %v3442 = vunpack.c.l.b16 %v3270
      %v3443 = vunpack.c.h.b16 %v3270
      %v3444 = vunpack.c.l.b16 %v3271
      %v3445 = vunpack.c.h.b16 %v3271
      %v3446 = vunpack.c.l.b16 %v3272
      %v3447 = vunpack.c.h.b16 %v3272
      %v3448 = vunpack.c.l.b16 %v3273
      %v3449 = vunpack.c.h.b16 %v3273
      %v3450 = vunpack.c.l.b16 %v3274
      %v3451 = vunpack.c.h.b16 %v3274
      %v3452 = vunpack.c.l.b16 %v3275
      %v3453 = vunpack.c.h.b16 %v3275
      %v3454 = vunpack.c.l.b16 %v3276
      %v3455 = vunpack.c.h.b16 %v3276
      %v3456 = vunpack.c.l.b16 %v3277
      %v3457 = vunpack.c.h.b16 %v3277
      %v3458 = vunpack.c.l.b16 %v3278
      %v3459 = vunpack.c.h.b16 %v3278
      %v3460 = vunpack.c.l.b16 %v3279
      %v3461 = vunpack.c.h.b16 %v3279
      %v3462 = vunpack.c.l.b16 %v3280
      %v3463 = vunpack.c.h.b16 %v3280
      %v3464 = vunpack.c.l.b16 %v3281
      %v3465 = vunpack.c.h.b16 %v3281
      %v3466 = vunpack.c.l.b16 %v3282
      %v3467 = vunpack.c.h.b16 %v3282
      %v3468 = vunpack.c.l.b16 %v3283
      %v3469 = vunpack.c.h.b16 %v3283
      %v3470 = vunpack.c.l.b16 %v3284
      %v3471 = vunpack.c.h.b16 %v3284
      %v3472 = vunpack.c.l.b16 %v3285
      %v3473 = vunpack.c.h.b16 %v3285
      %v3474 = vunpack.c.l.b16 %v3286
      %v3475 = vunpack.c.h.b16 %v3286
      %v3476 = vunpack.c.l.b16 %v3287
      %v3477 = vunpack.c.h.b16 %v3287
      %v3478 = vunpack.c.l.b16 %v3288
      %v3479 = vunpack.c.h.b16 %v3288
      %v3480 = vunpack.c.l.b16 %v3289
      %v3481 = vunpack.c.h.b16 %v3289
      %v3482 = vpack.c.b16 %v3356, %v3354
      %v3483 = vpack.c.b16 %v3357, %v3355
      %v3484 = vpack.c.b16 %v3360, %v3358
      %v3485 = vpack.c.b16 %v3361, %v3359
      %v3486 = vpack.c.b16 %v3364, %v3362
      %v3487 = vpack.c.b16 %v3365, %v3363
      %v3488 = vpack.c.b16 %v3368, %v3366
      %v3489 = vpack.c.b16 %v3369, %v3367
      %v3490 = vpack.c.b16 %v3372, %v3370
      %v3491 = vpack.c.b16 %v3373, %v3371
      %v3492 = vpack.c.b16 %v3376, %v3374
      %v3493 = vpack.c.b16 %v3377, %v3375
      %v3494 = vpack.c.b16 %v3380, %v3378
      %v3495 = vpack.c.b16 %v3381, %v3379
      %v3496 = vpack.c.b16 %v3384, %v3382
      %v3497 = vpack.c.b16 %v3385, %v3383
      %v3498 = vpack.c.b16 %v3388, %v3386
      %v3499 = vpack.c.b16 %v3389, %v3387
      %v3500 = vpack.c.b16 %v3392, %v3390
      %v3501 = vpack.c.b16 %v3393, %v3391
      %v3502 = vpack.c.b16 %v3396, %v3394
      %v3503 = vpack.c.b16 %v3397, %v3395
      %v3504 = vpack.c.b16 %v3400, %v3398
      %v3505 = vpack.c.b16 %v3401, %v3399
      %v3506 = vpack.c.b16 %v3404, %v3402
      %v3507 = vpack.c.b16 %v3405, %v3403
      %v3508 = vpack.c.b16 %v3408, %v3406
      %v3509 = vpack.c.b16 %v3409, %v3407
      %v3510 = vpack.c.b16 %v3412, %v3410
      %v3511 = vpack.c.b16 %v3413, %v3411
      %v3512 = vpack.c.b16 %v3416, %v3414
      %v3513 = vpack.c.b16 %v3417, %v3415
      %v3514 = vpack.c.b16 %v3420, %v3418
      %v3515 = vpack.c.b16 %v3421, %v3419
      %v3516 = vpack.c.b16 %v3424, %v3422
      %v3517 = vpack.c.b16 %v3425, %v3423
      %v3518 = vpack.c.b16 %v3428, %v3426
      %v3519 = vpack.c.b16 %v3429, %v3427
      %v3520 = vpack.c.b16 %v3432, %v3430
      %v3521 = vpack.c.b16 %v3433, %v3431
      %v3522 = vpack.c.b16 %v3436, %v3434
      %v3523 = vpack.c.b16 %v3437, %v3435
      %v3524 = vpack.c.b16 %v3440, %v3438
      %v3525 = vpack.c.b16 %v3441, %v3439
      %v3526 = vpack.c.b16 %v3444, %v3442
      %v3527 = vpack.c.b16 %v3445, %v3443
      %v3528 = vpack.c.b16 %v3448, %v3446
      %v3529 = vpack.c.b16 %v3449, %v3447
      %v3530 = vpack.c.b16 %v3452, %v3450
      %v3531 = vpack.c.b16 %v3453, %v3451
      %v3532 = vpack.c.b16 %v3456, %v3454
      %v3533 = vpack.c.b16 %v3457, %v3455
      %v3534 = vpack.c.b16 %v3460, %v3458
      %v3535 = vpack.c.b16 %v3461, %v3459
      %v3536 = vpack.c.b16 %v3464, %v3462
      %v3537 = vpack.c.b16 %v3465, %v3463
      %v3538 = vpack.c.b16 %v3468, %v3466
      %v3539 = vpack.c.b16 %v3469, %v3467
      %v3540 = vpack.c.b16 %v3472, %v3470
      %v3541 = vpack.c.b16 %v3473, %v3471
      %v3542 = vpack.c.b16 %v3476, %v3474
      %v3543 = vpack.c.b16 %v3477, %v3475
      %v3544 = vpack.c.b16 %v3480, %v3478
      %v3545 = vpack.c.b16 %v3481, %v3479
      %3610 = vmatpush.bf16.msra.mxu0 %v3496
      %3611 = vmatpush.bf16.msra.mxu0 %v3494
      %3612 = vmatpush.bf16.msra.mxu0 %v3492
      %3613 = vmatpush.bf16.msra.mxu0 %v3490
      %3614 = vmatpush.bf16.msra.mxu0 %v3488
      %3615 = vmatpush.bf16.msra.mxu0 %v3486
      %3616 = vmatpush.bf16.msra.mxu0 %v3484
      %3617 = vmatpush.bf16.msra.mxu0 %v3482
      %3618 = vmatmul.bf16.gmra.mxu0 %v3217
      %v3619 = vpop.f32.mrf.mxu0
      %v3620 = vadd.f32 0.0, %v3619
      %v3621 = vpop.f32.mrf.mxu0
      %v3622 = vadd.f32 0.0, %v3621
      %3623 = vmatmul.bf16.gmra.mxu0 %v3221
      %v3624 = vpop.f32.mrf.mxu0
      %v3625 = vadd.f32 0.0, %v3624
      %v3626 = vpop.f32.mrf.mxu0
      %3627 = vdwg.mxu0
      %3628 = vmatpush.bf16.msra.mxu0 %v3512
      %3629 = vmatpush.bf16.msra.mxu0 %v3510
      %3630 = vmatpush.bf16.msra.mxu0 %v3508
      %3631 = vmatpush.bf16.msra.mxu0 %v3506
      %3632 = vmatpush.bf16.msra.mxu0 %v3504
      %3633 = vmatpush.bf16.msra.mxu0 %v3502
      %3634 = vmatpush.bf16.msra.mxu0 %v3500
      %3635 = vmatpush.bf16.msra.mxu0 %v3498
      %3636 = vmatmul.bf16.gmra.mxu0 %v3218
      %v3637 = vpop.f32.mrf.mxu0
      %v3638 = vadd.f32 %v3620, %v3637
      %v3639 = vpop.f32.mrf.mxu0
      %v3640 = vadd.f32 %v3622, %v3639
      %3641 = vmatmul.bf16.gmra.mxu0 %v3222
      %v3642 = vpop.f32.mrf.mxu0
      %v3643 = vadd.f32 %v3625, %v3642
      %v3644 = vpop.f32.mrf.mxu0
      %3645 = vdwg.mxu0
      %3646 = vmatpush.bf16.msra.mxu0 %v3528
      %3647 = vmatpush.bf16.msra.mxu0 %v3526
      %3648 = vmatpush.bf16.msra.mxu0 %v3524
      %3649 = vmatpush.bf16.msra.mxu0 %v3522
      %3650 = vmatpush.bf16.msra.mxu0 %v3520
      %3651 = vmatpush.bf16.msra.mxu0 %v3518
      %3652 = vmatpush.bf16.msra.mxu0 %v3516
      %3653 = vmatpush.bf16.msra.mxu0 %v3514
      %3654 = vmatmul.bf16.gmra.mxu0 %v3219
      %v3655 = vpop.f32.mrf.mxu0
      %v3656 = vadd.f32 %v3638, %v3655
      %v3657 = vpop.f32.mrf.mxu0
      %v3658 = vadd.f32 %v3640, %v3657
      %3659 = vmatmul.bf16.gmra.mxu0 %v3223
      %v3660 = vpop.f32.mrf.mxu0
      %v3661 = vadd.f32 %v3643, %v3660
      %v3662 = vpop.f32.mrf.mxu0
      %3663 = vdwg.mxu0
      %3664 = vmatpush.bf16.msra.mxu0 %v3544
      %3665 = vmatpush.bf16.msra.mxu0 %v3542
      %3666 = vmatpush.bf16.msra.mxu0 %v3540
      %3667 = vmatpush.bf16.msra.mxu0 %v3538
      %3668 = vmatpush.bf16.msra.mxu0 %v3536
      %3669 = vmatpush.bf16.msra.mxu0 %v3534
      %3670 = vmatpush.bf16.msra.mxu0 %v3532
      %3671 = vmatpush.bf16.msra.mxu0 %v3530
      %3672 = vmatmul.bf16.gmra.mxu0 %v3220
      %v3673 = vpop.f32.mrf.mxu0
      %v3674 = vadd.f32 %v3656, %v3673
      %v3675 = vpop.f32.mrf.mxu0
      %v3676 = vadd.f32 %v3658, %v3675
      %3677 = vmatmul.bf16.gmra.mxu0 %v3224
      %v3678 = vpop.f32.mrf.mxu0
      %v3679 = vadd.f32 %v3661, %v3678
      %v3680 = vpop.f32.mrf.mxu0
      %3681 = vdwg.mxu0
      %3682 = vmatpush.bf16.msra.mxu0 %v3497
      %3683 = vmatpush.bf16.msra.mxu0 %v3495
      %3684 = vmatpush.bf16.msra.mxu0 %v3493
      %3685 = vmatpush.bf16.msra.mxu0 %v3491
      %3686 = vmatpush.bf16.msra.mxu0 %v3489
      %3687 = vmatpush.bf16.msra.mxu0 %v3487
      %3688 = vmatpush.bf16.msra.mxu0 %v3485
      %3689 = vmatpush.bf16.msra.mxu0 %v3483
      %3690 = vmatmul.bf16.gmra.mxu0 %v3217
      %v3691 = vpop.f32.mrf.mxu0
      %v3692 = vadd.f32 0.0, %v3691
      %v3693 = vpop.f32.mrf.mxu0
      %v3694 = vadd.f32 0.0, %v3693
      %3695 = vmatmul.bf16.gmra.mxu0 %v3221
      %v3696 = vpop.f32.mrf.mxu0
      %v3697 = vadd.f32 0.0, %v3696
      %v3698 = vpop.f32.mrf.mxu0
      %3699 = vdwg.mxu0
      %3700 = vmatpush.bf16.msra.mxu0 %v3513
      %3701 = vmatpush.bf16.msra.mxu0 %v3511
      %3702 = vmatpush.bf16.msra.mxu0 %v3509
      %3703 = vmatpush.bf16.msra.mxu0 %v3507
      %3704 = vmatpush.bf16.msra.mxu0 %v3505
      %3705 = vmatpush.bf16.msra.mxu0 %v3503
      %3706 = vmatpush.bf16.msra.mxu0 %v3501
      %3707 = vmatpush.bf16.msra.mxu0 %v3499
      %3708 = vmatmul.bf16.gmra.mxu0 %v3218
      %v3709 = vpop.f32.mrf.mxu0
      %v3710 = vadd.f32 %v3692, %v3709
      %v3711 = vpop.f32.mrf.mxu0
      %v3712 = vadd.f32 %v3694, %v3711
      %3713 = vmatmul.bf16.gmra.mxu0 %v3222
      %v3714 = vpop.f32.mrf.mxu0
      %v3715 = vadd.f32 %v3697, %v3714
      %v3716 = vpop.f32.mrf.mxu0
      %3717 = vdwg.mxu0
      %3718 = vmatpush.bf16.msra.mxu0 %v3529
      %3719 = vmatpush.bf16.msra.mxu0 %v3527
      %3720 = vmatpush.bf16.msra.mxu0 %v3525
      %3721 = vmatpush.bf16.msra.mxu0 %v3523
      %3722 = vmatpush.bf16.msra.mxu0 %v3521
      %3723 = vmatpush.bf16.msra.mxu0 %v3519
      %3724 = vmatpush.bf16.msra.mxu0 %v3517
      %3725 = vmatpush.bf16.msra.mxu0 %v3515
      %3726 = vmatmul.bf16.gmra.mxu0 %v3219
      %v3727 = vpop.f32.mrf.mxu0
      %v3728 = vadd.f32 %v3710, %v3727
      %v3729 = vpop.f32.mrf.mxu0
      %v3730 = vadd.f32 %v3712, %v3729
      %3731 = vmatmul.bf16.gmra.mxu0 %v3223
      %v3732 = vpop.f32.mrf.mxu0
      %v3733 = vadd.f32 %v3715, %v3732
      %v3734 = vpop.f32.mrf.mxu0
      %3735 = vdwg.mxu0
      %3736 = vmatpush.bf16.msra.mxu0 %v3545
      %3737 = vmatpush.bf16.msra.mxu0 %v3543
      %3738 = vmatpush.bf16.msra.mxu0 %v3541
      %3739 = vmatpush.bf16.msra.mxu0 %v3539
      %3740 = vmatpush.bf16.msra.mxu0 %v3537
      %3741 = vmatpush.bf16.msra.mxu0 %v3535
      %3742 = vmatpush.bf16.msra.mxu0 %v3533
      %3743 = vmatpush.bf16.msra.mxu0 %v3531
      %3744 = vmatmul.bf16.gmra.mxu0 %v3220
      %v3745 = vpop.f32.mrf.mxu0
      %v3746 = vadd.f32 %v3728, %v3745
      %v3747 = vpop.f32.mrf.mxu0
      %v3748 = vadd.f32 %v3730, %v3747
      %3749 = vmatmul.bf16.gmra.mxu0 %v3224
      %v3750 = vpop.f32.mrf.mxu0
      %v3751 = vadd.f32 %v3733, %v3750
      %v3752 = vpop.f32.mrf.mxu0
      %3753 = vdwg.mxu0
      %v3818 = vunpack.c.l.b16 %v3141
      %v3819 = vunpack.c.h.b16 %v3141
      %v3820 = vunpack.c.l.b16 %v3142
      %v3821 = vunpack.c.h.b16 %v3142
      %v3822 = vunpack.c.l.b16 %v3143
      %v3823 = vunpack.c.h.b16 %v3143
      %v3824 = vunpack.c.l.b16 %v3144
      %v3825 = vunpack.c.h.b16 %v3144
      %v3826 = vunpack.c.l.b16 %v3145
      %v3827 = vunpack.c.h.b16 %v3145
      %v3828 = vunpack.c.l.b16 %v3146
      %v3829 = vunpack.c.h.b16 %v3146
      %v3830 = vunpack.c.l.b16 %v3147
      %v3831 = vunpack.c.h.b16 %v3147
      %v3832 = vunpack.c.l.b16 %v3148
      %v3833 = vunpack.c.h.b16 %v3148
      %v3834 = vunpack.c.l.b16 %v3149
      %v3835 = vunpack.c.h.b16 %v3149
      %v3836 = vunpack.c.l.b16 %v3150
      %v3837 = vunpack.c.h.b16 %v3150
      %v3838 = vunpack.c.l.b16 %v3151
      %v3839 = vunpack.c.h.b16 %v3151
      %v3840 = vunpack.c.l.b16 %v3152
      %v3841 = vunpack.c.h.b16 %v3152
      %v3842 = vunpack.c.l.b16 %v3153
      %v3843 = vunpack.c.h.b16 %v3153
      %v3844 = vunpack.c.l.b16 %v3154
      %v3845 = vunpack.c.h.b16 %v3154
      %v3846 = vunpack.c.l.b16 %v3155
      %v3847 = vunpack.c.h.b16 %v3155
      %v3848 = vunpack.c.l.b16 %v3156
      %v3849 = vunpack.c.h.b16 %v3156
      %v3850 = vunpack.c.l.b16 %v3157
      %v3851 = vunpack.c.h.b16 %v3157
      %v3852 = vunpack.c.l.b16 %v3158
      %v3853 = vunpack.c.h.b16 %v3158
      %v3854 = vunpack.c.l.b16 %v3159
      %v3855 = vunpack.c.h.b16 %v3159
      %v3856 = vunpack.c.l.b16 %v3160
      %v3857 = vunpack.c.h.b16 %v3160
      %v3858 = vunpack.c.l.b16 %v3161
      %v3859 = vunpack.c.h.b16 %v3161
      %v3860 = vunpack.c.l.b16 %v3162
      %v3861 = vunpack.c.h.b16 %v3162
      %v3862 = vunpack.c.l.b16 %v3163
      %v3863 = vunpack.c.h.b16 %v3163
      %v3864 = vunpack.c.l.b16 %v3164
      %v3865 = vunpack.c.h.b16 %v3164
      %v3866 = vunpack.c.l.b16 %v3165
      %v3867 = vunpack.c.h.b16 %v3165
      %v3868 = vunpack.c.l.b16 %v3166
      %v3869 = vunpack.c.h.b16 %v3166
      %v3870 = vunpack.c.l.b16 %v3167
      %v3871 = vunpack.c.h.b16 %v3167
      %v3872 = vunpack.c.l.b16 %v3168
      %v3873 = vunpack.c.h.b16 %v3168
      %v3874 = vunpack.c.l.b16 %v3169
      %v3875 = vunpack.c.h.b16 %v3169
      %v3876 = vunpack.c.l.b16 %v3170
      %v3877 = vunpack.c.h.b16 %v3170
      %v3878 = vunpack.c.l.b16 %v3171
      %v3879 = vunpack.c.h.b16 %v3171
      %v3880 = vunpack.c.l.b16 %v3172
      %v3881 = vunpack.c.h.b16 %v3172
      %v3882 = vunpack.c.l.b16 %v3173
      %v3883 = vunpack.c.h.b16 %v3173
      %v3884 = vunpack.c.l.b16 %v3174
      %v3885 = vunpack.c.h.b16 %v3174
      %v3886 = vunpack.c.l.b16 %v3175
      %v3887 = vunpack.c.h.b16 %v3175
      %v3888 = vunpack.c.l.b16 %v3176
      %v3889 = vunpack.c.h.b16 %v3176
      %v3890 = vunpack.c.l.b16 %v3177
      %v3891 = vunpack.c.h.b16 %v3177
      %v3892 = vunpack.c.l.b16 %v3178
      %v3893 = vunpack.c.h.b16 %v3178
      %v3894 = vunpack.c.l.b16 %v3179
      %v3895 = vunpack.c.h.b16 %v3179
      %v3896 = vunpack.c.l.b16 %v3180
      %v3897 = vunpack.c.h.b16 %v3180
      %v3898 = vunpack.c.l.b16 %v3181
      %v3899 = vunpack.c.h.b16 %v3181
      %v3900 = vunpack.c.l.b16 %v3182
      %v3901 = vunpack.c.h.b16 %v3182
      %v3902 = vunpack.c.l.b16 %v3183
      %v3903 = vunpack.c.h.b16 %v3183
      %v3904 = vunpack.c.l.b16 %v3184
      %v3905 = vunpack.c.h.b16 %v3184
      %v3906 = vunpack.c.l.b16 %v3185
      %v3907 = vunpack.c.h.b16 %v3185
      %v3908 = vunpack.c.l.b16 %v3186
      %v3909 = vunpack.c.h.b16 %v3186
      %v3910 = vunpack.c.l.b16 %v3187
      %v3911 = vunpack.c.h.b16 %v3187
      %v3912 = vunpack.c.l.b16 %v3188
      %v3913 = vunpack.c.h.b16 %v3188
      %v3914 = vunpack.c.l.b16 %v3189
      %v3915 = vunpack.c.h.b16 %v3189
      %v3916 = vunpack.c.l.b16 %v3190
      %v3917 = vunpack.c.h.b16 %v3190
      %v3918 = vunpack.c.l.b16 %v3191
      %v3919 = vunpack.c.h.b16 %v3191
      %v3920 = vunpack.c.l.b16 %v3192
      %v3921 = vunpack.c.h.b16 %v3192
      %v3922 = vunpack.c.l.b16 %v3193
      %v3923 = vunpack.c.h.b16 %v3193
      %v3924 = vunpack.c.l.b16 %v3194
      %v3925 = vunpack.c.h.b16 %v3194
      %v3926 = vunpack.c.l.b16 %v3195
      %v3927 = vunpack.c.h.b16 %v3195
      %v3928 = vunpack.c.l.b16 %v3196
      %v3929 = vunpack.c.h.b16 %v3196
      %v3930 = vunpack.c.l.b16 %v3197
      %v3931 = vunpack.c.h.b16 %v3197
      %v3932 = vunpack.c.l.b16 %v3198
      %v3933 = vunpack.c.h.b16 %v3198
      %v3934 = vunpack.c.l.b16 %v3199
      %v3935 = vunpack.c.h.b16 %v3199
      %v3936 = vunpack.c.l.b16 %v3200
      %v3937 = vunpack.c.h.b16 %v3200
      %v3938 = vunpack.c.l.b16 %v3201
      %v3939 = vunpack.c.h.b16 %v3201
      %v3940 = vunpack.c.l.b16 %v3202
      %v3941 = vunpack.c.h.b16 %v3202
      %v3942 = vunpack.c.l.b16 %v3203
      %v3943 = vunpack.c.h.b16 %v3203
      %v3944 = vunpack.c.l.b16 %v3204
      %v3945 = vunpack.c.h.b16 %v3204
      %v3946 = vpack.c.b16 %v3820, %v3818
      %v3947 = vpack.c.b16 %v3821, %v3819
      %v3948 = vpack.c.b16 %v3824, %v3822
      %v3949 = vpack.c.b16 %v3825, %v3823
      %v3950 = vpack.c.b16 %v3828, %v3826
      %v3951 = vpack.c.b16 %v3829, %v3827
      %v3952 = vpack.c.b16 %v3832, %v3830
      %v3953 = vpack.c.b16 %v3833, %v3831
      %v3954 = vpack.c.b16 %v3836, %v3834
      %v3955 = vpack.c.b16 %v3837, %v3835
      %v3956 = vpack.c.b16 %v3840, %v3838
      %v3957 = vpack.c.b16 %v3841, %v3839
      %v3958 = vpack.c.b16 %v3844, %v3842
      %v3959 = vpack.c.b16 %v3845, %v3843
      %v3960 = vpack.c.b16 %v3848, %v3846
      %v3961 = vpack.c.b16 %v3849, %v3847
      %v3962 = vpack.c.b16 %v3852, %v3850
      %v3963 = vpack.c.b16 %v3853, %v3851
      %v3964 = vpack.c.b16 %v3856, %v3854
      %v3965 = vpack.c.b16 %v3857, %v3855
      %v3966 = vpack.c.b16 %v3860, %v3858
      %v3967 = vpack.c.b16 %v3861, %v3859
      %v3968 = vpack.c.b16 %v3864, %v3862
      %v3969 = vpack.c.b16 %v3865, %v3863
      %v3970 = vpack.c.b16 %v3868, %v3866
      %v3971 = vpack.c.b16 %v3869, %v3867
      %v3972 = vpack.c.b16 %v3872, %v3870
      %v3973 = vpack.c.b16 %v3873, %v3871
      %v3974 = vpack.c.b16 %v3876, %v3874
      %v3975 = vpack.c.b16 %v3877, %v3875
      %v3976 = vpack.c.b16 %v3880, %v3878
      %v3977 = vpack.c.b16 %v3881, %v3879
      %v3978 = vpack.c.b16 %v3884, %v3882
      %v3979 = vpack.c.b16 %v3885, %v3883
      %v3980 = vpack.c.b16 %v3888, %v3886
      %v3981 = vpack.c.b16 %v3889, %v3887
      %v3982 = vpack.c.b16 %v3892, %v3890
      %v3983 = vpack.c.b16 %v3893, %v3891
      %v3984 = vpack.c.b16 %v3896, %v3894
      %v3985 = vpack.c.b16 %v3897, %v3895
      %v3986 = vpack.c.b16 %v3900, %v3898
      %v3987 = vpack.c.b16 %v3901, %v3899
      %v3988 = vpack.c.b16 %v3904, %v3902
      %v3989 = vpack.c.b16 %v3905, %v3903
      %v3990 = vpack.c.b16 %v3908, %v3906
      %v3991 = vpack.c.b16 %v3909, %v3907
      %v3992 = vpack.c.b16 %v3912, %v3910
      %v3993 = vpack.c.b16 %v3913, %v3911
      %v3994 = vpack.c.b16 %v3916, %v3914
      %v3995 = vpack.c.b16 %v3917, %v3915
      %v3996 = vpack.c.b16 %v3920, %v3918
      %v3997 = vpack.c.b16 %v3921, %v3919
      %v3998 = vpack.c.b16 %v3924, %v3922
      %v3999 = vpack.c.b16 %v3925, %v3923
      %v4000 = vpack.c.b16 %v3928, %v3926
      %v4001 = vpack.c.b16 %v3929, %v3927
      %v4002 = vpack.c.b16 %v3932, %v3930
      %v4003 = vpack.c.b16 %v3933, %v3931
      %v4004 = vpack.c.b16 %v3936, %v3934
      %v4005 = vpack.c.b16 %v3937, %v3935
      %v4006 = vpack.c.b16 %v3940, %v3938
      %v4007 = vpack.c.b16 %v3941, %v3939
      %v4008 = vpack.c.b16 %v3944, %v3942
      %v4009 = vpack.c.b16 %v3945, %v3943
      %4074 = vmatpush.bf16.msra.mxu0 %v3960
      %4075 = vmatpush.bf16.msra.mxu0 %v3958
      %4076 = vmatpush.bf16.msra.mxu0 %v3956
      %4077 = vmatpush.bf16.msra.mxu0 %v3954
      %4078 = vmatpush.bf16.msra.mxu0 %v3952
      %4079 = vmatpush.bf16.msra.mxu0 %v3950
      %4080 = vmatpush.bf16.msra.mxu0 %v3948
      %4081 = vmatpush.bf16.msra.mxu0 %v3946
      %4082 = vmatmul.bf16.gmra.mxu0 %v3133
      %v4083 = vpop.f32.mrf.mxu0
      %v4084 = vadd.f32 %v3674, %v4083
      %v4085 = vpop.f32.mrf.mxu0
      %v4086 = vadd.f32 %v3676, %v4085
      %4087 = vmatmul.bf16.gmra.mxu0 %v3137
      %v4088 = vpop.f32.mrf.mxu0
      %v4089 = vadd.f32 %v3679, %v4088
      %v4090 = vpop.f32.mrf.mxu0
      %4091 = vdwg.mxu0
      %4092 = vmatpush.bf16.msra.mxu0 %v3976
      %4093 = vmatpush.bf16.msra.mxu0 %v3974
      %4094 = vmatpush.bf16.msra.mxu0 %v3972
      %4095 = vmatpush.bf16.msra.mxu0 %v3970
      %4096 = vmatpush.bf16.msra.mxu0 %v3968
      %4097 = vmatpush.bf16.msra.mxu0 %v3966
      %4098 = vmatpush.bf16.msra.mxu0 %v3964
      %4099 = vmatpush.bf16.msra.mxu0 %v3962
      %4100 = vmatmul.bf16.gmra.mxu0 %v3134
      %v4101 = vpop.f32.mrf.mxu0
      %v4102 = vadd.f32 %v4084, %v4101
      %v4103 = vpop.f32.mrf.mxu0
      %v4104 = vadd.f32 %v4086, %v4103
      %4105 = vmatmul.bf16.gmra.mxu0 %v3138
      %v4106 = vpop.f32.mrf.mxu0
      %v4107 = vadd.f32 %v4089, %v4106
      %v4108 = vpop.f32.mrf.mxu0
      %4109 = vdwg.mxu0
      %4110 = vmatpush.bf16.msra.mxu0 %v3992
      %4111 = vmatpush.bf16.msra.mxu0 %v3990
      %4112 = vmatpush.bf16.msra.mxu0 %v3988
      %4113 = vmatpush.bf16.msra.mxu0 %v3986
      %4114 = vmatpush.bf16.msra.mxu0 %v3984
      %4115 = vmatpush.bf16.msra.mxu0 %v3982
      %4116 = vmatpush.bf16.msra.mxu0 %v3980
      %4117 = vmatpush.bf16.msra.mxu0 %v3978
      %4118 = vmatmul.bf16.gmra.mxu0 %v3135
      %v4119 = vpop.f32.mrf.mxu0
      %v4120 = vadd.f32 %v4102, %v4119
      %v4121 = vpop.f32.mrf.mxu0
      %v4122 = vadd.f32 %v4104, %v4121
      %4123 = vmatmul.bf16.gmra.mxu0 %v3139
      %v4124 = vpop.f32.mrf.mxu0
      %v4125 = vadd.f32 %v4107, %v4124
      %v4126 = vpop.f32.mrf.mxu0
      %4127 = vdwg.mxu0
      %4128 = vmatpush.bf16.msra.mxu0 %v4008
      %4129 = vmatpush.bf16.msra.mxu0 %v4006
      %4130 = vmatpush.bf16.msra.mxu0 %v4004
      %4131 = vmatpush.bf16.msra.mxu0 %v4002
      %4132 = vmatpush.bf16.msra.mxu0 %v4000
      %4133 = vmatpush.bf16.msra.mxu0 %v3998
      %4134 = vmatpush.bf16.msra.mxu0 %v3996
      %4135 = vmatpush.bf16.msra.mxu0 %v3994
      %4136 = vmatmul.bf16.gmra.mxu0 %v3136
      %v4137 = vpop.f32.mrf.mxu0
      %v4138 = vadd.f32 %v4120, %v4137
      %v4139 = vpop.f32.mrf.mxu0
      %v4140 = vadd.f32 %v4122, %v4139
      %4141 = vmatmul.bf16.gmra.mxu0 %v3140
      %v4142 = vpop.f32.mrf.mxu0
      %v4143 = vadd.f32 %v4125, %v4142
      %v4144 = vpop.f32.mrf.mxu0
      %4145 = vdwg.mxu0
      %4146 = vmatpush.bf16.msra.mxu0 %v3961
      %4147 = vmatpush.bf16.msra.mxu0 %v3959
      %4148 = vmatpush.bf16.msra.mxu0 %v3957
      %4149 = vmatpush.bf16.msra.mxu0 %v3955
      %4150 = vmatpush.bf16.msra.mxu0 %v3953
      %4151 = vmatpush.bf16.msra.mxu0 %v3951
      %4152 = vmatpush.bf16.msra.mxu0 %v3949
      %4153 = vmatpush.bf16.msra.mxu0 %v3947
      %4154 = vmatmul.bf16.gmra.mxu0 %v3133
      %v4155 = vpop.f32.mrf.mxu0
      %v4156 = vadd.f32 %v3746, %v4155
      %v4157 = vpop.f32.mrf.mxu0
      %v4158 = vadd.f32 %v3748, %v4157
      %4159 = vmatmul.bf16.gmra.mxu0 %v3137
      %v4160 = vpop.f32.mrf.mxu0
      %v4161 = vadd.f32 %v3751, %v4160
      %v4162 = vpop.f32.mrf.mxu0
      %4163 = vdwg.mxu0
      %4164 = vmatpush.bf16.msra.mxu0 %v3977
      %4165 = vmatpush.bf16.msra.mxu0 %v3975
      %4166 = vmatpush.bf16.msra.mxu0 %v3973
      %4167 = vmatpush.bf16.msra.mxu0 %v3971
      %4168 = vmatpush.bf16.msra.mxu0 %v3969
      %4169 = vmatpush.bf16.msra.mxu0 %v3967
      %4170 = vmatpush.bf16.msra.mxu0 %v3965
      %4171 = vmatpush.bf16.msra.mxu0 %v3963
      %4172 = vmatmul.bf16.gmra.mxu0 %v3134
      %v4173 = vpop.f32.mrf.mxu0
      %v4174 = vadd.f32 %v4156, %v4173
      %v4175 = vpop.f32.mrf.mxu0
      %v4176 = vadd.f32 %v4158, %v4175
      %4177 = vmatmul.bf16.gmra.mxu0 %v3138
      %v4178 = vpop.f32.mrf.mxu0
      %v4179 = vadd.f32 %v4161, %v4178
      %v4180 = vpop.f32.mrf.mxu0
      %4181 = vdwg.mxu0
      %4182 = vmatpush.bf16.msra.mxu0 %v3993
      %4183 = vmatpush.bf16.msra.mxu0 %v3991
      %4184 = vmatpush.bf16.msra.mxu0 %v3989
      %4185 = vmatpush.bf16.msra.mxu0 %v3987
      %4186 = vmatpush.bf16.msra.mxu0 %v3985
      %4187 = vmatpush.bf16.msra.mxu0 %v3983
      %4188 = vmatpush.bf16.msra.mxu0 %v3981
      %4189 = vmatpush.bf16.msra.mxu0 %v3979
      %4190 = vmatmul.bf16.gmra.mxu0 %v3135
      %v4191 = vpop.f32.mrf.mxu0
      %v4192 = vadd.f32 %v4174, %v4191
      %v4193 = vpop.f32.mrf.mxu0
      %v4194 = vadd.f32 %v4176, %v4193
      %4195 = vmatmul.bf16.gmra.mxu0 %v3139
      %v4196 = vpop.f32.mrf.mxu0
      %v4197 = vadd.f32 %v4179, %v4196
      %v4198 = vpop.f32.mrf.mxu0
      %4199 = vdwg.mxu0
      %4200 = vmatpush.bf16.msra.mxu0 %v4009
      %4201 = vmatpush.bf16.msra.mxu0 %v4007
      %4202 = vmatpush.bf16.msra.mxu0 %v4005
      %4203 = vmatpush.bf16.msra.mxu0 %v4003
      %4204 = vmatpush.bf16.msra.mxu0 %v4001
      %4205 = vmatpush.bf16.msra.mxu0 %v3999
      %4206 = vmatpush.bf16.msra.mxu0 %v3997
      %4207 = vmatpush.bf16.msra.mxu0 %v3995
      %4208 = vmatmul.bf16.gmra.mxu0 %v3136
      %v4209 = vpop.f32.mrf.mxu0
      %v4210 = vadd.f32 %v4192, %v4209
      %v4211 = vpop.f32.mrf.mxu0
      %v4212 = vadd.f32 %v4194, %v4211
      %4213 = vmatmul.bf16.gmra.mxu0 %v3140
      %v4214 = vpop.f32.mrf.mxu0
      %v4215 = vadd.f32 %v4197, %v4214
      %v4216 = vpop.f32.mrf.mxu0
      %4217 = vdwg.mxu0
      %v4218 = vld [vmem:[%s3114] sm:$0xff]
      %v4219 = vld [vmem:[%s3114 + $0x10] sm:$0xff]
      %v4220 = vld [vmem:[%s3114 + $0x20] sm:$0xff]
      %v4221 = vld [vmem:[%s3114 + $0x1] sm:$0xff]
      %v4222 = vld [vmem:[%s3114 + $0x11] sm:$0xff]
      %v4223 = vld [vmem:[%s3114 + $0x21] sm:$0xff]
      %v4224 = vld [vmem:[%s3114 + $0x2] sm:$0xff]
      %v4225 = vld [vmem:[%s3114 + $0x12] sm:$0xff]
      %v4226 = vld [vmem:[%s3114 + $0x22] sm:$0xff]
      %v4227 = vld [vmem:[%s3114 + $0x3] sm:$0xff]
      %v4228 = vld [vmem:[%s3114 + $0x13] sm:$0xff]
      %v4229 = vld [vmem:[%s3114 + $0x23] sm:$0xff]
      %v4230 = vpack.c.bf16 %v4219, %v4218
      %v4231 = vpack.c.bf16 %v4222, %v4221
      %v4232 = vpack.c.bf16 %v4225, %v4224
      %v4233 = vpack.c.bf16 %v4228, %v4227
      %v4234 = vpack.c.bf16 %v4220, %v4220
      %v4235 = vpack.c.bf16 %v4223, %v4223
      %v4236 = vpack.c.bf16 %v4226, %v4226
      %v4237 = vpack.c.bf16 %v4229, %v4229
      %s4238 = scalar_lea.vmem %s4, 1024
      %v4239 = vld [vmem:[%s4238] sm:$0xff]
      %v4240 = vld [vmem:[%s4238 + $0x8] sm:$0xff]
      %v4241 = vld [vmem:[%s4238 + $0x10] sm:$0xff]
      %v4242 = vld [vmem:[%s4238 + $0x18] sm:$0xff]
      %v4243 = vld [vmem:[%s4238 + $0x20] sm:$0xff]
      %v4244 = vld [vmem:[%s4238 + $0x28] sm:$0xff]
      %v4245 = vld [vmem:[%s4238 + $0x30] sm:$0xff]
      %v4246 = vld [vmem:[%s4238 + $0x38] sm:$0xff]
      %v4247 = vld [vmem:[%s4238 + $0x40] sm:$0xff]
      %v4248 = vld [vmem:[%s4238 + $0x48] sm:$0xff]
      %v4249 = vld [vmem:[%s4238 + $0x50] sm:$0xff]
      %v4250 = vld [vmem:[%s4238 + $0x58] sm:$0xff]
      %v4251 = vld [vmem:[%s4238 + $0x60] sm:$0xff]
      %v4252 = vld [vmem:[%s4238 + $0x68] sm:$0xff]
      %v4253 = vld [vmem:[%s4238 + $0x70] sm:$0xff]
      %v4254 = vld [vmem:[%s4238 + $0x78] sm:$0xff]
      %v4255 = vld [vmem:[%s4238 + $0x80] sm:$0xff]
      %v4256 = vld [vmem:[%s4238 + $0x88] sm:$0xff]
      %v4257 = vld [vmem:[%s4238 + $0x90] sm:$0xff]
      %v4258 = vld [vmem:[%s4238 + $0x98] sm:$0xff]
      %v4259 = vld [vmem:[%s4238 + $0xa0] sm:$0xff]
      %v4260 = vld [vmem:[%s4238 + $0xa8] sm:$0xff]
      %v4261 = vld [vmem:[%s4238 + $0xb0] sm:$0xff]
      %v4262 = vld [vmem:[%s4238 + $0xb8] sm:$0xff]
      %v4263 = vld [vmem:[%s4238 + $0xc0] sm:$0xff]
      %v4264 = vld [vmem:[%s4238 + $0xc8] sm:$0xff]
      %v4265 = vld [vmem:[%s4238 + $0xd0] sm:$0xff]
      %v4266 = vld [vmem:[%s4238 + $0xd8] sm:$0xff]
      %v4267 = vld [vmem:[%s4238 + $0xe0] sm:$0xff]
      %v4268 = vld [vmem:[%s4238 + $0xe8] sm:$0xff]
      %v4269 = vld [vmem:[%s4238 + $0xf0] sm:$0xff]
      %v4270 = vld [vmem:[%s4238 + $0xf8] sm:$0xff]
      %v4271 = vld [vmem:[%s4238 + $0x100] sm:$0xff]
      %v4272 = vld [vmem:[%s4238 + $0x108] sm:$0xff]
      %v4273 = vld [vmem:[%s4238 + $0x110] sm:$0xff]
      %v4274 = vld [vmem:[%s4238 + $0x118] sm:$0xff]
      %v4275 = vld [vmem:[%s4238 + $0x120] sm:$0xff]
      %v4276 = vld [vmem:[%s4238 + $0x128] sm:$0xff]
      %v4277 = vld [vmem:[%s4238 + $0x130] sm:$0xff]
      %v4278 = vld [vmem:[%s4238 + $0x138] sm:$0xff]
      %v4279 = vld [vmem:[%s4238 + $0x140] sm:$0xff]
      %v4280 = vld [vmem:[%s4238 + $0x148] sm:$0xff]
      %v4281 = vld [vmem:[%s4238 + $0x150] sm:$0xff]
      %v4282 = vld [vmem:[%s4238 + $0x158] sm:$0xff]
      %v4283 = vld [vmem:[%s4238 + $0x160] sm:$0xff]
      %v4284 = vld [vmem:[%s4238 + $0x168] sm:$0xff]
      %v4285 = vld [vmem:[%s4238 + $0x170] sm:$0xff]
      %v4286 = vld [vmem:[%s4238 + $0x178] sm:$0xff]
      %v4287 = vld [vmem:[%s4238 + $0x180] sm:$0xff]
      %v4288 = vld [vmem:[%s4238 + $0x188] sm:$0xff]
      %v4289 = vld [vmem:[%s4238 + $0x190] sm:$0xff]
      %v4290 = vld [vmem:[%s4238 + $0x198] sm:$0xff]
      %v4291 = vld [vmem:[%s4238 + $0x1a0] sm:$0xff]
      %v4292 = vld [vmem:[%s4238 + $0x1a8] sm:$0xff]
      %v4293 = vld [vmem:[%s4238 + $0x1b0] sm:$0xff]
      %v4294 = vld [vmem:[%s4238 + $0x1b8] sm:$0xff]
      %v4295 = vld [vmem:[%s4238 + $0x1c0] sm:$0xff]
      %v4296 = vld [vmem:[%s4238 + $0x1c8] sm:$0xff]
      %v4297 = vld [vmem:[%s4238 + $0x1d0] sm:$0xff]
      %v4298 = vld [vmem:[%s4238 + $0x1d8] sm:$0xff]
      %v4299 = vld [vmem:[%s4238 + $0x1e0] sm:$0xff]
      %v4300 = vld [vmem:[%s4238 + $0x1e8] sm:$0xff]
      %v4301 = vld [vmem:[%s4238 + $0x1f0] sm:$0xff]
      %v4302 = vld [vmem:[%s4238 + $0x1f8] sm:$0xff]
      %v4367 = vunpack.c.l.b16 %v4239
      %v4368 = vunpack.c.h.b16 %v4239
      %v4369 = vunpack.c.l.b16 %v4240
      %v4370 = vunpack.c.h.b16 %v4240
      %v4371 = vunpack.c.l.b16 %v4241
      %v4372 = vunpack.c.h.b16 %v4241
      %v4373 = vunpack.c.l.b16 %v4242
      %v4374 = vunpack.c.h.b16 %v4242
      %v4375 = vunpack.c.l.b16 %v4243
      %v4376 = vunpack.c.h.b16 %v4243
      %v4377 = vunpack.c.l.b16 %v4244
      %v4378 = vunpack.c.h.b16 %v4244
      %v4379 = vunpack.c.l.b16 %v4245
      %v4380 = vunpack.c.h.b16 %v4245
      %v4381 = vunpack.c.l.b16 %v4246
      %v4382 = vunpack.c.h.b16 %v4246
      %v4383 = vunpack.c.l.b16 %v4247
      %v4384 = vunpack.c.h.b16 %v4247
      %v4385 = vunpack.c.l.b16 %v4248
      %v4386 = vunpack.c.h.b16 %v4248
      %v4387 = vunpack.c.l.b16 %v4249
      %v4388 = vunpack.c.h.b16 %v4249
      %v4389 = vunpack.c.l.b16 %v4250
      %v4390 = vunpack.c.h.b16 %v4250
      %v4391 = vunpack.c.l.b16 %v4251
      %v4392 = vunpack.c.h.b16 %v4251
      %v4393 = vunpack.c.l.b16 %v4252
      %v4394 = vunpack.c.h.b16 %v4252
      %v4395 = vunpack.c.l.b16 %v4253
      %v4396 = vunpack.c.h.b16 %v4253
      %v4397 = vunpack.c.l.b16 %v4254
      %v4398 = vunpack.c.h.b16 %v4254
      %v4399 = vunpack.c.l.b16 %v4255
      %v4400 = vunpack.c.h.b16 %v4255
      %v4401 = vunpack.c.l.b16 %v4256
      %v4402 = vunpack.c.h.b16 %v4256
      %v4403 = vunpack.c.l.b16 %v4257
      %v4404 = vunpack.c.h.b16 %v4257
      %v4405 = vunpack.c.l.b16 %v4258
      %v4406 = vunpack.c.h.b16 %v4258
      %v4407 = vunpack.c.l.b16 %v4259
      %v4408 = vunpack.c.h.b16 %v4259
      %v4409 = vunpack.c.l.b16 %v4260
      %v4410 = vunpack.c.h.b16 %v4260
      %v4411 = vunpack.c.l.b16 %v4261
      %v4412 = vunpack.c.h.b16 %v4261
      %v4413 = vunpack.c.l.b16 %v4262
      %v4414 = vunpack.c.h.b16 %v4262
      %v4415 = vunpack.c.l.b16 %v4263
      %v4416 = vunpack.c.h.b16 %v4263
      %v4417 = vunpack.c.l.b16 %v4264
      %v4418 = vunpack.c.h.b16 %v4264
      %v4419 = vunpack.c.l.b16 %v4265
      %v4420 = vunpack.c.h.b16 %v4265
      %v4421 = vunpack.c.l.b16 %v4266
      %v4422 = vunpack.c.h.b16 %v4266
      %v4423 = vunpack.c.l.b16 %v4267
      %v4424 = vunpack.c.h.b16 %v4267
      %v4425 = vunpack.c.l.b16 %v4268
      %v4426 = vunpack.c.h.b16 %v4268
      %v4427 = vunpack.c.l.b16 %v4269
      %v4428 = vunpack.c.h.b16 %v4269
      %v4429 = vunpack.c.l.b16 %v4270
      %v4430 = vunpack.c.h.b16 %v4270
      %v4431 = vunpack.c.l.b16 %v4271
      %v4432 = vunpack.c.h.b16 %v4271
      %v4433 = vunpack.c.l.b16 %v4272
      %v4434 = vunpack.c.h.b16 %v4272
      %v4435 = vunpack.c.l.b16 %v4273
      %v4436 = vunpack.c.h.b16 %v4273
      %v4437 = vunpack.c.l.b16 %v4274
      %v4438 = vunpack.c.h.b16 %v4274
      %v4439 = vunpack.c.l.b16 %v4275
      %v4440 = vunpack.c.h.b16 %v4275
      %v4441 = vunpack.c.l.b16 %v4276
      %v4442 = vunpack.c.h.b16 %v4276
      %v4443 = vunpack.c.l.b16 %v4277
      %v4444 = vunpack.c.h.b16 %v4277
      %v4445 = vunpack.c.l.b16 %v4278
      %v4446 = vunpack.c.h.b16 %v4278
      %v4447 = vunpack.c.l.b16 %v4279
      %v4448 = vunpack.c.h.b16 %v4279
      %v4449 = vunpack.c.l.b16 %v4280
      %v4450 = vunpack.c.h.b16 %v4280
      %v4451 = vunpack.c.l.b16 %v4281
      %v4452 = vunpack.c.h.b16 %v4281
      %v4453 = vunpack.c.l.b16 %v4282
      %v4454 = vunpack.c.h.b16 %v4282
      %v4455 = vunpack.c.l.b16 %v4283
      %v4456 = vunpack.c.h.b16 %v4283
      %v4457 = vunpack.c.l.b16 %v4284
      %v4458 = vunpack.c.h.b16 %v4284
      %v4459 = vunpack.c.l.b16 %v4285
      %v4460 = vunpack.c.h.b16 %v4285
      %v4461 = vunpack.c.l.b16 %v4286
      %v4462 = vunpack.c.h.b16 %v4286
      %v4463 = vunpack.c.l.b16 %v4287
      %v4464 = vunpack.c.h.b16 %v4287
      %v4465 = vunpack.c.l.b16 %v4288
      %v4466 = vunpack.c.h.b16 %v4288
      %v4467 = vunpack.c.l.b16 %v4289
      %v4468 = vunpack.c.h.b16 %v4289
      %v4469 = vunpack.c.l.b16 %v4290
      %v4470 = vunpack.c.h.b16 %v4290
      %v4471 = vunpack.c.l.b16 %v4291
      %v4472 = vunpack.c.h.b16 %v4291
      %v4473 = vunpack.c.l.b16 %v4292
      %v4474 = vunpack.c.h.b16 %v4292
      %v4475 = vunpack.c.l.b16 %v4293
      %v4476 = vunpack.c.h.b16 %v4293
      %v4477 = vunpack.c.l.b16 %v4294
      %v4478 = vunpack.c.h.b16 %v4294
      %v4479 = vunpack.c.l.b16 %v4295
      %v4480 = vunpack.c.h.b16 %v4295
      %v4481 = vunpack.c.l.b16 %v4296
      %v4482 = vunpack.c.h.b16 %v4296
      %v4483 = vunpack.c.l.b16 %v4297
      %v4484 = vunpack.c.h.b16 %v4297
      %v4485 = vunpack.c.l.b16 %v4298
      %v4486 = vunpack.c.h.b16 %v4298
      %v4487 = vunpack.c.l.b16 %v4299
      %v4488 = vunpack.c.h.b16 %v4299
      %v4489 = vunpack.c.l.b16 %v4300
      %v4490 = vunpack.c.h.b16 %v4300
      %v4491 = vunpack.c.l.b16 %v4301
      %v4492 = vunpack.c.h.b16 %v4301
      %v4493 = vunpack.c.l.b16 %v4302
      %v4494 = vunpack.c.h.b16 %v4302
      %v4495 = vpack.c.b16 %v4369, %v4367
      %v4496 = vpack.c.b16 %v4370, %v4368
      %v4497 = vpack.c.b16 %v4373, %v4371
      %v4498 = vpack.c.b16 %v4374, %v4372
      %v4499 = vpack.c.b16 %v4377, %v4375
      %v4500 = vpack.c.b16 %v4378, %v4376
      %v4501 = vpack.c.b16 %v4381, %v4379
      %v4502 = vpack.c.b16 %v4382, %v4380
      %v4503 = vpack.c.b16 %v4385, %v4383
      %v4504 = vpack.c.b16 %v4386, %v4384
      %v4505 = vpack.c.b16 %v4389, %v4387
      %v4506 = vpack.c.b16 %v4390, %v4388
      %v4507 = vpack.c.b16 %v4393, %v4391
      %v4508 = vpack.c.b16 %v4394, %v4392
      %v4509 = vpack.c.b16 %v4397, %v4395
      %v4510 = vpack.c.b16 %v4398, %v4396
      %v4511 = vpack.c.b16 %v4401, %v4399
      %v4512 = vpack.c.b16 %v4402, %v4400
      %v4513 = vpack.c.b16 %v4405, %v4403
      %v4514 = vpack.c.b16 %v4406, %v4404
      %v4515 = vpack.c.b16 %v4409, %v4407
      %v4516 = vpack.c.b16 %v4410, %v4408
      %v4517 = vpack.c.b16 %v4413, %v4411
      %v4518 = vpack.c.b16 %v4414, %v4412
      %v4519 = vpack.c.b16 %v4417, %v4415
      %v4520 = vpack.c.b16 %v4418, %v4416
      %v4521 = vpack.c.b16 %v4421, %v4419
      %v4522 = vpack.c.b16 %v4422, %v4420
      %v4523 = vpack.c.b16 %v4425, %v4423
      %v4524 = vpack.c.b16 %v4426, %v4424
      %v4525 = vpack.c.b16 %v4429, %v4427
      %v4526 = vpack.c.b16 %v4430, %v4428
      %v4527 = vpack.c.b16 %v4433, %v4431
      %v4528 = vpack.c.b16 %v4434, %v4432
      %v4529 = vpack.c.b16 %v4437, %v4435
      %v4530 = vpack.c.b16 %v4438, %v4436
      %v4531 = vpack.c.b16 %v4441, %v4439
      %v4532 = vpack.c.b16 %v4442, %v4440
      %v4533 = vpack.c.b16 %v4445, %v4443
      %v4534 = vpack.c.b16 %v4446, %v4444
      %v4535 = vpack.c.b16 %v4449, %v4447
      %v4536 = vpack.c.b16 %v4450, %v4448
      %v4537 = vpack.c.b16 %v4453, %v4451
      %v4538 = vpack.c.b16 %v4454, %v4452
      %v4539 = vpack.c.b16 %v4457, %v4455
      %v4540 = vpack.c.b16 %v4458, %v4456
      %v4541 = vpack.c.b16 %v4461, %v4459
      %v4542 = vpack.c.b16 %v4462, %v4460
      %v4543 = vpack.c.b16 %v4465, %v4463
      %v4544 = vpack.c.b16 %v4466, %v4464
      %v4545 = vpack.c.b16 %v4469, %v4467
      %v4546 = vpack.c.b16 %v4470, %v4468
      %v4547 = vpack.c.b16 %v4473, %v4471
      %v4548 = vpack.c.b16 %v4474, %v4472
      %v4549 = vpack.c.b16 %v4477, %v4475
      %v4550 = vpack.c.b16 %v4478, %v4476
      %v4551 = vpack.c.b16 %v4481, %v4479
      %v4552 = vpack.c.b16 %v4482, %v4480
      %v4553 = vpack.c.b16 %v4485, %v4483
      %v4554 = vpack.c.b16 %v4486, %v4484
      %v4555 = vpack.c.b16 %v4489, %v4487
      %v4556 = vpack.c.b16 %v4490, %v4488
      %v4557 = vpack.c.b16 %v4493, %v4491
      %v4558 = vpack.c.b16 %v4494, %v4492
      %4623 = vmatpush.bf16.msra.mxu0 %v4509
      %4624 = vmatpush.bf16.msra.mxu0 %v4507
      %4625 = vmatpush.bf16.msra.mxu0 %v4505
      %4626 = vmatpush.bf16.msra.mxu0 %v4503
      %4627 = vmatpush.bf16.msra.mxu0 %v4501
      %4628 = vmatpush.bf16.msra.mxu0 %v4499
      %4629 = vmatpush.bf16.msra.mxu0 %v4497
      %4630 = vmatpush.bf16.msra.mxu0 %v4495
      %4631 = vmatmul.bf16.gmra.mxu0 %v4230
      %v4632 = vpop.f32.mrf.mxu0
      %v4633 = vadd.f32 0.0, %v4632
      %v4634 = vpop.f32.mrf.mxu0
      %v4635 = vadd.f32 0.0, %v4634
      %4636 = vmatmul.bf16.gmra.mxu0 %v4234
      %v4637 = vpop.f32.mrf.mxu0
      %v4638 = vadd.f32 0.0, %v4637
      %v4639 = vpop.f32.mrf.mxu0
      %4640 = vdwg.mxu0
      %4641 = vmatpush.bf16.msra.mxu0 %v4525
      %4642 = vmatpush.bf16.msra.mxu0 %v4523
      %4643 = vmatpush.bf16.msra.mxu0 %v4521
      %4644 = vmatpush.bf16.msra.mxu0 %v4519
      %4645 = vmatpush.bf16.msra.mxu0 %v4517
      %4646 = vmatpush.bf16.msra.mxu0 %v4515
      %4647 = vmatpush.bf16.msra.mxu0 %v4513
      %4648 = vmatpush.bf16.msra.mxu0 %v4511
      %4649 = vmatmul.bf16.gmra.mxu0 %v4231
      %v4650 = vpop.f32.mrf.mxu0
      %v4651 = vadd.f32 %v4633, %v4650
      %v4652 = vpop.f32.mrf.mxu0
      %v4653 = vadd.f32 %v4635, %v4652
      %4654 = vmatmul.bf16.gmra.mxu0 %v4235
      %v4655 = vpop.f32.mrf.mxu0
      %v4656 = vadd.f32 %v4638, %v4655
      %v4657 = vpop.f32.mrf.mxu0
      %4658 = vdwg.mxu0
      %4659 = vmatpush.bf16.msra.mxu0 %v4541
      %4660 = vmatpush.bf16.msra.mxu0 %v4539
      %4661 = vmatpush.bf16.msra.mxu0 %v4537
      %4662 = vmatpush.bf16.msra.mxu0 %v4535
      %4663 = vmatpush.bf16.msra.mxu0 %v4533
      %4664 = vmatpush.bf16.msra.mxu0 %v4531
      %4665 = vmatpush.bf16.msra.mxu0 %v4529
      %4666 = vmatpush.bf16.msra.mxu0 %v4527
      %4667 = vmatmul.bf16.gmra.mxu0 %v4232
      %v4668 = vpop.f32.mrf.mxu0
      %v4669 = vadd.f32 %v4651, %v4668
      %v4670 = vpop.f32.mrf.mxu0
      %v4671 = vadd.f32 %v4653, %v4670
      %4672 = vmatmul.bf16.gmra.mxu0 %v4236
      %v4673 = vpop.f32.mrf.mxu0
      %v4674 = vadd.f32 %v4656, %v4673
      %v4675 = vpop.f32.mrf.mxu0
      %4676 = vdwg.mxu0
      %4677 = vmatpush.bf16.msra.mxu0 %v4557
      %4678 = vmatpush.bf16.msra.mxu0 %v4555
      %4679 = vmatpush.bf16.msra.mxu0 %v4553
      %4680 = vmatpush.bf16.msra.mxu0 %v4551
      %4681 = vmatpush.bf16.msra.mxu0 %v4549
      %4682 = vmatpush.bf16.msra.mxu0 %v4547
      %4683 = vmatpush.bf16.msra.mxu0 %v4545
      %4684 = vmatpush.bf16.msra.mxu0 %v4543
      %4685 = vmatmul.bf16.gmra.mxu0 %v4233
      %v4686 = vpop.f32.mrf.mxu0
      %v4687 = vadd.f32 %v4669, %v4686
      %v4688 = vpop.f32.mrf.mxu0
      %v4689 = vadd.f32 %v4671, %v4688
      %4690 = vmatmul.bf16.gmra.mxu0 %v4237
      %v4691 = vpop.f32.mrf.mxu0
      %v4692 = vadd.f32 %v4674, %v4691
      %v4693 = vpop.f32.mrf.mxu0
      %4694 = vdwg.mxu0
      %4695 = vmatpush.bf16.msra.mxu0 %v4510
      %4696 = vmatpush.bf16.msra.mxu0 %v4508
      %4697 = vmatpush.bf16.msra.mxu0 %v4506
      %4698 = vmatpush.bf16.msra.mxu0 %v4504
      %4699 = vmatpush.bf16.msra.mxu0 %v4502
      %4700 = vmatpush.bf16.msra.mxu0 %v4500
      %4701 = vmatpush.bf16.msra.mxu0 %v4498
      %4702 = vmatpush.bf16.msra.mxu0 %v4496
      %4703 = vmatmul.bf16.gmra.mxu0 %v4230
      %v4704 = vpop.f32.mrf.mxu0
      %v4705 = vadd.f32 0.0, %v4704
      %v4706 = vpop.f32.mrf.mxu0
      %v4707 = vadd.f32 0.0, %v4706
      %4708 = vmatmul.bf16.gmra.mxu0 %v4234
      %v4709 = vpop.f32.mrf.mxu0
      %v4710 = vadd.f32 0.0, %v4709
      %v4711 = vpop.f32.mrf.mxu0
      %4712 = vdwg.mxu0
      %4713 = vmatpush.bf16.msra.mxu0 %v4526
      %4714 = vmatpush.bf16.msra.mxu0 %v4524
      %4715 = vmatpush.bf16.msra.mxu0 %v4522
      %4716 = vmatpush.bf16.msra.mxu0 %v4520
      %4717 = vmatpush.bf16.msra.mxu0 %v4518
      %4718 = vmatpush.bf16.msra.mxu0 %v4516
      %4719 = vmatpush.bf16.msra.mxu0 %v4514
      %4720 = vmatpush.bf16.msra.mxu0 %v4512
      %4721 = vmatmul.bf16.gmra.mxu0 %v4231
      %v4722 = vpop.f32.mrf.mxu0
      %v4723 = vadd.f32 %v4705, %v4722
      %v4724 = vpop.f32.mrf.mxu0
      %v4725 = vadd.f32 %v4707, %v4724
      %4726 = vmatmul.bf16.gmra.mxu0 %v4235
      %v4727 = vpop.f32.mrf.mxu0
      %v4728 = vadd.f32 %v4710, %v4727
      %v4729 = vpop.f32.mrf.mxu0
      %4730 = vdwg.mxu0
      %4731 = vmatpush.bf16.msra.mxu0 %v4542
      %4732 = vmatpush.bf16.msra.mxu0 %v4540
      %4733 = vmatpush.bf16.msra.mxu0 %v4538
      %4734 = vmatpush.bf16.msra.mxu0 %v4536
      %4735 = vmatpush.bf16.msra.mxu0 %v4534
      %4736 = vmatpush.bf16.msra.mxu0 %v4532
      %4737 = vmatpush.bf16.msra.mxu0 %v4530
      %4738 = vmatpush.bf16.msra.mxu0 %v4528
      %4739 = vmatmul.bf16.gmra.mxu0 %v4232
      %v4740 = vpop.f32.mrf.mxu0
      %v4741 = vadd.f32 %v4723, %v4740
      %v4742 = vpop.f32.mrf.mxu0
      %v4743 = vadd.f32 %v4725, %v4742
      %4744 = vmatmul.bf16.gmra.mxu0 %v4236
      %v4745 = vpop.f32.mrf.mxu0
      %v4746 = vadd.f32 %v4728, %v4745
      %v4747 = vpop.f32.mrf.mxu0
      %4748 = vdwg.mxu0
      %4749 = vmatpush.bf16.msra.mxu0 %v4558
      %4750 = vmatpush.bf16.msra.mxu0 %v4556
      %4751 = vmatpush.bf16.msra.mxu0 %v4554
      %4752 = vmatpush.bf16.msra.mxu0 %v4552
      %4753 = vmatpush.bf16.msra.mxu0 %v4550
      %4754 = vmatpush.bf16.msra.mxu0 %v4548
      %4755 = vmatpush.bf16.msra.mxu0 %v4546
      %4756 = vmatpush.bf16.msra.mxu0 %v4544
      %4757 = vmatmul.bf16.gmra.mxu0 %v4233
      %v4758 = vpop.f32.mrf.mxu0
      %v4759 = vadd.f32 %v4741, %v4758
      %v4760 = vpop.f32.mrf.mxu0
      %v4761 = vadd.f32 %v4743, %v4760
      %4762 = vmatmul.bf16.gmra.mxu0 %v4237
      %v4763 = vpop.f32.mrf.mxu0
      %v4764 = vadd.f32 %v4746, %v4763
      %v4765 = vpop.f32.mrf.mxu0
      %4766 = vdwg.mxu0
      %v4767 = vadd.f32 %v4138, %v4687
      %v4768 = vadd.f32 %v4210, %v4759
      %v4769 = vadd.f32 %v4140, %v4689
      %v4770 = vadd.f32 %v4212, %v4761
      %v4771 = vadd.f32 %v4143, %v4692
      %v4772 = vadd.f32 %v4215, %v4764
      %v4773 = vld [vmem:[%s3117] sm:$0xff]
      %v4774 = vld [vmem:[%s3117 + $0x10] sm:$0xff]
      %v4775 = vld [vmem:[%s3117 + $0x20] sm:$0xff]
      %v4776 = vld [vmem:[%s3117 + $0x1] sm:$0xff]
      %v4777 = vld [vmem:[%s3117 + $0x11] sm:$0xff]
      %v4778 = vld [vmem:[%s3117 + $0x21] sm:$0xff]
      %v4779 = vld [vmem:[%s3117 + $0x2] sm:$0xff]
      %v4780 = vld [vmem:[%s3117 + $0x12] sm:$0xff]
      %v4781 = vld [vmem:[%s3117 + $0x22] sm:$0xff]
      %v4782 = vld [vmem:[%s3117 + $0x3] sm:$0xff]
      %v4783 = vld [vmem:[%s3117 + $0x13] sm:$0xff]
      %v4784 = vld [vmem:[%s3117 + $0x23] sm:$0xff]
      %v4785 = vpack.c.bf16 %v4774, %v4773
      %v4786 = vpack.c.bf16 %v4777, %v4776
      %v4787 = vpack.c.bf16 %v4780, %v4779
      %v4788 = vpack.c.bf16 %v4783, %v4782
      %v4789 = vpack.c.bf16 %v4775, %v4775
      %v4790 = vpack.c.bf16 %v4778, %v4778
      %v4791 = vpack.c.bf16 %v4781, %v4781
      %v4792 = vpack.c.bf16 %v4784, %v4784
      %s4793 = scalar_lea.vmem %s4, 1536
      %v4794 = vld [vmem:[%s4793] sm:$0xff]
      %v4795 = vld [vmem:[%s4793 + $0x8] sm:$0xff]
      %v4796 = vld [vmem:[%s4793 + $0x10] sm:$0xff]
      %v4797 = vld [vmem:[%s4793 + $0x18] sm:$0xff]
      %v4798 = vld [vmem:[%s4793 + $0x20] sm:$0xff]
      %v4799 = vld [vmem:[%s4793 + $0x28] sm:$0xff]
      %v4800 = vld [vmem:[%s4793 + $0x30] sm:$0xff]
      %v4801 = vld [vmem:[%s4793 + $0x38] sm:$0xff]
      %v4802 = vld [vmem:[%s4793 + $0x40] sm:$0xff]
      %v4803 = vld [vmem:[%s4793 + $0x48] sm:$0xff]
      %v4804 = vld [vmem:[%s4793 + $0x50] sm:$0xff]
      %v4805 = vld [vmem:[%s4793 + $0x58] sm:$0xff]
      %v4806 = vld [vmem:[%s4793 + $0x60] sm:$0xff]
      %v4807 = vld [vmem:[%s4793 + $0x68] sm:$0xff]
      %v4808 = vld [vmem:[%s4793 + $0x70] sm:$0xff]
      %v4809 = vld [vmem:[%s4793 + $0x78] sm:$0xff]
      %v4810 = vld [vmem:[%s4793 + $0x80] sm:$0xff]
      %v4811 = vld [vmem:[%s4793 + $0x88] sm:$0xff]
      %v4812 = vld [vmem:[%s4793 + $0x90] sm:$0xff]
      %v4813 = vld [vmem:[%s4793 + $0x98] sm:$0xff]
      %v4814 = vld [vmem:[%s4793 + $0xa0] sm:$0xff]
      %v4815 = vld [vmem:[%s4793 + $0xa8] sm:$0xff]
      %v4816 = vld [vmem:[%s4793 + $0xb0] sm:$0xff]
      %v4817 = vld [vmem:[%s4793 + $0xb8] sm:$0xff]
      %v4818 = vld [vmem:[%s4793 + $0xc0] sm:$0xff]
      %v4819 = vld [vmem:[%s4793 + $0xc8] sm:$0xff]
      %v4820 = vld [vmem:[%s4793 + $0xd0] sm:$0xff]
      %v4821 = vld [vmem:[%s4793 + $0xd8] sm:$0xff]
      %v4822 = vld [vmem:[%s4793 + $0xe0] sm:$0xff]
      %v4823 = vld [vmem:[%s4793 + $0xe8] sm:$0xff]
      %v4824 = vld [vmem:[%s4793 + $0xf0] sm:$0xff]
      %v4825 = vld [vmem:[%s4793 + $0xf8] sm:$0xff]
      %v4826 = vld [vmem:[%s4793 + $0x100] sm:$0xff]
      %v4827 = vld [vmem:[%s4793 + $0x108] sm:$0xff]
      %v4828 = vld [vmem:[%s4793 + $0x110] sm:$0xff]
      %v4829 = vld [vmem:[%s4793 + $0x118] sm:$0xff]
      %v4830 = vld [vmem:[%s4793 + $0x120] sm:$0xff]
      %v4831 = vld [vmem:[%s4793 + $0x128] sm:$0xff]
      %v4832 = vld [vmem:[%s4793 + $0x130] sm:$0xff]
      %v4833 = vld [vmem:[%s4793 + $0x138] sm:$0xff]
      %v4834 = vld [vmem:[%s4793 + $0x140] sm:$0xff]
      %v4835 = vld [vmem:[%s4793 + $0x148] sm:$0xff]
      %v4836 = vld [vmem:[%s4793 + $0x150] sm:$0xff]
      %v4837 = vld [vmem:[%s4793 + $0x158] sm:$0xff]
      %v4838 = vld [vmem:[%s4793 + $0x160] sm:$0xff]
      %v4839 = vld [vmem:[%s4793 + $0x168] sm:$0xff]
      %v4840 = vld [vmem:[%s4793 + $0x170] sm:$0xff]
      %v4841 = vld [vmem:[%s4793 + $0x178] sm:$0xff]
      %v4842 = vld [vmem:[%s4793 + $0x180] sm:$0xff]
      %v4843 = vld [vmem:[%s4793 + $0x188] sm:$0xff]
      %v4844 = vld [vmem:[%s4793 + $0x190] sm:$0xff]
      %v4845 = vld [vmem:[%s4793 + $0x198] sm:$0xff]
      %v4846 = vld [vmem:[%s4793 + $0x1a0] sm:$0xff]
      %v4847 = vld [vmem:[%s4793 + $0x1a8] sm:$0xff]
      %v4848 = vld [vmem:[%s4793 + $0x1b0] sm:$0xff]
      %v4849 = vld [vmem:[%s4793 + $0x1b8] sm:$0xff]
      %v4850 = vld [vmem:[%s4793 + $0x1c0] sm:$0xff]
      %v4851 = vld [vmem:[%s4793 + $0x1c8] sm:$0xff]
      %v4852 = vld [vmem:[%s4793 + $0x1d0] sm:$0xff]
      %v4853 = vld [vmem:[%s4793 + $0x1d8] sm:$0xff]
      %v4854 = vld [vmem:[%s4793 + $0x1e0] sm:$0xff]
      %v4855 = vld [vmem:[%s4793 + $0x1e8] sm:$0xff]
      %v4856 = vld [vmem:[%s4793 + $0x1f0] sm:$0xff]
      %v4857 = vld [vmem:[%s4793 + $0x1f8] sm:$0xff]
      %v4922 = vunpack.c.l.b16 %v4794
      %v4923 = vunpack.c.h.b16 %v4794
      %v4924 = vunpack.c.l.b16 %v4795
      %v4925 = vunpack.c.h.b16 %v4795
      %v4926 = vunpack.c.l.b16 %v4796
      %v4927 = vunpack.c.h.b16 %v4796
      %v4928 = vunpack.c.l.b16 %v4797
      %v4929 = vunpack.c.h.b16 %v4797
      %v4930 = vunpack.c.l.b16 %v4798
      %v4931 = vunpack.c.h.b16 %v4798
      %v4932 = vunpack.c.l.b16 %v4799
      %v4933 = vunpack.c.h.b16 %v4799
      %v4934 = vunpack.c.l.b16 %v4800
      %v4935 = vunpack.c.h.b16 %v4800
      %v4936 = vunpack.c.l.b16 %v4801
      %v4937 = vunpack.c.h.b16 %v4801
      %v4938 = vunpack.c.l.b16 %v4802
      %v4939 = vunpack.c.h.b16 %v4802
      %v4940 = vunpack.c.l.b16 %v4803
      %v4941 = vunpack.c.h.b16 %v4803
      %v4942 = vunpack.c.l.b16 %v4804
      %v4943 = vunpack.c.h.b16 %v4804
      %v4944 = vunpack.c.l.b16 %v4805
      %v4945 = vunpack.c.h.b16 %v4805
      %v4946 = vunpack.c.l.b16 %v4806
      %v4947 = vunpack.c.h.b16 %v4806
      %v4948 = vunpack.c.l.b16 %v4807
      %v4949 = vunpack.c.h.b16 %v4807
      %v4950 = vunpack.c.l.b16 %v4808
      %v4951 = vunpack.c.h.b16 %v4808
      %v4952 = vunpack.c.l.b16 %v4809
      %v4953 = vunpack.c.h.b16 %v4809
      %v4954 = vunpack.c.l.b16 %v4810
      %v4955 = vunpack.c.h.b16 %v4810
      %v4956 = vunpack.c.l.b16 %v4811
      %v4957 = vunpack.c.h.b16 %v4811
      %v4958 = vunpack.c.l.b16 %v4812
      %v4959 = vunpack.c.h.b16 %v4812
      %v4960 = vunpack.c.l.b16 %v4813
      %v4961 = vunpack.c.h.b16 %v4813
      %v4962 = vunpack.c.l.b16 %v4814
      %v4963 = vunpack.c.h.b16 %v4814
      %v4964 = vunpack.c.l.b16 %v4815
      %v4965 = vunpack.c.h.b16 %v4815
      %v4966 = vunpack.c.l.b16 %v4816
      %v4967 = vunpack.c.h.b16 %v4816
      %v4968 = vunpack.c.l.b16 %v4817
      %v4969 = vunpack.c.h.b16 %v4817
      %v4970 = vunpack.c.l.b16 %v4818
      %v4971 = vunpack.c.h.b16 %v4818
      %v4972 = vunpack.c.l.b16 %v4819
      %v4973 = vunpack.c.h.b16 %v4819
      %v4974 = vunpack.c.l.b16 %v4820
      %v4975 = vunpack.c.h.b16 %v4820
      %v4976 = vunpack.c.l.b16 %v4821
      %v4977 = vunpack.c.h.b16 %v4821
      %v4978 = vunpack.c.l.b16 %v4822
      %v4979 = vunpack.c.h.b16 %v4822
      %v4980 = vunpack.c.l.b16 %v4823
      %v4981 = vunpack.c.h.b16 %v4823
      %v4982 = vunpack.c.l.b16 %v4824
      %v4983 = vunpack.c.h.b16 %v4824
      %v4984 = vunpack.c.l.b16 %v4825
      %v4985 = vunpack.c.h.b16 %v4825
      %v4986 = vunpack.c.l.b16 %v4826
      %v4987 = vunpack.c.h.b16 %v4826
      %v4988 = vunpack.c.l.b16 %v4827
      %v4989 = vunpack.c.h.b16 %v4827
      %v4990 = vunpack.c.l.b16 %v4828
      %v4991 = vunpack.c.h.b16 %v4828
      %v4992 = vunpack.c.l.b16 %v4829
      %v4993 = vunpack.c.h.b16 %v4829
      %v4994 = vunpack.c.l.b16 %v4830
      %v4995 = vunpack.c.h.b16 %v4830
      %v4996 = vunpack.c.l.b16 %v4831
      %v4997 = vunpack.c.h.b16 %v4831
      %v4998 = vunpack.c.l.b16 %v4832
      %v4999 = vunpack.c.h.b16 %v4832
      %v5000 = vunpack.c.l.b16 %v4833
      %v5001 = vunpack.c.h.b16 %v4833
      %v5002 = vunpack.c.l.b16 %v4834
      %v5003 = vunpack.c.h.b16 %v4834
      %v5004 = vunpack.c.l.b16 %v4835
      %v5005 = vunpack.c.h.b16 %v4835
      %v5006 = vunpack.c.l.b16 %v4836
      %v5007 = vunpack.c.h.b16 %v4836
      %v5008 = vunpack.c.l.b16 %v4837
      %v5009 = vunpack.c.h.b16 %v4837
      %v5010 = vunpack.c.l.b16 %v4838
      %v5011 = vunpack.c.h.b16 %v4838
      %v5012 = vunpack.c.l.b16 %v4839
      %v5013 = vunpack.c.h.b16 %v4839
      %v5014 = vunpack.c.l.b16 %v4840
      %v5015 = vunpack.c.h.b16 %v4840
      %v5016 = vunpack.c.l.b16 %v4841
      %v5017 = vunpack.c.h.b16 %v4841
      %v5018 = vunpack.c.l.b16 %v4842
      %v5019 = vunpack.c.h.b16 %v4842
      %v5020 = vunpack.c.l.b16 %v4843
      %v5021 = vunpack.c.h.b16 %v4843
      %v5022 = vunpack.c.l.b16 %v4844
      %v5023 = vunpack.c.h.b16 %v4844
      %v5024 = vunpack.c.l.b16 %v4845
      %v5025 = vunpack.c.h.b16 %v4845
      %v5026 = vunpack.c.l.b16 %v4846
      %v5027 = vunpack.c.h.b16 %v4846
      %v5028 = vunpack.c.l.b16 %v4847
      %v5029 = vunpack.c.h.b16 %v4847
      %v5030 = vunpack.c.l.b16 %v4848
      %v5031 = vunpack.c.h.b16 %v4848
      %v5032 = vunpack.c.l.b16 %v4849
      %v5033 = vunpack.c.h.b16 %v4849
      %v5034 = vunpack.c.l.b16 %v4850
      %v5035 = vunpack.c.h.b16 %v4850
      %v5036 = vunpack.c.l.b16 %v4851
      %v5037 = vunpack.c.h.b16 %v4851
      %v5038 = vunpack.c.l.b16 %v4852
      %v5039 = vunpack.c.h.b16 %v4852
      %v5040 = vunpack.c.l.b16 %v4853
      %v5041 = vunpack.c.h.b16 %v4853
      %v5042 = vunpack.c.l.b16 %v4854
      %v5043 = vunpack.c.h.b16 %v4854
      %v5044 = vunpack.c.l.b16 %v4855
      %v5045 = vunpack.c.h.b16 %v4855
      %v5046 = vunpack.c.l.b16 %v4856
      %v5047 = vunpack.c.h.b16 %v4856
      %v5048 = vunpack.c.l.b16 %v4857
      %v5049 = vunpack.c.h.b16 %v4857
      %v5050 = vpack.c.b16 %v4924, %v4922
      %v5051 = vpack.c.b16 %v4925, %v4923
      %v5052 = vpack.c.b16 %v4928, %v4926
      %v5053 = vpack.c.b16 %v4929, %v4927
      %v5054 = vpack.c.b16 %v4932, %v4930
      %v5055 = vpack.c.b16 %v4933, %v4931
      %v5056 = vpack.c.b16 %v4936, %v4934
      %v5057 = vpack.c.b16 %v4937, %v4935
      %v5058 = vpack.c.b16 %v4940, %v4938
      %v5059 = vpack.c.b16 %v4941, %v4939
      %v5060 = vpack.c.b16 %v4944, %v4942
      %v5061 = vpack.c.b16 %v4945, %v4943
      %v5062 = vpack.c.b16 %v4948, %v4946
      %v5063 = vpack.c.b16 %v4949, %v4947
      %v5064 = vpack.c.b16 %v4952, %v4950
      %v5065 = vpack.c.b16 %v4953, %v4951
      %v5066 = vpack.c.b16 %v4956, %v4954
      %v5067 = vpack.c.b16 %v4957, %v4955
      %v5068 = vpack.c.b16 %v4960, %v4958
      %v5069 = vpack.c.b16 %v4961, %v4959
      %v5070 = vpack.c.b16 %v4964, %v4962
      %v5071 = vpack.c.b16 %v4965, %v4963
      %v5072 = vpack.c.b16 %v4968, %v4966
      %v5073 = vpack.c.b16 %v4969, %v4967
      %v5074 = vpack.c.b16 %v4972, %v4970
      %v5075 = vpack.c.b16 %v4973, %v4971
      %v5076 = vpack.c.b16 %v4976, %v4974
      %v5077 = vpack.c.b16 %v4977, %v4975
      %v5078 = vpack.c.b16 %v4980, %v4978
      %v5079 = vpack.c.b16 %v4981, %v4979
      %v5080 = vpack.c.b16 %v4984, %v4982
      %v5081 = vpack.c.b16 %v4985, %v4983
      %v5082 = vpack.c.b16 %v4988, %v4986
      %v5083 = vpack.c.b16 %v4989, %v4987
      %v5084 = vpack.c.b16 %v4992, %v4990
      %v5085 = vpack.c.b16 %v4993, %v4991
      %v5086 = vpack.c.b16 %v4996, %v4994
      %v5087 = vpack.c.b16 %v4997, %v4995
      %v5088 = vpack.c.b16 %v5000, %v4998
      %v5089 = vpack.c.b16 %v5001, %v4999
      %v5090 = vpack.c.b16 %v5004, %v5002
      %v5091 = vpack.c.b16 %v5005, %v5003
      %v5092 = vpack.c.b16 %v5008, %v5006
      %v5093 = vpack.c.b16 %v5009, %v5007
      %v5094 = vpack.c.b16 %v5012, %v5010
      %v5095 = vpack.c.b16 %v5013, %v5011
      %v5096 = vpack.c.b16 %v5016, %v5014
      %v5097 = vpack.c.b16 %v5017, %v5015
      %v5098 = vpack.c.b16 %v5020, %v5018
      %v5099 = vpack.c.b16 %v5021, %v5019
      %v5100 = vpack.c.b16 %v5024, %v5022
      %v5101 = vpack.c.b16 %v5025, %v5023
      %v5102 = vpack.c.b16 %v5028, %v5026
      %v5103 = vpack.c.b16 %v5029, %v5027
      %v5104 = vpack.c.b16 %v5032, %v5030
      %v5105 = vpack.c.b16 %v5033, %v5031
      %v5106 = vpack.c.b16 %v5036, %v5034
      %v5107 = vpack.c.b16 %v5037, %v5035
      %v5108 = vpack.c.b16 %v5040, %v5038
      %v5109 = vpack.c.b16 %v5041, %v5039
      %v5110 = vpack.c.b16 %v5044, %v5042
      %v5111 = vpack.c.b16 %v5045, %v5043
      %v5112 = vpack.c.b16 %v5048, %v5046
      %v5113 = vpack.c.b16 %v5049, %v5047
      %5178 = vmatpush.bf16.msra.mxu0 %v5064
      %5179 = vmatpush.bf16.msra.mxu0 %v5062
      %5180 = vmatpush.bf16.msra.mxu0 %v5060
      %5181 = vmatpush.bf16.msra.mxu0 %v5058
      %5182 = vmatpush.bf16.msra.mxu0 %v5056
      %5183 = vmatpush.bf16.msra.mxu0 %v5054
      %5184 = vmatpush.bf16.msra.mxu0 %v5052
      %5185 = vmatpush.bf16.msra.mxu0 %v5050
      %5186 = vmatmul.bf16.gmra.mxu0 %v4785
      %v5187 = vpop.f32.mrf.mxu0
      %v5188 = vadd.f32 0.0, %v5187
      %v5189 = vpop.f32.mrf.mxu0
      %v5190 = vadd.f32 0.0, %v5189
      %5191 = vmatmul.bf16.gmra.mxu0 %v4789
      %v5192 = vpop.f32.mrf.mxu0
      %v5193 = vadd.f32 0.0, %v5192
      %v5194 = vpop.f32.mrf.mxu0
      %5195 = vdwg.mxu0
      %5196 = vmatpush.bf16.msra.mxu0 %v5080
      %5197 = vmatpush.bf16.msra.mxu0 %v5078
      %5198 = vmatpush.bf16.msra.mxu0 %v5076
      %5199 = vmatpush.bf16.msra.mxu0 %v5074
      %5200 = vmatpush.bf16.msra.mxu0 %v5072
      %5201 = vmatpush.bf16.msra.mxu0 %v5070
      %5202 = vmatpush.bf16.msra.mxu0 %v5068
      %5203 = vmatpush.bf16.msra.mxu0 %v5066
      %5204 = vmatmul.bf16.gmra.mxu0 %v4786
      %v5205 = vpop.f32.mrf.mxu0
      %v5206 = vadd.f32 %v5188, %v5205
      %v5207 = vpop.f32.mrf.mxu0
      %v5208 = vadd.f32 %v5190, %v5207
      %5209 = vmatmul.bf16.gmra.mxu0 %v4790
      %v5210 = vpop.f32.mrf.mxu0
      %v5211 = vadd.f32 %v5193, %v5210
      %v5212 = vpop.f32.mrf.mxu0
      %5213 = vdwg.mxu0
      %5214 = vmatpush.bf16.msra.mxu0 %v5096
      %5215 = vmatpush.bf16.msra.mxu0 %v5094
      %5216 = vmatpush.bf16.msra.mxu0 %v5092
      %5217 = vmatpush.bf16.msra.mxu0 %v5090
      %5218 = vmatpush.bf16.msra.mxu0 %v5088
      %5219 = vmatpush.bf16.msra.mxu0 %v5086
      %5220 = vmatpush.bf16.msra.mxu0 %v5084
      %5221 = vmatpush.bf16.msra.mxu0 %v5082
      %5222 = vmatmul.bf16.gmra.mxu0 %v4787
      %v5223 = vpop.f32.mrf.mxu0
      %v5224 = vadd.f32 %v5206, %v5223
      %v5225 = vpop.f32.mrf.mxu0
      %v5226 = vadd.f32 %v5208, %v5225
      %5227 = vmatmul.bf16.gmra.mxu0 %v4791
      %v5228 = vpop.f32.mrf.mxu0
      %v5229 = vadd.f32 %v5211, %v5228
      %v5230 = vpop.f32.mrf.mxu0
      %5231 = vdwg.mxu0
      %5232 = vmatpush.bf16.msra.mxu0 %v5112
      %5233 = vmatpush.bf16.msra.mxu0 %v5110
      %5234 = vmatpush.bf16.msra.mxu0 %v5108
      %5235 = vmatpush.bf16.msra.mxu0 %v5106
      %5236 = vmatpush.bf16.msra.mxu0 %v5104
      %5237 = vmatpush.bf16.msra.mxu0 %v5102
      %5238 = vmatpush.bf16.msra.mxu0 %v5100
      %5239 = vmatpush.bf16.msra.mxu0 %v5098
      %5240 = vmatmul.bf16.gmra.mxu0 %v4788
      %v5241 = vpop.f32.mrf.mxu0
      %v5242 = vadd.f32 %v5224, %v5241
      %v5243 = vpop.f32.mrf.mxu0
      %v5244 = vadd.f32 %v5226, %v5243
      %5245 = vmatmul.bf16.gmra.mxu0 %v4792
      %v5246 = vpop.f32.mrf.mxu0
      %v5247 = vadd.f32 %v5229, %v5246
      %v5248 = vpop.f32.mrf.mxu0
      %5249 = vdwg.mxu0
      %5250 = vmatpush.bf16.msra.mxu0 %v5065
      %5251 = vmatpush.bf16.msra.mxu0 %v5063
      %5252 = vmatpush.bf16.msra.mxu0 %v5061
      %5253 = vmatpush.bf16.msra.mxu0 %v5059
      %5254 = vmatpush.bf16.msra.mxu0 %v5057
      %5255 = vmatpush.bf16.msra.mxu0 %v5055
      %5256 = vmatpush.bf16.msra.mxu0 %v5053
      %5257 = vmatpush.bf16.msra.mxu0 %v5051
      %5258 = vmatmul.bf16.gmra.mxu0 %v4785
      %v5259 = vpop.f32.mrf.mxu0
      %v5260 = vadd.f32 0.0, %v5259
      %v5261 = vpop.f32.mrf.mxu0
      %v5262 = vadd.f32 0.0, %v5261
      %5263 = vmatmul.bf16.gmra.mxu0 %v4789
      %v5264 = vpop.f32.mrf.mxu0
      %v5265 = vadd.f32 0.0, %v5264
      %v5266 = vpop.f32.mrf.mxu0
      %5267 = vdwg.mxu0
      %5268 = vmatpush.bf16.msra.mxu0 %v5081
      %5269 = vmatpush.bf16.msra.mxu0 %v5079
      %5270 = vmatpush.bf16.msra.mxu0 %v5077
      %5271 = vmatpush.bf16.msra.mxu0 %v5075
      %5272 = vmatpush.bf16.msra.mxu0 %v5073
      %5273 = vmatpush.bf16.msra.mxu0 %v5071
      %5274 = vmatpush.bf16.msra.mxu0 %v5069
      %5275 = vmatpush.bf16.msra.mxu0 %v5067
      %5276 = vmatmul.bf16.gmra.mxu0 %v4786
      %v5277 = vpop.f32.mrf.mxu0
      %v5278 = vadd.f32 %v5260, %v5277
      %v5279 = vpop.f32.mrf.mxu0
      %v5280 = vadd.f32 %v5262, %v5279
      %5281 = vmatmul.bf16.gmra.mxu0 %v4790
      %v5282 = vpop.f32.mrf.mxu0
      %v5283 = vadd.f32 %v5265, %v5282
      %v5284 = vpop.f32.mrf.mxu0
      %5285 = vdwg.mxu0
      %5286 = vmatpush.bf16.msra.mxu0 %v5097
      %5287 = vmatpush.bf16.msra.mxu0 %v5095
      %5288 = vmatpush.bf16.msra.mxu0 %v5093
      %5289 = vmatpush.bf16.msra.mxu0 %v5091
      %5290 = vmatpush.bf16.msra.mxu0 %v5089
      %5291 = vmatpush.bf16.msra.mxu0 %v5087
      %5292 = vmatpush.bf16.msra.mxu0 %v5085
      %5293 = vmatpush.bf16.msra.mxu0 %v5083
      %5294 = vmatmul.bf16.gmra.mxu0 %v4787
      %v5295 = vpop.f32.mrf.mxu0
      %v5296 = vadd.f32 %v5278, %v5295
      %v5297 = vpop.f32.mrf.mxu0
      %v5298 = vadd.f32 %v5280, %v5297
      %5299 = vmatmul.bf16.gmra.mxu0 %v4791
      %v5300 = vpop.f32.mrf.mxu0
      %v5301 = vadd.f32 %v5283, %v5300
      %v5302 = vpop.f32.mrf.mxu0
      %5303 = vdwg.mxu0
      %5304 = vmatpush.bf16.msra.mxu0 %v5113
      %5305 = vmatpush.bf16.msra.mxu0 %v5111
      %5306 = vmatpush.bf16.msra.mxu0 %v5109
      %5307 = vmatpush.bf16.msra.mxu0 %v5107
      %5308 = vmatpush.bf16.msra.mxu0 %v5105
      %5309 = vmatpush.bf16.msra.mxu0 %v5103
      %5310 = vmatpush.bf16.msra.mxu0 %v5101
      %5311 = vmatpush.bf16.msra.mxu0 %v5099
      %5312 = vmatmul.bf16.gmra.mxu0 %v4788
      %v5313 = vpop.f32.mrf.mxu0
      %v5314 = vadd.f32 %v5296, %v5313
      %v5315 = vpop.f32.mrf.mxu0
      %v5316 = vadd.f32 %v5298, %v5315
      %5317 = vmatmul.bf16.gmra.mxu0 %v4792
      %v5318 = vpop.f32.mrf.mxu0
      %v5319 = vadd.f32 %v5301, %v5318
      %v5320 = vpop.f32.mrf.mxu0
      %5321 = vdwg.mxu0
      %v5322 = vadd.f32 %v4767, %v5242
      %v5323 = vadd.f32 %v4768, %v5314
      %v5324 = vadd.f32 %v4769, %v5244
      %v5325 = vadd.f32 %v4770, %v5316
      %v5326 = vadd.f32 %v4771, %v5247
      %v5327 = vadd.f32 %v4772, %v5319
      %v5328 = vld [vmem:[%s9] sm:$0x3]
      %v5330 = vperm.slane %v5328, 0
      %v5331 = vperm.slane %v5328, 1
      %v5334 = vadd.f32 %v5322, %v5330
      %v5335 = vadd.f32 %v5323, %v5331
      %v5336 = vadd.f32 %v5324, %v5330
      %v5337 = vadd.f32 %v5325, %v5331
      %v5338 = vadd.f32 %v5326, %v5330
      %v5339 = vadd.f32 %v5327, %v5331
      %vm5340 = vcmp.ge.f32.partialorder %v5334, 0.0
      %vm5341 = vcmp.ge.f32.partialorder %v5335, 0.0
      %vm5342 = vcmp.ge.f32.partialorder %v5336, 0.0
      %vm5343 = vcmp.ge.f32.partialorder %v5337, 0.0
      %vm5344 = vcmp.ge.f32.partialorder %v5338, 0.0
      %vm5345 = vcmp.ge.f32.partialorder %v5339, 0.0
      %v5346 = vmul.f32 %v5334, 0.2
      %v5347 = vmul.f32 %v5335, 0.2
      %v5348 = vmul.f32 %v5336, 0.2
      %v5349 = vmul.f32 %v5337, 0.2
      %v5350 = vmul.f32 %v5338, 0.2
      %v5351 = vmul.f32 %v5339, 0.2
      %v5352 = vsel %vm5340, %v5334, %v5346
      %v5353 = vsel %vm5341, %v5335, %v5347
      %v5354 = vsel %vm5342, %v5336, %v5348
      %v5355 = vsel %vm5343, %v5337, %v5349
      %v5356 = vsel %vm5344, %v5338, %v5350
      %v5357 = vsel %vm5345, %v5339, %v5351
      %v5364 = vrot.slane %v5352, 7
      %v5365 = vrot.slane %v5353, 7
      %v5366 = vrot.slane %v5354, 7
      %v5367 = vrot.slane %v5355, 7
      %v5368 = vrot.slane %v5356, 7
      %v5369 = vrot.slane %v5357, 7
      %s5376 = scalar_lea.vmem [#allocation5], 32
      %5377 = vst [vmem:[%s5376] sm:$0xe] %v5364
      %5378 = vst [vmem:[%s5376 + $0x8] sm:$0xe] %v5365
      %5379 = vst [vmem:[%s5376 + $0x20] sm:$0xe] %v5366
      %5380 = vst [vmem:[%s5376 + $0x28] sm:$0xe] %v5367
      %5381 = vst [vmem:[%s5376 + $0x40] sm:$0xe] %v5368
      %5382 = vst [vmem:[%s5376 + $0x48] sm:$0xe] %v5369
      %5383 = vst [vmem:[#allocation1] sm:$0xff] %v5352
      %5384 = vst [vmem:[#allocation1 + $0x9] sm:$0xff] %v5353
      %s5385 = scalar_lea.vmem [#allocation1], 1
      %v5386 = vld [vmem:[%s5385] ss:$9 sm:$0xff]
      %5387 = vst [vmem:[#allocation1] sm:$0xff] %v5354
      %5388 = vst [vmem:[#allocation1 + $0x9] sm:$0xff] %v5355
      %v5389 = vld [vmem:[%s5385] ss:$9 sm:$0xff]
      %5390 = vst [vmem:[#allocation1] sm:$0xff] %v5356
      %5391 = vst [vmem:[#allocation1 + $0x9] sm:$0xff] %v5357
      %v5392 = vld [vmem:[%s5385] ss:$9 sm:$0xff]
      %v5396 = vlaneseq
      %vm5397 = vcmp.ge.s32.totalorder %v5396, 0
      %vm5398 = vcmp.lt.s32.totalorder %v5396, 256
      %vm5399 = vmand %vm5397, %vm5398
      %5400 = vst.msk [vmem:[%s5376] ss:$8 sm:$0x3] %vm5399, %v5386
      %5401 = vst.msk [vmem:[%s5376] ss:$8 sm:$0x0] %vm5399, %v5386
      %s5402 = scalar_lea.vmem %s5376, 32 [#allocation5]
      %5403 = vst.msk [vmem:[%s5402] ss:$8 sm:$0x3] %vm5399, %v5389
      %5404 = vst.msk [vmem:[%s5402] ss:$8 sm:$0x0] %vm5399, %v5389
      %s5405 = scalar_lea.vmem %s5376, 64 [#allocation5]
      %5406 = vst.msk [vmem:[%s5405] ss:$8 sm:$0x3] %vm5399, %v5392
      %5407 = vst.msk [vmem:[%s5405] ss:$8 sm:$0x0] %vm5399, %v5392
      %5408 = vst [vmem:[#allocation1] sm:$0xff] %v5352
      %5409 = vst [vmem:[#allocation1 + $0x9] sm:$0xff] %v5353
      %s5410 = scalar_lea.vmem [#allocation1], 1
      %v5411 = vld [vmem:[%s5410] ss:$9 sm:$0xff]
      %5412 = vst [vmem:[#allocation1] sm:$0xff] %v5354
      %5413 = vst [vmem:[#allocation1 + $0x9] sm:$0xff] %v5355
      %v5414 = vld [vmem:[%s5410] ss:$9 sm:$0xff]
      %5415 = vst [vmem:[#allocation1] sm:$0xff] %v5356
      %5416 = vst [vmem:[#allocation1 + $0x9] sm:$0xff] %v5357
      %v5417 = vld [vmem:[%s5410] ss:$9 sm:$0xff]
      %s5421 = scalar_lea.vmem %s5376, 4 [#allocation5]
      %5422 = vst.msk [vmem:[%s5421] ss:$8 sm:$0x3] %vm5399, %v5411
      %5423 = vst.msk [vmem:[%s5421] ss:$8 sm:$0x0] %vm5399, %v5411
      %s5424 = scalar_lea.vmem %s5376, 36 [#allocation5]
      %5425 = vst.msk [vmem:[%s5424] ss:$8 sm:$0x3] %vm5399, %v5414
      %5426 = vst.msk [vmem:[%s5424] ss:$8 sm:$0x0] %vm5399, %v5414
      %s5427 = scalar_lea.vmem %s5376, 68 [#allocation5]
      %5428 = vst.msk [vmem:[%s5427] ss:$8 sm:$0x3] %vm5399, %v5417
      %5429 = vst.msk [vmem:[%s5427] ss:$8 sm:$0x0] %vm5399, %v5417
      %s5430 = scalar_lea.vmem [#allocation5], 64
      %v5431 = vld [vmem:[%s5430] sm:$0x1f]
      %v5432 = vld [vmem:[%s5430 + $0x8] sm:$0x1f]
      %5433 = vst [vmem:[#allocation5] sm:$0x1f] %v5431
      %5434 = vst [vmem:[#allocation5 + $0x8] sm:$0x1f] %v5432
      %v5435 = vld [vmem:[%s5430] sm:$0x1f]
      %v5436 = vld [vmem:[%s5430 + $0x8] sm:$0x1f]
      %s5437 = scalar_lea.vmem [#allocation5], 128
      %5438 = vst [vmem:[%s5437] sm:$0x1f] %v5435
      %5439 = vst [vmem:[%s5437 + $0x8] sm:$0x1f] %v5436
      %v5440 = vld [vmem:[#allocation5] sm:$0xff]
      %v5441 = vld [vmem:[#allocation5 + $0x8] sm:$0xff]
      %v5442 = vld [vmem:[#allocation5 + $0x20] sm:$0xff]
      %v5443 = vld [vmem:[#allocation5 + $0x28] sm:$0xff]
      %v5444 = vld [vmem:[#allocation5] sm:$0xfe]
      %v5445 = vld [vmem:[#allocation5 + $0x8] sm:$0xfe]
      %v5446 = vld [vmem:[#allocation5 + $0x10] sm:$0x1]
      %v5447 = vld [vmem:[#allocation5 + $0x18] sm:$0x1]
      %v5448 = vld [vmem:[#allocation5 + $0x20] sm:$0xfe]
      %v5449 = vld [vmem:[#allocation5 + $0x28] sm:$0xfe]
      %v5450 = vld [vmem:[#allocation5 + $0x30] sm:$0x1]
      %v5451 = vld [vmem:[#allocation5 + $0x38] sm:$0x1]
      %v5452 = vld [vmem:[#allocation5] sm:$0xfc]
      %v5453 = vld [vmem:[#allocation5 + $0x8] sm:$0xfc]
      %v5454 = vld [vmem:[#allocation5 + $0x10] sm:$0x3]
      %v5455 = vld [vmem:[#allocation5 + $0x18] sm:$0x3]
      %v5456 = vld [vmem:[#allocation5 + $0x20] sm:$0xfc]
      %v5457 = vld [vmem:[#allocation5 + $0x28] sm:$0xfc]
      %v5458 = vld [vmem:[#allocation5 + $0x30] sm:$0x3]
      %v5459 = vld [vmem:[#allocation5 + $0x38] sm:$0x3]
      %v5460 = vld [vmem:[#allocation5] sm:$0xf8]
      %v5461 = vld [vmem:[#allocation5 + $0x8] sm:$0xf8]
      %v5462 = vld [vmem:[#allocation5 + $0x10] sm:$0x7]
      %v5463 = vld [vmem:[#allocation5 + $0x18] sm:$0x7]
      %v5464 = vld [vmem:[#allocation5 + $0x20] sm:$0xf8]
      %v5465 = vld [vmem:[#allocation5 + $0x28] sm:$0xf8]
      %v5466 = vld [vmem:[#allocation5 + $0x30] sm:$0x7]
      %v5467 = vld [vmem:[#allocation5 + $0x38] sm:$0x7]
      %vm5476 = vcmask 1046528
      %v5477 = vrot.slane %v5444, 1
      %v5478 = vrot.slane %v5446, 1
      %v5479 = vsel %vm5476, %v5477, %v5478
      %v5480 = vrot.slane %v5445, 1
      %v5481 = vrot.slane %v5447, 1
      %v5482 = vsel %vm5476, %v5480, %v5481
      %v5483 = vrot.slane %v5448, 1
      %v5484 = vrot.slane %v5450, 1
      %v5485 = vsel %vm5476, %v5483, %v5484
      %v5486 = vrot.slane %v5449, 1
      %v5487 = vrot.slane %v5451, 1
      %v5488 = vsel %vm5476, %v5486, %v5487
      %vm5501 = vcmask 1045504
      %v5502 = vrot.slane %v5452, 2
      %v5503 = vrot.slane %v5454, 2
      %v5504 = vsel %vm5501, %v5502, %v5503
      %v5505 = vrot.slane %v5453, 2
      %v5506 = vrot.slane %v5455, 2
      %v5507 = vsel %vm5501, %v5505, %v5506
      %v5508 = vrot.slane %v5456, 2
      %v5509 = vrot.slane %v5458, 2
      %v5510 = vsel %vm5501, %v5508, %v5509
      %v5511 = vrot.slane %v5457, 2
      %v5512 = vrot.slane %v5459, 2
      %v5513 = vsel %vm5501, %v5511, %v5512
      %vm5526 = vcmask 1044480
      %v5527 = vrot.slane %v5460, 3
      %v5528 = vrot.slane %v5462, 3
      %v5529 = vsel %vm5526, %v5527, %v5528
      %v5530 = vrot.slane %v5461, 3
      %v5531 = vrot.slane %v5463, 3
      %v5532 = vsel %vm5526, %v5530, %v5531
      %v5533 = vrot.slane %v5464, 3
      %v5534 = vrot.slane %v5466, 3
      %v5535 = vsel %vm5526, %v5533, %v5534
      %v5536 = vrot.slane %v5465, 3
      %v5537 = vrot.slane %v5467, 3
      %v5538 = vsel %vm5526, %v5536, %v5537
      %v5543 = vpack.c.bf16 %v5442, %v5440
      %v5544 = vpack.c.bf16 %v5443, %v5441
      %v5545 = vpack.c.bf16 %v5485, %v5479
      %v5546 = vpack.c.bf16 %v5488, %v5482
      %v5547 = vpack.c.bf16 %v5510, %v5504
      %v5548 = vpack.c.bf16 %v5513, %v5507
      %v5549 = vpack.c.bf16 %v5535, %v5529
      %v5550 = vpack.c.bf16 %v5538, %v5532
      %v5551 = vld [vmem:[%s5] sm:$0xf]
      %v5552 = vld [vmem:[%s5 + $0x4] sm:$0xf]
      %v5553 = vld [vmem:[%s5 + $0x8] sm:$0xf]
      %v5554 = vld [vmem:[%s5 + $0xc] sm:$0xf]
      %v5555 = vld [vmem:[%s5 + $0x10] sm:$0xf]
      %v5556 = vld [vmem:[%s5 + $0x14] sm:$0xf]
      %v5557 = vld [vmem:[%s5 + $0x18] sm:$0xf]
      %v5558 = vld [vmem:[%s5 + $0x1c] sm:$0xf]
      %v5559 = vld [vmem:[%s5 + $0x20] sm:$0xf]
      %v5560 = vld [vmem:[%s5 + $0x24] sm:$0xf]
      %v5561 = vld [vmem:[%s5 + $0x28] sm:$0xf]
      %v5562 = vld [vmem:[%s5 + $0x2c] sm:$0xf]
      %v5563 = vld [vmem:[%s5 + $0x30] sm:$0xf]
      %v5564 = vld [vmem:[%s5 + $0x34] sm:$0xf]
      %v5565 = vld [vmem:[%s5 + $0x38] sm:$0xf]
      %v5566 = vld [vmem:[%s5 + $0x3c] sm:$0xf]
      %v5567 = vld [vmem:[%s5 + $0x40] sm:$0xf]
      %v5568 = vld [vmem:[%s5 + $0x44] sm:$0xf]
      %v5569 = vld [vmem:[%s5 + $0x48] sm:$0xf]
      %v5570 = vld [vmem:[%s5 + $0x4c] sm:$0xf]
      %v5571 = vld [vmem:[%s5 + $0x50] sm:$0xf]
      %v5572 = vld [vmem:[%s5 + $0x54] sm:$0xf]
      %v5573 = vld [vmem:[%s5 + $0x58] sm:$0xf]
      %v5574 = vld [vmem:[%s5 + $0x5c] sm:$0xf]
      %v5575 = vld [vmem:[%s5 + $0x60] sm:$0xf]
      %v5576 = vld [vmem:[%s5 + $0x64] sm:$0xf]
      %v5577 = vld [vmem:[%s5 + $0x68] sm:$0xf]
      %v5578 = vld [vmem:[%s5 + $0x6c] sm:$0xf]
      %v5579 = vld [vmem:[%s5 + $0x70] sm:$0xf]
      %v5580 = vld [vmem:[%s5 + $0x74] sm:$0xf]
      %v5581 = vld [vmem:[%s5 + $0x78] sm:$0xf]
      %v5582 = vld [vmem:[%s5 + $0x7c] sm:$0xf]
      %v5583 = vld [vmem:[%s5 + $0x80] sm:$0xf]
      %v5584 = vld [vmem:[%s5 + $0x84] sm:$0xf]
      %v5585 = vld [vmem:[%s5 + $0x88] sm:$0xf]
      %v5586 = vld [vmem:[%s5 + $0x8c] sm:$0xf]
      %v5587 = vld [vmem:[%s5 + $0x90] sm:$0xf]
      %v5588 = vld [vmem:[%s5 + $0x94] sm:$0xf]
      %v5589 = vld [vmem:[%s5 + $0x98] sm:$0xf]
      %v5590 = vld [vmem:[%s5 + $0x9c] sm:$0xf]
      %v5591 = vld [vmem:[%s5 + $0xa0] sm:$0xf]
      %v5592 = vld [vmem:[%s5 + $0xa4] sm:$0xf]
      %v5593 = vld [vmem:[%s5 + $0xa8] sm:$0xf]
      %v5594 = vld [vmem:[%s5 + $0xac] sm:$0xf]
      %v5595 = vld [vmem:[%s5 + $0xb0] sm:$0xf]
      %v5596 = vld [vmem:[%s5 + $0xb4] sm:$0xf]
      %v5597 = vld [vmem:[%s5 + $0xb8] sm:$0xf]
      %v5598 = vld [vmem:[%s5 + $0xbc] sm:$0xf]
      %v5599 = vld [vmem:[%s5 + $0xc0] sm:$0xf]
      %v5600 = vld [vmem:[%s5 + $0xc4] sm:$0xf]
      %v5601 = vld [vmem:[%s5 + $0xc8] sm:$0xf]
      %v5602 = vld [vmem:[%s5 + $0xcc] sm:$0xf]
      %v5603 = vld [vmem:[%s5 + $0xd0] sm:$0xf]
      %v5604 = vld [vmem:[%s5 + $0xd4] sm:$0xf]
      %v5605 = vld [vmem:[%s5 + $0xd8] sm:$0xf]
      %v5606 = vld [vmem:[%s5 + $0xdc] sm:$0xf]
      %v5607 = vld [vmem:[%s5 + $0xe0] sm:$0xf]
      %v5608 = vld [vmem:[%s5 + $0xe4] sm:$0xf]
      %v5609 = vld [vmem:[%s5 + $0xe8] sm:$0xf]
      %v5610 = vld [vmem:[%s5 + $0xec] sm:$0xf]
      %v5611 = vld [vmem:[%s5 + $0xf0] sm:$0xf]
      %v5612 = vld [vmem:[%s5 + $0xf4] sm:$0xf]
      %v5613 = vld [vmem:[%s5 + $0xf8] sm:$0xf]
      %v5614 = vld [vmem:[%s5 + $0xfc] sm:$0xf]
      %v5615 = vld [vmem:[%s5 + $0x100] sm:$0xf]
      %v5616 = vld [vmem:[%s5 + $0x104] sm:$0xf]
      %v5617 = vld [vmem:[%s5 + $0x108] sm:$0xf]
      %v5618 = vld [vmem:[%s5 + $0x10c] sm:$0xf]
      %v5619 = vld [vmem:[%s5 + $0x110] sm:$0xf]
      %v5620 = vld [vmem:[%s5 + $0x114] sm:$0xf]
      %v5621 = vld [vmem:[%s5 + $0x118] sm:$0xf]
      %v5622 = vld [vmem:[%s5 + $0x11c] sm:$0xf]
      %v5623 = vld [vmem:[%s5 + $0x120] sm:$0xf]
      %v5624 = vld [vmem:[%s5 + $0x124] sm:$0xf]
      %v5625 = vld [vmem:[%s5 + $0x128] sm:$0xf]
      %v5626 = vld [vmem:[%s5 + $0x12c] sm:$0xf]
      %v5627 = vld [vmem:[%s5 + $0x130] sm:$0xf]
      %v5628 = vld [vmem:[%s5 + $0x134] sm:$0xf]
      %v5629 = vld [vmem:[%s5 + $0x138] sm:$0xf]
      %v5630 = vld [vmem:[%s5 + $0x13c] sm:$0xf]
      %v5631 = vld [vmem:[%s5 + $0x140] sm:$0xf]
      %v5632 = vld [vmem:[%s5 + $0x144] sm:$0xf]
      %v5633 = vld [vmem:[%s5 + $0x148] sm:$0xf]
      %v5634 = vld [vmem:[%s5 + $0x14c] sm:$0xf]
      %v5635 = vld [vmem:[%s5 + $0x150] sm:$0xf]
      %v5636 = vld [vmem:[%s5 + $0x154] sm:$0xf]
      %v5637 = vld [vmem:[%s5 + $0x158] sm:$0xf]
      %v5638 = vld [vmem:[%s5 + $0x15c] sm:$0xf]
      %v5639 = vld [vmem:[%s5 + $0x160] sm:$0xf]
      %v5640 = vld [vmem:[%s5 + $0x164] sm:$0xf]
      %v5641 = vld [vmem:[%s5 + $0x168] sm:$0xf]
      %v5642 = vld [vmem:[%s5 + $0x16c] sm:$0xf]
      %v5643 = vld [vmem:[%s5 + $0x170] sm:$0xf]
      %v5644 = vld [vmem:[%s5 + $0x174] sm:$0xf]
      %v5645 = vld [vmem:[%s5 + $0x178] sm:$0xf]
      %v5646 = vld [vmem:[%s5 + $0x17c] sm:$0xf]
      %v5647 = vld [vmem:[%s5 + $0x180] sm:$0xf]
      %v5648 = vld [vmem:[%s5 + $0x184] sm:$0xf]
      %v5649 = vld [vmem:[%s5 + $0x188] sm:$0xf]
      %v5650 = vld [vmem:[%s5 + $0x18c] sm:$0xf]
      %v5651 = vld [vmem:[%s5 + $0x190] sm:$0xf]
      %v5652 = vld [vmem:[%s5 + $0x194] sm:$0xf]
      %v5653 = vld [vmem:[%s5 + $0x198] sm:$0xf]
      %v5654 = vld [vmem:[%s5 + $0x19c] sm:$0xf]
      %v5655 = vld [vmem:[%s5 + $0x1a0] sm:$0xf]
      %v5656 = vld [vmem:[%s5 + $0x1a4] sm:$0xf]
      %v5657 = vld [vmem:[%s5 + $0x1a8] sm:$0xf]
      %v5658 = vld [vmem:[%s5 + $0x1ac] sm:$0xf]
      %v5659 = vld [vmem:[%s5 + $0x1b0] sm:$0xf]
      %v5660 = vld [vmem:[%s5 + $0x1b4] sm:$0xf]
      %v5661 = vld [vmem:[%s5 + $0x1b8] sm:$0xf]
      %v5662 = vld [vmem:[%s5 + $0x1bc] sm:$0xf]
      %v5663 = vld [vmem:[%s5 + $0x1c0] sm:$0xf]
      %v5664 = vld [vmem:[%s5 + $0x1c4] sm:$0xf]
      %v5665 = vld [vmem:[%s5 + $0x1c8] sm:$0xf]
      %v5666 = vld [vmem:[%s5 + $0x1cc] sm:$0xf]
      %v5667 = vld [vmem:[%s5 + $0x1d0] sm:$0xf]
      %v5668 = vld [vmem:[%s5 + $0x1d4] sm:$0xf]
      %v5669 = vld [vmem:[%s5 + $0x1d8] sm:$0xf]
      %v5670 = vld [vmem:[%s5 + $0x1dc] sm:$0xf]
      %v5671 = vld [vmem:[%s5 + $0x1e0] sm:$0xf]
      %v5672 = vld [vmem:[%s5 + $0x1e4] sm:$0xf]
      %v5673 = vld [vmem:[%s5 + $0x1e8] sm:$0xf]
      %v5674 = vld [vmem:[%s5 + $0x1ec] sm:$0xf]
      %v5675 = vld [vmem:[%s5 + $0x1f0] sm:$0xf]
      %v5676 = vld [vmem:[%s5 + $0x1f4] sm:$0xf]
      %v5677 = vld [vmem:[%s5 + $0x1f8] sm:$0xf]
      %v5678 = vld [vmem:[%s5 + $0x1fc] sm:$0xf]
      %v5679 = vld [vmem:[%s5376] sm:$0xff]
      %v5680 = vld [vmem:[%s5376 + $0x8] sm:$0xff]
      %v5681 = vld [vmem:[%s5376 + $0x20] sm:$0xff]
      %v5682 = vld [vmem:[%s5376 + $0x28] sm:$0xff]
      %v5683 = vld [vmem:[%s5376] sm:$0xfe]
      %v5684 = vld [vmem:[%s5376 + $0x8] sm:$0xfe]
      %v5685 = vld [vmem:[%s5376 + $0x10] sm:$0x1]
      %v5686 = vld [vmem:[%s5376 + $0x18] sm:$0x1]
      %v5687 = vld [vmem:[%s5376 + $0x20] sm:$0xfe]
      %v5688 = vld [vmem:[%s5376 + $0x28] sm:$0xfe]
      %v5689 = vld [vmem:[%s5376 + $0x30] sm:$0x1]
      %v5690 = vld [vmem:[%s5376 + $0x38] sm:$0x1]
      %v5691 = vld [vmem:[%s5376] sm:$0xfc]
      %v5692 = vld [vmem:[%s5376 + $0x8] sm:$0xfc]
      %v5693 = vld [vmem:[%s5376 + $0x10] sm:$0x3]
      %v5694 = vld [vmem:[%s5376 + $0x18] sm:$0x3]
      %v5695 = vld [vmem:[%s5376 + $0x20] sm:$0xfc]
      %v5696 = vld [vmem:[%s5376 + $0x28] sm:$0xfc]
      %v5697 = vld [vmem:[%s5376 + $0x30] sm:$0x3]
      %v5698 = vld [vmem:[%s5376 + $0x38] sm:$0x3]
      %v5699 = vld [vmem:[%s5376] sm:$0xf8]
      %v5700 = vld [vmem:[%s5376 + $0x8] sm:$0xf8]
      %v5701 = vld [vmem:[%s5376 + $0x10] sm:$0x7]
      %v5702 = vld [vmem:[%s5376 + $0x18] sm:$0x7]
      %v5703 = vld [vmem:[%s5376 + $0x20] sm:$0xf8]
      %v5704 = vld [vmem:[%s5376 + $0x28] sm:$0xf8]
      %v5705 = vld [vmem:[%s5376 + $0x30] sm:$0x7]
      %v5706 = vld [vmem:[%s5376 + $0x38] sm:$0x7]
      %v5715 = vrot.slane %v5683, 1
      %v5716 = vrot.slane %v5685, 1
      %v5717 = vsel %vm5476, %v5715, %v5716
      %v5718 = vrot.slane %v5684, 1
      %v5719 = vrot.slane %v5686, 1
      %v5720 = vsel %vm5476, %v5718, %v5719
      %v5721 = vrot.slane %v5687, 1
      %v5722 = vrot.slane %v5689, 1
      %v5723 = vsel %vm5476, %v5721, %v5722
      %v5724 = vrot.slane %v5688, 1
      %v5725 = vrot.slane %v5690, 1
      %v5726 = vsel %vm5476, %v5724, %v5725
      %v5739 = vrot.slane %v5691, 2
      %v5740 = vrot.slane %v5693, 2
      %v5741 = vsel %vm5501, %v5739, %v5740
      %v5742 = vrot.slane %v5692, 2
      %v5743 = vrot.slane %v5694, 2
      %v5744 = vsel %vm5501, %v5742, %v5743
      %v5745 = vrot.slane %v5695, 2
      %v5746 = vrot.slane %v5697, 2
      %v5747 = vsel %vm5501, %v5745, %v5746
      %v5748 = vrot.slane %v5696, 2
      %v5749 = vrot.slane %v5698, 2
      %v5750 = vsel %vm5501, %v5748, %v5749
      %v5763 = vrot.slane %v5699, 3
      %v5764 = vrot.slane %v5701, 3
      %v5765 = vsel %vm5526, %v5763, %v5764
      %v5766 = vrot.slane %v5700, 3
      %v5767 = vrot.slane %v5702, 3
      %v5768 = vsel %vm5526, %v5766, %v5767
      %v5769 = vrot.slane %v5703, 3
      %v5770 = vrot.slane %v5705, 3
      %v5771 = vsel %vm5526, %v5769, %v5770
      %v5772 = vrot.slane %v5704, 3
      %v5773 = vrot.slane %v5706, 3
      %v5774 = vsel %vm5526, %v5772, %v5773
      %v5779 = vpack.c.bf16 %v5681, %v5679
      %v5780 = vpack.c.bf16 %v5682, %v5680
      %v5781 = vpack.c.bf16 %v5723, %v5717
      %v5782 = vpack.c.bf16 %v5726, %v5720
      %v5783 = vpack.c.bf16 %v5747, %v5741
      %v5784 = vpack.c.bf16 %v5750, %v5744
      %v5785 = vpack.c.bf16 %v5771, %v5765
      %v5786 = vpack.c.bf16 %v5774, %v5768
      %s5787 = scalar_lea.vmem %s5, 512
      %v5788 = vld [vmem:[%s5787] sm:$0xf]
      %v5789 = vld [vmem:[%s5787 + $0x4] sm:$0xf]
      %v5790 = vld [vmem:[%s5787 + $0x8] sm:$0xf]
      %v5791 = vld [vmem:[%s5787 + $0xc] sm:$0xf]
      %v5792 = vld [vmem:[%s5787 + $0x10] sm:$0xf]
      %v5793 = vld [vmem:[%s5787 + $0x14] sm:$0xf]
      %v5794 = vld [vmem:[%s5787 + $0x18] sm:$0xf]
      %v5795 = vld [vmem:[%s5787 + $0x1c] sm:$0xf]
      %v5796 = vld [vmem:[%s5787 + $0x20] sm:$0xf]
      %v5797 = vld [vmem:[%s5787 + $0x24] sm:$0xf]
      %v5798 = vld [vmem:[%s5787 + $0x28] sm:$0xf]
      %v5799 = vld [vmem:[%s5787 + $0x2c] sm:$0xf]
      %v5800 = vld [vmem:[%s5787 + $0x30] sm:$0xf]
      %v5801 = vld [vmem:[%s5787 + $0x34] sm:$0xf]
      %v5802 = vld [vmem:[%s5787 + $0x38] sm:$0xf]
      %v5803 = vld [vmem:[%s5787 + $0x3c] sm:$0xf]
      %v5804 = vld [vmem:[%s5787 + $0x40] sm:$0xf]
      %v5805 = vld [vmem:[%s5787 + $0x44] sm:$0xf]
      %v5806 = vld [vmem:[%s5787 + $0x48] sm:$0xf]
      %v5807 = vld [vmem:[%s5787 + $0x4c] sm:$0xf]
      %v5808 = vld [vmem:[%s5787 + $0x50] sm:$0xf]
      %v5809 = vld [vmem:[%s5787 + $0x54] sm:$0xf]
      %v5810 = vld [vmem:[%s5787 + $0x58] sm:$0xf]
      %v5811 = vld [vmem:[%s5787 + $0x5c] sm:$0xf]
      %v5812 = vld [vmem:[%s5787 + $0x60] sm:$0xf]
      %v5813 = vld [vmem:[%s5787 + $0x64] sm:$0xf]
      %v5814 = vld [vmem:[%s5787 + $0x68] sm:$0xf]
      %v5815 = vld [vmem:[%s5787 + $0x6c] sm:$0xf]
      %v5816 = vld [vmem:[%s5787 + $0x70] sm:$0xf]
      %v5817 = vld [vmem:[%s5787 + $0x74] sm:$0xf]
      %v5818 = vld [vmem:[%s5787 + $0x78] sm:$0xf]
      %v5819 = vld [vmem:[%s5787 + $0x7c] sm:$0xf]
      %v5820 = vld [vmem:[%s5787 + $0x80] sm:$0xf]
      %v5821 = vld [vmem:[%s5787 + $0x84] sm:$0xf]
      %v5822 = vld [vmem:[%s5787 + $0x88] sm:$0xf]
      %v5823 = vld [vmem:[%s5787 + $0x8c] sm:$0xf]
      %v5824 = vld [vmem:[%s5787 + $0x90] sm:$0xf]
      %v5825 = vld [vmem:[%s5787 + $0x94] sm:$0xf]
      %v5826 = vld [vmem:[%s5787 + $0x98] sm:$0xf]
      %v5827 = vld [vmem:[%s5787 + $0x9c] sm:$0xf]
      %v5828 = vld [vmem:[%s5787 + $0xa0] sm:$0xf]
      %v5829 = vld [vmem:[%s5787 + $0xa4] sm:$0xf]
      %v5830 = vld [vmem:[%s5787 + $0xa8] sm:$0xf]
      %v5831 = vld [vmem:[%s5787 + $0xac] sm:$0xf]
      %v5832 = vld [vmem:[%s5787 + $0xb0] sm:$0xf]
      %v5833 = vld [vmem:[%s5787 + $0xb4] sm:$0xf]
      %v5834 = vld [vmem:[%s5787 + $0xb8] sm:$0xf]
      %v5835 = vld [vmem:[%s5787 + $0xbc] sm:$0xf]
      %v5836 = vld [vmem:[%s5787 + $0xc0] sm:$0xf]
      %v5837 = vld [vmem:[%s5787 + $0xc4] sm:$0xf]
      %v5838 = vld [vmem:[%s5787 + $0xc8] sm:$0xf]
      %v5839 = vld [vmem:[%s5787 + $0xcc] sm:$0xf]
      %v5840 = vld [vmem:[%s5787 + $0xd0] sm:$0xf]
      %v5841 = vld [vmem:[%s5787 + $0xd4] sm:$0xf]
      %v5842 = vld [vmem:[%s5787 + $0xd8] sm:$0xf]
      %v5843 = vld [vmem:[%s5787 + $0xdc] sm:$0xf]
      %v5844 = vld [vmem:[%s5787 + $0xe0] sm:$0xf]
      %v5845 = vld [vmem:[%s5787 + $0xe4] sm:$0xf]
      %v5846 = vld [vmem:[%s5787 + $0xe8] sm:$0xf]
      %v5847 = vld [vmem:[%s5787 + $0xec] sm:$0xf]
      %v5848 = vld [vmem:[%s5787 + $0xf0] sm:$0xf]
      %v5849 = vld [vmem:[%s5787 + $0xf4] sm:$0xf]
      %v5850 = vld [vmem:[%s5787 + $0xf8] sm:$0xf]
      %v5851 = vld [vmem:[%s5787 + $0xfc] sm:$0xf]
      %v5852 = vld [vmem:[%s5787 + $0x100] sm:$0xf]
      %v5853 = vld [vmem:[%s5787 + $0x104] sm:$0xf]
      %v5854 = vld [vmem:[%s5787 + $0x108] sm:$0xf]
      %v5855 = vld [vmem:[%s5787 + $0x10c] sm:$0xf]
      %v5856 = vld [vmem:[%s5787 + $0x110] sm:$0xf]
      %v5857 = vld [vmem:[%s5787 + $0x114] sm:$0xf]
      %v5858 = vld [vmem:[%s5787 + $0x118] sm:$0xf]
      %v5859 = vld [vmem:[%s5787 + $0x11c] sm:$0xf]
      %v5860 = vld [vmem:[%s5787 + $0x120] sm:$0xf]
      %v5861 = vld [vmem:[%s5787 + $0x124] sm:$0xf]
      %v5862 = vld [vmem:[%s5787 + $0x128] sm:$0xf]
      %v5863 = vld [vmem:[%s5787 + $0x12c] sm:$0xf]
      %v5864 = vld [vmem:[%s5787 + $0x130] sm:$0xf]
      %v5865 = vld [vmem:[%s5787 + $0x134] sm:$0xf]
      %v5866 = vld [vmem:[%s5787 + $0x138] sm:$0xf]
      %v5867 = vld [vmem:[%s5787 + $0x13c] sm:$0xf]
      %v5868 = vld [vmem:[%s5787 + $0x140] sm:$0xf]
      %v5869 = vld [vmem:[%s5787 + $0x144] sm:$0xf]
      %v5870 = vld [vmem:[%s5787 + $0x148] sm:$0xf]
      %v5871 = vld [vmem:[%s5787 + $0x14c] sm:$0xf]
      %v5872 = vld [vmem:[%s5787 + $0x150] sm:$0xf]
      %v5873 = vld [vmem:[%s5787 + $0x154] sm:$0xf]
      %v5874 = vld [vmem:[%s5787 + $0x158] sm:$0xf]
      %v5875 = vld [vmem:[%s5787 + $0x15c] sm:$0xf]
      %v5876 = vld [vmem:[%s5787 + $0x160] sm:$0xf]
      %v5877 = vld [vmem:[%s5787 + $0x164] sm:$0xf]
      %v5878 = vld [vmem:[%s5787 + $0x168] sm:$0xf]
      %v5879 = vld [vmem:[%s5787 + $0x16c] sm:$0xf]
      %v5880 = vld [vmem:[%s5787 + $0x170] sm:$0xf]
      %v5881 = vld [vmem:[%s5787 + $0x174] sm:$0xf]
      %v5882 = vld [vmem:[%s5787 + $0x178] sm:$0xf]
      %v5883 = vld [vmem:[%s5787 + $0x17c] sm:$0xf]
      %v5884 = vld [vmem:[%s5787 + $0x180] sm:$0xf]
      %v5885 = vld [vmem:[%s5787 + $0x184] sm:$0xf]
      %v5886 = vld [vmem:[%s5787 + $0x188] sm:$0xf]
      %v5887 = vld [vmem:[%s5787 + $0x18c] sm:$0xf]
      %v5888 = vld [vmem:[%s5787 + $0x190] sm:$0xf]
      %v5889 = vld [vmem:[%s5787 + $0x194] sm:$0xf]
      %v5890 = vld [vmem:[%s5787 + $0x198] sm:$0xf]
      %v5891 = vld [vmem:[%s5787 + $0x19c] sm:$0xf]
      %v5892 = vld [vmem:[%s5787 + $0x1a0] sm:$0xf]
      %v5893 = vld [vmem:[%s5787 + $0x1a4] sm:$0xf]
      %v5894 = vld [vmem:[%s5787 + $0x1a8] sm:$0xf]
      %v5895 = vld [vmem:[%s5787 + $0x1ac] sm:$0xf]
      %v5896 = vld [vmem:[%s5787 + $0x1b0] sm:$0xf]
      %v5897 = vld [vmem:[%s5787 + $0x1b4] sm:$0xf]
      %v5898 = vld [vmem:[%s5787 + $0x1b8] sm:$0xf]
      %v5899 = vld [vmem:[%s5787 + $0x1bc] sm:$0xf]
      %v5900 = vld [vmem:[%s5787 + $0x1c0] sm:$0xf]
      %v5901 = vld [vmem:[%s5787 + $0x1c4] sm:$0xf]
      %v5902 = vld [vmem:[%s5787 + $0x1c8] sm:$0xf]
      %v5903 = vld [vmem:[%s5787 + $0x1cc] sm:$0xf]
      %v5904 = vld [vmem:[%s5787 + $0x1d0] sm:$0xf]
      %v5905 = vld [vmem:[%s5787 + $0x1d4] sm:$0xf]
      %v5906 = vld [vmem:[%s5787 + $0x1d8] sm:$0xf]
      %v5907 = vld [vmem:[%s5787 + $0x1dc] sm:$0xf]
      %v5908 = vld [vmem:[%s5787 + $0x1e0] sm:$0xf]
      %v5909 = vld [vmem:[%s5787 + $0x1e4] sm:$0xf]
      %v5910 = vld [vmem:[%s5787 + $0x1e8] sm:$0xf]
      %v5911 = vld [vmem:[%s5787 + $0x1ec] sm:$0xf]
      %v5912 = vld [vmem:[%s5787 + $0x1f0] sm:$0xf]
      %v5913 = vld [vmem:[%s5787 + $0x1f4] sm:$0xf]
      %v5914 = vld [vmem:[%s5787 + $0x1f8] sm:$0xf]
      %v5915 = vld [vmem:[%s5787 + $0x1fc] sm:$0xf]
      %v6044 = vunpack.c.l.b16 %v5788
      %v6045 = vunpack.c.l.b16 %v5789
      %v6046 = vunpack.c.l.b16 %v5790
      %v6047 = vunpack.c.l.b16 %v5791
      %v6048 = vunpack.c.l.b16 %v5792
      %v6049 = vunpack.c.l.b16 %v5793
      %v6050 = vunpack.c.l.b16 %v5794
      %v6051 = vunpack.c.l.b16 %v5795
      %v6052 = vunpack.c.l.b16 %v5796
      %v6053 = vunpack.c.l.b16 %v5797
      %v6054 = vunpack.c.l.b16 %v5798
      %v6055 = vunpack.c.l.b16 %v5799
      %v6056 = vunpack.c.l.b16 %v5800
      %v6057 = vunpack.c.l.b16 %v5801
      %v6058 = vunpack.c.l.b16 %v5802
      %v6059 = vunpack.c.l.b16 %v5803
      %v6060 = vunpack.c.l.b16 %v5804
      %v6061 = vunpack.c.l.b16 %v5805
      %v6062 = vunpack.c.l.b16 %v5806
      %v6063 = vunpack.c.l.b16 %v5807
      %v6064 = vunpack.c.l.b16 %v5808
      %v6065 = vunpack.c.l.b16 %v5809
      %v6066 = vunpack.c.l.b16 %v5810
      %v6067 = vunpack.c.l.b16 %v5811
      %v6068 = vunpack.c.l.b16 %v5812
      %v6069 = vunpack.c.l.b16 %v5813
      %v6070 = vunpack.c.l.b16 %v5814
      %v6071 = vunpack.c.l.b16 %v5815
      %v6072 = vunpack.c.l.b16 %v5816
      %v6073 = vunpack.c.l.b16 %v5817
      %v6074 = vunpack.c.l.b16 %v5818
      %v6075 = vunpack.c.l.b16 %v5819
      %v6076 = vunpack.c.l.b16 %v5820
      %v6077 = vunpack.c.l.b16 %v5821
      %v6078 = vunpack.c.l.b16 %v5822
      %v6079 = vunpack.c.l.b16 %v5823
      %v6080 = vunpack.c.l.b16 %v5824
      %v6081 = vunpack.c.l.b16 %v5825
      %v6082 = vunpack.c.l.b16 %v5826
      %v6083 = vunpack.c.l.b16 %v5827
      %v6084 = vunpack.c.l.b16 %v5828
      %v6085 = vunpack.c.l.b16 %v5829
      %v6086 = vunpack.c.l.b16 %v5830
      %v6087 = vunpack.c.l.b16 %v5831
      %v6088 = vunpack.c.l.b16 %v5832
      %v6089 = vunpack.c.l.b16 %v5833
      %v6090 = vunpack.c.l.b16 %v5834
      %v6091 = vunpack.c.l.b16 %v5835
      %v6092 = vunpack.c.l.b16 %v5836
      %v6093 = vunpack.c.l.b16 %v5837
      %v6094 = vunpack.c.l.b16 %v5838
      %v6095 = vunpack.c.l.b16 %v5839
      %v6096 = vunpack.c.l.b16 %v5840
      %v6097 = vunpack.c.l.b16 %v5841
      %v6098 = vunpack.c.l.b16 %v5842
      %v6099 = vunpack.c.l.b16 %v5843
      %v6100 = vunpack.c.l.b16 %v5844
      %v6101 = vunpack.c.l.b16 %v5845
      %v6102 = vunpack.c.l.b16 %v5846
      %v6103 = vunpack.c.l.b16 %v5847
      %v6104 = vunpack.c.l.b16 %v5848
      %v6105 = vunpack.c.l.b16 %v5849
      %v6106 = vunpack.c.l.b16 %v5850
      %v6107 = vunpack.c.l.b16 %v5851
      %v6108 = vunpack.c.l.b16 %v5852
      %v6109 = vunpack.c.l.b16 %v5853
      %v6110 = vunpack.c.l.b16 %v5854
      %v6111 = vunpack.c.l.b16 %v5855
      %v6112 = vunpack.c.l.b16 %v5856
      %v6113 = vunpack.c.l.b16 %v5857
      %v6114 = vunpack.c.l.b16 %v5858
      %v6115 = vunpack.c.l.b16 %v5859
      %v6116 = vunpack.c.l.b16 %v5860
      %v6117 = vunpack.c.l.b16 %v5861
      %v6118 = vunpack.c.l.b16 %v5862
      %v6119 = vunpack.c.l.b16 %v5863
      %v6120 = vunpack.c.l.b16 %v5864
      %v6121 = vunpack.c.l.b16 %v5865
      %v6122 = vunpack.c.l.b16 %v5866
      %v6123 = vunpack.c.l.b16 %v5867
      %v6124 = vunpack.c.l.b16 %v5868
      %v6125 = vunpack.c.l.b16 %v5869
      %v6126 = vunpack.c.l.b16 %v5870
      %v6127 = vunpack.c.l.b16 %v5871
      %v6128 = vunpack.c.l.b16 %v5872
      %v6129 = vunpack.c.l.b16 %v5873
      %v6130 = vunpack.c.l.b16 %v5874
      %v6131 = vunpack.c.l.b16 %v5875
      %v6132 = vunpack.c.l.b16 %v5876
      %v6133 = vunpack.c.l.b16 %v5877
      %v6134 = vunpack.c.l.b16 %v5878
      %v6135 = vunpack.c.l.b16 %v5879
      %v6136 = vunpack.c.l.b16 %v5880
      %v6137 = vunpack.c.l.b16 %v5881
      %v6138 = vunpack.c.l.b16 %v5882
      %v6139 = vunpack.c.l.b16 %v5883
      %v6140 = vunpack.c.l.b16 %v5884
      %v6141 = vunpack.c.l.b16 %v5885
      %v6142 = vunpack.c.l.b16 %v5886
      %v6143 = vunpack.c.l.b16 %v5887
      %v6144 = vunpack.c.l.b16 %v5888
      %v6145 = vunpack.c.l.b16 %v5889
      %v6146 = vunpack.c.l.b16 %v5890
      %v6147 = vunpack.c.l.b16 %v5891
      %v6148 = vunpack.c.l.b16 %v5892
      %v6149 = vunpack.c.l.b16 %v5893
      %v6150 = vunpack.c.l.b16 %v5894
      %v6151 = vunpack.c.l.b16 %v5895
      %v6152 = vunpack.c.l.b16 %v5896
      %v6153 = vunpack.c.l.b16 %v5897
      %v6154 = vunpack.c.l.b16 %v5898
      %v6155 = vunpack.c.l.b16 %v5899
      %v6156 = vunpack.c.l.b16 %v5900
      %v6157 = vunpack.c.l.b16 %v5901
      %v6158 = vunpack.c.l.b16 %v5902
      %v6159 = vunpack.c.l.b16 %v5903
      %v6160 = vunpack.c.l.b16 %v5904
      %v6161 = vunpack.c.l.b16 %v5905
      %v6162 = vunpack.c.l.b16 %v5906
      %v6163 = vunpack.c.l.b16 %v5907
      %v6164 = vunpack.c.l.b16 %v5908
      %v6165 = vunpack.c.l.b16 %v5909
      %v6166 = vunpack.c.l.b16 %v5910
      %v6167 = vunpack.c.l.b16 %v5911
      %v6168 = vunpack.c.l.b16 %v5912
      %v6169 = vunpack.c.l.b16 %v5913
      %v6170 = vunpack.c.l.b16 %v5914
      %v6171 = vunpack.c.l.b16 %v5915
      %v6172 = vpack.c.b16 %v6045, %v6044
      %v6173 = vpack.c.b16 %v6047, %v6046
      %v6174 = vpack.c.b16 %v6049, %v6048
      %v6175 = vpack.c.b16 %v6051, %v6050
      %v6176 = vpack.c.b16 %v6053, %v6052
      %v6177 = vpack.c.b16 %v6055, %v6054
      %v6178 = vpack.c.b16 %v6057, %v6056
      %v6179 = vpack.c.b16 %v6059, %v6058
      %v6180 = vpack.c.b16 %v6061, %v6060
      %v6181 = vpack.c.b16 %v6063, %v6062
      %v6182 = vpack.c.b16 %v6065, %v6064
      %v6183 = vpack.c.b16 %v6067, %v6066
      %v6184 = vpack.c.b16 %v6069, %v6068
      %v6185 = vpack.c.b16 %v6071, %v6070
      %v6186 = vpack.c.b16 %v6073, %v6072
      %v6187 = vpack.c.b16 %v6075, %v6074
      %v6188 = vpack.c.b16 %v6077, %v6076
      %v6189 = vpack.c.b16 %v6079, %v6078
      %v6190 = vpack.c.b16 %v6081, %v6080
      %v6191 = vpack.c.b16 %v6083, %v6082
      %v6192 = vpack.c.b16 %v6085, %v6084
      %v6193 = vpack.c.b16 %v6087, %v6086
      %v6194 = vpack.c.b16 %v6089, %v6088
      %v6195 = vpack.c.b16 %v6091, %v6090
      %v6196 = vpack.c.b16 %v6093, %v6092
      %v6197 = vpack.c.b16 %v6095, %v6094
      %v6198 = vpack.c.b16 %v6097, %v6096
      %v6199 = vpack.c.b16 %v6099, %v6098
      %v6200 = vpack.c.b16 %v6101, %v6100
      %v6201 = vpack.c.b16 %v6103, %v6102
      %v6202 = vpack.c.b16 %v6105, %v6104
      %v6203 = vpack.c.b16 %v6107, %v6106
      %v6204 = vpack.c.b16 %v6109, %v6108
      %v6205 = vpack.c.b16 %v6111, %v6110
      %v6206 = vpack.c.b16 %v6113, %v6112
      %v6207 = vpack.c.b16 %v6115, %v6114
      %v6208 = vpack.c.b16 %v6117, %v6116
      %v6209 = vpack.c.b16 %v6119, %v6118
      %v6210 = vpack.c.b16 %v6121, %v6120
      %v6211 = vpack.c.b16 %v6123, %v6122
      %v6212 = vpack.c.b16 %v6125, %v6124
      %v6213 = vpack.c.b16 %v6127, %v6126
      %v6214 = vpack.c.b16 %v6129, %v6128
      %v6215 = vpack.c.b16 %v6131, %v6130
      %v6216 = vpack.c.b16 %v6133, %v6132
      %v6217 = vpack.c.b16 %v6135, %v6134
      %v6218 = vpack.c.b16 %v6137, %v6136
      %v6219 = vpack.c.b16 %v6139, %v6138
      %v6220 = vpack.c.b16 %v6141, %v6140
      %v6221 = vpack.c.b16 %v6143, %v6142
      %v6222 = vpack.c.b16 %v6145, %v6144
      %v6223 = vpack.c.b16 %v6147, %v6146
      %v6224 = vpack.c.b16 %v6149, %v6148
      %v6225 = vpack.c.b16 %v6151, %v6150
      %v6226 = vpack.c.b16 %v6153, %v6152
      %v6227 = vpack.c.b16 %v6155, %v6154
      %v6228 = vpack.c.b16 %v6157, %v6156
      %v6229 = vpack.c.b16 %v6159, %v6158
      %v6230 = vpack.c.b16 %v6161, %v6160
      %v6231 = vpack.c.b16 %v6163, %v6162
      %v6232 = vpack.c.b16 %v6165, %v6164
      %v6233 = vpack.c.b16 %v6167, %v6166
      %v6234 = vpack.c.b16 %v6169, %v6168
      %v6235 = vpack.c.b16 %v6171, %v6170
      %6300 = vmatpush.bf16.msra.mxu0 %v6179
      %6301 = vmatpush.bf16.msra.mxu0 %v6178
      %6302 = vmatpush.bf16.msra.mxu0 %v6177
      %6303 = vmatpush.bf16.msra.mxu0 %v6176
      %6304 = vmatpush.bf16.msra.mxu0 %v6175
      %6305 = vmatpush.bf16.msra.mxu0 %v6174
      %6306 = vmatpush.bf16.msra.mxu0 %v6173
      %6307 = vmatpush.bf16.msra.mxu0 %v6172
      %6308 = vmatmul.bf16.gmra.mxu0 %v5779
      %v6309 = vpop.f32.mrf.mxu0
      %v6310 = vadd.f32 0.0, %v6309
      %v6311 = vpop.f32.mrf.mxu0
      %v6312 = vadd.f32 0.0, %v6311
      %6313 = vdwg.mxu0
      %6314 = vmatpush.bf16.msra.mxu0 %v6187
      %6315 = vmatpush.bf16.msra.mxu0 %v6186
      %6316 = vmatpush.bf16.msra.mxu0 %v6185
      %6317 = vmatpush.bf16.msra.mxu0 %v6184
      %6318 = vmatpush.bf16.msra.mxu0 %v6183
      %6319 = vmatpush.bf16.msra.mxu0 %v6182
      %6320 = vmatpush.bf16.msra.mxu0 %v6181
      %6321 = vmatpush.bf16.msra.mxu0 %v6180
      %6322 = vmatmul.bf16.gmra.mxu0 %v5780
      %v6323 = vpop.f32.mrf.mxu0
      %v6324 = vadd.f32 %v6310, %v6323
      %v6325 = vpop.f32.mrf.mxu0
      %v6326 = vadd.f32 %v6312, %v6325
      %6327 = vdwg.mxu0
      %6328 = vmatpush.bf16.msra.mxu0 %v6195
      %6329 = vmatpush.bf16.msra.mxu0 %v6194
      %6330 = vmatpush.bf16.msra.mxu0 %v6193
      %6331 = vmatpush.bf16.msra.mxu0 %v6192
      %6332 = vmatpush.bf16.msra.mxu0 %v6191
      %6333 = vmatpush.bf16.msra.mxu0 %v6190
      %6334 = vmatpush.bf16.msra.mxu0 %v6189
      %6335 = vmatpush.bf16.msra.mxu0 %v6188
      %6336 = vmatmul.bf16.gmra.mxu0 %v5781
      %v6337 = vpop.f32.mrf.mxu0
      %v6338 = vadd.f32 %v6324, %v6337
      %v6339 = vpop.f32.mrf.mxu0
      %v6340 = vadd.f32 %v6326, %v6339
      %6341 = vdwg.mxu0
      %6342 = vmatpush.bf16.msra.mxu0 %v6203
      %6343 = vmatpush.bf16.msra.mxu0 %v6202
      %6344 = vmatpush.bf16.msra.mxu0 %v6201
      %6345 = vmatpush.bf16.msra.mxu0 %v6200
      %6346 = vmatpush.bf16.msra.mxu0 %v6199
      %6347 = vmatpush.bf16.msra.mxu0 %v6198
      %6348 = vmatpush.bf16.msra.mxu0 %v6197
      %6349 = vmatpush.bf16.msra.mxu0 %v6196
      %6350 = vmatmul.bf16.gmra.mxu0 %v5782
      %v6351 = vpop.f32.mrf.mxu0
      %v6352 = vadd.f32 %v6338, %v6351
      %v6353 = vpop.f32.mrf.mxu0
      %v6354 = vadd.f32 %v6340, %v6353
      %6355 = vdwg.mxu0
      %6356 = vmatpush.bf16.msra.mxu0 %v6211
      %6357 = vmatpush.bf16.msra.mxu0 %v6210
      %6358 = vmatpush.bf16.msra.mxu0 %v6209
      %6359 = vmatpush.bf16.msra.mxu0 %v6208
      %6360 = vmatpush.bf16.msra.mxu0 %v6207
      %6361 = vmatpush.bf16.msra.mxu0 %v6206
      %6362 = vmatpush.bf16.msra.mxu0 %v6205
      %6363 = vmatpush.bf16.msra.mxu0 %v6204
      %6364 = vmatmul.bf16.gmra.mxu0 %v5783
      %v6365 = vpop.f32.mrf.mxu0
      %v6366 = vadd.f32 %v6352, %v6365
      %v6367 = vpop.f32.mrf.mxu0
      %v6368 = vadd.f32 %v6354, %v6367
      %6369 = vdwg.mxu0
      %6370 = vmatpush.bf16.msra.mxu0 %v6219
      %6371 = vmatpush.bf16.msra.mxu0 %v6218
      %6372 = vmatpush.bf16.msra.mxu0 %v6217
      %6373 = vmatpush.bf16.msra.mxu0 %v6216
      %6374 = vmatpush.bf16.msra.mxu0 %v6215
      %6375 = vmatpush.bf16.msra.mxu0 %v6214
      %6376 = vmatpush.bf16.msra.mxu0 %v6213
      %6377 = vmatpush.bf16.msra.mxu0 %v6212
      %6378 = vmatmul.bf16.gmra.mxu0 %v5784
      %v6379 = vpop.f32.mrf.mxu0
      %v6380 = vadd.f32 %v6366, %v6379
      %v6381 = vpop.f32.mrf.mxu0
      %v6382 = vadd.f32 %v6368, %v6381
      %6383 = vdwg.mxu0
      %6384 = vmatpush.bf16.msra.mxu0 %v6227
      %6385 = vmatpush.bf16.msra.mxu0 %v6226
      %6386 = vmatpush.bf16.msra.mxu0 %v6225
      %6387 = vmatpush.bf16.msra.mxu0 %v6224
      %6388 = vmatpush.bf16.msra.mxu0 %v6223
      %6389 = vmatpush.bf16.msra.mxu0 %v6222
      %6390 = vmatpush.bf16.msra.mxu0 %v6221
      %6391 = vmatpush.bf16.msra.mxu0 %v6220
      %6392 = vmatmul.bf16.gmra.mxu0 %v5785
      %v6393 = vpop.f32.mrf.mxu0
      %v6394 = vadd.f32 %v6380, %v6393
      %v6395 = vpop.f32.mrf.mxu0
      %v6396 = vadd.f32 %v6382, %v6395
      %6397 = vdwg.mxu0
      %6398 = vmatpush.bf16.msra.mxu0 %v6235
      %6399 = vmatpush.bf16.msra.mxu0 %v6234
      %6400 = vmatpush.bf16.msra.mxu0 %v6233
      %6401 = vmatpush.bf16.msra.mxu0 %v6232
      %6402 = vmatpush.bf16.msra.mxu0 %v6231
      %6403 = vmatpush.bf16.msra.mxu0 %v6230
      %6404 = vmatpush.bf16.msra.mxu0 %v6229
      %6405 = vmatpush.bf16.msra.mxu0 %v6228
      %6406 = vmatmul.bf16.gmra.mxu0 %v5786
      %v6407 = vpop.f32.mrf.mxu0
      %v6408 = vadd.f32 %v6394, %v6407
      %v6409 = vpop.f32.mrf.mxu0
      %v6410 = vadd.f32 %v6396, %v6409
      %6411 = vdwg.mxu0
      %v6540 = vunpack.c.l.b16 %v5551
      %v6541 = vunpack.c.l.b16 %v5552
      %v6542 = vunpack.c.l.b16 %v5553
      %v6543 = vunpack.c.l.b16 %v5554
      %v6544 = vunpack.c.l.b16 %v5555
      %v6545 = vunpack.c.l.b16 %v5556
      %v6546 = vunpack.c.l.b16 %v5557
      %v6547 = vunpack.c.l.b16 %v5558
      %v6548 = vunpack.c.l.b16 %v5559
      %v6549 = vunpack.c.l.b16 %v5560
      %v6550 = vunpack.c.l.b16 %v5561
      %v6551 = vunpack.c.l.b16 %v5562
      %v6552 = vunpack.c.l.b16 %v5563
      %v6553 = vunpack.c.l.b16 %v5564
      %v6554 = vunpack.c.l.b16 %v5565
      %v6555 = vunpack.c.l.b16 %v5566
      %v6556 = vunpack.c.l.b16 %v5567
      %v6557 = vunpack.c.l.b16 %v5568
      %v6558 = vunpack.c.l.b16 %v5569
      %v6559 = vunpack.c.l.b16 %v5570
      %v6560 = vunpack.c.l.b16 %v5571
      %v6561 = vunpack.c.l.b16 %v5572
      %v6562 = vunpack.c.l.b16 %v5573
      %v6563 = vunpack.c.l.b16 %v5574
      %v6564 = vunpack.c.l.b16 %v5575
      %v6565 = vunpack.c.l.b16 %v5576
      %v6566 = vunpack.c.l.b16 %v5577
      %v6567 = vunpack.c.l.b16 %v5578
      %v6568 = vunpack.c.l.b16 %v5579
      %v6569 = vunpack.c.l.b16 %v5580
      %v6570 = vunpack.c.l.b16 %v5581
      %v6571 = vunpack.c.l.b16 %v5582
      %v6572 = vunpack.c.l.b16 %v5583
      %v6573 = vunpack.c.l.b16 %v5584
      %v6574 = vunpack.c.l.b16 %v5585
      %v6575 = vunpack.c.l.b16 %v5586
      %v6576 = vunpack.c.l.b16 %v5587
      %v6577 = vunpack.c.l.b16 %v5588
      %v6578 = vunpack.c.l.b16 %v5589
      %v6579 = vunpack.c.l.b16 %v5590
      %v6580 = vunpack.c.l.b16 %v5591
      %v6581 = vunpack.c.l.b16 %v5592
      %v6582 = vunpack.c.l.b16 %v5593
      %v6583 = vunpack.c.l.b16 %v5594
      %v6584 = vunpack.c.l.b16 %v5595
      %v6585 = vunpack.c.l.b16 %v5596
      %v6586 = vunpack.c.l.b16 %v5597
      %v6587 = vunpack.c.l.b16 %v5598
      %v6588 = vunpack.c.l.b16 %v5599
      %v6589 = vunpack.c.l.b16 %v5600
      %v6590 = vunpack.c.l.b16 %v5601
      %v6591 = vunpack.c.l.b16 %v5602
      %v6592 = vunpack.c.l.b16 %v5603
      %v6593 = vunpack.c.l.b16 %v5604
      %v6594 = vunpack.c.l.b16 %v5605
      %v6595 = vunpack.c.l.b16 %v5606
      %v6596 = vunpack.c.l.b16 %v5607
      %v6597 = vunpack.c.l.b16 %v5608
      %v6598 = vunpack.c.l.b16 %v5609
      %v6599 = vunpack.c.l.b16 %v5610
      %v6600 = vunpack.c.l.b16 %v5611
      %v6601 = vunpack.c.l.b16 %v5612
      %v6602 = vunpack.c.l.b16 %v5613
      %v6603 = vunpack.c.l.b16 %v5614
      %v6604 = vunpack.c.l.b16 %v5615
      %v6605 = vunpack.c.l.b16 %v5616
      %v6606 = vunpack.c.l.b16 %v5617
      %v6607 = vunpack.c.l.b16 %v5618
      %v6608 = vunpack.c.l.b16 %v5619
      %v6609 = vunpack.c.l.b16 %v5620
      %v6610 = vunpack.c.l.b16 %v5621
      %v6611 = vunpack.c.l.b16 %v5622
      %v6612 = vunpack.c.l.b16 %v5623
      %v6613 = vunpack.c.l.b16 %v5624
      %v6614 = vunpack.c.l.b16 %v5625
      %v6615 = vunpack.c.l.b16 %v5626
      %v6616 = vunpack.c.l.b16 %v5627
      %v6617 = vunpack.c.l.b16 %v5628
      %v6618 = vunpack.c.l.b16 %v5629
      %v6619 = vunpack.c.l.b16 %v5630
      %v6620 = vunpack.c.l.b16 %v5631
      %v6621 = vunpack.c.l.b16 %v5632
      %v6622 = vunpack.c.l.b16 %v5633
      %v6623 = vunpack.c.l.b16 %v5634
      %v6624 = vunpack.c.l.b16 %v5635
      %v6625 = vunpack.c.l.b16 %v5636
      %v6626 = vunpack.c.l.b16 %v5637
      %v6627 = vunpack.c.l.b16 %v5638
      %v6628 = vunpack.c.l.b16 %v5639
      %v6629 = vunpack.c.l.b16 %v5640
      %v6630 = vunpack.c.l.b16 %v5641
      %v6631 = vunpack.c.l.b16 %v5642
      %v6632 = vunpack.c.l.b16 %v5643
      %v6633 = vunpack.c.l.b16 %v5644
      %v6634 = vunpack.c.l.b16 %v5645
      %v6635 = vunpack.c.l.b16 %v5646
      %v6636 = vunpack.c.l.b16 %v5647
      %v6637 = vunpack.c.l.b16 %v5648
      %v6638 = vunpack.c.l.b16 %v5649
      %v6639 = vunpack.c.l.b16 %v5650
      %v6640 = vunpack.c.l.b16 %v5651
      %v6641 = vunpack.c.l.b16 %v5652
      %v6642 = vunpack.c.l.b16 %v5653
      %v6643 = vunpack.c.l.b16 %v5654
      %v6644 = vunpack.c.l.b16 %v5655
      %v6645 = vunpack.c.l.b16 %v5656
      %v6646 = vunpack.c.l.b16 %v5657
      %v6647 = vunpack.c.l.b16 %v5658
      %v6648 = vunpack.c.l.b16 %v5659
      %v6649 = vunpack.c.l.b16 %v5660
      %v6650 = vunpack.c.l.b16 %v5661
      %v6651 = vunpack.c.l.b16 %v5662
      %v6652 = vunpack.c.l.b16 %v5663
      %v6653 = vunpack.c.l.b16 %v5664
      %v6654 = vunpack.c.l.b16 %v5665
      %v6655 = vunpack.c.l.b16 %v5666
      %v6656 = vunpack.c.l.b16 %v5667
      %v6657 = vunpack.c.l.b16 %v5668
      %v6658 = vunpack.c.l.b16 %v5669
      %v6659 = vunpack.c.l.b16 %v5670
      %v6660 = vunpack.c.l.b16 %v5671
      %v6661 = vunpack.c.l.b16 %v5672
      %v6662 = vunpack.c.l.b16 %v5673
      %v6663 = vunpack.c.l.b16 %v5674
      %v6664 = vunpack.c.l.b16 %v5675
      %v6665 = vunpack.c.l.b16 %v5676
      %v6666 = vunpack.c.l.b16 %v5677
      %v6667 = vunpack.c.l.b16 %v5678
      %v6668 = vpack.c.b16 %v6541, %v6540
      %v6669 = vpack.c.b16 %v6543, %v6542
      %v6670 = vpack.c.b16 %v6545, %v6544
      %v6671 = vpack.c.b16 %v6547, %v6546
      %v6672 = vpack.c.b16 %v6549, %v6548
      %v6673 = vpack.c.b16 %v6551, %v6550
      %v6674 = vpack.c.b16 %v6553, %v6552
      %v6675 = vpack.c.b16 %v6555, %v6554
      %v6676 = vpack.c.b16 %v6557, %v6556
      %v6677 = vpack.c.b16 %v6559, %v6558
      %v6678 = vpack.c.b16 %v6561, %v6560
      %v6679 = vpack.c.b16 %v6563, %v6562
      %v6680 = vpack.c.b16 %v6565, %v6564
      %v6681 = vpack.c.b16 %v6567, %v6566
      %v6682 = vpack.c.b16 %v6569, %v6568
      %v6683 = vpack.c.b16 %v6571, %v6570
      %v6684 = vpack.c.b16 %v6573, %v6572
      %v6685 = vpack.c.b16 %v6575, %v6574
      %v6686 = vpack.c.b16 %v6577, %v6576
      %v6687 = vpack.c.b16 %v6579, %v6578
      %v6688 = vpack.c.b16 %v6581, %v6580
      %v6689 = vpack.c.b16 %v6583, %v6582
      %v6690 = vpack.c.b16 %v6585, %v6584
      %v6691 = vpack.c.b16 %v6587, %v6586
      %v6692 = vpack.c.b16 %v6589, %v6588
      %v6693 = vpack.c.b16 %v6591, %v6590
      %v6694 = vpack.c.b16 %v6593, %v6592
      %v6695 = vpack.c.b16 %v6595, %v6594
      %v6696 = vpack.c.b16 %v6597, %v6596
      %v6697 = vpack.c.b16 %v6599, %v6598
      %v6698 = vpack.c.b16 %v6601, %v6600
      %v6699 = vpack.c.b16 %v6603, %v6602
      %v6700 = vpack.c.b16 %v6605, %v6604
      %v6701 = vpack.c.b16 %v6607, %v6606
      %v6702 = vpack.c.b16 %v6609, %v6608
      %v6703 = vpack.c.b16 %v6611, %v6610
      %v6704 = vpack.c.b16 %v6613, %v6612
      %v6705 = vpack.c.b16 %v6615, %v6614
      %v6706 = vpack.c.b16 %v6617, %v6616
      %v6707 = vpack.c.b16 %v6619, %v6618
      %v6708 = vpack.c.b16 %v6621, %v6620
      %v6709 = vpack.c.b16 %v6623, %v6622
      %v6710 = vpack.c.b16 %v6625, %v6624
      %v6711 = vpack.c.b16 %v6627, %v6626
      %v6712 = vpack.c.b16 %v6629, %v6628
      %v6713 = vpack.c.b16 %v6631, %v6630
      %v6714 = vpack.c.b16 %v6633, %v6632
      %v6715 = vpack.c.b16 %v6635, %v6634
      %v6716 = vpack.c.b16 %v6637, %v6636
      %v6717 = vpack.c.b16 %v6639, %v6638
      %v6718 = vpack.c.b16 %v6641, %v6640
      %v6719 = vpack.c.b16 %v6643, %v6642
      %v6720 = vpack.c.b16 %v6645, %v6644
      %v6721 = vpack.c.b16 %v6647, %v6646
      %v6722 = vpack.c.b16 %v6649, %v6648
      %v6723 = vpack.c.b16 %v6651, %v6650
      %v6724 = vpack.c.b16 %v6653, %v6652
      %v6725 = vpack.c.b16 %v6655, %v6654
      %v6726 = vpack.c.b16 %v6657, %v6656
      %v6727 = vpack.c.b16 %v6659, %v6658
      %v6728 = vpack.c.b16 %v6661, %v6660
      %v6729 = vpack.c.b16 %v6663, %v6662
      %v6730 = vpack.c.b16 %v6665, %v6664
      %v6731 = vpack.c.b16 %v6667, %v6666
      %6796 = vmatpush.bf16.msra.mxu0 %v6675
      %6797 = vmatpush.bf16.msra.mxu0 %v6674
      %6798 = vmatpush.bf16.msra.mxu0 %v6673
      %6799 = vmatpush.bf16.msra.mxu0 %v6672
      %6800 = vmatpush.bf16.msra.mxu0 %v6671
      %6801 = vmatpush.bf16.msra.mxu0 %v6670
      %6802 = vmatpush.bf16.msra.mxu0 %v6669
      %6803 = vmatpush.bf16.msra.mxu0 %v6668
      %6804 = vmatmul.bf16.gmra.mxu0 %v5543
      %v6805 = vpop.f32.mrf.mxu0
      %v6806 = vadd.f32 %v6408, %v6805
      %v6807 = vpop.f32.mrf.mxu0
      %v6808 = vadd.f32 %v6410, %v6807
      %6809 = vdwg.mxu0
      %6810 = vmatpush.bf16.msra.mxu0 %v6683
      %6811 = vmatpush.bf16.msra.mxu0 %v6682
      %6812 = vmatpush.bf16.msra.mxu0 %v6681
      %6813 = vmatpush.bf16.msra.mxu0 %v6680
      %6814 = vmatpush.bf16.msra.mxu0 %v6679
      %6815 = vmatpush.bf16.msra.mxu0 %v6678
      %6816 = vmatpush.bf16.msra.mxu0 %v6677
      %6817 = vmatpush.bf16.msra.mxu0 %v6676
      %6818 = vmatmul.bf16.gmra.mxu0 %v5544
      %v6819 = vpop.f32.mrf.mxu0
      %v6820 = vadd.f32 %v6806, %v6819
      %v6821 = vpop.f32.mrf.mxu0
      %v6822 = vadd.f32 %v6808, %v6821
      %6823 = vdwg.mxu0
      %6824 = vmatpush.bf16.msra.mxu0 %v6691
      %6825 = vmatpush.bf16.msra.mxu0 %v6690
      %6826 = vmatpush.bf16.msra.mxu0 %v6689
      %6827 = vmatpush.bf16.msra.mxu0 %v6688
      %6828 = vmatpush.bf16.msra.mxu0 %v6687
      %6829 = vmatpush.bf16.msra.mxu0 %v6686
      %6830 = vmatpush.bf16.msra.mxu0 %v6685
      %6831 = vmatpush.bf16.msra.mxu0 %v6684
      %6832 = vmatmul.bf16.gmra.mxu0 %v5545
      %v6833 = vpop.f32.mrf.mxu0
      %v6834 = vadd.f32 %v6820, %v6833
      %v6835 = vpop.f32.mrf.mxu0
      %v6836 = vadd.f32 %v6822, %v6835
      %6837 = vdwg.mxu0
      %6838 = vmatpush.bf16.msra.mxu0 %v6699
      %6839 = vmatpush.bf16.msra.mxu0 %v6698
      %6840 = vmatpush.bf16.msra.mxu0 %v6697
      %6841 = vmatpush.bf16.msra.mxu0 %v6696
      %6842 = vmatpush.bf16.msra.mxu0 %v6695
      %6843 = vmatpush.bf16.msra.mxu0 %v6694
      %6844 = vmatpush.bf16.msra.mxu0 %v6693
      %6845 = vmatpush.bf16.msra.mxu0 %v6692
      %6846 = vmatmul.bf16.gmra.mxu0 %v5546
      %v6847 = vpop.f32.mrf.mxu0
      %v6848 = vadd.f32 %v6834, %v6847
      %v6849 = vpop.f32.mrf.mxu0
      %v6850 = vadd.f32 %v6836, %v6849
      %6851 = vdwg.mxu0
      %6852 = vmatpush.bf16.msra.mxu0 %v6707
      %6853 = vmatpush.bf16.msra.mxu0 %v6706
      %6854 = vmatpush.bf16.msra.mxu0 %v6705
      %6855 = vmatpush.bf16.msra.mxu0 %v6704
      %6856 = vmatpush.bf16.msra.mxu0 %v6703
      %6857 = vmatpush.bf16.msra.mxu0 %v6702
      %6858 = vmatpush.bf16.msra.mxu0 %v6701
      %6859 = vmatpush.bf16.msra.mxu0 %v6700
      %6860 = vmatmul.bf16.gmra.mxu0 %v5547
      %v6861 = vpop.f32.mrf.mxu0
      %v6862 = vadd.f32 %v6848, %v6861
      %v6863 = vpop.f32.mrf.mxu0
      %v6864 = vadd.f32 %v6850, %v6863
      %6865 = vdwg.mxu0
      %6866 = vmatpush.bf16.msra.mxu0 %v6715
      %6867 = vmatpush.bf16.msra.mxu0 %v6714
      %6868 = vmatpush.bf16.msra.mxu0 %v6713
      %6869 = vmatpush.bf16.msra.mxu0 %v6712
      %6870 = vmatpush.bf16.msra.mxu0 %v6711
      %6871 = vmatpush.bf16.msra.mxu0 %v6710
      %6872 = vmatpush.bf16.msra.mxu0 %v6709
      %6873 = vmatpush.bf16.msra.mxu0 %v6708
      %6874 = vmatmul.bf16.gmra.mxu0 %v5548
      %v6875 = vpop.f32.mrf.mxu0
      %v6876 = vadd.f32 %v6862, %v6875
      %v6877 = vpop.f32.mrf.mxu0
      %v6878 = vadd.f32 %v6864, %v6877
      %6879 = vdwg.mxu0
      %6880 = vmatpush.bf16.msra.mxu0 %v6723
      %6881 = vmatpush.bf16.msra.mxu0 %v6722
      %6882 = vmatpush.bf16.msra.mxu0 %v6721
      %6883 = vmatpush.bf16.msra.mxu0 %v6720
      %6884 = vmatpush.bf16.msra.mxu0 %v6719
      %6885 = vmatpush.bf16.msra.mxu0 %v6718
      %6886 = vmatpush.bf16.msra.mxu0 %v6717
      %6887 = vmatpush.bf16.msra.mxu0 %v6716
      %6888 = vmatmul.bf16.gmra.mxu0 %v5549
      %v6889 = vpop.f32.mrf.mxu0
      %v6890 = vadd.f32 %v6876, %v6889
      %v6891 = vpop.f32.mrf.mxu0
      %v6892 = vadd.f32 %v6878, %v6891
      %6893 = vdwg.mxu0
      %6894 = vmatpush.bf16.msra.mxu0 %v6731
      %6895 = vmatpush.bf16.msra.mxu0 %v6730
      %6896 = vmatpush.bf16.msra.mxu0 %v6729
      %6897 = vmatpush.bf16.msra.mxu0 %v6728
      %6898 = vmatpush.bf16.msra.mxu0 %v6727
      %6899 = vmatpush.bf16.msra.mxu0 %v6726
      %6900 = vmatpush.bf16.msra.mxu0 %v6725
      %6901 = vmatpush.bf16.msra.mxu0 %v6724
      %6902 = vmatmul.bf16.gmra.mxu0 %v5550
      %v6903 = vpop.f32.mrf.mxu0
      %v6904 = vadd.f32 %v6890, %v6903
      %v6905 = vpop.f32.mrf.mxu0
      %v6906 = vadd.f32 %v6892, %v6905
      %6907 = vdwg.mxu0
      %v6908 = vld [vmem:[%s5430] sm:$0xff]
      %v6909 = vld [vmem:[%s5430 + $0x8] sm:$0xff]
      %v6910 = vld [vmem:[%s5430 + $0x20] sm:$0xff]
      %v6911 = vld [vmem:[%s5430 + $0x28] sm:$0xff]
      %v6912 = vld [vmem:[%s5430] sm:$0xfe]
      %v6913 = vld [vmem:[%s5430 + $0x8] sm:$0xfe]
      %v6914 = vld [vmem:[%s5430 + $0x10] sm:$0x1]
      %v6915 = vld [vmem:[%s5430 + $0x18] sm:$0x1]
      %v6916 = vld [vmem:[%s5430 + $0x20] sm:$0xfe]
      %v6917 = vld [vmem:[%s5430 + $0x28] sm:$0xfe]
      %v6918 = vld [vmem:[%s5430 + $0x30] sm:$0x1]
      %v6919 = vld [vmem:[%s5430 + $0x38] sm:$0x1]
      %v6920 = vld [vmem:[%s5430] sm:$0xfc]
      %v6921 = vld [vmem:[%s5430 + $0x8] sm:$0xfc]
      %v6922 = vld [vmem:[%s5430 + $0x10] sm:$0x3]
      %v6923 = vld [vmem:[%s5430 + $0x18] sm:$0x3]
      %v6924 = vld [vmem:[%s5430 + $0x20] sm:$0xfc]
      %v6925 = vld [vmem:[%s5430 + $0x28] sm:$0xfc]
      %v6926 = vld [vmem:[%s5430 + $0x30] sm:$0x3]
      %v6927 = vld [vmem:[%s5430 + $0x38] sm:$0x3]
      %v6928 = vld [vmem:[%s5430] sm:$0xf8]
      %v6929 = vld [vmem:[%s5430 + $0x8] sm:$0xf8]
      %v6930 = vld [vmem:[%s5430 + $0x10] sm:$0x7]
      %v6931 = vld [vmem:[%s5430 + $0x18] sm:$0x7]
      %v6932 = vld [vmem:[%s5430 + $0x20] sm:$0xf8]
      %v6933 = vld [vmem:[%s5430 + $0x28] sm:$0xf8]
      %v6934 = vld [vmem:[%s5430 + $0x30] sm:$0x7]
      %v6935 = vld [vmem:[%s5430 + $0x38] sm:$0x7]
      %v6944 = vrot.slane %v6912, 1
      %v6945 = vrot.slane %v6914, 1
      %v6946 = vsel %vm5476, %v6944, %v6945
      %v6947 = vrot.slane %v6913, 1
      %v6948 = vrot.slane %v6915, 1
      %v6949 = vsel %vm5476, %v6947, %v6948
      %v6950 = vrot.slane %v6916, 1
      %v6951 = vrot.slane %v6918, 1
      %v6952 = vsel %vm5476, %v6950, %v6951
      %v6953 = vrot.slane %v6917, 1
      %v6954 = vrot.slane %v6919, 1
      %v6955 = vsel %vm5476, %v6953, %v6954
      %v6968 = vrot.slane %v6920, 2
      %v6969 = vrot.slane %v6922, 2
      %v6970 = vsel %vm5501, %v6968, %v6969
      %v6971 = vrot.slane %v6921, 2
      %v6972 = vrot.slane %v6923, 2
      %v6973 = vsel %vm5501, %v6971, %v6972
      %v6974 = vrot.slane %v6924, 2
      %v6975 = vrot.slane %v6926, 2
      %v6976 = vsel %vm5501, %v6974, %v6975
      %v6977 = vrot.slane %v6925, 2
      %v6978 = vrot.slane %v6927, 2
      %v6979 = vsel %vm5501, %v6977, %v6978
      %v6992 = vrot.slane %v6928, 3
      %v6993 = vrot.slane %v6930, 3
      %v6994 = vsel %vm5526, %v6992, %v6993
      %v6995 = vrot.slane %v6929, 3
      %v6996 = vrot.slane %v6931, 3
      %v6997 = vsel %vm5526, %v6995, %v6996
      %v6998 = vrot.slane %v6932, 3
      %v6999 = vrot.slane %v6934, 3
      %v7000 = vsel %vm5526, %v6998, %v6999
      %v7001 = vrot.slane %v6933, 3
      %v7002 = vrot.slane %v6935, 3
      %v7003 = vsel %vm5526, %v7001, %v7002
      %v7008 = vpack.c.bf16 %v6910, %v6908
      %v7009 = vpack.c.bf16 %v6911, %v6909
      %v7010 = vpack.c.bf16 %v6952, %v6946
      %v7011 = vpack.c.bf16 %v6955, %v6949
      %v7012 = vpack.c.bf16 %v6976, %v6970
      %v7013 = vpack.c.bf16 %v6979, %v6973
      %v7014 = vpack.c.bf16 %v7000, %v6994
      %v7015 = vpack.c.bf16 %v7003, %v6997
      %s7016 = scalar_lea.vmem %s5, 1024
      %v7017 = vld [vmem:[%s7016] sm:$0xf]
      %v7018 = vld [vmem:[%s7016 + $0x4] sm:$0xf]
      %v7019 = vld [vmem:[%s7016 + $0x8] sm:$0xf]
      %v7020 = vld [vmem:[%s7016 + $0xc] sm:$0xf]
      %v7021 = vld [vmem:[%s7016 + $0x10] sm:$0xf]
      %v7022 = vld [vmem:[%s7016 + $0x14] sm:$0xf]
      %v7023 = vld [vmem:[%s7016 + $0x18] sm:$0xf]
      %v7024 = vld [vmem:[%s7016 + $0x1c] sm:$0xf]
      %v7025 = vld [vmem:[%s7016 + $0x20] sm:$0xf]
      %v7026 = vld [vmem:[%s7016 + $0x24] sm:$0xf]
      %v7027 = vld [vmem:[%s7016 + $0x28] sm:$0xf]
      %v7028 = vld [vmem:[%s7016 + $0x2c] sm:$0xf]
      %v7029 = vld [vmem:[%s7016 + $0x30] sm:$0xf]
      %v7030 = vld [vmem:[%s7016 + $0x34] sm:$0xf]
      %v7031 = vld [vmem:[%s7016 + $0x38] sm:$0xf]
      %v7032 = vld [vmem:[%s7016 + $0x3c] sm:$0xf]
      %v7033 = vld [vmem:[%s7016 + $0x40] sm:$0xf]
      %v7034 = vld [vmem:[%s7016 + $0x44] sm:$0xf]
      %v7035 = vld [vmem:[%s7016 + $0x48] sm:$0xf]
      %v7036 = vld [vmem:[%s7016 + $0x4c] sm:$0xf]
      %v7037 = vld [vmem:[%s7016 + $0x50] sm:$0xf]
      %v7038 = vld [vmem:[%s7016 + $0x54] sm:$0xf]
      %v7039 = vld [vmem:[%s7016 + $0x58] sm:$0xf]
      %v7040 = vld [vmem:[%s7016 + $0x5c] sm:$0xf]
      %v7041 = vld [vmem:[%s7016 + $0x60] sm:$0xf]
      %v7042 = vld [vmem:[%s7016 + $0x64] sm:$0xf]
      %v7043 = vld [vmem:[%s7016 + $0x68] sm:$0xf]
      %v7044 = vld [vmem:[%s7016 + $0x6c] sm:$0xf]
      %v7045 = vld [vmem:[%s7016 + $0x70] sm:$0xf]
      %v7046 = vld [vmem:[%s7016 + $0x74] sm:$0xf]
      %v7047 = vld [vmem:[%s7016 + $0x78] sm:$0xf]
      %v7048 = vld [vmem:[%s7016 + $0x7c] sm:$0xf]
      %v7049 = vld [vmem:[%s7016 + $0x80] sm:$0xf]
      %v7050 = vld [vmem:[%s7016 + $0x84] sm:$0xf]
      %v7051 = vld [vmem:[%s7016 + $0x88] sm:$0xf]
      %v7052 = vld [vmem:[%s7016 + $0x8c] sm:$0xf]
      %v7053 = vld [vmem:[%s7016 + $0x90] sm:$0xf]
      %v7054 = vld [vmem:[%s7016 + $0x94] sm:$0xf]
      %v7055 = vld [vmem:[%s7016 + $0x98] sm:$0xf]
      %v7056 = vld [vmem:[%s7016 + $0x9c] sm:$0xf]
      %v7057 = vld [vmem:[%s7016 + $0xa0] sm:$0xf]
      %v7058 = vld [vmem:[%s7016 + $0xa4] sm:$0xf]
      %v7059 = vld [vmem:[%s7016 + $0xa8] sm:$0xf]
      %v7060 = vld [vmem:[%s7016 + $0xac] sm:$0xf]
      %v7061 = vld [vmem:[%s7016 + $0xb0] sm:$0xf]
      %v7062 = vld [vmem:[%s7016 + $0xb4] sm:$0xf]
      %v7063 = vld [vmem:[%s7016 + $0xb8] sm:$0xf]
      %v7064 = vld [vmem:[%s7016 + $0xbc] sm:$0xf]
      %v7065 = vld [vmem:[%s7016 + $0xc0] sm:$0xf]
      %v7066 = vld [vmem:[%s7016 + $0xc4] sm:$0xf]
      %v7067 = vld [vmem:[%s7016 + $0xc8] sm:$0xf]
      %v7068 = vld [vmem:[%s7016 + $0xcc] sm:$0xf]
      %v7069 = vld [vmem:[%s7016 + $0xd0] sm:$0xf]
      %v7070 = vld [vmem:[%s7016 + $0xd4] sm:$0xf]
      %v7071 = vld [vmem:[%s7016 + $0xd8] sm:$0xf]
      %v7072 = vld [vmem:[%s7016 + $0xdc] sm:$0xf]
      %v7073 = vld [vmem:[%s7016 + $0xe0] sm:$0xf]
      %v7074 = vld [vmem:[%s7016 + $0xe4] sm:$0xf]
      %v7075 = vld [vmem:[%s7016 + $0xe8] sm:$0xf]
      %v7076 = vld [vmem:[%s7016 + $0xec] sm:$0xf]
      %v7077 = vld [vmem:[%s7016 + $0xf0] sm:$0xf]
      %v7078 = vld [vmem:[%s7016 + $0xf4] sm:$0xf]
      %v7079 = vld [vmem:[%s7016 + $0xf8] sm:$0xf]
      %v7080 = vld [vmem:[%s7016 + $0xfc] sm:$0xf]
      %v7081 = vld [vmem:[%s7016 + $0x100] sm:$0xf]
      %v7082 = vld [vmem:[%s7016 + $0x104] sm:$0xf]
      %v7083 = vld [vmem:[%s7016 + $0x108] sm:$0xf]
      %v7084 = vld [vmem:[%s7016 + $0x10c] sm:$0xf]
      %v7085 = vld [vmem:[%s7016 + $0x110] sm:$0xf]
      %v7086 = vld [vmem:[%s7016 + $0x114] sm:$0xf]
      %v7087 = vld [vmem:[%s7016 + $0x118] sm:$0xf]
      %v7088 = vld [vmem:[%s7016 + $0x11c] sm:$0xf]
      %v7089 = vld [vmem:[%s7016 + $0x120] sm:$0xf]
      %v7090 = vld [vmem:[%s7016 + $0x124] sm:$0xf]
      %v7091 = vld [vmem:[%s7016 + $0x128] sm:$0xf]
      %v7092 = vld [vmem:[%s7016 + $0x12c] sm:$0xf]
      %v7093 = vld [vmem:[%s7016 + $0x130] sm:$0xf]
      %v7094 = vld [vmem:[%s7016 + $0x134] sm:$0xf]
      %v7095 = vld [vmem:[%s7016 + $0x138] sm:$0xf]
      %v7096 = vld [vmem:[%s7016 + $0x13c] sm:$0xf]
      %v7097 = vld [vmem:[%s7016 + $0x140] sm:$0xf]
      %v7098 = vld [vmem:[%s7016 + $0x144] sm:$0xf]
      %v7099 = vld [vmem:[%s7016 + $0x148] sm:$0xf]
      %v7100 = vld [vmem:[%s7016 + $0x14c] sm:$0xf]
      %v7101 = vld [vmem:[%s7016 + $0x150] sm:$0xf]
      %v7102 = vld [vmem:[%s7016 + $0x154] sm:$0xf]
      %v7103 = vld [vmem:[%s7016 + $0x158] sm:$0xf]
      %v7104 = vld [vmem:[%s7016 + $0x15c] sm:$0xf]
      %v7105 = vld [vmem:[%s7016 + $0x160] sm:$0xf]
      %v7106 = vld [vmem:[%s7016 + $0x164] sm:$0xf]
      %v7107 = vld [vmem:[%s7016 + $0x168] sm:$0xf]
      %v7108 = vld [vmem:[%s7016 + $0x16c] sm:$0xf]
      %v7109 = vld [vmem:[%s7016 + $0x170] sm:$0xf]
      %v7110 = vld [vmem:[%s7016 + $0x174] sm:$0xf]
      %v7111 = vld [vmem:[%s7016 + $0x178] sm:$0xf]
      %v7112 = vld [vmem:[%s7016 + $0x17c] sm:$0xf]
      %v7113 = vld [vmem:[%s7016 + $0x180] sm:$0xf]
      %v7114 = vld [vmem:[%s7016 + $0x184] sm:$0xf]
      %v7115 = vld [vmem:[%s7016 + $0x188] sm:$0xf]
      %v7116 = vld [vmem:[%s7016 + $0x18c] sm:$0xf]
      %v7117 = vld [vmem:[%s7016 + $0x190] sm:$0xf]
      %v7118 = vld [vmem:[%s7016 + $0x194] sm:$0xf]
      %v7119 = vld [vmem:[%s7016 + $0x198] sm:$0xf]
      %v7120 = vld [vmem:[%s7016 + $0x19c] sm:$0xf]
      %v7121 = vld [vmem:[%s7016 + $0x1a0] sm:$0xf]
      %v7122 = vld [vmem:[%s7016 + $0x1a4] sm:$0xf]
      %v7123 = vld [vmem:[%s7016 + $0x1a8] sm:$0xf]
      %v7124 = vld [vmem:[%s7016 + $0x1ac] sm:$0xf]
      %v7125 = vld [vmem:[%s7016 + $0x1b0] sm:$0xf]
      %v7126 = vld [vmem:[%s7016 + $0x1b4] sm:$0xf]
      %v7127 = vld [vmem:[%s7016 + $0x1b8] sm:$0xf]
      %v7128 = vld [vmem:[%s7016 + $0x1bc] sm:$0xf]
      %v7129 = vld [vmem:[%s7016 + $0x1c0] sm:$0xf]
      %v7130 = vld [vmem:[%s7016 + $0x1c4] sm:$0xf]
      %v7131 = vld [vmem:[%s7016 + $0x1c8] sm:$0xf]
      %v7132 = vld [vmem:[%s7016 + $0x1cc] sm:$0xf]
      %v7133 = vld [vmem:[%s7016 + $0x1d0] sm:$0xf]
      %v7134 = vld [vmem:[%s7016 + $0x1d4] sm:$0xf]
      %v7135 = vld [vmem:[%s7016 + $0x1d8] sm:$0xf]
      %v7136 = vld [vmem:[%s7016 + $0x1dc] sm:$0xf]
      %v7137 = vld [vmem:[%s7016 + $0x1e0] sm:$0xf]
      %v7138 = vld [vmem:[%s7016 + $0x1e4] sm:$0xf]
      %v7139 = vld [vmem:[%s7016 + $0x1e8] sm:$0xf]
      %v7140 = vld [vmem:[%s7016 + $0x1ec] sm:$0xf]
      %v7141 = vld [vmem:[%s7016 + $0x1f0] sm:$0xf]
      %v7142 = vld [vmem:[%s7016 + $0x1f4] sm:$0xf]
      %v7143 = vld [vmem:[%s7016 + $0x1f8] sm:$0xf]
      %v7144 = vld [vmem:[%s7016 + $0x1fc] sm:$0xf]
      %v7273 = vunpack.c.l.b16 %v7017
      %v7274 = vunpack.c.l.b16 %v7018
      %v7275 = vunpack.c.l.b16 %v7019
      %v7276 = vunpack.c.l.b16 %v7020
      %v7277 = vunpack.c.l.b16 %v7021
      %v7278 = vunpack.c.l.b16 %v7022
      %v7279 = vunpack.c.l.b16 %v7023
      %v7280 = vunpack.c.l.b16 %v7024
      %v7281 = vunpack.c.l.b16 %v7025
      %v7282 = vunpack.c.l.b16 %v7026
      %v7283 = vunpack.c.l.b16 %v7027
      %v7284 = vunpack.c.l.b16 %v7028
      %v7285 = vunpack.c.l.b16 %v7029
      %v7286 = vunpack.c.l.b16 %v7030
      %v7287 = vunpack.c.l.b16 %v7031
      %v7288 = vunpack.c.l.b16 %v7032
      %v7289 = vunpack.c.l.b16 %v7033
      %v7290 = vunpack.c.l.b16 %v7034
      %v7291 = vunpack.c.l.b16 %v7035
      %v7292 = vunpack.c.l.b16 %v7036
      %v7293 = vunpack.c.l.b16 %v7037
      %v7294 = vunpack.c.l.b16 %v7038
      %v7295 = vunpack.c.l.b16 %v7039
      %v7296 = vunpack.c.l.b16 %v7040
      %v7297 = vunpack.c.l.b16 %v7041
      %v7298 = vunpack.c.l.b16 %v7042
      %v7299 = vunpack.c.l.b16 %v7043
      %v7300 = vunpack.c.l.b16 %v7044
      %v7301 = vunpack.c.l.b16 %v7045
      %v7302 = vunpack.c.l.b16 %v7046
      %v7303 = vunpack.c.l.b16 %v7047
      %v7304 = vunpack.c.l.b16 %v7048
      %v7305 = vunpack.c.l.b16 %v7049
      %v7306 = vunpack.c.l.b16 %v7050
      %v7307 = vunpack.c.l.b16 %v7051
      %v7308 = vunpack.c.l.b16 %v7052
      %v7309 = vunpack.c.l.b16 %v7053
      %v7310 = vunpack.c.l.b16 %v7054
      %v7311 = vunpack.c.l.b16 %v7055
      %v7312 = vunpack.c.l.b16 %v7056
      %v7313 = vunpack.c.l.b16 %v7057
      %v7314 = vunpack.c.l.b16 %v7058
      %v7315 = vunpack.c.l.b16 %v7059
      %v7316 = vunpack.c.l.b16 %v7060
      %v7317 = vunpack.c.l.b16 %v7061
      %v7318 = vunpack.c.l.b16 %v7062
      %v7319 = vunpack.c.l.b16 %v7063
      %v7320 = vunpack.c.l.b16 %v7064
      %v7321 = vunpack.c.l.b16 %v7065
      %v7322 = vunpack.c.l.b16 %v7066
      %v7323 = vunpack.c.l.b16 %v7067
      %v7324 = vunpack.c.l.b16 %v7068
      %v7325 = vunpack.c.l.b16 %v7069
      %v7326 = vunpack.c.l.b16 %v7070
      %v7327 = vunpack.c.l.b16 %v7071
      %v7328 = vunpack.c.l.b16 %v7072
      %v7329 = vunpack.c.l.b16 %v7073
      %v7330 = vunpack.c.l.b16 %v7074
      %v7331 = vunpack.c.l.b16 %v7075
      %v7332 = vunpack.c.l.b16 %v7076
      %v7333 = vunpack.c.l.b16 %v7077
      %v7334 = vunpack.c.l.b16 %v7078
      %v7335 = vunpack.c.l.b16 %v7079
      %v7336 = vunpack.c.l.b16 %v7080
      %v7337 = vunpack.c.l.b16 %v7081
      %v7338 = vunpack.c.l.b16 %v7082
      %v7339 = vunpack.c.l.b16 %v7083
      %v7340 = vunpack.c.l.b16 %v7084
      %v7341 = vunpack.c.l.b16 %v7085
      %v7342 = vunpack.c.l.b16 %v7086
      %v7343 = vunpack.c.l.b16 %v7087
      %v7344 = vunpack.c.l.b16 %v7088
      %v7345 = vunpack.c.l.b16 %v7089
      %v7346 = vunpack.c.l.b16 %v7090
      %v7347 = vunpack.c.l.b16 %v7091
      %v7348 = vunpack.c.l.b16 %v7092
      %v7349 = vunpack.c.l.b16 %v7093
      %v7350 = vunpack.c.l.b16 %v7094
      %v7351 = vunpack.c.l.b16 %v7095
      %v7352 = vunpack.c.l.b16 %v7096
      %v7353 = vunpack.c.l.b16 %v7097
      %v7354 = vunpack.c.l.b16 %v7098
      %v7355 = vunpack.c.l.b16 %v7099
      %v7356 = vunpack.c.l.b16 %v7100
      %v7357 = vunpack.c.l.b16 %v7101
      %v7358 = vunpack.c.l.b16 %v7102
      %v7359 = vunpack.c.l.b16 %v7103
      %v7360 = vunpack.c.l.b16 %v7104
      %v7361 = vunpack.c.l.b16 %v7105
      %v7362 = vunpack.c.l.b16 %v7106
      %v7363 = vunpack.c.l.b16 %v7107
      %v7364 = vunpack.c.l.b16 %v7108
      %v7365 = vunpack.c.l.b16 %v7109
      %v7366 = vunpack.c.l.b16 %v7110
      %v7367 = vunpack.c.l.b16 %v7111
      %v7368 = vunpack.c.l.b16 %v7112
      %v7369 = vunpack.c.l.b16 %v7113
      %v7370 = vunpack.c.l.b16 %v7114
      %v7371 = vunpack.c.l.b16 %v7115
      %v7372 = vunpack.c.l.b16 %v7116
      %v7373 = vunpack.c.l.b16 %v7117
      %v7374 = vunpack.c.l.b16 %v7118
      %v7375 = vunpack.c.l.b16 %v7119
      %v7376 = vunpack.c.l.b16 %v7120
      %v7377 = vunpack.c.l.b16 %v7121
      %v7378 = vunpack.c.l.b16 %v7122
      %v7379 = vunpack.c.l.b16 %v7123
      %v7380 = vunpack.c.l.b16 %v7124
      %v7381 = vunpack.c.l.b16 %v7125
      %v7382 = vunpack.c.l.b16 %v7126
      %v7383 = vunpack.c.l.b16 %v7127
      %v7384 = vunpack.c.l.b16 %v7128
      %v7385 = vunpack.c.l.b16 %v7129
      %v7386 = vunpack.c.l.b16 %v7130
      %v7387 = vunpack.c.l.b16 %v7131
      %v7388 = vunpack.c.l.b16 %v7132
      %v7389 = vunpack.c.l.b16 %v7133
      %v7390 = vunpack.c.l.b16 %v7134
      %v7391 = vunpack.c.l.b16 %v7135
      %v7392 = vunpack.c.l.b16 %v7136
      %v7393 = vunpack.c.l.b16 %v7137
      %v7394 = vunpack.c.l.b16 %v7138
      %v7395 = vunpack.c.l.b16 %v7139
      %v7396 = vunpack.c.l.b16 %v7140
      %v7397 = vunpack.c.l.b16 %v7141
      %v7398 = vunpack.c.l.b16 %v7142
      %v7399 = vunpack.c.l.b16 %v7143
      %v7400 = vunpack.c.l.b16 %v7144
      %v7401 = vpack.c.b16 %v7274, %v7273
      %v7402 = vpack.c.b16 %v7276, %v7275
      %v7403 = vpack.c.b16 %v7278, %v7277
      %v7404 = vpack.c.b16 %v7280, %v7279
      %v7405 = vpack.c.b16 %v7282, %v7281
      %v7406 = vpack.c.b16 %v7284, %v7283
      %v7407 = vpack.c.b16 %v7286, %v7285
      %v7408 = vpack.c.b16 %v7288, %v7287
      %v7409 = vpack.c.b16 %v7290, %v7289
      %v7410 = vpack.c.b16 %v7292, %v7291
      %v7411 = vpack.c.b16 %v7294, %v7293
      %v7412 = vpack.c.b16 %v7296, %v7295
      %v7413 = vpack.c.b16 %v7298, %v7297
      %v7414 = vpack.c.b16 %v7300, %v7299
      %v7415 = vpack.c.b16 %v7302, %v7301
      %v7416 = vpack.c.b16 %v7304, %v7303
      %v7417 = vpack.c.b16 %v7306, %v7305
      %v7418 = vpack.c.b16 %v7308, %v7307
      %v7419 = vpack.c.b16 %v7310, %v7309
      %v7420 = vpack.c.b16 %v7312, %v7311
      %v7421 = vpack.c.b16 %v7314, %v7313
      %v7422 = vpack.c.b16 %v7316, %v7315
      %v7423 = vpack.c.b16 %v7318, %v7317
      %v7424 = vpack.c.b16 %v7320, %v7319
      %v7425 = vpack.c.b16 %v7322, %v7321
      %v7426 = vpack.c.b16 %v7324, %v7323
      %v7427 = vpack.c.b16 %v7326, %v7325
      %v7428 = vpack.c.b16 %v7328, %v7327
      %v7429 = vpack.c.b16 %v7330, %v7329
      %v7430 = vpack.c.b16 %v7332, %v7331
      %v7431 = vpack.c.b16 %v7334, %v7333
      %v7432 = vpack.c.b16 %v7336, %v7335
      %v7433 = vpack.c.b16 %v7338, %v7337
      %v7434 = vpack.c.b16 %v7340, %v7339
      %v7435 = vpack.c.b16 %v7342, %v7341
      %v7436 = vpack.c.b16 %v7344, %v7343
      %v7437 = vpack.c.b16 %v7346, %v7345
      %v7438 = vpack.c.b16 %v7348, %v7347
      %v7439 = vpack.c.b16 %v7350, %v7349
      %v7440 = vpack.c.b16 %v7352, %v7351
      %v7441 = vpack.c.b16 %v7354, %v7353
      %v7442 = vpack.c.b16 %v7356, %v7355
      %v7443 = vpack.c.b16 %v7358, %v7357
      %v7444 = vpack.c.b16 %v7360, %v7359
      %v7445 = vpack.c.b16 %v7362, %v7361
      %v7446 = vpack.c.b16 %v7364, %v7363
      %v7447 = vpack.c.b16 %v7366, %v7365
      %v7448 = vpack.c.b16 %v7368, %v7367
      %v7449 = vpack.c.b16 %v7370, %v7369
      %v7450 = vpack.c.b16 %v7372, %v7371
      %v7451 = vpack.c.b16 %v7374, %v7373
      %v7452 = vpack.c.b16 %v7376, %v7375
      %v7453 = vpack.c.b16 %v7378, %v7377
      %v7454 = vpack.c.b16 %v7380, %v7379
      %v7455 = vpack.c.b16 %v7382, %v7381
      %v7456 = vpack.c.b16 %v7384, %v7383
      %v7457 = vpack.c.b16 %v7386, %v7385
      %v7458 = vpack.c.b16 %v7388, %v7387
      %v7459 = vpack.c.b16 %v7390, %v7389
      %v7460 = vpack.c.b16 %v7392, %v7391
      %v7461 = vpack.c.b16 %v7394, %v7393
      %v7462 = vpack.c.b16 %v7396, %v7395
      %v7463 = vpack.c.b16 %v7398, %v7397
      %v7464 = vpack.c.b16 %v7400, %v7399
      %7529 = vmatpush.bf16.msra.mxu0 %v7408
      %7530 = vmatpush.bf16.msra.mxu0 %v7407
      %7531 = vmatpush.bf16.msra.mxu0 %v7406
      %7532 = vmatpush.bf16.msra.mxu0 %v7405
      %7533 = vmatpush.bf16.msra.mxu0 %v7404
      %7534 = vmatpush.bf16.msra.mxu0 %v7403
      %7535 = vmatpush.bf16.msra.mxu0 %v7402
      %7536 = vmatpush.bf16.msra.mxu0 %v7401
      %7537 = vmatmul.bf16.gmra.mxu0 %v7008
      %v7538 = vpop.f32.mrf.mxu0
      %v7539 = vadd.f32 0.0, %v7538
      %v7540 = vpop.f32.mrf.mxu0
      %v7541 = vadd.f32 0.0, %v7540
      %7542 = vdwg.mxu0
      %7543 = vmatpush.bf16.msra.mxu0 %v7416
      %7544 = vmatpush.bf16.msra.mxu0 %v7415
      %7545 = vmatpush.bf16.msra.mxu0 %v7414
      %7546 = vmatpush.bf16.msra.mxu0 %v7413
      %7547 = vmatpush.bf16.msra.mxu0 %v7412
      %7548 = vmatpush.bf16.msra.mxu0 %v7411
      %7549 = vmatpush.bf16.msra.mxu0 %v7410
      %7550 = vmatpush.bf16.msra.mxu0 %v7409
      %7551 = vmatmul.bf16.gmra.mxu0 %v7009
      %v7552 = vpop.f32.mrf.mxu0
      %v7553 = vadd.f32 %v7539, %v7552
      %v7554 = vpop.f32.mrf.mxu0
      %v7555 = vadd.f32 %v7541, %v7554
      %7556 = vdwg.mxu0
      %7557 = vmatpush.bf16.msra.mxu0 %v7424
      %7558 = vmatpush.bf16.msra.mxu0 %v7423
      %7559 = vmatpush.bf16.msra.mxu0 %v7422
      %7560 = vmatpush.bf16.msra.mxu0 %v7421
      %7561 = vmatpush.bf16.msra.mxu0 %v7420
      %7562 = vmatpush.bf16.msra.mxu0 %v7419
      %7563 = vmatpush.bf16.msra.mxu0 %v7418
      %7564 = vmatpush.bf16.msra.mxu0 %v7417
      %7565 = vmatmul.bf16.gmra.mxu0 %v7010
      %v7566 = vpop.f32.mrf.mxu0
      %v7567 = vadd.f32 %v7553, %v7566
      %v7568 = vpop.f32.mrf.mxu0
      %v7569 = vadd.f32 %v7555, %v7568
      %7570 = vdwg.mxu0
      %7571 = vmatpush.bf16.msra.mxu0 %v7432
      %7572 = vmatpush.bf16.msra.mxu0 %v7431
      %7573 = vmatpush.bf16.msra.mxu0 %v7430
      %7574 = vmatpush.bf16.msra.mxu0 %v7429
      %7575 = vmatpush.bf16.msra.mxu0 %v7428
      %7576 = vmatpush.bf16.msra.mxu0 %v7427
      %7577 = vmatpush.bf16.msra.mxu0 %v7426
      %7578 = vmatpush.bf16.msra.mxu0 %v7425
      %7579 = vmatmul.bf16.gmra.mxu0 %v7011
      %v7580 = vpop.f32.mrf.mxu0
      %v7581 = vadd.f32 %v7567, %v7580
      %v7582 = vpop.f32.mrf.mxu0
      %v7583 = vadd.f32 %v7569, %v7582
      %7584 = vdwg.mxu0
      %7585 = vmatpush.bf16.msra.mxu0 %v7440
      %7586 = vmatpush.bf16.msra.mxu0 %v7439
      %7587 = vmatpush.bf16.msra.mxu0 %v7438
      %7588 = vmatpush.bf16.msra.mxu0 %v7437
      %7589 = vmatpush.bf16.msra.mxu0 %v7436
      %7590 = vmatpush.bf16.msra.mxu0 %v7435
      %7591 = vmatpush.bf16.msra.mxu0 %v7434
      %7592 = vmatpush.bf16.msra.mxu0 %v7433
      %7593 = vmatmul.bf16.gmra.mxu0 %v7012
      %v7594 = vpop.f32.mrf.mxu0
      %v7595 = vadd.f32 %v7581, %v7594
      %v7596 = vpop.f32.mrf.mxu0
      %v7597 = vadd.f32 %v7583, %v7596
      %7598 = vdwg.mxu0
      %7599 = vmatpush.bf16.msra.mxu0 %v7448
      %7600 = vmatpush.bf16.msra.mxu0 %v7447
      %7601 = vmatpush.bf16.msra.mxu0 %v7446
      %7602 = vmatpush.bf16.msra.mxu0 %v7445
      %7603 = vmatpush.bf16.msra.mxu0 %v7444
      %7604 = vmatpush.bf16.msra.mxu0 %v7443
      %7605 = vmatpush.bf16.msra.mxu0 %v7442
      %7606 = vmatpush.bf16.msra.mxu0 %v7441
      %7607 = vmatmul.bf16.gmra.mxu0 %v7013
      %v7608 = vpop.f32.mrf.mxu0
      %v7609 = vadd.f32 %v7595, %v7608
      %v7610 = vpop.f32.mrf.mxu0
      %v7611 = vadd.f32 %v7597, %v7610
      %7612 = vdwg.mxu0
      %7613 = vmatpush.bf16.msra.mxu0 %v7456
      %7614 = vmatpush.bf16.msra.mxu0 %v7455
      %7615 = vmatpush.bf16.msra.mxu0 %v7454
      %7616 = vmatpush.bf16.msra.mxu0 %v7453
      %7617 = vmatpush.bf16.msra.mxu0 %v7452
      %7618 = vmatpush.bf16.msra.mxu0 %v7451
      %7619 = vmatpush.bf16.msra.mxu0 %v7450
      %7620 = vmatpush.bf16.msra.mxu0 %v7449
      %7621 = vmatmul.bf16.gmra.mxu0 %v7014
      %v7622 = vpop.f32.mrf.mxu0
      %v7623 = vadd.f32 %v7609, %v7622
      %v7624 = vpop.f32.mrf.mxu0
      %v7625 = vadd.f32 %v7611, %v7624
      %7626 = vdwg.mxu0
      %7627 = vmatpush.bf16.msra.mxu0 %v7464
      %7628 = vmatpush.bf16.msra.mxu0 %v7463
      %7629 = vmatpush.bf16.msra.mxu0 %v7462
      %7630 = vmatpush.bf16.msra.mxu0 %v7461
      %7631 = vmatpush.bf16.msra.mxu0 %v7460
      %7632 = vmatpush.bf16.msra.mxu0 %v7459
      %7633 = vmatpush.bf16.msra.mxu0 %v7458
      %7634 = vmatpush.bf16.msra.mxu0 %v7457
      %7635 = vmatmul.bf16.gmra.mxu0 %v7015
      %v7636 = vpop.f32.mrf.mxu0
      %v7637 = vadd.f32 %v7623, %v7636
      %v7638 = vpop.f32.mrf.mxu0
      %v7639 = vadd.f32 %v7625, %v7638
      %7640 = vdwg.mxu0
      %v7641 = vadd.f32 %v6904, %v7637
      %v7642 = vadd.f32 %v6906, %v7639
      %s7643 = scalar_lea.vmem [#allocation5], 96
      %v7644 = vld [vmem:[%s7643] sm:$0xff]
      %v7645 = vld [vmem:[%s7643 + $0x8] sm:$0xff]
      %v7646 = vld [vmem:[%s7643 + $0x20] sm:$0xff]
      %v7647 = vld [vmem:[%s7643 + $0x28] sm:$0xff]
      %v7648 = vld [vmem:[%s7643] sm:$0xfe]
      %v7649 = vld [vmem:[%s7643 + $0x8] sm:$0xfe]
      %v7650 = vld [vmem:[%s7643 + $0x10] sm:$0x1]
      %v7651 = vld [vmem:[%s7643 + $0x18] sm:$0x1]
      %v7652 = vld [vmem:[%s7643 + $0x20] sm:$0xfe]
      %v7653 = vld [vmem:[%s7643 + $0x28] sm:$0xfe]
      %v7654 = vld [vmem:[%s7643 + $0x30] sm:$0x1]
      %v7655 = vld [vmem:[%s7643 + $0x38] sm:$0x1]
      %v7656 = vld [vmem:[%s7643] sm:$0xfc]
      %v7657 = vld [vmem:[%s7643 + $0x8] sm:$0xfc]
      %v7658 = vld [vmem:[%s7643 + $0x10] sm:$0x3]
      %v7659 = vld [vmem:[%s7643 + $0x18] sm:$0x3]
      %v7660 = vld [vmem:[%s7643 + $0x20] sm:$0xfc]
      %v7661 = vld [vmem:[%s7643 + $0x28] sm:$0xfc]
      %v7662 = vld [vmem:[%s7643 + $0x30] sm:$0x3]
      %v7663 = vld [vmem:[%s7643 + $0x38] sm:$0x3]
      %v7664 = vld [vmem:[%s7643] sm:$0xf8]
      %v7665 = vld [vmem:[%s7643 + $0x8] sm:$0xf8]
      %v7666 = vld [vmem:[%s7643 + $0x10] sm:$0x7]
      %v7667 = vld [vmem:[%s7643 + $0x18] sm:$0x7]
      %v7668 = vld [vmem:[%s7643 + $0x20] sm:$0xf8]
      %v7669 = vld [vmem:[%s7643 + $0x28] sm:$0xf8]
      %v7670 = vld [vmem:[%s7643 + $0x30] sm:$0x7]
      %v7671 = vld [vmem:[%s7643 + $0x38] sm:$0x7]
      %v7680 = vrot.slane %v7648, 1
      %v7681 = vrot.slane %v7650, 1
      %v7682 = vsel %vm5476, %v7680, %v7681
      %v7683 = vrot.slane %v7649, 1
      %v7684 = vrot.slane %v7651, 1
      %v7685 = vsel %vm5476, %v7683, %v7684
      %v7686 = vrot.slane %v7652, 1
      %v7687 = vrot.slane %v7654, 1
      %v7688 = vsel %vm5476, %v7686, %v7687
      %v7689 = vrot.slane %v7653, 1
      %v7690 = vrot.slane %v7655, 1
      %v7691 = vsel %vm5476, %v7689, %v7690
      %v7704 = vrot.slane %v7656, 2
      %v7705 = vrot.slane %v7658, 2
      %v7706 = vsel %vm5501, %v7704, %v7705
      %v7707 = vrot.slane %v7657, 2
      %v7708 = vrot.slane %v7659, 2
      %v7709 = vsel %vm5501, %v7707, %v7708
      %v7710 = vrot.slane %v7660, 2
      %v7711 = vrot.slane %v7662, 2
      %v7712 = vsel %vm5501, %v7710, %v7711
      %v7713 = vrot.slane %v7661, 2
      %v7714 = vrot.slane %v7663, 2
      %v7715 = vsel %vm5501, %v7713, %v7714
      %v7728 = vrot.slane %v7664, 3
      %v7729 = vrot.slane %v7666, 3
      %v7730 = vsel %vm5526, %v7728, %v7729
      %v7731 = vrot.slane %v7665, 3
      %v7732 = vrot.slane %v7667, 3
      %v7733 = vsel %vm5526, %v7731, %v7732
      %v7734 = vrot.slane %v7668, 3
      %v7735 = vrot.slane %v7670, 3
      %v7736 = vsel %vm5526, %v7734, %v7735
      %v7737 = vrot.slane %v7669, 3
      %v7738 = vrot.slane %v7671, 3
      %v7739 = vsel %vm5526, %v7737, %v7738
      %v7744 = vpack.c.bf16 %v7646, %v7644
      %v7745 = vpack.c.bf16 %v7647, %v7645
      %v7746 = vpack.c.bf16 %v7688, %v7682
      %v7747 = vpack.c.bf16 %v7691, %v7685
      %v7748 = vpack.c.bf16 %v7712, %v7706
      %v7749 = vpack.c.bf16 %v7715, %v7709
      %v7750 = vpack.c.bf16 %v7736, %v7730
      %v7751 = vpack.c.bf16 %v7739, %v7733
      %s7752 = scalar_lea.vmem %s5, 1536
      %v7753 = vld [vmem:[%s7752] sm:$0xf]
      %v7754 = vld [vmem:[%s7752 + $0x4] sm:$0xf]
      %v7755 = vld [vmem:[%s7752 + $0x8] sm:$0xf]
      %v7756 = vld [vmem:[%s7752 + $0xc] sm:$0xf]
      %v7757 = vld [vmem:[%s7752 + $0x10] sm:$0xf]
      %v7758 = vld [vmem:[%s7752 + $0x14] sm:$0xf]
      %v7759 = vld [vmem:[%s7752 + $0x18] sm:$0xf]
      %v7760 = vld [vmem:[%s7752 + $0x1c] sm:$0xf]
      %v7761 = vld [vmem:[%s7752 + $0x20] sm:$0xf]
      %v7762 = vld [vmem:[%s7752 + $0x24] sm:$0xf]
      %v7763 = vld [vmem:[%s7752 + $0x28] sm:$0xf]
      %v7764 = vld [vmem:[%s7752 + $0x2c] sm:$0xf]
      %v7765 = vld [vmem:[%s7752 + $0x30] sm:$0xf]
      %v7766 = vld [vmem:[%s7752 + $0x34] sm:$0xf]
      %v7767 = vld [vmem:[%s7752 + $0x38] sm:$0xf]
      %v7768 = vld [vmem:[%s7752 + $0x3c] sm:$0xf]
      %v7769 = vld [vmem:[%s7752 + $0x40] sm:$0xf]
      %v7770 = vld [vmem:[%s7752 + $0x44] sm:$0xf]
      %v7771 = vld [vmem:[%s7752 + $0x48] sm:$0xf]
      %v7772 = vld [vmem:[%s7752 + $0x4c] sm:$0xf]
      %v7773 = vld [vmem:[%s7752 + $0x50] sm:$0xf]
      %v7774 = vld [vmem:[%s7752 + $0x54] sm:$0xf]
      %v7775 = vld [vmem:[%s7752 + $0x58] sm:$0xf]
      %v7776 = vld [vmem:[%s7752 + $0x5c] sm:$0xf]
      %v7777 = vld [vmem:[%s7752 + $0x60] sm:$0xf]
      %v7778 = vld [vmem:[%s7752 + $0x64] sm:$0xf]
      %v7779 = vld [vmem:[%s7752 + $0x68] sm:$0xf]
      %v7780 = vld [vmem:[%s7752 + $0x6c] sm:$0xf]
      %v7781 = vld [vmem:[%s7752 + $0x70] sm:$0xf]
      %v7782 = vld [vmem:[%s7752 + $0x74] sm:$0xf]
      %v7783 = vld [vmem:[%s7752 + $0x78] sm:$0xf]
      %v7784 = vld [vmem:[%s7752 + $0x7c] sm:$0xf]
      %v7785 = vld [vmem:[%s7752 + $0x80] sm:$0xf]
      %v7786 = vld [vmem:[%s7752 + $0x84] sm:$0xf]
      %v7787 = vld [vmem:[%s7752 + $0x88] sm:$0xf]
      %v7788 = vld [vmem:[%s7752 + $0x8c] sm:$0xf]
      %v7789 = vld [vmem:[%s7752 + $0x90] sm:$0xf]
      %v7790 = vld [vmem:[%s7752 + $0x94] sm:$0xf]
      %v7791 = vld [vmem:[%s7752 + $0x98] sm:$0xf]
      %v7792 = vld [vmem:[%s7752 + $0x9c] sm:$0xf]
      %v7793 = vld [vmem:[%s7752 + $0xa0] sm:$0xf]
      %v7794 = vld [vmem:[%s7752 + $0xa4] sm:$0xf]
      %v7795 = vld [vmem:[%s7752 + $0xa8] sm:$0xf]
      %v7796 = vld [vmem:[%s7752 + $0xac] sm:$0xf]
      %v7797 = vld [vmem:[%s7752 + $0xb0] sm:$0xf]
      %v7798 = vld [vmem:[%s7752 + $0xb4] sm:$0xf]
      %v7799 = vld [vmem:[%s7752 + $0xb8] sm:$0xf]
      %v7800 = vld [vmem:[%s7752 + $0xbc] sm:$0xf]
      %v7801 = vld [vmem:[%s7752 + $0xc0] sm:$0xf]
      %v7802 = vld [vmem:[%s7752 + $0xc4] sm:$0xf]
      %v7803 = vld [vmem:[%s7752 + $0xc8] sm:$0xf]
      %v7804 = vld [vmem:[%s7752 + $0xcc] sm:$0xf]
      %v7805 = vld [vmem:[%s7752 + $0xd0] sm:$0xf]
      %v7806 = vld [vmem:[%s7752 + $0xd4] sm:$0xf]
      %v7807 = vld [vmem:[%s7752 + $0xd8] sm:$0xf]
      %v7808 = vld [vmem:[%s7752 + $0xdc] sm:$0xf]
      %v7809 = vld [vmem:[%s7752 + $0xe0] sm:$0xf]
      %v7810 = vld [vmem:[%s7752 + $0xe4] sm:$0xf]
      %v7811 = vld [vmem:[%s7752 + $0xe8] sm:$0xf]
      %v7812 = vld [vmem:[%s7752 + $0xec] sm:$0xf]
      %v7813 = vld [vmem:[%s7752 + $0xf0] sm:$0xf]
      %v7814 = vld [vmem:[%s7752 + $0xf4] sm:$0xf]
      %v7815 = vld [vmem:[%s7752 + $0xf8] sm:$0xf]
      %v7816 = vld [vmem:[%s7752 + $0xfc] sm:$0xf]
      %v7817 = vld [vmem:[%s7752 + $0x100] sm:$0xf]
      %v7818 = vld [vmem:[%s7752 + $0x104] sm:$0xf]
      %v7819 = vld [vmem:[%s7752 + $0x108] sm:$0xf]
      %v7820 = vld [vmem:[%s7752 + $0x10c] sm:$0xf]
      %v7821 = vld [vmem:[%s7752 + $0x110] sm:$0xf]
      %v7822 = vld [vmem:[%s7752 + $0x114] sm:$0xf]
      %v7823 = vld [vmem:[%s7752 + $0x118] sm:$0xf]
      %v7824 = vld [vmem:[%s7752 + $0x11c] sm:$0xf]
      %v7825 = vld [vmem:[%s7752 + $0x120] sm:$0xf]
      %v7826 = vld [vmem:[%s7752 + $0x124] sm:$0xf]
      %v7827 = vld [vmem:[%s7752 + $0x128] sm:$0xf]
      %v7828 = vld [vmem:[%s7752 + $0x12c] sm:$0xf]
      %v7829 = vld [vmem:[%s7752 + $0x130] sm:$0xf]
      %v7830 = vld [vmem:[%s7752 + $0x134] sm:$0xf]
      %v7831 = vld [vmem:[%s7752 + $0x138] sm:$0xf]
      %v7832 = vld [vmem:[%s7752 + $0x13c] sm:$0xf]
      %v7833 = vld [vmem:[%s7752 + $0x140] sm:$0xf]
      %v7834 = vld [vmem:[%s7752 + $0x144] sm:$0xf]
      %v7835 = vld [vmem:[%s7752 + $0x148] sm:$0xf]
      %v7836 = vld [vmem:[%s7752 + $0x14c] sm:$0xf]
      %v7837 = vld [vmem:[%s7752 + $0x150] sm:$0xf]
      %v7838 = vld [vmem:[%s7752 + $0x154] sm:$0xf]
      %v7839 = vld [vmem:[%s7752 + $0x158] sm:$0xf]
      %v7840 = vld [vmem:[%s7752 + $0x15c] sm:$0xf]
      %v7841 = vld [vmem:[%s7752 + $0x160] sm:$0xf]
      %v7842 = vld [vmem:[%s7752 + $0x164] sm:$0xf]
      %v7843 = vld [vmem:[%s7752 + $0x168] sm:$0xf]
      %v7844 = vld [vmem:[%s7752 + $0x16c] sm:$0xf]
      %v7845 = vld [vmem:[%s7752 + $0x170] sm:$0xf]
      %v7846 = vld [vmem:[%s7752 + $0x174] sm:$0xf]
      %v7847 = vld [vmem:[%s7752 + $0x178] sm:$0xf]
      %v7848 = vld [vmem:[%s7752 + $0x17c] sm:$0xf]
      %v7849 = vld [vmem:[%s7752 + $0x180] sm:$0xf]
      %v7850 = vld [vmem:[%s7752 + $0x184] sm:$0xf]
      %v7851 = vld [vmem:[%s7752 + $0x188] sm:$0xf]
      %v7852 = vld [vmem:[%s7752 + $0x18c] sm:$0xf]
      %v7853 = vld [vmem:[%s7752 + $0x190] sm:$0xf]
      %v7854 = vld [vmem:[%s7752 + $0x194] sm:$0xf]
      %v7855 = vld [vmem:[%s7752 + $0x198] sm:$0xf]
      %v7856 = vld [vmem:[%s7752 + $0x19c] sm:$0xf]
      %v7857 = vld [vmem:[%s7752 + $0x1a0] sm:$0xf]
      %v7858 = vld [vmem:[%s7752 + $0x1a4] sm:$0xf]
      %v7859 = vld [vmem:[%s7752 + $0x1a8] sm:$0xf]
      %v7860 = vld [vmem:[%s7752 + $0x1ac] sm:$0xf]
      %v7861 = vld [vmem:[%s7752 + $0x1b0] sm:$0xf]
      %v7862 = vld [vmem:[%s7752 + $0x1b4] sm:$0xf]
      %v7863 = vld [vmem:[%s7752 + $0x1b8] sm:$0xf]
      %v7864 = vld [vmem:[%s7752 + $0x1bc] sm:$0xf]
      %v7865 = vld [vmem:[%s7752 + $0x1c0] sm:$0xf]
      %v7866 = vld [vmem:[%s7752 + $0x1c4] sm:$0xf]
      %v7867 = vld [vmem:[%s7752 + $0x1c8] sm:$0xf]
      %v7868 = vld [vmem:[%s7752 + $0x1cc] sm:$0xf]
      %v7869 = vld [vmem:[%s7752 + $0x1d0] sm:$0xf]
      %v7870 = vld [vmem:[%s7752 + $0x1d4] sm:$0xf]
      %v7871 = vld [vmem:[%s7752 + $0x1d8] sm:$0xf]
      %v7872 = vld [vmem:[%s7752 + $0x1dc] sm:$0xf]
      %v7873 = vld [vmem:[%s7752 + $0x1e0] sm:$0xf]
      %v7874 = vld [vmem:[%s7752 + $0x1e4] sm:$0xf]
      %v7875 = vld [vmem:[%s7752 + $0x1e8] sm:$0xf]
      %v7876 = vld [vmem:[%s7752 + $0x1ec] sm:$0xf]
      %v7877 = vld [vmem:[%s7752 + $0x1f0] sm:$0xf]
      %v7878 = vld [vmem:[%s7752 + $0x1f4] sm:$0xf]
      %v7879 = vld [vmem:[%s7752 + $0x1f8] sm:$0xf]
      %v7880 = vld [vmem:[%s7752 + $0x1fc] sm:$0xf]
      %v8009 = vunpack.c.l.b16 %v7753
      %v8010 = vunpack.c.l.b16 %v7754
      %v8011 = vunpack.c.l.b16 %v7755
      %v8012 = vunpack.c.l.b16 %v7756
      %v8013 = vunpack.c.l.b16 %v7757
      %v8014 = vunpack.c.l.b16 %v7758
      %v8015 = vunpack.c.l.b16 %v7759
      %v8016 = vunpack.c.l.b16 %v7760
      %v8017 = vunpack.c.l.b16 %v7761
      %v8018 = vunpack.c.l.b16 %v7762
      %v8019 = vunpack.c.l.b16 %v7763
      %v8020 = vunpack.c.l.b16 %v7764
      %v8021 = vunpack.c.l.b16 %v7765
      %v8022 = vunpack.c.l.b16 %v7766
      %v8023 = vunpack.c.l.b16 %v7767
      %v8024 = vunpack.c.l.b16 %v7768
      %v8025 = vunpack.c.l.b16 %v7769
      %v8026 = vunpack.c.l.b16 %v7770
      %v8027 = vunpack.c.l.b16 %v7771
      %v8028 = vunpack.c.l.b16 %v7772
      %v8029 = vunpack.c.l.b16 %v7773
      %v8030 = vunpack.c.l.b16 %v7774
      %v8031 = vunpack.c.l.b16 %v7775
      %v8032 = vunpack.c.l.b16 %v7776
      %v8033 = vunpack.c.l.b16 %v7777
      %v8034 = vunpack.c.l.b16 %v7778
      %v8035 = vunpack.c.l.b16 %v7779
      %v8036 = vunpack.c.l.b16 %v7780
      %v8037 = vunpack.c.l.b16 %v7781
      %v8038 = vunpack.c.l.b16 %v7782
      %v8039 = vunpack.c.l.b16 %v7783
      %v8040 = vunpack.c.l.b16 %v7784
      %v8041 = vunpack.c.l.b16 %v7785
      %v8042 = vunpack.c.l.b16 %v7786
      %v8043 = vunpack.c.l.b16 %v7787
      %v8044 = vunpack.c.l.b16 %v7788
      %v8045 = vunpack.c.l.b16 %v7789
      %v8046 = vunpack.c.l.b16 %v7790
      %v8047 = vunpack.c.l.b16 %v7791
      %v8048 = vunpack.c.l.b16 %v7792
      %v8049 = vunpack.c.l.b16 %v7793
      %v8050 = vunpack.c.l.b16 %v7794
      %v8051 = vunpack.c.l.b16 %v7795
      %v8052 = vunpack.c.l.b16 %v7796
      %v8053 = vunpack.c.l.b16 %v7797
      %v8054 = vunpack.c.l.b16 %v7798
      %v8055 = vunpack.c.l.b16 %v7799
      %v8056 = vunpack.c.l.b16 %v7800
      %v8057 = vunpack.c.l.b16 %v7801
      %v8058 = vunpack.c.l.b16 %v7802
      %v8059 = vunpack.c.l.b16 %v7803
      %v8060 = vunpack.c.l.b16 %v7804
      %v8061 = vunpack.c.l.b16 %v7805
      %v8062 = vunpack.c.l.b16 %v7806
      %v8063 = vunpack.c.l.b16 %v7807
      %v8064 = vunpack.c.l.b16 %v7808
      %v8065 = vunpack.c.l.b16 %v7809
      %v8066 = vunpack.c.l.b16 %v7810
      %v8067 = vunpack.c.l.b16 %v7811
      %v8068 = vunpack.c.l.b16 %v7812
      %v8069 = vunpack.c.l.b16 %v7813
      %v8070 = vunpack.c.l.b16 %v7814
      %v8071 = vunpack.c.l.b16 %v7815
      %v8072 = vunpack.c.l.b16 %v7816
      %v8073 = vunpack.c.l.b16 %v7817
      %v8074 = vunpack.c.l.b16 %v7818
      %v8075 = vunpack.c.l.b16 %v7819
      %v8076 = vunpack.c.l.b16 %v7820
      %v8077 = vunpack.c.l.b16 %v7821
      %v8078 = vunpack.c.l.b16 %v7822
      %v8079 = vunpack.c.l.b16 %v7823
      %v8080 = vunpack.c.l.b16 %v7824
      %v8081 = vunpack.c.l.b16 %v7825
      %v8082 = vunpack.c.l.b16 %v7826
      %v8083 = vunpack.c.l.b16 %v7827
      %v8084 = vunpack.c.l.b16 %v7828
      %v8085 = vunpack.c.l.b16 %v7829
      %v8086 = vunpack.c.l.b16 %v7830
      %v8087 = vunpack.c.l.b16 %v7831
      %v8088 = vunpack.c.l.b16 %v7832
      %v8089 = vunpack.c.l.b16 %v7833
      %v8090 = vunpack.c.l.b16 %v7834
      %v8091 = vunpack.c.l.b16 %v7835
      %v8092 = vunpack.c.l.b16 %v7836
      %v8093 = vunpack.c.l.b16 %v7837
      %v8094 = vunpack.c.l.b16 %v7838
      %v8095 = vunpack.c.l.b16 %v7839
      %v8096 = vunpack.c.l.b16 %v7840
      %v8097 = vunpack.c.l.b16 %v7841
      %v8098 = vunpack.c.l.b16 %v7842
      %v8099 = vunpack.c.l.b16 %v7843
      %v8100 = vunpack.c.l.b16 %v7844
      %v8101 = vunpack.c.l.b16 %v7845
      %v8102 = vunpack.c.l.b16 %v7846
      %v8103 = vunpack.c.l.b16 %v7847
      %v8104 = vunpack.c.l.b16 %v7848
      %v8105 = vunpack.c.l.b16 %v7849
      %v8106 = vunpack.c.l.b16 %v7850
      %v8107 = vunpack.c.l.b16 %v7851
      %v8108 = vunpack.c.l.b16 %v7852
      %v8109 = vunpack.c.l.b16 %v7853
      %v8110 = vunpack.c.l.b16 %v7854
      %v8111 = vunpack.c.l.b16 %v7855
      %v8112 = vunpack.c.l.b16 %v7856
      %v8113 = vunpack.c.l.b16 %v7857
      %v8114 = vunpack.c.l.b16 %v7858
      %v8115 = vunpack.c.l.b16 %v7859
      %v8116 = vunpack.c.l.b16 %v7860
      %v8117 = vunpack.c.l.b16 %v7861
      %v8118 = vunpack.c.l.b16 %v7862
      %v8119 = vunpack.c.l.b16 %v7863
      %v8120 = vunpack.c.l.b16 %v7864
      %v8121 = vunpack.c.l.b16 %v7865
      %v8122 = vunpack.c.l.b16 %v7866
      %v8123 = vunpack.c.l.b16 %v7867
      %v8124 = vunpack.c.l.b16 %v7868
      %v8125 = vunpack.c.l.b16 %v7869
      %v8126 = vunpack.c.l.b16 %v7870
      %v8127 = vunpack.c.l.b16 %v7871
      %v8128 = vunpack.c.l.b16 %v7872
      %v8129 = vunpack.c.l.b16 %v7873
      %v8130 = vunpack.c.l.b16 %v7874
      %v8131 = vunpack.c.l.b16 %v7875
      %v8132 = vunpack.c.l.b16 %v7876
      %v8133 = vunpack.c.l.b16 %v7877
      %v8134 = vunpack.c.l.b16 %v7878
      %v8135 = vunpack.c.l.b16 %v7879
      %v8136 = vunpack.c.l.b16 %v7880
      %v8137 = vpack.c.b16 %v8010, %v8009
      %v8138 = vpack.c.b16 %v8012, %v8011
      %v8139 = vpack.c.b16 %v8014, %v8013
      %v8140 = vpack.c.b16 %v8016, %v8015
      %v8141 = vpack.c.b16 %v8018, %v8017
      %v8142 = vpack.c.b16 %v8020, %v8019
      %v8143 = vpack.c.b16 %v8022, %v8021
      %v8144 = vpack.c.b16 %v8024, %v8023
      %v8145 = vpack.c.b16 %v8026, %v8025
      %v8146 = vpack.c.b16 %v8028, %v8027
      %v8147 = vpack.c.b16 %v8030, %v8029
      %v8148 = vpack.c.b16 %v8032, %v8031
      %v8149 = vpack.c.b16 %v8034, %v8033
      %v8150 = vpack.c.b16 %v8036, %v8035
      %v8151 = vpack.c.b16 %v8038, %v8037
      %v8152 = vpack.c.b16 %v8040, %v8039
      %v8153 = vpack.c.b16 %v8042, %v8041
      %v8154 = vpack.c.b16 %v8044, %v8043
      %v8155 = vpack.c.b16 %v8046, %v8045
      %v8156 = vpack.c.b16 %v8048, %v8047
      %v8157 = vpack.c.b16 %v8050, %v8049
      %v8158 = vpack.c.b16 %v8052, %v8051
      %v8159 = vpack.c.b16 %v8054, %v8053
      %v8160 = vpack.c.b16 %v8056, %v8055
      %v8161 = vpack.c.b16 %v8058, %v8057
      %v8162 = vpack.c.b16 %v8060, %v8059
      %v8163 = vpack.c.b16 %v8062, %v8061
      %v8164 = vpack.c.b16 %v8064, %v8063
      %v8165 = vpack.c.b16 %v8066, %v8065
      %v8166 = vpack.c.b16 %v8068, %v8067
      %v8167 = vpack.c.b16 %v8070, %v8069
      %v8168 = vpack.c.b16 %v8072, %v8071
      %v8169 = vpack.c.b16 %v8074, %v8073
      %v8170 = vpack.c.b16 %v8076, %v8075
      %v8171 = vpack.c.b16 %v8078, %v8077
      %v8172 = vpack.c.b16 %v8080, %v8079
      %v8173 = vpack.c.b16 %v8082, %v8081
      %v8174 = vpack.c.b16 %v8084, %v8083
      %v8175 = vpack.c.b16 %v8086, %v8085
      %v8176 = vpack.c.b16 %v8088, %v8087
      %v8177 = vpack.c.b16 %v8090, %v8089
      %v8178 = vpack.c.b16 %v8092, %v8091
      %v8179 = vpack.c.b16 %v8094, %v8093
      %v8180 = vpack.c.b16 %v8096, %v8095
      %v8181 = vpack.c.b16 %v8098, %v8097
      %v8182 = vpack.c.b16 %v8100, %v8099
      %v8183 = vpack.c.b16 %v8102, %v8101
      %v8184 = vpack.c.b16 %v8104, %v8103
      %v8185 = vpack.c.b16 %v8106, %v8105
      %v8186 = vpack.c.b16 %v8108, %v8107
      %v8187 = vpack.c.b16 %v8110, %v8109
      %v8188 = vpack.c.b16 %v8112, %v8111
      %v8189 = vpack.c.b16 %v8114, %v8113
      %v8190 = vpack.c.b16 %v8116, %v8115
      %v8191 = vpack.c.b16 %v8118, %v8117
      %v8192 = vpack.c.b16 %v8120, %v8119
      %v8193 = vpack.c.b16 %v8122, %v8121
      %v8194 = vpack.c.b16 %v8124, %v8123
      %v8195 = vpack.c.b16 %v8126, %v8125
      %v8196 = vpack.c.b16 %v8128, %v8127
      %v8197 = vpack.c.b16 %v8130, %v8129
      %v8198 = vpack.c.b16 %v8132, %v8131
      %v8199 = vpack.c.b16 %v8134, %v8133
      %v8200 = vpack.c.b16 %v8136, %v8135
      %8265 = vmatpush.bf16.msra.mxu0 %v8144
      %8266 = vmatpush.bf16.msra.mxu0 %v8143
      %8267 = vmatpush.bf16.msra.mxu0 %v8142
      %8268 = vmatpush.bf16.msra.mxu0 %v8141
      %8269 = vmatpush.bf16.msra.mxu0 %v8140
      %8270 = vmatpush.bf16.msra.mxu0 %v8139
      %8271 = vmatpush.bf16.msra.mxu0 %v8138
      %8272 = vmatpush.bf16.msra.mxu0 %v8137
      %8273 = vmatmul.bf16.gmra.mxu0 %v7744
      %v8274 = vpop.f32.mrf.mxu0
      %v8275 = vadd.f32 0.0, %v8274
      %v8276 = vpop.f32.mrf.mxu0
      %v8277 = vadd.f32 0.0, %v8276
      %8278 = vdwg.mxu0
      %8279 = vmatpush.bf16.msra.mxu0 %v8152
      %8280 = vmatpush.bf16.msra.mxu0 %v8151
      %8281 = vmatpush.bf16.msra.mxu0 %v8150
      %8282 = vmatpush.bf16.msra.mxu0 %v8149
      %8283 = vmatpush.bf16.msra.mxu0 %v8148
      %8284 = vmatpush.bf16.msra.mxu0 %v8147
      %8285 = vmatpush.bf16.msra.mxu0 %v8146
      %8286 = vmatpush.bf16.msra.mxu0 %v8145
      %8287 = vmatmul.bf16.gmra.mxu0 %v7745
      %v8288 = vpop.f32.mrf.mxu0
      %v8289 = vadd.f32 %v8275, %v8288
      %v8290 = vpop.f32.mrf.mxu0
      %v8291 = vadd.f32 %v8277, %v8290
      %8292 = vdwg.mxu0
      %8293 = vmatpush.bf16.msra.mxu0 %v8160
      %8294 = vmatpush.bf16.msra.mxu0 %v8159
      %8295 = vmatpush.bf16.msra.mxu0 %v8158
      %8296 = vmatpush.bf16.msra.mxu0 %v8157
      %8297 = vmatpush.bf16.msra.mxu0 %v8156
      %8298 = vmatpush.bf16.msra.mxu0 %v8155
      %8299 = vmatpush.bf16.msra.mxu0 %v8154
      %8300 = vmatpush.bf16.msra.mxu0 %v8153
      %8301 = vmatmul.bf16.gmra.mxu0 %v7746
      %v8302 = vpop.f32.mrf.mxu0
      %v8303 = vadd.f32 %v8289, %v8302
      %v8304 = vpop.f32.mrf.mxu0
      %v8305 = vadd.f32 %v8291, %v8304
      %8306 = vdwg.mxu0
      %8307 = vmatpush.bf16.msra.mxu0 %v8168
      %8308 = vmatpush.bf16.msra.mxu0 %v8167
      %8309 = vmatpush.bf16.msra.mxu0 %v8166
      %8310 = vmatpush.bf16.msra.mxu0 %v8165
      %8311 = vmatpush.bf16.msra.mxu0 %v8164
      %8312 = vmatpush.bf16.msra.mxu0 %v8163
      %8313 = vmatpush.bf16.msra.mxu0 %v8162
      %8314 = vmatpush.bf16.msra.mxu0 %v8161
      %8315 = vmatmul.bf16.gmra.mxu0 %v7747
      %v8316 = vpop.f32.mrf.mxu0
      %v8317 = vadd.f32 %v8303, %v8316
      %v8318 = vpop.f32.mrf.mxu0
      %v8319 = vadd.f32 %v8305, %v8318
      %8320 = vdwg.mxu0
      %8321 = vmatpush.bf16.msra.mxu0 %v8176
      %8322 = vmatpush.bf16.msra.mxu0 %v8175
      %8323 = vmatpush.bf16.msra.mxu0 %v8174
      %8324 = vmatpush.bf16.msra.mxu0 %v8173
      %8325 = vmatpush.bf16.msra.mxu0 %v8172
      %8326 = vmatpush.bf16.msra.mxu0 %v8171
      %8327 = vmatpush.bf16.msra.mxu0 %v8170
      %8328 = vmatpush.bf16.msra.mxu0 %v8169
      %8329 = vmatmul.bf16.gmra.mxu0 %v7748
      %v8330 = vpop.f32.mrf.mxu0
      %v8331 = vadd.f32 %v8317, %v8330
      %v8332 = vpop.f32.mrf.mxu0
      %v8333 = vadd.f32 %v8319, %v8332
      %8334 = vdwg.mxu0
      %8335 = vmatpush.bf16.msra.mxu0 %v8184
      %8336 = vmatpush.bf16.msra.mxu0 %v8183
      %8337 = vmatpush.bf16.msra.mxu0 %v8182
      %8338 = vmatpush.bf16.msra.mxu0 %v8181
      %8339 = vmatpush.bf16.msra.mxu0 %v8180
      %8340 = vmatpush.bf16.msra.mxu0 %v8179
      %8341 = vmatpush.bf16.msra.mxu0 %v8178
      %8342 = vmatpush.bf16.msra.mxu0 %v8177
      %8343 = vmatmul.bf16.gmra.mxu0 %v7749
      %v8344 = vpop.f32.mrf.mxu0
      %v8345 = vadd.f32 %v8331, %v8344
      %v8346 = vpop.f32.mrf.mxu0
      %v8347 = vadd.f32 %v8333, %v8346
      %8348 = vdwg.mxu0
      %8349 = vmatpush.bf16.msra.mxu0 %v8192
      %8350 = vmatpush.bf16.msra.mxu0 %v8191
      %8351 = vmatpush.bf16.msra.mxu0 %v8190
      %8352 = vmatpush.bf16.msra.mxu0 %v8189
      %8353 = vmatpush.bf16.msra.mxu0 %v8188
      %8354 = vmatpush.bf16.msra.mxu0 %v8187
      %8355 = vmatpush.bf16.msra.mxu0 %v8186
      %8356 = vmatpush.bf16.msra.mxu0 %v8185
      %8357 = vmatmul.bf16.gmra.mxu0 %v7750
      %v8358 = vpop.f32.mrf.mxu0
      %v8359 = vadd.f32 %v8345, %v8358
      %v8360 = vpop.f32.mrf.mxu0
      %v8361 = vadd.f32 %v8347, %v8360
      %8362 = vdwg.mxu0
      %8363 = vmatpush.bf16.msra.mxu0 %v8200
      %8364 = vmatpush.bf16.msra.mxu0 %v8199
      %8365 = vmatpush.bf16.msra.mxu0 %v8198
      %8366 = vmatpush.bf16.msra.mxu0 %v8197
      %8367 = vmatpush.bf16.msra.mxu0 %v8196
      %8368 = vmatpush.bf16.msra.mxu0 %v8195
      %8369 = vmatpush.bf16.msra.mxu0 %v8194
      %8370 = vmatpush.bf16.msra.mxu0 %v8193
      %8371 = vmatmul.bf16.gmra.mxu0 %v7751
      %v8372 = vpop.f32.mrf.mxu0
      %v8373 = vadd.f32 %v8359, %v8372
      %v8374 = vpop.f32.mrf.mxu0
      %v8375 = vadd.f32 %v8361, %v8374
      %8376 = vdwg.mxu0
      %v8377 = vadd.f32 %v7641, %v8373
      %v8378 = vadd.f32 %v7642, %v8375
      %v8379 = vld [vmem:[%s10] sm:$0x1]
      %v8381 = vperm.slane %v8379, 0
      %v8383 = vadd.f32 %v8377, %v8381
      %v8384 = vadd.f32 %v8378, %v8381
      %v8385 = vsub.f32 0.0, %v8383
      %v8386 = vsub.f32 0.0, %v8384
      %v8387 = vmul.f32 %v8385, 1.442695
      %v8388 = vpow.pop %v8387
      %v8389 = vmul.f32 %v8386, 1.442695
      %v8390 = vpow.pop %v8389
      %v8391 = vadd.f32 %v8388, 1.0
      %v8392 = vadd.f32 %v8390, 1.0
      %v8393 = vrcp.pop %v8391
      %v8394 = vmul.f32 %v8391, %v8393
      %v8395 = vsub.f32 1.0, %v8394
      %v8396 = vmul.f32 %v8393, %v8395
      %v8397 = vadd.f32 %v8393, %v8396
      %vm8398 = vweird.f32 %v8391
      %vm8399 = vweird.f32 %v8393
      %vm8400 = vmor %vm8398, %vm8399
      %v8401 = vsel %vm8400, %v8393, %v8397
      %v8402 = vand.u32 2147483647, %v8391
      %vm8403 = vcmp.eq.f32.partialorder %v8402, 8.507059e+37
      %v8404 = vand.u32 %v8391, 2147483648
      %v8405 = vor.u32 1.1754944e-38, %v8404
      %v8406 = vsel %vm8403, %v8405, %v8401
      %v8407 = vmul.f32 1.0, %v8406
      %v8408 = vrcp.pop %v8392
      %v8409 = vmul.f32 %v8392, %v8408
      %v8410 = vsub.f32 1.0, %v8409
      %v8411 = vmul.f32 %v8408, %v8410
      %v8412 = vadd.f32 %v8408, %v8411
      %vm8413 = vweird.f32 %v8392
      %vm8414 = vweird.f32 %v8408
      %vm8415 = vmor %vm8413, %vm8414
      %v8416 = vsel %vm8415, %v8408, %v8412
      %v8417 = vand.u32 2147483647, %v8392
      %vm8418 = vcmp.eq.f32.partialorder %v8417, 8.507059e+37
      %v8419 = vand.u32 %v8392, 2147483648
      %v8420 = vor.u32 1.1754944e-38, %v8419
      %v8421 = vsel %vm8418, %v8420, %v8416
      %v8422 = vmul.f32 1.0, %v8421
      %8423 = vst [vmem:[%s386] sm:$0x3] %v8407
      %8424 = vst [vmem:[%s386 + $0x2] sm:$0x3] %v8422
      %p8425 = scmp.lt.s32.totalorder %s22, 1
      %s8426 = scalar_select %p8425, %s22, 1
      %s8427 = smul.addr %s8426, 2
      %s8428 = smul.addr %s8427, 2
      %s8429 = scalar_lea.vmem %s11, %s8428
      // Predicated region
      $region65: #{forward.1} parent=63 // pred_check
        %p8430 = pneg %p276
      $region66: #{forward.1} parent=63 // pred_check_branch
        %8432 = sbr.rel (%p8430) target = $region68
      $region67: #{forward.1} parent=63 // pred_region
        _
      $region68: #{forward.1} parent=63 // pred_fallthru
        _
    $region64: #{forward.1} parent=5 // pred_fallthru
      _
    %p8433 = scmp.le.s32.totalorder 2, %s17
    // Predicated region
    $region69: #{forward.1} parent=5 // pred_check
      %p8434 = pneg %p8433
    $region70: #{forward.1} parent=5 // pred_check_branch
      %8436 = sbr.rel (%p8434) target = $region72
    $region71: #{forward.1} parent=5 // pred_region
      %s8437 = ssub.s32 %s17, 2
      // Predicated region
      $region73: #{forward.1} parent=71 // pred_check
        %p8438 = pneg %p282
      $region74: #{forward.1} parent=71 // pred_check_branch
        %8440 = sbr.rel (%p8438) target = $region76
      $region75: #{forward.1} parent=71 // pred_region
        %p8441 = scmp.lt.s32.totalorder %s23, 1
        %s8442 = scalar_select %p8441, %s23, 1
        %s8443 = smul.addr %s8442, 2
        %s8444 = smul.addr %s8443, 2
        %s8445 = scalar_lea.vmem %s11, %s8444
      $region76: #{forward.1} parent=71 // pred_fallthru
        _
    $region72: #{forward.1} parent=5 // pred_fallthru
      _
  $region6: #{forward.1} parent=0 // loop_footer
    %s21 = sadd.s32 1, %s17
  $region7: #{forward.1} parent=0 // loop_footer_branch
    %16 = sbr.rel target = $region3
  $region8: #{forward.1} parent=0 // loop_exit
    _

</llo_original>
